<compile_context>
chip_gen: v7x
topology: tpu7x:2x2x1
jax: 0.10.0
libtpu: 0.0.40
codegen_flags: <defaults>
</compile_context>

<pallas_src>
import math
import jax
import jax.numpy as jnp
from jax.experimental import pallas as pl
from jax.experimental.pallas import tpu as pltpu

_MIB = 1 << 20


def _round_up(x, m):
    return -(-x // m) * m


# ---------------------------------------------------------------------------
# Pallas kernel factory: whole MLP chain (encoder + decoder + FCN) on a batch tile
# ---------------------------------------------------------------------------
def _make_kernel(fcn_pad, res_dim, fcn_out, latent, slab_pad):
    def _linear(h, w_ref, b_ref):
        w = w_ref[...]
        # bf16 MXU operands (cast happens here, in-kernel), f32 accumulation,
        # f32 bias add / activations.
        y = jnp.dot(h.astype(w.dtype), w, preferred_element_type=jnp.float32)
        return y + b_ref[...].astype(jnp.float32)

    def kernel(
        x_ref,
        # encoder: 4 Linear layers
        ew0, eb0, ew1, eb1, ew2, eb2, ew3, eb3,
        # fused first layers, lane-aligned: [FCN-L0 padded to fcn_pad | decoder-L0]
        dfw0, dfb0,
        # decoder L1
        dw1, db1,
        # FCN layers 1..3 (fw1's K rows zero-padded to fcn_pad)
        fw1, fb1, fw2, fb2, fw3, fb3,
        # single lane-dense output slab: [out | pred | emb | zero pad]
        slab_ref,
    ):
        h = x_ref[...]                                   # f32 input, cast in _linear

        # ----- encoder -----
        h = jax.nn.relu(_linear(h, ew0, eb0))
        h = jax.nn.relu(_linear(h, ew1, eb1))
        h = jax.nn.relu(_linear(h, ew2, eb2))
        emb = jax.nn.relu(_linear(h, ew3, eb3))          # (tile_b, latent), f32

        # ----- fused first layers of decoder + FCN (one MXU push) -----
        df = jax.nn.relu(_linear(emb, dfw0, dfb0))       # (tile_b, fcn_pad + gene_dim)
        f = df[:, :fcn_pad]      # lane-aligned; padded columns are exactly 0
        d = df[:, fcn_pad:]      # slice starts at a 128-lane boundary

        # ----- decoder tail -----
        out = jax.nn.sigmoid(_linear(d, dw1, db1))       # (tile_b, res_dim)

        # ----- FCN tail -----
        f = jax.nn.relu(_linear(f, fw1, fb1))            # zero-padded K rows: exact
        f = jax.nn.relu(_linear(f, fw2, fb2))
        pred = jax.nn.sigmoid(_linear(f, fw3, fb3))      # (tile_b, fcn_out)

        # ----- single lane-dense write (Pallas masks any partial trailing tile) ---
        parts = [out, pred, emb]
        pad = slab_pad - (res_dim + fcn_out + latent)
        if pad > 0:
            parts.append(jnp.zeros((out.shape[0], pad), jnp.float32))
        slab_ref[...] = jnp.concatenate(parts, axis=-1).astype(slab_ref.dtype)

    return kernel


# ---------------------------------------------------------------------------
# Generation-aware tiling helpers
# ---------------------------------------------------------------------------
def _tpu_traits():
    """Return (target grid steps, VMEM budget bytes) from the local device kind."""
    kind = ""
    try:
        kind = jax.devices()[0].device_kind.lower()
    except Exception:
        pass
    if "v7" in kind or "7x" in kind:
        return 2, 48 * _MIB          # 2 TCs/chip, only 64 MiB physical VMEM
    if "v4" in kind or "v3" in kind:
        return 2, 96 * _MIB          # megacore pair, 128 MiB VMEM
    return 1, 96 * _MIB              # v5e / v6e: single TC -> single grid step


def _pick_tile_b(batch, in_dim, slab_pad, act_width_sum, weight_bytes,
                 n_steps, budget_bytes):
    """Largest batch tile that fits the VMEM budget, targeting n_steps grid steps."""
    # Bytes held in VMEM per batch row: double-buffered f32 x block,
    # double-buffered slab block, live f32 activations along the chain.
    per_row = 4 * (2 * in_dim + 2 * slab_pad + act_width_sum)
    avail = budget_bytes - 2 * weight_bytes - 4 * _MIB
    cap = max(8, (max(avail, 8 * per_row) // per_row) // 8 * 8)
    want = _round_up(pl.cdiv(batch, n_steps), 8)
    return max(8, min(want, cap, _round_up(batch, 8), 1024))


# ---------------------------------------------------------------------------
# Wrapper
# ---------------------------------------------------------------------------
def meinn_forward(x, params, *, tile_b=None, use_bf16=True, out_dtype=jnp.float32):
    """params: flat list of 20 f32 arrays — 10 (in,out) weights interleaved with
    10 (1,out) biases, in encoder(4) / decoder(2) / FCN(4) layer order."""
    B, in_dim = x.shape

    dw0, db0, dw1, db1 = params[8:12]
    fw0, fb0, fw1, fb1, fw2, fb2, fw3, fb3 = params[12:20]

    latent = params[6].shape[1]        # encoder last layer out
    gene_dim = dw0.shape[1]
    res_dim = dw1.shape[1]
    f_q3 = fw0.shape[1]
    fcn_out = fw3.shape[1]
    fcn_pad = _round_up(f_q3, 128)     # lane-aligned split point in the fused L0
    slab_total = res_dim + fcn_out + latent
    slab_pad = _round_up(slab_total, 128)   # lane-dense output slab width
    # (Writing the slab in bf16 would halve writeback bytes — keep f32 here so the
    #  returned tensors match an f32 downstream without extra quantization.)

    # Fused, lane-aligned first layers of the two `emb` consumers:
    #   [ FCN-L0 zero-padded to fcn_pad | decoder-L0 ]
    fw0_p = jnp.pad(fw0, ((0, 0), (0, fcn_pad - f_q3)))
    fb0_p = jnp.pad(fb0, ((0, 0), (0, fcn_pad - f_q3)))
    dfw0 = jnp.concatenate([fw0_p, dw0], axis=1)
    dfb0 = jnp.concatenate([fb0_p, db0], axis=1)
    fw1_p = jnp.pad(fw1, ((0, fcn_pad - f_q3), (0, 0)))    # K rows padded (zeros)

    w_dtype = jnp.bfloat16 if use_bf16 else x.dtype
    _w = lambda w: w.astype(w_dtype)

    kernel_params = []
    for li in range(4):                                        # encoder
        kernel_params += [_w(params[2 * li]), params[2 * li + 1]]
    kernel_params += [_w(dfw0), dfb0, _w(dw1), db1]            # fused L0 + decoder L1
    kernel_params += [_w(fw1_p), fb1, _w(fw2), fb2, _w(fw3), fb3]

    # ---- generation-aware batch tiling under a VMEM budget ----
    n_steps, budget = _tpu_traits()
    act_width_sum = sum(p.shape[1] for p in kernel_params[0::2]) + slab_pad
    weight_bytes = sum(int(p.size) * p.dtype.itemsize for p in kernel_params)
    if tile_b is None:
        tile_b = _pick_tile_b(B, in_dim, slab_pad, act_width_sum, weight_bytes,
                              n_steps, budget)

    grid = (pl.cdiv(B, tile_b),)
    # f32 x goes straight in — no wrapper-side dtype pass over the input.
    x_spec = pl.BlockSpec((tile_b, in_dim), lambda i: (i, 0))
    out_spec = pl.BlockSpec((tile_b, slab_pad), lambda i: (i, 0))
    out_shape = jax.ShapeDtypeStruct((B, slab_pad), out_dtype)

    est_vmem = (2 * weight_bytes
                + tile_b * 4 * (2 * in_dim + 2 * slab_pad + act_width_sum)
                + 4 * _MIB)
    vmem_limit = int(min(budget, max(32 * _MIB, est_vmem)))

    # Advisory cost estimate for XLA scheduling.
    flops = 2 * B * sum(int(p.size) for p in kernel_params[0::2])
    transcendentals = B * (res_dim + fcn_out)   # sigmoids
    bytes_accessed = (int(x.size) * x.dtype.itemsize
                      + weight_bytes
                      + B * slab_pad * jnp.dtype(out_dtype).itemsize)

    kernel = _make_kernel(fcn_pad, res_dim, fcn_out, latent, slab_pad)

    def _call(single_buffer_params):
        if single_buffer_params:
            # Constant index_map -> revisit-constant block: single VMEM buffer.
            pspec = lambda shp: pl.BlockSpec(shp, lambda i: (0, 0),
                                             pipeline_mode=pl.Buffered(1))
        else:
            pspec = lambda shp: pl.BlockSpec(shp, lambda i: (0, 0))
        return pl.pallas_call(
            kernel,
            grid=grid,
            in_specs=[x_spec] + [pspec(p.shape) for p in kernel_params],
            out_specs=out_spec,
            out_shape=out_shape,
            compiler_params=pltpu.CompilerParams(
                dimension_semantics=("parallel",),
                vmem_limit_bytes=vmem_limit,
            ),
            cost_estimate=pl.CostEstimate(
                flops=flops,
                transcendentals=transcendentals,
                bytes_accessed=bytes_accessed,
            ),
        )(x, *kernel_params)

    try:
        slab = _call(True)
    except Exception:
        # Older jax builds may reject pl.Buffered(1); fall back to default buffering.
        slab = _call(False)

    if slab.dtype != jnp.float32:
        slab = slab.astype(jnp.float32)
    out = slab[:, :res_dim]
    pred = slab[:, res_dim:res_dim + fcn_out]
    emb = slab[:, res_dim + fcn_out:res_dim + fcn_out + latent]
    return out, pred, emb


# ---------------------------------------------------------------------------
# Deterministic parameter construction (PyTorch nn.Linear default init style)
# ---------------------------------------------------------------------------
def _init_linear(key, fan_in, fan_out):
    k = 1.0 / math.sqrt(fan_in)
    kw, kb = jax.random.split(key)
    # stored as (in, out)  == transpose of torch's (out, in)
    w = jax.random.uniform(kw, (fan_in, fan_out), jnp.float32, -k, k)
    b = jax.random.uniform(kb, (1, fan_out), jnp.float32, -k, k)
    return w, b


def build_params(key, residue_dim, gene_dim, latent_dim, n_datasets):
    # --- dimensions exactly as MeiNN.__init__ computes them ---
    in_dim = residue_dim
    mid_dim = int(math.sqrt(latent_dim * in_dim))
    q1_dim = int(math.sqrt(latent_dim * mid_dim))
    q3_dim = int(math.sqrt(mid_dim * in_dim))
    enc_dims = [in_dim, q3_dim, mid_dim, q1_dim, latent_dim]

    dec_dims = [latent_dim, gene_dim, residue_dim]

    f_in, f_out = latent_dim, n_datasets          # multiDatasetMode == 'softmax'
    f_mid = int(math.sqrt(f_in * f_out))
    f_q3 = int(math.sqrt(f_in * f_mid))
    f_q1 = int(math.sqrt(latent_dim * f_mid))
    fcn_dims = [f_in, f_q3, f_mid, f_q1, f_out]

    params = []
    all_dims = [enc_dims, dec_dims, fcn_dims]
    n_layers = sum(len(d) - 1 for d in all_dims)
    keys = jax.random.split(key, n_layers)
    ki = 0
    for dims in all_dims:
        for a, b in zip(dims[:-1], dims[1:]):
            w, bias = _init_linear(keys[ki], a, b)
            ki += 1
            params.extend([w, bias])
    return params


# ---------------------------------------------------------------------------
# Pure-JAX reference (compute_dtype selects the matmul-operand precision)
# ---------------------------------------------------------------------------
def meinn_ref(x, params, compute_dtype=jnp.float32):
    p = list(params)

    def lin(h, w, b):
        return jnp.dot(h.astype(compute_dtype), w.astype(compute_dtype),
                       preferred_element_type=jnp.float32) + b.astype(jnp.float32)

    def seq(h, layers, last_act):
        n = len(layers) // 2
        for i in range(n):
            w, b = layers[2 * i], layers[2 * i + 1]
            h = lin(h, w, b)
            h = jax.nn.relu(h) if (i < n - 1 or last_act == "relu") else jax.nn.sigmoid(h)
        return h

    enc, dec, fcn = p[0:8], p[8:12], p[12:20]
    emb = seq(x, enc, "relu")
    out = seq(emb, dec, "sigmoid")
    pred = seq(emb, fcn, "sigmoid")
    return out, pred, emb


# ---------------------------------------------------------------------------
if __name__ == "__main__":
    # small synthetic dims consistent with the module's construction
    B = 256               # batch (1 tile on v5e/v6e, 2 tiles of 128 on v7x megacore)
    RESIDUE_DIM = 64      # residue_layer_dim == model input width
    GENE_DIM = 32         # gene_layer_dim
    LATENT_DIM = 16       # gene_pathway.shape[0]
    N_DATASETS = 3        # len(datasetNameList), softmax mode -> FCN out_dim

    key = jax.random.PRNGKey(0)
    kx, kp = jax.random.split(key)
    x = jax.random.uniform(kx, (B, RESIDUE_DIM), jnp.float32)  # methylation-like in [0,1]
    params = build_params(kp, RESIDUE_DIM, GENE_DIM, LATENT_DIM, N_DATASETS)

    out, pred, emb = meinn_forward(x, params)                  # bf16 MXU ops, f32 acc
    jax.block_until_ready((out, pred, emb))

    assert out.shape == (B, RESIDUE_DIM)
    assert pred.shape == (B, N_DATASETS)
    assert emb.shape == (B, LATENT_DIM)

    # Tight check against a reference using the same arithmetic (bf16 operands).
    out_b, pred_b, emb_b = meinn_ref(x, params, compute_dtype=jnp.bfloat16)
    assert jnp.allclose(out, out_b, atol=1e-3), "decoder output mismatch (bf16 ref)"
    assert jnp.allclose(pred, pred_b, atol=1e-3), "FCN pred mismatch (bf16 ref)"
    assert jnp.allclose(emb, emb_b, atol=1e-3), "embedding mismatch (bf16 ref)"

    # Realistic-tolerance check against a full-f32 reference (bf16 quantization).
    out_f, pred_f, emb_f = meinn_ref(x, params, compute_dtype=jnp.float32)
    assert jnp.allclose(out, out_f, atol=2e-2), "decoder output mismatch (f32 ref)"
    assert jnp.allclose(pred, pred_f, atol=2e-2), "FCN pred mismatch (f32 ref)"
    assert jnp.allclose(emb, emb_f, atol=2e-2), "embedding mismatch (f32 ref)"

    print("KERNEL_OK")
</pallas_src>

<mosaic_0001>
module attributes {stable_mosaic.version = 11 : i64} {
  func.func @kernel(%arg0: i32, %arg1: memref<256x64xf32, #tpu.memory_space<vmem>>, %arg2: memref<64x45xbf16, #tpu.memory_space<vmem>>, %arg3: memref<1x45xf32, #tpu.memory_space<vmem>>, %arg4: memref<45x32xbf16, #tpu.memory_space<vmem>>, %arg5: memref<1x32xf32, #tpu.memory_space<vmem>>, %arg6: memref<32x22xbf16, #tpu.memory_space<vmem>>, %arg7: memref<1x22xf32, #tpu.memory_space<vmem>>, %arg8: memref<22x16xbf16, #tpu.memory_space<vmem>>, %arg9: memref<1x16xf32, #tpu.memory_space<vmem>>, %arg10: memref<16x160xbf16, #tpu.memory_space<vmem>>, %arg11: memref<1x160xf32, #tpu.memory_space<vmem>>, %arg12: memref<32x64xbf16, #tpu.memory_space<vmem>>, %arg13: memref<1x64xf32, #tpu.memory_space<vmem>>, %arg14: memref<128x6xbf16, #tpu.memory_space<vmem>>, %arg15: memref<1x6xf32, #tpu.memory_space<vmem>>, %arg16: memref<6x9xbf16, #tpu.memory_space<vmem>>, %arg17: memref<1x9xf32, #tpu.memory_space<vmem>>, %arg18: memref<9x3xbf16, #tpu.memory_space<vmem>>, %arg19: memref<1x3xf32, #tpu.memory_space<vmem>>, %arg20: memref<256x128xf32, #tpu.memory_space<vmem>>) attributes {dimension_semantics = [#tpu.dimension_semantics<parallel>], iteration_bounds = array<i64: 1>, scalar_prefetch = 0 : i64, scratch_operands = 0 : i64, tpu.core_type = #tpu.core_type<tc>, window_params = [{transform_indices = @transform_0, window_bounds = array<i64: 256, 64>}, {pipeline_mode = #tpu.pipeline_mode<synchronous>, transform_indices = @transform_1, window_bounds = array<i64: 64, 45>}, {pipeline_mode = #tpu.pipeline_mode<synchronous>, transform_indices = @transform_2, window_bounds = array<i64: 1, 45>}, {pipeline_mode = #tpu.pipeline_mode<synchronous>, transform_indices = @transform_3, window_bounds = array<i64: 45, 32>}, {pipeline_mode = #tpu.pipeline_mode<synchronous>, transform_indices = @transform_4, window_bounds = array<i64: 1, 32>}, {pipeline_mode = #tpu.pipeline_mode<synchronous>, transform_indices = @transform_5, window_bounds = array<i64: 32, 22>}, {pipeline_mode = #tpu.pipeline_mode<synchronous>, transform_indices = @transform_6, window_bounds = array<i64: 1, 22>}, {pipeline_mode = #tpu.pipeline_mode<synchronous>, transform_indices = @transform_7, window_bounds = array<i64: 22, 16>}, {pipeline_mode = #tpu.pipeline_mode<synchronous>, transform_indices = @transform_8, window_bounds = array<i64: 1, 16>}, {pipeline_mode = #tpu.pipeline_mode<synchronous>, transform_indices = @transform_9, window_bounds = array<i64: 16, 160>}, {pipeline_mode = #tpu.pipeline_mode<synchronous>, transform_indices = @transform_10, window_bounds = array<i64: 1, 160>}, {pipeline_mode = #tpu.pipeline_mode<synchronous>, transform_indices = @transform_11, window_bounds = array<i64: 32, 64>}, {pipeline_mode = #tpu.pipeline_mode<synchronous>, transform_indices = @transform_12, window_bounds = array<i64: 1, 64>}, {pipeline_mode = #tpu.pipeline_mode<synchronous>, transform_indices = @transform_13, window_bounds = array<i64: 128, 6>}, {pipeline_mode = #tpu.pipeline_mode<synchronous>, transform_indices = @transform_14, window_bounds = array<i64: 1, 6>}, {pipeline_mode = #tpu.pipeline_mode<synchronous>, transform_indices = @transform_15, window_bounds = array<i64: 6, 9>}, {pipeline_mode = #tpu.pipeline_mode<synchronous>, transform_indices = @transform_16, window_bounds = array<i64: 1, 9>}, {pipeline_mode = #tpu.pipeline_mode<synchronous>, transform_indices = @transform_17, window_bounds = array<i64: 9, 3>}, {pipeline_mode = #tpu.pipeline_mode<synchronous>, transform_indices = @transform_18, window_bounds = array<i64: 1, 3>}, {transform_indices = @transform_19, window_bounds = array<i64: 256, 128>}]} {
    %c0 = arith.constant 0 : index
    %c0_0 = arith.constant 0 : index
    %0 = vector.load %arg1[%c0, %c0_0] : memref<256x64xf32, #tpu.memory_space<vmem>>, vector<256x64xf32>
    %c0_1 = arith.constant 0 : index
    %c0_2 = arith.constant 0 : index
    %1 = vector.load %arg2[%c0_1, %c0_2] : memref<64x45xbf16, #tpu.memory_space<vmem>>, vector<64x45xbf16>
    %2 = arith.truncf %0 : vector<256x64xf32> to vector<256x64xbf16>
    %cst = arith.constant dense<0.000000e+00> : vector<256x45xf32>
    %3 = tpu.matmul %2, %1, %cst {dimension_numbers = #tpu.dot_dimension_numbers<[1], [0], [0], [1], [0, 0, 1, 1], [], []>} : vector<256x64xbf16>, vector<64x45xbf16>, vector<256x45xf32> -> vector<256x45xf32>
    %c0_3 = arith.constant 0 : index
    %c0_4 = arith.constant 0 : index
    %4 = vector.load %arg3[%c0_3, %c0_4] : memref<1x45xf32, #tpu.memory_space<vmem>>, vector<1x45xf32>
    %5 = vector.broadcast %4 : vector<1x45xf32> to vector<256x45xf32>
    %6 = arith.addf %3, %5 : vector<256x45xf32>
    %cst_5 = arith.constant 0.000000e+00 : f32
    %7 = vector.broadcast %cst_5 : f32 to vector<256x45xf32>
    %8 = arith.maximumf %6, %7 : vector<256x45xf32>
    %c0_6 = arith.constant 0 : index
    %c0_7 = arith.constant 0 : index
    %9 = vector.load %arg4[%c0_6, %c0_7] : memref<45x32xbf16, #tpu.memory_space<vmem>>, vector<45x32xbf16>
    %10 = arith.truncf %8 : vector<256x45xf32> to vector<256x45xbf16>
    %cst_8 = arith.constant dense<0.000000e+00> : vector<256x32xf32>
    %11 = tpu.matmul %10, %9, %cst_8 {dimension_numbers = #tpu.dot_dimension_numbers<[1], [0], [0], [1], [0, 0, 1, 1], [], []>} : vector<256x45xbf16>, vector<45x32xbf16>, vector<256x32xf32> -> vector<256x32xf32>
    %c0_9 = arith.constant 0 : index
    %c0_10 = arith.constant 0 : index
    %12 = vector.load %arg5[%c0_9, %c0_10] : memref<1x32xf32, #tpu.memory_space<vmem>>, vector<1x32xf32>
    %13 = vector.broadcast %12 : vector<1x32xf32> to vector<256x32xf32>
    %14 = arith.addf %11, %13 : vector<256x32xf32>
    %cst_11 = arith.constant 0.000000e+00 : f32
    %15 = vector.broadcast %cst_11 : f32 to vector<256x32xf32>
    %16 = arith.maximumf %14, %15 : vector<256x32xf32>
    %c0_12 = arith.constant 0 : index
    %c0_13 = arith.constant 0 : index
    %17 = vector.load %arg6[%c0_12, %c0_13] : memref<32x22xbf16, #tpu.memory_space<vmem>>, vector<32x22xbf16>
    %18 = arith.truncf %16 : vector<256x32xf32> to vector<256x32xbf16>
    %cst_14 = arith.constant dense<0.000000e+00> : vector<256x22xf32>
    %19 = tpu.matmul %18, %17, %cst_14 {dimension_numbers = #tpu.dot_dimension_numbers<[1], [0], [0], [1], [0, 0, 1, 1], [], []>} : vector<256x32xbf16>, vector<32x22xbf16>, vector<256x22xf32> -> vector<256x22xf32>
    %c0_15 = arith.constant 0 : index
    %c0_16 = arith.constant 0 : index
    %20 = vector.load %arg7[%c0_15, %c0_16] : memref<1x22xf32, #tpu.memory_space<vmem>>, vector<1x22xf32>
    %21 = vector.broadcast %20 : vector<1x22xf32> to vector<256x22xf32>
    %22 = arith.addf %19, %21 : vector<256x22xf32>
    %cst_17 = arith.constant 0.000000e+00 : f32
    %23 = vector.broadcast %cst_17 : f32 to vector<256x22xf32>
    %24 = arith.maximumf %22, %23 : vector<256x22xf32>
    %c0_18 = arith.constant 0 : index
    %c0_19 = arith.constant 0 : index
    %25 = vector.load %arg8[%c0_18, %c0_19] : memref<22x16xbf16, #tpu.memory_space<vmem>>, vector<22x16xbf16>
    %26 = arith.truncf %24 : vector<256x22xf32> to vector<256x22xbf16>
    %cst_20 = arith.constant dense<0.000000e+00> : vector<256x16xf32>
    %27 = tpu.matmul %26, %25, %cst_20 {dimension_numbers = #tpu.dot_dimension_numbers<[1], [0], [0], [1], [0, 0, 1, 1], [], []>} : vector<256x22xbf16>, vector<22x16xbf16>, vector<256x16xf32> -> vector<256x16xf32>
    %c0_21 = arith.constant 0 : index
    %c0_22 = arith.constant 0 : index
    %28 = vector.load %arg9[%c0_21, %c0_22] : memref<1x16xf32, #tpu.memory_space<vmem>>, vector<1x16xf32>
    %29 = vector.broadcast %28 : vector<1x16xf32> to vector<256x16xf32>
    %30 = arith.addf %27, %29 : vector<256x16xf32>
    %cst_23 = arith.constant 0.000000e+00 : f32
    %31 = vector.broadcast %cst_23 : f32 to vector<256x16xf32>
    %32 = arith.maximumf %30, %31 : vector<256x16xf32>
    %c0_24 = arith.constant 0 : index
    %c0_25 = arith.constant 0 : index
    %33 = vector.load %arg10[%c0_24, %c0_25] : memref<16x160xbf16, #tpu.memory_space<vmem>>, vector<16x160xbf16>
    %34 = arith.truncf %32 : vector<256x16xf32> to vector<256x16xbf16>
    %cst_26 = arith.constant dense<0.000000e+00> : vector<256x160xf32>
    %35 = tpu.matmul %34, %33, %cst_26 {dimension_numbers = #tpu.dot_dimension_numbers<[1], [0], [0], [1], [0, 0, 1, 1], [], []>} : vector<256x16xbf16>, vector<16x160xbf16>, vector<256x160xf32> -> vector<256x160xf32>
    %c0_27 = arith.constant 0 : index
    %c0_28 = arith.constant 0 : index
    %36 = vector.load %arg11[%c0_27, %c0_28] : memref<1x160xf32, #tpu.memory_space<vmem>>, vector<1x160xf32>
    %37 = vector.broadcast %36 : vector<1x160xf32> to vector<256x160xf32>
    %38 = arith.addf %35, %37 : vector<256x160xf32>
    %cst_29 = arith.constant 0.000000e+00 : f32
    %39 = vector.broadcast %cst_29 : f32 to vector<256x160xf32>
    %40 = arith.maximumf %38, %39 : vector<256x160xf32>
    %41 = vector.extract_strided_slice %40 {offsets = [0, 0], sizes = [256, 128], strides = [1, 1]} : vector<256x160xf32> to vector<256x128xf32>
    %42 = vector.extract_strided_slice %40 {offsets = [0, 128], sizes = [256, 32], strides = [1, 1]} : vector<256x160xf32> to vector<256x32xf32>
    %c0_30 = arith.constant 0 : index
    %c0_31 = arith.constant 0 : index
    %43 = vector.load %arg12[%c0_30, %c0_31] : memref<32x64xbf16, #tpu.memory_space<vmem>>, vector<32x64xbf16>
    %44 = arith.truncf %42 : vector<256x32xf32> to vector<256x32xbf16>
    %cst_32 = arith.constant dense<0.000000e+00> : vector<256x64xf32>
    %45 = tpu.matmul %44, %43, %cst_32 {dimension_numbers = #tpu.dot_dimension_numbers<[1], [0], [0], [1], [0, 0, 1, 1], [], []>} : vector<256x32xbf16>, vector<32x64xbf16>, vector<256x64xf32> -> vector<256x64xf32>
    %c0_33 = arith.constant 0 : index
    %c0_34 = arith.constant 0 : index
    %46 = vector.load %arg13[%c0_33, %c0_34] : memref<1x64xf32, #tpu.memory_space<vmem>>, vector<1x64xf32>
    %47 = vector.broadcast %46 : vector<1x64xf32> to vector<256x64xf32>
    %48 = arith.addf %45, %47 : vector<256x64xf32>
    %49 = arith.negf %48 : vector<256x64xf32>
    %50 = math.exp %49 : vector<256x64xf32>
    %cst_35 = arith.constant 1.000000e+00 : f32
    %51 = vector.broadcast %cst_35 : f32 to vector<256x64xf32>
    %52 = arith.addf %51, %50 : vector<256x64xf32>
    %53 = arith.divf %51, %52 : vector<256x64xf32>
    %c0_36 = arith.constant 0 : index
    %c0_37 = arith.constant 0 : index
    %54 = vector.load %arg14[%c0_36, %c0_37] : memref<128x6xbf16, #tpu.memory_space<vmem>>, vector<128x6xbf16>
    %55 = arith.truncf %41 : vector<256x128xf32> to vector<256x128xbf16>
    %cst_38 = arith.constant dense<0.000000e+00> : vector<256x6xf32>
    %56 = tpu.matmul %55, %54, %cst_38 {dimension_numbers = #tpu.dot_dimension_numbers<[1], [0], [0], [1], [0, 0, 1, 1], [], []>} : vector<256x128xbf16>, vector<128x6xbf16>, vector<256x6xf32> -> vector<256x6xf32>
    %c0_39 = arith.constant 0 : index
    %c0_40 = arith.constant 0 : index
    %57 = vector.load %arg15[%c0_39, %c0_40] : memref<1x6xf32, #tpu.memory_space<vmem>>, vector<1x6xf32>
    %58 = vector.broadcast %57 : vector<1x6xf32> to vector<256x6xf32>
    %59 = arith.addf %56, %58 : vector<256x6xf32>
    %cst_41 = arith.constant 0.000000e+00 : f32
    %60 = vector.broadcast %cst_41 : f32 to vector<256x6xf32>
    %61 = arith.maximumf %59, %60 : vector<256x6xf32>
    %c0_42 = arith.constant 0 : index
    %c0_43 = arith.constant 0 : index
    %62 = vector.load %arg16[%c0_42, %c0_43] : memref<6x9xbf16, #tpu.memory_space<vmem>>, vector<6x9xbf16>
    %63 = arith.truncf %61 : vector<256x6xf32> to vector<256x6xbf16>
    %cst_44 = arith.constant dense<0.000000e+00> : vector<256x9xf32>
    %64 = tpu.matmul %63, %62, %cst_44 {dimension_numbers = #tpu.dot_dimension_numbers<[1], [0], [0], [1], [0, 0, 1, 1], [], []>} : vector<256x6xbf16>, vector<6x9xbf16>, vector<256x9xf32> -> vector<256x9xf32>
    %c0_45 = arith.constant 0 : index
    %c0_46 = arith.constant 0 : index
    %65 = vector.load %arg17[%c0_45, %c0_46] : memref<1x9xf32, #tpu.memory_space<vmem>>, vector<1x9xf32>
    %66 = vector.broadcast %65 : vector<1x9xf32> to vector<256x9xf32>
    %67 = arith.addf %64, %66 : vector<256x9xf32>
    %cst_47 = arith.constant 0.000000e+00 : f32
    %68 = vector.broadcast %cst_47 : f32 to vector<256x9xf32>
    %69 = arith.maximumf %67, %68 : vector<256x9xf32>
    %c0_48 = arith.constant 0 : index
    %c0_49 = arith.constant 0 : index
    %70 = vector.load %arg18[%c0_48, %c0_49] : memref<9x3xbf16, #tpu.memory_space<vmem>>, vector<9x3xbf16>
    %71 = arith.truncf %69 : vector<256x9xf32> to vector<256x9xbf16>
    %cst_50 = arith.constant dense<0.000000e+00> : vector<256x3xf32>
    %72 = tpu.matmul %71, %70, %cst_50 {dimension_numbers = #tpu.dot_dimension_numbers<[1], [0], [0], [1], [0, 0, 1, 1], [], []>} : vector<256x9xbf16>, vector<9x3xbf16>, vector<256x3xf32> -> vector<256x3xf32>
    %c0_51 = arith.constant 0 : index
    %c0_52 = arith.constant 0 : index
    %73 = vector.load %arg19[%c0_51, %c0_52] : memref<1x3xf32, #tpu.memory_space<vmem>>, vector<1x3xf32>
    %74 = vector.broadcast %73 : vector<1x3xf32> to vector<256x3xf32>
    %75 = arith.addf %72, %74 : vector<256x3xf32>
    %76 = arith.negf %75 : vector<256x3xf32>
    %77 = math.exp %76 : vector<256x3xf32>
    %cst_53 = arith.constant 1.000000e+00 : f32
    %78 = vector.broadcast %cst_53 : f32 to vector<256x3xf32>
    %79 = arith.addf %78, %77 : vector<256x3xf32>
    %80 = arith.divf %78, %79 : vector<256x3xf32>
    %cst_54 = arith.constant 0.000000e+00 : f32
    %81 = vector.broadcast %cst_54 : f32 to vector<256x45xf32>
    %82 = tpu.concatenate %53, %80, %32, %81 in 1 : vector<256x64xf32>, vector<256x3xf32>, vector<256x16xf32>, vector<256x45xf32> -> vector<256x128xf32>
    %c0_55 = arith.constant 0 : index
    %c0_56 = arith.constant 0 : index
    %83 = vector.load %arg20[%c0_55, %c0_56] : memref<256x128xf32, #tpu.memory_space<vmem>>, vector<256x128xf32>
    tpu.vector_store %arg20[%c0_55, %c0_56], %82 {strides = array<i32>} : memref<256x128xf32, #tpu.memory_space<vmem>>, vector<256x128xf32>,
    return
  }
  func.func @transform_0(%arg0: i32) -> (i32, i32) {
    %c0_i32 = arith.constant 0 : i32
    %c0_i32_0 = arith.constant 0 : i32
    return %arg0, %c0_i32 : i32, i32
  }
  func.func @transform_1(%arg0: i32) -> (i32, i32) {
    %c0_i32 = arith.constant 0 : i32
    %c0_i32_0 = arith.constant 0 : i32
    %c0_i32_1 = arith.constant 0 : i32
    return %c0_i32, %c0_i32_0 : i32, i32
  }
  func.func @transform_2(%arg0: i32) -> (i32, i32) {
    %c0_i32 = arith.constant 0 : i32
    %c0_i32_0 = arith.constant 0 : i32
    %c0_i32_1 = arith.constant 0 : i32
    return %c0_i32, %c0_i32_0 : i32, i32
  }
  func.func @transform_3(%arg0: i32) -> (i32, i32) {
    %c0_i32 = arith.constant 0 : i32
    %c0_i32_0 = arith.constant 0 : i32
    %c0_i32_1 = arith.constant 0 : i32
    return %c0_i32, %c0_i32_0 : i32, i32
  }
  func.func @transform_4(%arg0: i32) -> (i32, i32) {
    %c0_i32 = arith.constant 0 : i32
    %c0_i32_0 = arith.constant 0 : i32
    %c0_i32_1 = arith.constant 0 : i32
    return %c0_i32, %c0_i32_0 : i32, i32
  }
  func.func @transform_5(%arg0: i32) -> (i32, i32) {
    %c0_i32 = arith.constant 0 : i32
    %c0_i32_0 = arith.constant 0 : i32
    %c0_i32_1 = arith.constant 0 : i32
    return %c0_i32, %c0_i32_0 : i32, i32
  }
  func.func @transform_6(%arg0: i32) -> (i32, i32) {
    %c0_i32 = arith.constant 0 : i32
    %c0_i32_0 = arith.constant 0 : i32
    %c0_i32_1 = arith.constant 0 : i32
    return %c0_i32, %c0_i32_0 : i32, i32
  }
  func.func @transform_7(%arg0: i32) -> (i32, i32) {
    %c0_i32 = arith.constant 0 : i32
    %c0_i32_0 = arith.constant 0 : i32
    %c0_i32_1 = arith.constant 0 : i32
    return %c0_i32, %c0_i32_0 : i32, i32
  }
  func.func @transform_8(%arg0: i32) -> (i32, i32) {
    %c0_i32 = arith.constant 0 : i32
    %c0_i32_0 = arith.constant 0 : i32
    %c0_i32_1 = arith.constant 0 : i32
    return %c0_i32, %c0_i32_0 : i32, i32
  }
  func.func @transform_9(%arg0: i32) -> (i32, i32) {
    %c0_i32 = arith.constant 0 : i32
    %c0_i32_0 = arith.constant 0 : i32
    %c0_i32_1 = arith.constant 0 : i32
    return %c0_i32, %c0_i32_0 : i32, i32
  }
  func.func @transform_10(%arg0: i32) -> (i32, i32) {
    %c0_i32 = arith.constant 0 : i32
    %c0_i32_0 = arith.constant 0 : i32
    %c0_i32_1 = arith.constant 0 : i32
    return %c0_i32, %c0_i32_0 : i32, i32
  }
  func.func @transform_11(%arg0: i32) -> (i32, i32) {
    %c0_i32 = arith.constant 0 : i32
    %c0_i32_0 = arith.constant 0 : i32
    %c0_i32_1 = arith.constant 0 : i32
    return %c0_i32, %c0_i32_0 : i32, i32
  }
  func.func @transform_12(%arg0: i32) -> (i32, i32) {
    %c0_i32 = arith.constant 0 : i32
    %c0_i32_0 = arith.constant 0 : i32
    %c0_i32_1 = arith.constant 0 : i32
    return %c0_i32, %c0_i32_0 : i32, i32
  }
  func.func @transform_13(%arg0: i32) -> (i32, i32) {
    %c0_i32 = arith.constant 0 : i32
    %c0_i32_0 = arith.constant 0 : i32
    %c0_i32_1 = arith.constant 0 : i32
    return %c0_i32, %c0_i32_0 : i32, i32
  }
  func.func @transform_14(%arg0: i32) -> (i32, i32) {
    %c0_i32 = arith.constant 0 : i32
    %c0_i32_0 = arith.constant 0 : i32
    %c0_i32_1 = arith.constant 0 : i32
    return %c0_i32, %c0_i32_0 : i32, i32
  }
  func.func @transform_15(%arg0: i32) -> (i32, i32) {
    %c0_i32 = arith.constant 0 : i32
    %c0_i32_0 = arith.constant 0 : i32
    %c0_i32_1 = arith.constant 0 : i32
    return %c0_i32, %c0_i32_0 : i32, i32
  }
  func.func @transform_16(%arg0: i32) -> (i32, i32) {
    %c0_i32 = arith.constant 0 : i32
    %c0_i32_0 = arith.constant 0 : i32
    %c0_i32_1 = arith.constant 0 : i32
    return %c0_i32, %c0_i32_0 : i32, i32
  }
  func.func @transform_17(%arg0: i32) -> (i32, i32) {
    %c0_i32 = arith.constant 0 : i32
    %c0_i32_0 = arith.constant 0 : i32
    %c0_i32_1 = arith.constant 0 : i32
    return %c0_i32, %c0_i32_0 : i32, i32
  }
  func.func @transform_18(%arg0: i32) -> (i32, i32) {
    %c0_i32 = arith.constant 0 : i32
    %c0_i32_0 = arith.constant 0 : i32
    %c0_i32_1 = arith.constant 0 : i32
    return %c0_i32, %c0_i32_0 : i32, i32
  }
  func.func @transform_19(%arg0: i32) -> (i32, i32) {
    %c0_i32 = arith.constant 0 : i32
    %c0_i32_0 = arith.constant 0 : i32
    return %arg0, %c0_i32 : i32, i32
  }
}

module attributes {stable_mosaic.version = 11 : i64} {
  func.func @kernel(%arg0: i32, %arg1: memref<256x64xf32, #tpu.memory_space<vmem>>, %arg2: memref<64x45xbf16, #tpu.memory_space<vmem>>, %arg3: memref<1x45xf32, #tpu.memory_space<vmem>>, %arg4: memref<45x32xbf16, #tpu.memory_space<vmem>>, %arg5: memref<1x32xf32, #tpu.memory_space<vmem>>, %arg6: memref<32x22xbf16, #tpu.memory_space<vmem>>, %arg7: memref<1x22xf32, #tpu.memory_space<vmem>>, %arg8: memref<22x16xbf16, #tpu.memory_space<vmem>>, %arg9: memref<1x16xf32, #tpu.memory_space<vmem>>, %arg10: memref<16x160xbf16, #tpu.memory_space<vmem>>, %arg11: memref<1x160xf32, #tpu.memory_space<vmem>>, %arg12: memref<32x64xbf16, #tpu.memory_space<vmem>>, %arg13: memref<1x64xf32, #tpu.memory_space<vmem>>, %arg14: memref<128x6xbf16, #tpu.memory_space<vmem>>, %arg15: memref<1x6xf32, #tpu.memory_space<vmem>>, %arg16: memref<6x9xbf16, #tpu.memory_space<vmem>>, %arg17: memref<1x9xf32, #tpu.memory_space<vmem>>, %arg18: memref<9x3xbf16, #tpu.memory_space<vmem>>, %arg19: memref<1x3xf32, #tpu.memory_space<vmem>>, %arg20: memref<256x128xf32, #tpu.memory_space<vmem>>) attributes {dimension_semantics = [#tpu.dimension_semantics<parallel>], iteration_bounds = array<i64: 1>, scalar_prefetch = 0 : i64, scratch_operands = 0 : i64, tpu.core_type = #tpu.core_type<tc>, window_params = [{transform_indices = @transform_0, window_bounds = array<i64: 256, 64>}, {pipeline_mode = #tpu.pipeline_mode<synchronous>, transform_indices = @transform_1, window_bounds = array<i64: 64, 45>}, {pipeline_mode = #tpu.pipeline_mode<synchronous>, transform_indices = @transform_2, window_bounds = array<i64: 1, 45>}, {pipeline_mode = #tpu.pipeline_mode<synchronous>, transform_indices = @transform_3, window_bounds = array<i64: 45, 32>}, {pipeline_mode = #tpu.pipeline_mode<synchronous>, transform_indices = @transform_4, window_bounds = array<i64: 1, 32>}, {pipeline_mode = #tpu.pipeline_mode<synchronous>, transform_indices = @transform_5, window_bounds = array<i64: 32, 22>}, {pipeline_mode = #tpu.pipeline_mode<synchronous>, transform_indices = @transform_6, window_bounds = array<i64: 1, 22>}, {pipeline_mode = #tpu.pipeline_mode<synchronous>, transform_indices = @transform_7, window_bounds = array<i64: 22, 16>}, {pipeline_mode = #tpu.pipeline_mode<synchronous>, transform_indices = @transform_8, window_bounds = array<i64: 1, 16>}, {pipeline_mode = #tpu.pipeline_mode<synchronous>, transform_indices = @transform_9, window_bounds = array<i64: 16, 160>}, {pipeline_mode = #tpu.pipeline_mode<synchronous>, transform_indices = @transform_10, window_bounds = array<i64: 1, 160>}, {pipeline_mode = #tpu.pipeline_mode<synchronous>, transform_indices = @transform_11, window_bounds = array<i64: 32, 64>}, {pipeline_mode = #tpu.pipeline_mode<synchronous>, transform_indices = @transform_12, window_bounds = array<i64: 1, 64>}, {pipeline_mode = #tpu.pipeline_mode<synchronous>, transform_indices = @transform_13, window_bounds = array<i64: 128, 6>}, {pipeline_mode = #tpu.pipeline_mode<synchronous>, transform_indices = @transform_14, window_bounds = array<i64: 1, 6>}, {pipeline_mode = #tpu.pipeline_mode<synchronous>, transform_indices = @transform_15, window_bounds = array<i64: 6, 9>}, {pipeline_mode = #tpu.pipeline_mode<synchronous>, transform_indices = @transform_16, window_bounds = array<i64: 1, 9>}, {pipeline_mode = #tpu.pipeline_mode<synchronous>, transform_indices = @transform_17, window_bounds = array<i64: 9, 3>}, {pipeline_mode = #tpu.pipeline_mode<synchronous>, transform_indices = @transform_18, window_bounds = array<i64: 1, 3>}, {transform_indices = @transform_19, window_bounds = array<i64: 256, 128>}]} {
    %c0 = arith.constant 0 : index
    %c0_0 = arith.constant 0 : index
    %0 = vector.load %arg1[%c0, %c0_0] : memref<256x64xf32, #tpu.memory_space<vmem>>, vector<256x64xf32>
    %c0_1 = arith.constant 0 : index
    %c0_2 = arith.constant 0 : index
    %1 = vector.load %arg2[%c0_1, %c0_2] : memref<64x45xbf16, #tpu.memory_space<vmem>>, vector<64x45xbf16>
    %2 = arith.truncf %0 : vector<256x64xf32> to vector<256x64xbf16>
    %cst = arith.constant dense<0.000000e+00> : vector<256x45xf32>
    %3 = tpu.matmul %2, %1, %cst {dimension_numbers = #tpu.dot_dimension_numbers<[1], [0], [0], [1], [0, 0, 1, 1], [], []>} : vector<256x64xbf16>, vector<64x45xbf16>, vector<256x45xf32> -> vector<256x45xf32>
    %c0_3 = arith.constant 0 : index
    %c0_4 = arith.constant 0 : index
    %4 = vector.load %arg3[%c0_3, %c0_4] : memref<1x45xf32, #tpu.memory_space<vmem>>, vector<1x45xf32>
    %5 = vector.broadcast %4 : vector<1x45xf32> to vector<256x45xf32>
    %6 = arith.addf %3, %5 : vector<256x45xf32>
    %cst_5 = arith.constant 0.000000e+00 : f32
    %7 = vector.broadcast %cst_5 : f32 to vector<256x45xf32>
    %8 = arith.maximumf %6, %7 : vector<256x45xf32>
    %c0_6 = arith.constant 0 : index
    %c0_7 = arith.constant 0 : index
    %9 = vector.load %arg4[%c0_6, %c0_7] : memref<45x32xbf16, #tpu.memory_space<vmem>>, vector<45x32xbf16>
    %10 = arith.truncf %8 : vector<256x45xf32> to vector<256x45xbf16>
    %cst_8 = arith.constant dense<0.000000e+00> : vector<256x32xf32>
    %11 = tpu.matmul %10, %9, %cst_8 {dimension_numbers = #tpu.dot_dimension_numbers<[1], [0], [0], [1], [0, 0, 1, 1], [], []>} : vector<256x45xbf16>, vector<45x32xbf16>, vector<256x32xf32> -> vector<256x32xf32>
    %c0_9 = arith.constant 0 : index
    %c0_10 = arith.constant 0 : index
    %12 = vector.load %arg5[%c0_9, %c0_10] : memref<1x32xf32, #tpu.memory_space<vmem>>, vector<1x32xf32>
    %13 = vector.broadcast %12 : vector<1x32xf32> to vector<256x32xf32>
    %14 = arith.addf %11, %13 : vector<256x32xf32>
    %cst_11 = arith.constant 0.000000e+00 : f32
    %15 = vector.broadcast %cst_11 : f32 to vector<256x32xf32>
    %16 = arith.maximumf %14, %15 : vector<256x32xf32>
    %c0_12 = arith.constant 0 : index
    %c0_13 = arith.constant 0 : index
    %17 = vector.load %arg6[%c0_12, %c0_13] : memref<32x22xbf16, #tpu.memory_space<vmem>>, vector<32x22xbf16>
    %18 = arith.truncf %16 : vector<256x32xf32> to vector<256x32xbf16>
    %cst_14 = arith.constant dense<0.000000e+00> : vector<256x22xf32>
    %19 = tpu.matmul %18, %17, %cst_14 {dimension_numbers = #tpu.dot_dimension_numbers<[1], [0], [0], [1], [0, 0, 1, 1], [], []>} : vector<256x32xbf16>, vector<32x22xbf16>, vector<256x22xf32> -> vector<256x22xf32>
    %c0_15 = arith.constant 0 : index
    %c0_16 = arith.constant 0 : index
    %20 = vector.load %arg7[%c0_15, %c0_16] : memref<1x22xf32, #tpu.memory_space<vmem>>, vector<1x22xf32>
    %21 = vector.broadcast %20 : vector<1x22xf32> to vector<256x22xf32>
    %22 = arith.addf %19, %21 : vector<256x22xf32>
    %cst_17 = arith.constant 0.000000e+00 : f32
    %23 = vector.broadcast %cst_17 : f32 to vector<256x22xf32>
    %24 = arith.maximumf %22, %23 : vector<256x22xf32>
    %c0_18 = arith.constant 0 : index
    %c0_19 = arith.constant 0 : index
    %25 = vector.load %arg8[%c0_18, %c0_19] : memref<22x16xbf16, #tpu.memory_space<vmem>>, vector<22x16xbf16>
    %26 = arith.truncf %24 : vector<256x22xf32> to vector<256x22xbf16>
    %cst_20 = arith.constant dense<0.000000e+00> : vector<256x16xf32>
    %27 = tpu.matmul %26, %25, %cst_20 {dimension_numbers = #tpu.dot_dimension_numbers<[1], [0], [0], [1], [0, 0, 1, 1], [], []>} : vector<256x22xbf16>, vector<22x16xbf16>, vector<256x16xf32> -> vector<256x16xf32>
    %c0_21 = arith.constant 0 : index
    %c0_22 = arith.constant 0 : index
    %28 = vector.load %arg9[%c0_21, %c0_22] : memref<1x16xf32, #tpu.memory_space<vmem>>, vector<1x16xf32>
    %29 = vector.broadcast %28 : vector<1x16xf32> to vector<256x16xf32>
    %30 = arith.addf %27, %29 : vector<256x16xf32>
    %cst_23 = arith.constant 0.000000e+00 : f32
    %31 = vector.broadcast %cst_23 : f32 to vector<256x16xf32>
    %32 = arith.maximumf %30, %31 : vector<256x16xf32>
    %c0_24 = arith.constant 0 : index
    %c0_25 = arith.constant 0 : index
    %33 = vector.load %arg10[%c0_24, %c0_25] : memref<16x160xbf16, #tpu.memory_space<vmem>>, vector<16x160xbf16>
    %34 = arith.truncf %32 : vector<256x16xf32> to vector<256x16xbf16>
    %cst_26 = arith.constant dense<0.000000e+00> : vector<256x160xf32>
    %35 = tpu.matmul %34, %33, %cst_26 {dimension_numbers = #tpu.dot_dimension_numbers<[1], [0], [0], [1], [0, 0, 1, 1], [], []>} : vector<256x16xbf16>, vector<16x160xbf16>, vector<256x160xf32> -> vector<256x160xf32>
    %c0_27 = arith.constant 0 : index
    %c0_28 = arith.constant 0 : index
    %36 = vector.load %arg11[%c0_27, %c0_28] : memref<1x160xf32, #tpu.memory_space<vmem>>, vector<1x160xf32>
    %37 = vector.broadcast %36 : vector<1x160xf32> to vector<256x160xf32>
    %38 = arith.addf %35, %37 : vector<256x160xf32>
    %cst_29 = arith.constant 0.000000e+00 : f32
    %39 = vector.broadcast %cst_29 : f32 to vector<256x160xf32>
    %40 = arith.maximumf %38, %39 : vector<256x160xf32>
    %41 = vector.extract_strided_slice %40 {offsets = [0, 0], sizes = [256, 128], strides = [1, 1]} : vector<256x160xf32> to vector<256x128xf32>
    %42 = vector.extract_strided_slice %40 {offsets = [0, 128], sizes = [256, 32], strides = [1, 1]} : vector<256x160xf32> to vector<256x32xf32>
    %c0_30 = arith.constant 0 : index
    %c0_31 = arith.constant 0 : index
    %43 = vector.load %arg12[%c0_30, %c0_31] : memref<32x64xbf16, #tpu.memory_space<vmem>>, vector<32x64xbf16>
    %44 = arith.truncf %42 : vector<256x32xf32> to vector<256x32xbf16>
    %cst_32 = arith.constant dense<0.000000e+00> : vector<256x64xf32>
    %45 = tpu.matmul %44, %43, %cst_32 {dimension_numbers = #tpu.dot_dimension_numbers<[1], [0], [0], [1], [0, 0, 1, 1], [], []>} : vector<256x32xbf16>, vector<32x64xbf16>, vector<256x64xf32> -> vector<256x64xf32>
    %c0_33 = arith.constant 0 : index
    %c0_34 = arith.constant 0 : index
    %46 = vector.load %arg13[%c0_33, %c0_34] : memref<1x64xf32, #tpu.memory_space<vmem>>, vector<1x64xf32>
    %47 = vector.broadcast %46 : vector<1x64xf32> to vector<256x64xf32>
    %48 = arith.addf %45, %47 : vector<256x64xf32>
    %49 = arith.negf %48 : vector<256x64xf32>
    %50 = math.exp %49 : vector<256x64xf32>
    %cst_35 = arith.constant 1.000000e+00 : f32
    %51 = vector.broadcast %cst_35 : f32 to vector<256x64xf32>
    %52 = arith.addf %51, %50 : vector<256x64xf32>
    %53 = arith.divf %51, %52 : vector<256x64xf32>
    %c0_36 = arith.constant 0 : index
    %c0_37 = arith.constant 0 : index
    %54 = vector.load %arg14[%c0_36, %c0_37] : memref<128x6xbf16, #tpu.memory_space<vmem>>, vector<128x6xbf16>
    %55 = arith.truncf %41 : vector<256x128xf32> to vector<256x128xbf16>
    %cst_38 = arith.constant dense<0.000000e+00> : vector<256x6xf32>
    %56 = tpu.matmul %55, %54, %cst_38 {dimension_numbers = #tpu.dot_dimension_numbers<[1], [0], [0], [1], [0, 0, 1, 1], [], []>} : vector<256x128xbf16>, vector<128x6xbf16>, vector<256x6xf32> -> vector<256x6xf32>
    %c0_39 = arith.constant 0 : index
    %c0_40 = arith.constant 0 : index
    %57 = vector.load %arg15[%c0_39, %c0_40] : memref<1x6xf32, #tpu.memory_space<vmem>>, vector<1x6xf32>
    %58 = vector.broadcast %57 : vector<1x6xf32> to vector<256x6xf32>
    %59 = arith.addf %56, %58 : vector<256x6xf32>
    %cst_41 = arith.constant 0.000000e+00 : f32
    %60 = vector.broadcast %cst_41 : f32 to vector<256x6xf32>
    %61 = arith.maximumf %59, %60 : vector<256x6xf32>
    %c0_42 = arith.constant 0 : index
    %c0_43 = arith.constant 0 : index
    %62 = vector.load %arg16[%c0_42, %c0_43] : memref<6x9xbf16, #tpu.memory_space<vmem>>, vector<6x9xbf16>
    %63 = arith.truncf %61 : vector<256x6xf32> to vector<256x6xbf16>
    %cst_44 = arith.constant dense<0.000000e+00> : vector<256x9xf32>
    %64 = tpu.matmul %63, %62, %cst_44 {dimension_numbers = #tpu.dot_dimension_numbers<[1], [0], [0], [1], [0, 0, 1, 1], [], []>} : vector<256x6xbf16>, vector<6x9xbf16>, vector<256x9xf32> -> vector<256x9xf32>
    %c0_45 = arith.constant 0 : index
    %c0_46 = arith.constant 0 : index
    %65 = vector.load %arg17[%c0_45, %c0_46] : memref<1x9xf32, #tpu.memory_space<vmem>>, vector<1x9xf32>
    %66 = vector.broadcast %65 : vector<1x9xf32> to vector<256x9xf32>
    %67 = arith.addf %64, %66 : vector<256x9xf32>
    %cst_47 = arith.constant 0.000000e+00 : f32
    %68 = vector.broadcast %cst_47 : f32 to vector<256x9xf32>
    %69 = arith.maximumf %67, %68 : vector<256x9xf32>
    %c0_48 = arith.constant 0 : index
    %c0_49 = arith.constant 0 : index
    %70 = vector.load %arg18[%c0_48, %c0_49] : memref<9x3xbf16, #tpu.memory_space<vmem>>, vector<9x3xbf16>
    %71 = arith.truncf %69 : vector<256x9xf32> to vector<256x9xbf16>
    %cst_50 = arith.constant dense<0.000000e+00> : vector<256x3xf32>
    %72 = tpu.matmul %71, %70, %cst_50 {dimension_numbers = #tpu.dot_dimension_numbers<[1], [0], [0], [1], [0, 0, 1, 1], [], []>} : vector<256x9xbf16>, vector<9x3xbf16>, vector<256x3xf32> -> vector<256x3xf32>
    %c0_51 = arith.constant 0 : index
    %c0_52 = arith.constant 0 : index
    %73 = vector.load %arg19[%c0_51, %c0_52] : memref<1x3xf32, #tpu.memory_space<vmem>>, vector<1x3xf32>
    %74 = vector.broadcast %73 : vector<1x3xf32> to vector<256x3xf32>
    %75 = arith.addf %72, %74 : vector<256x3xf32>
    %76 = arith.negf %75 : vector<256x3xf32>
    %77 = math.exp %76 : vector<256x3xf32>
    %cst_53 = arith.constant 1.000000e+00 : f32
    %78 = vector.broadcast %cst_53 : f32 to vector<256x3xf32>
    %79 = arith.addf %78, %77 : vector<256x3xf32>
    %80 = arith.divf %78, %79 : vector<256x3xf32>
    %cst_54 = arith.constant 0.000000e+00 : f32
    %81 = vector.broadcast %cst_54 : f32 to vector<256x45xf32>
    %82 = tpu.concatenate %53, %80, %32, %81 in 1 : vector<256x64xf32>, vector<256x3xf32>, vector<256x16xf32>, vector<256x45xf32> -> vector<256x128xf32>
    %c0_55 = arith.constant 0 : index
    %c0_56 = arith.constant 0 : index
    %83 = vector.load %arg20[%c0_55, %c0_56] : memref<256x128xf32, #tpu.memory_space<vmem>>, vector<256x128xf32>
    tpu.vector_store %arg20[%c0_55, %c0_56], %82 {strides = array<i32>} : memref<256x128xf32, #tpu.memory_space<vmem>>, vector<256x128xf32>,
    return
  }
  func.func @transform_0(%arg0: i32) -> (i32, i32) {
    %c0_i32 = arith.constant 0 : i32
    %c0_i32_0 = arith.constant 0 : i32
    return %arg0, %c0_i32 : i32, i32
  }
  func.func @transform_1(%arg0: i32) -> (i32, i32) {
    %c0_i32 = arith.constant 0 : i32
    %c0_i32_0 = arith.constant 0 : i32
    %c0_i32_1 = arith.constant 0 : i32
    return %c0_i32, %c0_i32_0 : i32, i32
  }
  func.func @transform_2(%arg0: i32) -> (i32, i32) {
    %c0_i32 = arith.constant 0 : i32
    %c0_i32_0 = arith.constant 0 : i32
    %c0_i32_1 = arith.constant 0 : i32
    return %c0_i32, %c0_i32_0 : i32, i32
  }
  func.func @transform_3(%arg0: i32) -> (i32, i32) {
    %c0_i32 = arith.constant 0 : i32
    %c0_i32_0 = arith.constant 0 : i32
    %c0_i32_1 = arith.constant 0 : i32
    return %c0_i32, %c0_i32_0 : i32, i32
  }
  func.func @transform_4(%arg0: i32) -> (i32, i32) {
    %c0_i32 = arith.constant 0 : i32
    %c0_i32_0 = arith.constant 0 : i32
    %c0_i32_1 = arith.constant 0 : i32
    return %c0_i32, %c0_i32_0 : i32, i32
  }
  func.func @transform_5(%arg0: i32) -> (i32, i32) {
    %c0_i32 = arith.constant 0 : i32
    %c0_i32_0 = arith.constant 0 : i32
    %c0_i32_1 = arith.constant 0 : i32
    return %c0_i32, %c0_i32_0 : i32, i32
  }
  func.func @transform_6(%arg0: i32) -> (i32, i32) {
    %c0_i32 = arith.constant 0 : i32
    %c0_i32_0 = arith.constant 0 : i32
    %c0_i32_1 = arith.constant 0 : i32
    return %c0_i32, %c0_i32_0 : i32, i32
  }
  func.func @transform_7(%arg0: i32) -> (i32, i32) {
    %c0_i32 = arith.constant 0 : i32
    %c0_i32_0 = arith.constant 0 : i32
    %c0_i32_1 = arith.constant 0 : i32
    return %c0_i32, %c0_i32_0 : i32, i32
  }
  func.func @transform_8(%arg0: i32) -> (i32, i32) {
    %c0_i32 = arith.constant 0 : i32
    %c0_i32_0 = arith.constant 0 : i32
    %c0_i32_1 = arith.constant 0 : i32
    return %c0_i32, %c0_i32_0 : i32, i32
  }
  func.func @transform_9(%arg0: i32) -> (i32, i32) {
    %c0_i32 = arith.constant 0 : i32
    %c0_i32_0 = arith.constant 0 : i32
    %c0_i32_1 = arith.constant 0 : i32
    return %c0_i32, %c0_i32_0 : i32, i32
  }
  func.func @transform_10(%arg0: i32) -> (i32, i32) {
    %c0_i32 = arith.constant 0 : i32
    %c0_i32_0 = arith.constant 0 : i32
    %c0_i32_1 = arith.constant 0 : i32
    return %c0_i32, %c0_i32_0 : i32, i32
  }
  func.func @transform_11(%arg0: i32) -> (i32, i32) {
    %c0_i32 = arith.constant 0 : i32
    %c0_i32_0 = arith.constant 0 : i32
    %c0_i32_1 = arith.constant 0 : i32
    return %c0_i32, %c0_i32_0 : i32, i32
  }
  func.func @transform_12(%arg0: i32) -> (i32, i32) {
    %c0_i32 = arith.constant 0 : i32
    %c0_i32_0 = arith.constant 0 : i32
    %c0_i32_1 = arith.constant 0 : i32
    return %c0_i32, %c0_i32_0 : i32, i32
  }
  func.func @transform_13(%arg0: i32) -> (i32, i32) {
    %c0_i32 = arith.constant 0 : i32
    %c0_i32_0 = arith.constant 0 : i32
    %c0_i32_1 = arith.constant 0 : i32
    return %c0_i32, %c0_i32_0 : i32, i32
  }
  func.func @transform_14(%arg0: i32) -> (i32, i32) {
    %c0_i32 = arith.constant 0 : i32
    %c0_i32_0 = arith.constant 0 : i32
    %c0_i32_1 = arith.constant 0 : i32
    return %c0_i32, %c0_i32_0 : i32, i32
  }
  func.func @transform_15(%arg0: i32) -> (i32, i32) {
    %c0_i32 = arith.constant 0 : i32
    %c0_i32_0 = arith.constant 0 : i32
    %c0_i32_1 = arith.constant 0 : i32
    return %c0_i32, %c0_i32_0 : i32, i32
  }
  func.func @transform_16(%arg0: i32) -> (i32, i32) {
    %c0_i32 = arith.constant 0 : i32
    %c0_i32_0 = arith.constant 0 : i32
    %c0_i32_1 = arith.constant 0 : i32
    return %c0_i32, %c0_i32_0 : i32, i32
  }
  func.func @transform_17(%arg0: i32) -> (i32, i32) {
    %c0_i32 = arith.constant 0 : i32
    %c0_i32_0 = arith.constant 0 : i32
    %c0_i32_1 = arith.constant 0 : i32
    return %c0_i32, %c0_i32_0 : i32, i32
  }
  func.func @transform_18(%arg0: i32) -> (i32, i32) {
    %c0_i32 = arith.constant 0 : i32
    %c0_i32_0 = arith.constant 0 : i32
    %c0_i32_1 = arith.constant 0 : i32
    return %c0_i32, %c0_i32_0 : i32, i32
  }
  func.func @transform_19(%arg0: i32) -> (i32, i32) {
    %c0_i32 = arith.constant 0 : i32
    %c0_i32_0 = arith.constant 0 : i32
    return %arg0, %c0_i32 : i32, i32
  }
}

</mosaic_0001>

<llo_original>
// kernel: tpu_custom_call.1
$region0: #{tpu_custom_call.1}
  #allocation0 [shape = 'u32[]', space=smem, size = 0x4, offset = 0x4, fixed_abs, tag = 'smem constant byte address 0x4 - core index']
  #allocation1 [shape = 'u32[144,128]{1,0:T(1,128)}', space=vmem, size = 0x12000, scoped, tag = 'internal scratch']
  %s0 = inlined_call_operand.vmem [shape: f32[256,64], index: 0, kind: input, shape index: {}]
  %s1 = inlined_call_operand.vmem [shape: bf16[64,45], index: 1, kind: input, shape index: {}]
  %s2 = inlined_call_operand.vmem [shape: f32[1,45], index: 2, kind: input, shape index: {}]
  %s3 = inlined_call_operand.vmem [shape: bf16[45,32], index: 3, kind: input, shape index: {}]
  %s4 = inlined_call_operand.vmem [shape: f32[1,32], index: 4, kind: input, shape index: {}]
  %s5 = inlined_call_operand.vmem [shape: bf16[32,22], index: 5, kind: input, shape index: {}]
  %s6 = inlined_call_operand.vmem [shape: f32[1,22], index: 6, kind: input, shape index: {}]
  %s7 = inlined_call_operand.vmem [shape: bf16[22,16], index: 7, kind: input, shape index: {}]
  %s8 = inlined_call_operand.vmem [shape: f32[1,16], index: 8, kind: input, shape index: {}]
  %s9 = inlined_call_operand.vmem [shape: bf16[16,160], index: 9, kind: input, shape index: {}]
  %s10 = inlined_call_operand.vmem [shape: f32[1,160], index: 10, kind: input, shape index: {}]
  %s11 = inlined_call_operand.vmem [shape: bf16[32,64], index: 11, kind: input, shape index: {}]
  %s12 = inlined_call_operand.vmem [shape: f32[1,64], index: 12, kind: input, shape index: {}]
  %s13 = inlined_call_operand.vmem [shape: bf16[128,6], index: 13, kind: input, shape index: {}]
  %s14 = inlined_call_operand.vmem [shape: f32[1,6], index: 14, kind: input, shape index: {}]
  %s15 = inlined_call_operand.vmem [shape: bf16[6,9], index: 15, kind: input, shape index: {}]
  %s16 = inlined_call_operand.vmem [shape: f32[1,9], index: 16, kind: input, shape index: {}]
  %s17 = inlined_call_operand.vmem [shape: bf16[9,3], index: 17, kind: input, shape index: {}]
  %s18 = inlined_call_operand.vmem [shape: f32[1,3], index: 18, kind: input, shape index: {}]
  %s19 = inlined_call_operand.hbm [shape: f32[256,128], index: 19, kind: output, shape index: {}]
  %s20 = sld [smem:[#allocation0]]
  $region86: #{tpu_custom_call.1} parent=0
    _
  %s22 = ssub.s32 1, %s20
  %s23 = scalar_select 0, %s22, %s20
  $region1: #{tpu_custom_call.1} parent=0
    #allocation2 [shape = 'u8[131072]{0}', space=vmem, size = 0x20000, scoped, tag = 'output window, operand 0, single buffered']
    #allocation3 [shape = 's32[1]{0}', space=sflag, size = 0x4, scoped, tag = 'scoped memory for tpu_custom_call.1']
    %24 = vsyncpa [#allocation3], 0
    // Predicated region
    $region2: #{tpu_custom_call.1} parent=1 // pred_check
      _
    $region3: #{tpu_custom_call.1} parent=1 // pred_check_branch
      %26 = sbr.rel (0) target = $region5
    $region4: #{tpu_custom_call.1} parent=1 // pred_region
      _
    $region5: #{tpu_custom_call.1} parent=1 // pred_fallthru
      _
    // Predicated region
    $region6: #{tpu_custom_call.1} parent=1 // pred_check
      _
    $region7: #{tpu_custom_call.1} parent=1 // pred_check_branch
      %28 = sbr.rel (0) target = $region9
    $region8: #{tpu_custom_call.1} parent=1 // pred_region
      _
    $region9: #{tpu_custom_call.1} parent=1 // pred_fallthru
      _
    // Predicated region
    $region10: #{tpu_custom_call.1} parent=1 // pred_check
      _
    $region11: #{tpu_custom_call.1} parent=1 // pred_check_branch
      %30 = sbr.rel (0) target = $region13
    $region12: #{tpu_custom_call.1} parent=1 // pred_region
      _
    $region13: #{tpu_custom_call.1} parent=1 // pred_fallthru
      _
    // Predicated region
    $region14: #{tpu_custom_call.1} parent=1 // pred_check
      _
    $region15: #{tpu_custom_call.1} parent=1 // pred_check_branch
      %32 = sbr.rel (0) target = $region17
    $region16: #{tpu_custom_call.1} parent=1 // pred_region
      _
    $region17: #{tpu_custom_call.1} parent=1 // pred_fallthru
      _
    // Predicated region
    $region18: #{tpu_custom_call.1} parent=1 // pred_check
      _
    $region19: #{tpu_custom_call.1} parent=1 // pred_check_branch
      %34 = sbr.rel (0) target = $region21
    $region20: #{tpu_custom_call.1} parent=1 // pred_region
      _
    $region21: #{tpu_custom_call.1} parent=1 // pred_fallthru
      _
    // Predicated region
    $region22: #{tpu_custom_call.1} parent=1 // pred_check
      _
    $region23: #{tpu_custom_call.1} parent=1 // pred_check_branch
      %36 = sbr.rel (0) target = $region25
    $region24: #{tpu_custom_call.1} parent=1 // pred_region
      _
    $region25: #{tpu_custom_call.1} parent=1 // pred_fallthru
      _
    // Predicated region
    $region26: #{tpu_custom_call.1} parent=1 // pred_check
      _
    $region27: #{tpu_custom_call.1} parent=1 // pred_check_branch
      %38 = sbr.rel (0) target = $region29
    $region28: #{tpu_custom_call.1} parent=1 // pred_region
      _
    $region29: #{tpu_custom_call.1} parent=1 // pred_fallthru
      _
    // Predicated region
    $region30: #{tpu_custom_call.1} parent=1 // pred_check
      _
    $region31: #{tpu_custom_call.1} parent=1 // pred_check_branch
      %40 = sbr.rel (0) target = $region33
    $region32: #{tpu_custom_call.1} parent=1 // pred_region
      _
    $region33: #{tpu_custom_call.1} parent=1 // pred_fallthru
      _
    // Predicated region
    $region34: #{tpu_custom_call.1} parent=1 // pred_check
      _
    $region35: #{tpu_custom_call.1} parent=1 // pred_check_branch
      %42 = sbr.rel (0) target = $region37
    $region36: #{tpu_custom_call.1} parent=1 // pred_region
      _
    $region37: #{tpu_custom_call.1} parent=1 // pred_fallthru
      _
    // Predicated region
    $region38: #{tpu_custom_call.1} parent=1 // pred_check
      _
    $region39: #{tpu_custom_call.1} parent=1 // pred_check_branch
      %44 = sbr.rel (0) target = $region41
    $region40: #{tpu_custom_call.1} parent=1 // pred_region
      _
    $region41: #{tpu_custom_call.1} parent=1 // pred_fallthru
      _
    // Predicated region
    $region42: #{tpu_custom_call.1} parent=1 // pred_check
      _
    $region43: #{tpu_custom_call.1} parent=1 // pred_check_branch
      %46 = sbr.rel (0) target = $region45
    $region44: #{tpu_custom_call.1} parent=1 // pred_region
      _
    $region45: #{tpu_custom_call.1} parent=1 // pred_fallthru
      _
    // Predicated region
    $region46: #{tpu_custom_call.1} parent=1 // pred_check
      _
    $region47: #{tpu_custom_call.1} parent=1 // pred_check_branch
      %48 = sbr.rel (0) target = $region49
    $region48: #{tpu_custom_call.1} parent=1 // pred_region
      _
    $region49: #{tpu_custom_call.1} parent=1 // pred_fallthru
      _
    // Predicated region
    $region50: #{tpu_custom_call.1} parent=1 // pred_check
      _
    $region51: #{tpu_custom_call.1} parent=1 // pred_check_branch
      %50 = sbr.rel (0) target = $region53
    $region52: #{tpu_custom_call.1} parent=1 // pred_region
      _
    $region53: #{tpu_custom_call.1} parent=1 // pred_fallthru
      _
    // Predicated region
    $region54: #{tpu_custom_call.1} parent=1 // pred_check
      _
    $region55: #{tpu_custom_call.1} parent=1 // pred_check_branch
      %52 = sbr.rel (0) target = $region57
    $region56: #{tpu_custom_call.1} parent=1 // pred_region
      _
    $region57: #{tpu_custom_call.1} parent=1 // pred_fallthru
      _
    // Predicated region
    $region58: #{tpu_custom_call.1} parent=1 // pred_check
      _
    $region59: #{tpu_custom_call.1} parent=1 // pred_check_branch
      %54 = sbr.rel (0) target = $region61
    $region60: #{tpu_custom_call.1} parent=1 // pred_region
      _
    $region61: #{tpu_custom_call.1} parent=1 // pred_fallthru
      _
    // Predicated region
    $region62: #{tpu_custom_call.1} parent=1 // pred_check
      _
    $region63: #{tpu_custom_call.1} parent=1 // pred_check_branch
      %56 = sbr.rel (0) target = $region65
    $region64: #{tpu_custom_call.1} parent=1 // pred_region
      _
    $region65: #{tpu_custom_call.1} parent=1 // pred_fallthru
      _
    // Predicated region
    $region66: #{tpu_custom_call.1} parent=1 // pred_check
      _
    $region67: #{tpu_custom_call.1} parent=1 // pred_check_branch
      %58 = sbr.rel (0) target = $region69
    $region68: #{tpu_custom_call.1} parent=1 // pred_region
      _
    $region69: #{tpu_custom_call.1} parent=1 // pred_fallthru
      _
    // Predicated region
    $region70: #{tpu_custom_call.1} parent=1 // pred_check
      _
    $region71: #{tpu_custom_call.1} parent=1 // pred_check_branch
      %60 = sbr.rel (0) target = $region73
    $region72: #{tpu_custom_call.1} parent=1 // pred_region
      _
    $region73: #{tpu_custom_call.1} parent=1 // pred_fallthru
      _
    // Predicated region
    $region74: #{tpu_custom_call.1} parent=1 // pred_check
      _
    $region75: #{tpu_custom_call.1} parent=1 // pred_check_branch
      %62 = sbr.rel (0) target = $region77
    $region76: #{tpu_custom_call.1} parent=1 // pred_region
      _
    $region77: #{tpu_custom_call.1} parent=1 // pred_fallthru
      _
    %v64 = vld [vmem:[%s0] sm:$0xff]
    %v65 = vld [vmem:[%s0 + $0x8] sm:$0xff]
    %v66 = vld [vmem:[%s0 + $0x10] sm:$0xff]
    %v67 = vld [vmem:[%s0 + $0x18] sm:$0xff]
    %v68 = vld [vmem:[%s0 + $0x20] sm:$0xff]
    %v69 = vld [vmem:[%s0 + $0x28] sm:$0xff]
    %v70 = vld [vmem:[%s0 + $0x30] sm:$0xff]
    %v71 = vld [vmem:[%s0 + $0x38] sm:$0xff]
    %v72 = vld [vmem:[%s0 + $0x40] sm:$0xff]
    %v73 = vld [vmem:[%s0 + $0x48] sm:$0xff]
    %v74 = vld [vmem:[%s0 + $0x50] sm:$0xff]
    %v75 = vld [vmem:[%s0 + $0x58] sm:$0xff]
    %v76 = vld [vmem:[%s0 + $0x60] sm:$0xff]
    %v77 = vld [vmem:[%s0 + $0x68] sm:$0xff]
    %v78 = vld [vmem:[%s0 + $0x70] sm:$0xff]
    %v79 = vld [vmem:[%s0 + $0x78] sm:$0xff]
    %v80 = vld [vmem:[%s0 + $0x80] sm:$0xff]
    %v81 = vld [vmem:[%s0 + $0x88] sm:$0xff]
    %v82 = vld [vmem:[%s0 + $0x90] sm:$0xff]
    %v83 = vld [vmem:[%s0 + $0x98] sm:$0xff]
    %v84 = vld [vmem:[%s0 + $0xa0] sm:$0xff]
    %v85 = vld [vmem:[%s0 + $0xa8] sm:$0xff]
    %v86 = vld [vmem:[%s0 + $0xb0] sm:$0xff]
    %v87 = vld [vmem:[%s0 + $0xb8] sm:$0xff]
    %v88 = vld [vmem:[%s0 + $0xc0] sm:$0xff]
    %v89 = vld [vmem:[%s0 + $0xc8] sm:$0xff]
    %v90 = vld [vmem:[%s0 + $0xd0] sm:$0xff]
    %v91 = vld [vmem:[%s0 + $0xd8] sm:$0xff]
    %v92 = vld [vmem:[%s0 + $0xe0] sm:$0xff]
    %v93 = vld [vmem:[%s0 + $0xe8] sm:$0xff]
    %v94 = vld [vmem:[%s0 + $0xf0] sm:$0xff]
    %v95 = vld [vmem:[%s0 + $0xf8] sm:$0xff]
    %v96 = vld [vmem:[%s1] sm:$0xf]
    %v97 = vld [vmem:[%s1 + $0x4] sm:$0xf]
    %v98 = vld [vmem:[%s1 + $0x8] sm:$0xf]
    %v99 = vld [vmem:[%s1 + $0xc] sm:$0xf]
    %v100 = vld [vmem:[%s1 + $0x10] sm:$0xf]
    %v101 = vld [vmem:[%s1 + $0x14] sm:$0xf]
    %v102 = vld [vmem:[%s1 + $0x18] sm:$0xf]
    %v103 = vld [vmem:[%s1 + $0x1c] sm:$0xf]
    %v104 = vpack.c.bf16 %v65, %v64
    %v105 = vpack.c.bf16 %v67, %v66
    %v106 = vpack.c.bf16 %v69, %v68
    %v107 = vpack.c.bf16 %v71, %v70
    %v108 = vpack.c.bf16 %v73, %v72
    %v109 = vpack.c.bf16 %v75, %v74
    %v110 = vpack.c.bf16 %v77, %v76
    %v111 = vpack.c.bf16 %v79, %v78
    %v112 = vpack.c.bf16 %v81, %v80
    %v113 = vpack.c.bf16 %v83, %v82
    %v114 = vpack.c.bf16 %v85, %v84
    %v115 = vpack.c.bf16 %v87, %v86
    %v116 = vpack.c.bf16 %v89, %v88
    %v117 = vpack.c.bf16 %v91, %v90
    %v118 = vpack.c.bf16 %v93, %v92
    %v119 = vpack.c.bf16 %v95, %v94
    %v120 = vld [vmem:[%s2] sm:$0x1]
    %v122 = vlaneseq
    %v123 = vshrl.u32 %v122, 7
    %v124 = vsub.s32 0, %v123
    %v125 = vrot.slane %v120, %v124
    %v135 = vunpack.c.l.b16 %v96
    %v136 = vunpack.c.l.b16 %v97
    %v137 = vunpack.c.l.b16 %v98
    %v138 = vunpack.c.l.b16 %v99
    %v139 = vunpack.c.l.b16 %v100
    %v140 = vunpack.c.l.b16 %v101
    %v141 = vunpack.c.l.b16 %v102
    %v142 = vunpack.c.l.b16 %v103
    %v143 = vpack.c.b16 %v136, %v135
    %v144 = vpack.c.b16 %v138, %v137
    %v145 = vpack.c.b16 %v140, %v139
    %v146 = vpack.c.b16 %v142, %v141
    %vm151 = vcmask 523264
    %v153 = vsel %vm151, %v104, 0
    %v156 = vsel %vm151, %v105, 0
    %v159 = vsel %vm151, %v106, 0
    %v162 = vsel %vm151, %v107, 0
    %v165 = vsel %vm151, %v108, 0
    %v168 = vsel %vm151, %v109, 0
    %v171 = vsel %vm151, %v110, 0
    %v174 = vsel %vm151, %v111, 0
    %v177 = vsel %vm151, %v112, 0
    %v180 = vsel %vm151, %v113, 0
    %v183 = vsel %vm151, %v114, 0
    %v186 = vsel %vm151, %v115, 0
    %v189 = vsel %vm151, %v116, 0
    %v192 = vsel %vm151, %v117, 0
    %v195 = vsel %vm151, %v118, 0
    %v198 = vsel %vm151, %v119, 0
    %200 = vmatprep.subr.bf16.mxu0 0
    %201 = vmatpush1.bf16.msra.mxu0 %v143
    %202 = vmatprep.subr.bf16.mxu0 0
    %203 = vmatpush1.bf16.msra.mxu0 %v144
    %204 = vmatprep.subr.bf16.mxu0 0
    %205 = vmatpush1.bf16.msra.mxu0 %v145
    %206 = vmatprep.subr.bf16.mxu0 0
    %207 = vmatpush1.bf16.msra.mxu0 %v146
    %208 = vmatprep.subr.bf16.mxu0 0
    %209 = vmatpush1.bf16.msra.mxu0 0
    %210 = vmatprep.subr.bf16.mxu0 0
    %211 = vmatpush1.bf16.msra.mxu0 0
    %212 = vmatprep.subr.bf16.mxu0 0
    %213 = vmatpush1.bf16.msra.mxu0 0
    %214 = vmatprep.subr.bf16.mxu0 0
    %215 = vmatpush1.bf16.msra.mxu0 0
    %216 = vmatprep.subr.bf16.mxu0 0
    %217 = vmatpush1.bf16.msra.mxu0 0
    %218 = vmatprep.subr.bf16.mxu0 0
    %219 = vmatpush1.bf16.msra.mxu0 0
    %220 = vmatprep.subr.bf16.mxu0 0
    %221 = vmatpush1.bf16.msra.mxu0 0
    %222 = vmatprep.subr.bf16.mxu0 0
    %223 = vmatpush1.bf16.msra.mxu0 0
    %224 = vmatprep.subr.bf16.mxu0 0
    %225 = vmatpush1.bf16.msra.mxu0 0
    %226 = vmatprep.subr.bf16.mxu0 0
    %227 = vmatpush1.bf16.msra.mxu0 0
    %228 = vmatprep.subr.bf16.mxu0 0
    %229 = vmatpush1.bf16.msra.mxu0 0
    %230 = vmatprep.subr.bf16.mxu0 0
    %231 = vmatpush1.bf16.msra.mxu0 0
    %232 = vmatprep.mubr.bf16.mxu0 0
    %233 = vmatmul.mubr.bf16.gmra.mrb[0].mxu0 %v153
    %v234 = vpop.f32.mrb[0].mxu0
    %v235 = vadd.f32 %v125, %v234
    %v236 = vpop.f32.mrb[0].mxu0
    %v237 = vpop.f32.mrb[0].mxu0
    %v238 = vadd.f32 %v125, %v237
    %v239 = vpop.f32.mrb[0].mxu0
    %240 = vmatprep.mubr.bf16.mxu0 0
    %241 = vmatmul.mubr.bf16.gmra.mrb[0].mxu0 %v156
    %v242 = vpop.f32.mrb[0].mxu0
    %v243 = vadd.f32 %v125, %v242
    %v244 = vpop.f32.mrb[0].mxu0
    %v245 = vpop.f32.mrb[0].mxu0
    %v246 = vadd.f32 %v125, %v245
    %v247 = vpop.f32.mrb[0].mxu0
    %248 = vmatprep.mubr.bf16.mxu0 0
    %249 = vmatmul.mubr.bf16.gmra.mrb[0].mxu0 %v159
    %v250 = vpop.f32.mrb[0].mxu0
    %v251 = vadd.f32 %v125, %v250
    %v252 = vpop.f32.mrb[0].mxu0
    %v253 = vpop.f32.mrb[0].mxu0
    %v254 = vadd.f32 %v125, %v253
    %v255 = vpop.f32.mrb[0].mxu0
    %256 = vmatprep.mubr.bf16.mxu0 0
    %257 = vmatmul.mubr.bf16.gmra.mrb[0].mxu0 %v162
    %v258 = vpop.f32.mrb[0].mxu0
    %v259 = vadd.f32 %v125, %v258
    %v260 = vpop.f32.mrb[0].mxu0
    %v261 = vpop.f32.mrb[0].mxu0
    %v262 = vadd.f32 %v125, %v261
    %v263 = vpop.f32.mrb[0].mxu0
    %264 = vmatprep.mubr.bf16.mxu0 0
    %265 = vmatmul.mubr.bf16.gmra.mrb[0].mxu0 %v165
    %v266 = vpop.f32.mrb[0].mxu0
    %v267 = vadd.f32 %v125, %v266
    %v268 = vpop.f32.mrb[0].mxu0
    %v269 = vpop.f32.mrb[0].mxu0
    %v270 = vadd.f32 %v125, %v269
    %v271 = vpop.f32.mrb[0].mxu0
    %272 = vmatprep.mubr.bf16.mxu0 0
    %273 = vmatmul.mubr.bf16.gmra.mrb[0].mxu0 %v168
    %v274 = vpop.f32.mrb[0].mxu0
    %v275 = vadd.f32 %v125, %v274
    %v276 = vpop.f32.mrb[0].mxu0
    %v277 = vpop.f32.mrb[0].mxu0
    %v278 = vadd.f32 %v125, %v277
    %v279 = vpop.f32.mrb[0].mxu0
    %280 = vmatprep.mubr.bf16.mxu0 0
    %281 = vmatmul.mubr.bf16.gmra.mrb[0].mxu0 %v171
    %v282 = vpop.f32.mrb[0].mxu0
    %v283 = vadd.f32 %v125, %v282
    %v284 = vpop.f32.mrb[0].mxu0
    %v285 = vpop.f32.mrb[0].mxu0
    %v286 = vadd.f32 %v125, %v285
    %v287 = vpop.f32.mrb[0].mxu0
    %288 = vmatprep.mubr.bf16.mxu0 0
    %289 = vmatmul.mubr.bf16.gmra.mrb[0].mxu0 %v174
    %v290 = vpop.f32.mrb[0].mxu0
    %v291 = vadd.f32 %v125, %v290
    %v292 = vpop.f32.mrb[0].mxu0
    %v293 = vpop.f32.mrb[0].mxu0
    %v294 = vadd.f32 %v125, %v293
    %v295 = vpop.f32.mrb[0].mxu0
    %296 = vmatprep.mubr.bf16.mxu0 0
    %297 = vmatmul.mubr.bf16.gmra.mrb[0].mxu0 %v177
    %v298 = vpop.f32.mrb[0].mxu0
    %v299 = vadd.f32 %v125, %v298
    %v300 = vpop.f32.mrb[0].mxu0
    %v301 = vpop.f32.mrb[0].mxu0
    %v302 = vadd.f32 %v125, %v301
    %v303 = vpop.f32.mrb[0].mxu0
    %304 = vmatprep.mubr.bf16.mxu0 0
    %305 = vmatmul.mubr.bf16.gmra.mrb[0].mxu0 %v180
    %v306 = vpop.f32.mrb[0].mxu0
    %v307 = vadd.f32 %v125, %v306
    %v308 = vpop.f32.mrb[0].mxu0
    %v309 = vpop.f32.mrb[0].mxu0
    %v310 = vadd.f32 %v125, %v309
    %v311 = vpop.f32.mrb[0].mxu0
    %312 = vmatprep.mubr.bf16.mxu0 0
    %313 = vmatmul.mubr.bf16.gmra.mrb[0].mxu0 %v183
    %v314 = vpop.f32.mrb[0].mxu0
    %v315 = vadd.f32 %v125, %v314
    %v316 = vpop.f32.mrb[0].mxu0
    %v317 = vpop.f32.mrb[0].mxu0
    %v318 = vadd.f32 %v125, %v317
    %v319 = vpop.f32.mrb[0].mxu0
    %320 = vmatprep.mubr.bf16.mxu0 0
    %321 = vmatmul.mubr.bf16.gmra.mrb[0].mxu0 %v186
    %v322 = vpop.f32.mrb[0].mxu0
    %v323 = vadd.f32 %v125, %v322
    %v324 = vpop.f32.mrb[0].mxu0
    %v325 = vpop.f32.mrb[0].mxu0
    %v326 = vadd.f32 %v125, %v325
    %v327 = vpop.f32.mrb[0].mxu0
    %328 = vmatprep.mubr.bf16.mxu0 0
    %329 = vmatmul.mubr.bf16.gmra.mrb[0].mxu0 %v189
    %v330 = vpop.f32.mrb[0].mxu0
    %v331 = vadd.f32 %v125, %v330
    %v332 = vpop.f32.mrb[0].mxu0
    %v333 = vpop.f32.mrb[0].mxu0
    %v334 = vadd.f32 %v125, %v333
    %v335 = vpop.f32.mrb[0].mxu0
    %336 = vmatprep.mubr.bf16.mxu0 0
    %337 = vmatmul.mubr.bf16.gmra.mrb[0].mxu0 %v192
    %v338 = vpop.f32.mrb[0].mxu0
    %v339 = vadd.f32 %v125, %v338
    %v340 = vpop.f32.mrb[0].mxu0
    %v341 = vpop.f32.mrb[0].mxu0
    %v342 = vadd.f32 %v125, %v341
    %v343 = vpop.f32.mrb[0].mxu0
    %344 = vmatprep.mubr.bf16.mxu0 0
    %345 = vmatmul.mubr.bf16.gmra.mrb[0].mxu0 %v195
    %v346 = vpop.f32.mrb[0].mxu0
    %v347 = vadd.f32 %v125, %v346
    %v348 = vpop.f32.mrb[0].mxu0
    %v349 = vpop.f32.mrb[0].mxu0
    %v350 = vadd.f32 %v125, %v349
    %v351 = vpop.f32.mrb[0].mxu0
    %352 = vmatprep.mubr.bf16.mxu0 0
    %353 = vmatmul.mubr.bf16.gmra.mrb[0].mxu0 %v198
    %v354 = vpop.f32.mrb[0].mxu0
    %v355 = vadd.f32 %v125, %v354
    %v356 = vpop.f32.mrb[0].mxu0
    %v357 = vpop.f32.mrb[0].mxu0
    %v358 = vadd.f32 %v125, %v357
    %v359 = vpop.f32.mrb[0].mxu0
    %360 = vdwg.mxu0
    %v361 = vmax.f32 %v235, 0.0
    %v362 = vmax.f32 %v238, 0.0
    %v363 = vmax.f32 %v243, 0.0
    %v364 = vmax.f32 %v246, 0.0
    %v365 = vmax.f32 %v251, 0.0
    %v366 = vmax.f32 %v254, 0.0
    %v367 = vmax.f32 %v259, 0.0
    %v368 = vmax.f32 %v262, 0.0
    %v369 = vmax.f32 %v267, 0.0
    %v370 = vmax.f32 %v270, 0.0
    %v371 = vmax.f32 %v275, 0.0
    %v372 = vmax.f32 %v278, 0.0
    %v373 = vmax.f32 %v283, 0.0
    %v374 = vmax.f32 %v286, 0.0
    %v375 = vmax.f32 %v291, 0.0
    %v376 = vmax.f32 %v294, 0.0
    %v377 = vmax.f32 %v299, 0.0
    %v378 = vmax.f32 %v302, 0.0
    %v379 = vmax.f32 %v307, 0.0
    %v380 = vmax.f32 %v310, 0.0
    %v381 = vmax.f32 %v315, 0.0
    %v382 = vmax.f32 %v318, 0.0
    %v383 = vmax.f32 %v323, 0.0
    %v384 = vmax.f32 %v326, 0.0
    %v385 = vmax.f32 %v331, 0.0
    %v386 = vmax.f32 %v334, 0.0
    %v387 = vmax.f32 %v339, 0.0
    %v388 = vmax.f32 %v342, 0.0
    %v389 = vmax.f32 %v347, 0.0
    %v390 = vmax.f32 %v350, 0.0
    %v391 = vmax.f32 %v355, 0.0
    %v392 = vmax.f32 %v358, 0.0
    %v393 = vld [vmem:[%s3] sm:$0xf]
    %v394 = vld [vmem:[%s3 + $0x4] sm:$0xf]
    %v395 = vld [vmem:[%s3 + $0x8] sm:$0xf]
    %v396 = vld [vmem:[%s3 + $0xc] sm:$0xf]
    %v397 = vld [vmem:[%s3 + $0x10] sm:$0xf]
    %v398 = vld [vmem:[%s3 + $0x14] sm:$0x7]
    %v399 = vpack.c.bf16 %v362, %v361
    %v400 = vpack.c.bf16 %v364, %v363
    %v401 = vpack.c.bf16 %v366, %v365
    %v402 = vpack.c.bf16 %v368, %v367
    %v403 = vpack.c.bf16 %v370, %v369
    %v404 = vpack.c.bf16 %v372, %v371
    %v405 = vpack.c.bf16 %v374, %v373
    %v406 = vpack.c.bf16 %v376, %v375
    %v407 = vpack.c.bf16 %v378, %v377
    %v408 = vpack.c.bf16 %v380, %v379
    %v409 = vpack.c.bf16 %v382, %v381
    %v410 = vpack.c.bf16 %v384, %v383
    %v411 = vpack.c.bf16 %v386, %v385
    %v412 = vpack.c.bf16 %v388, %v387
    %v413 = vpack.c.bf16 %v390, %v389
    %v414 = vpack.c.bf16 %v392, %v391
    %v415 = vld [vmem:[%s4] sm:$0x1]
    %v417 = vlaneseq
    %v418 = vshrl.u32 %v417, 7
    %v419 = vsub.s32 0, %v418
    %v420 = vrot.slane %v415, %v419
    %v428 = vunpack.c.l.b16 %v393
    %v429 = vunpack.c.l.b16 %v394
    %v430 = vunpack.c.l.b16 %v395
    %v431 = vunpack.c.l.b16 %v396
    %v432 = vunpack.c.l.b16 %v397
    %v433 = vunpack.c.l.b16 %v398
    %v434 = vpack.c.b16 %v429, %v428
    %v435 = vpack.c.b16 %v431, %v430
    %v436 = vpack.c.b16 %v433, %v432
    %vm439 = vcmask 367616
    %v441 = vsel %vm439, %v399, 0
    %v444 = vsel %vm439, %v400, 0
    %v447 = vsel %vm439, %v401, 0
    %v450 = vsel %vm439, %v402, 0
    %v453 = vsel %vm439, %v403, 0
    %v456 = vsel %vm439, %v404, 0
    %v459 = vsel %vm439, %v405, 0
    %v462 = vsel %vm439, %v406, 0
    %v465 = vsel %vm439, %v407, 0
    %v468 = vsel %vm439, %v408, 0
    %v471 = vsel %vm439, %v409, 0
    %v474 = vsel %vm439, %v410, 0
    %v477 = vsel %vm439, %v411, 0
    %v480 = vsel %vm439, %v412, 0
    %v483 = vsel %vm439, %v413, 0
    %v486 = vsel %vm439, %v414, 0
    %vm488 = vcmask 1045504
    %vm489 = vcmask 1046528
    %v490 = vsel %vm488, 4294967295, 65535
    %v491 = vsel %vm489, %v490, 0
    %v493 = vand.u32 %v436, %v491
    %495 = vmatprep.subr.bf16.mxu0 0
    %496 = vmatpush1.bf16.msra.mxu0 %v434
    %497 = vmatprep.subr.bf16.mxu0 0
    %498 = vmatpush1.bf16.msra.mxu0 %v435
    %499 = vmatprep.subr.bf16.mxu0 0
    %500 = vmatpush1.bf16.msra.mxu0 %v493
    %501 = vmatprep.subr.bf16.mxu0 0
    %502 = vmatpush1.bf16.msra.mxu0 0
    %503 = vmatprep.subr.bf16.mxu0 0
    %504 = vmatpush1.bf16.msra.mxu0 0
    %505 = vmatprep.subr.bf16.mxu0 0
    %506 = vmatpush1.bf16.msra.mxu0 0
    %507 = vmatprep.subr.bf16.mxu0 0
    %508 = vmatpush1.bf16.msra.mxu0 0
    %509 = vmatprep.subr.bf16.mxu0 0
    %510 = vmatpush1.bf16.msra.mxu0 0
    %511 = vmatprep.subr.bf16.mxu0 0
    %512 = vmatpush1.bf16.msra.mxu0 0
    %513 = vmatprep.subr.bf16.mxu0 0
    %514 = vmatpush1.bf16.msra.mxu0 0
    %515 = vmatprep.subr.bf16.mxu0 0
    %516 = vmatpush1.bf16.msra.mxu0 0
    %517 = vmatprep.subr.bf16.mxu0 0
    %518 = vmatpush1.bf16.msra.mxu0 0
    %519 = vmatprep.subr.bf16.mxu0 0
    %520 = vmatpush1.bf16.msra.mxu0 0
    %521 = vmatprep.subr.bf16.mxu0 0
    %522 = vmatpush1.bf16.msra.mxu0 0
    %523 = vmatprep.subr.bf16.mxu0 0
    %524 = vmatpush1.bf16.msra.mxu0 0
    %525 = vmatprep.subr.bf16.mxu0 0
    %526 = vmatpush1.bf16.msra.mxu0 0
    %527 = vmatprep.mubr.bf16.mxu0 0
    %528 = vmatmul.mubr.bf16.gmra.mrb[0].mxu0 %v441
    %v529 = vpop.f32.mrb[0].mxu0
    %v530 = vadd.f32 %v420, %v529
    %v531 = vpop.f32.mrb[0].mxu0
    %v532 = vpop.f32.mrb[0].mxu0
    %v533 = vadd.f32 %v420, %v532
    %v534 = vpop.f32.mrb[0].mxu0
    %535 = vmatprep.mubr.bf16.mxu0 0
    %536 = vmatmul.mubr.bf16.gmra.mrb[0].mxu0 %v444
    %v537 = vpop.f32.mrb[0].mxu0
    %v538 = vadd.f32 %v420, %v537
    %v539 = vpop.f32.mrb[0].mxu0
    %v540 = vpop.f32.mrb[0].mxu0
    %v541 = vadd.f32 %v420, %v540
    %v542 = vpop.f32.mrb[0].mxu0
    %543 = vmatprep.mubr.bf16.mxu0 0
    %544 = vmatmul.mubr.bf16.gmra.mrb[0].mxu0 %v447
    %v545 = vpop.f32.mrb[0].mxu0
    %v546 = vadd.f32 %v420, %v545
    %v547 = vpop.f32.mrb[0].mxu0
    %v548 = vpop.f32.mrb[0].mxu0
    %v549 = vadd.f32 %v420, %v548
    %v550 = vpop.f32.mrb[0].mxu0
    %551 = vmatprep.mubr.bf16.mxu0 0
    %552 = vmatmul.mubr.bf16.gmra.mrb[0].mxu0 %v450
    %v553 = vpop.f32.mrb[0].mxu0
    %v554 = vadd.f32 %v420, %v553
    %v555 = vpop.f32.mrb[0].mxu0
    %v556 = vpop.f32.mrb[0].mxu0
    %v557 = vadd.f32 %v420, %v556
    %v558 = vpop.f32.mrb[0].mxu0
    %559 = vmatprep.mubr.bf16.mxu0 0
    %560 = vmatmul.mubr.bf16.gmra.mrb[0].mxu0 %v453
    %v561 = vpop.f32.mrb[0].mxu0
    %v562 = vadd.f32 %v420, %v561
    %v563 = vpop.f32.mrb[0].mxu0
    %v564 = vpop.f32.mrb[0].mxu0
    %v565 = vadd.f32 %v420, %v564
    %v566 = vpop.f32.mrb[0].mxu0
    %567 = vmatprep.mubr.bf16.mxu0 0
    %568 = vmatmul.mubr.bf16.gmra.mrb[0].mxu0 %v456
    %v569 = vpop.f32.mrb[0].mxu0
    %v570 = vadd.f32 %v420, %v569
    %v571 = vpop.f32.mrb[0].mxu0
    %v572 = vpop.f32.mrb[0].mxu0
    %v573 = vadd.f32 %v420, %v572
    %v574 = vpop.f32.mrb[0].mxu0
    %575 = vmatprep.mubr.bf16.mxu0 0
    %576 = vmatmul.mubr.bf16.gmra.mrb[0].mxu0 %v459
    %v577 = vpop.f32.mrb[0].mxu0
    %v578 = vadd.f32 %v420, %v577
    %v579 = vpop.f32.mrb[0].mxu0
    %v580 = vpop.f32.mrb[0].mxu0
    %v581 = vadd.f32 %v420, %v580
    %v582 = vpop.f32.mrb[0].mxu0
    %583 = vmatprep.mubr.bf16.mxu0 0
    %584 = vmatmul.mubr.bf16.gmra.mrb[0].mxu0 %v462
    %v585 = vpop.f32.mrb[0].mxu0
    %v586 = vadd.f32 %v420, %v585
    %v587 = vpop.f32.mrb[0].mxu0
    %v588 = vpop.f32.mrb[0].mxu0
    %v589 = vadd.f32 %v420, %v588
    %v590 = vpop.f32.mrb[0].mxu0
    %591 = vmatprep.mubr.bf16.mxu0 0
    %592 = vmatmul.mubr.bf16.gmra.mrb[0].mxu0 %v465
    %v593 = vpop.f32.mrb[0].mxu0
    %v594 = vadd.f32 %v420, %v593
    %v595 = vpop.f32.mrb[0].mxu0
    %v596 = vpop.f32.mrb[0].mxu0
    %v597 = vadd.f32 %v420, %v596
    %v598 = vpop.f32.mrb[0].mxu0
    %599 = vmatprep.mubr.bf16.mxu0 0
    %600 = vmatmul.mubr.bf16.gmra.mrb[0].mxu0 %v468
    %v601 = vpop.f32.mrb[0].mxu0
    %v602 = vadd.f32 %v420, %v601
    %v603 = vpop.f32.mrb[0].mxu0
    %v604 = vpop.f32.mrb[0].mxu0
    %v605 = vadd.f32 %v420, %v604
    %v606 = vpop.f32.mrb[0].mxu0
    %607 = vmatprep.mubr.bf16.mxu0 0
    %608 = vmatmul.mubr.bf16.gmra.mrb[0].mxu0 %v471
    %v609 = vpop.f32.mrb[0].mxu0
    %v610 = vadd.f32 %v420, %v609
    %v611 = vpop.f32.mrb[0].mxu0
    %v612 = vpop.f32.mrb[0].mxu0
    %v613 = vadd.f32 %v420, %v612
    %v614 = vpop.f32.mrb[0].mxu0
    %615 = vmatprep.mubr.bf16.mxu0 0
    %616 = vmatmul.mubr.bf16.gmra.mrb[0].mxu0 %v474
    %v617 = vpop.f32.mrb[0].mxu0
    %v618 = vadd.f32 %v420, %v617
    %v619 = vpop.f32.mrb[0].mxu0
    %v620 = vpop.f32.mrb[0].mxu0
    %v621 = vadd.f32 %v420, %v620
    %v622 = vpop.f32.mrb[0].mxu0
    %623 = vmatprep.mubr.bf16.mxu0 0
    %624 = vmatmul.mubr.bf16.gmra.mrb[0].mxu0 %v477
    %v625 = vpop.f32.mrb[0].mxu0
    %v626 = vadd.f32 %v420, %v625
    %v627 = vpop.f32.mrb[0].mxu0
    %v628 = vpop.f32.mrb[0].mxu0
    %v629 = vadd.f32 %v420, %v628
    %v630 = vpop.f32.mrb[0].mxu0
    %631 = vmatprep.mubr.bf16.mxu0 0
    %632 = vmatmul.mubr.bf16.gmra.mrb[0].mxu0 %v480
    %v633 = vpop.f32.mrb[0].mxu0
    %v634 = vadd.f32 %v420, %v633
    %v635 = vpop.f32.mrb[0].mxu0
    %v636 = vpop.f32.mrb[0].mxu0
    %v637 = vadd.f32 %v420, %v636
    %v638 = vpop.f32.mrb[0].mxu0
    %639 = vmatprep.mubr.bf16.mxu0 0
    %640 = vmatmul.mubr.bf16.gmra.mrb[0].mxu0 %v483
    %v641 = vpop.f32.mrb[0].mxu0
    %v642 = vadd.f32 %v420, %v641
    %v643 = vpop.f32.mrb[0].mxu0
    %v644 = vpop.f32.mrb[0].mxu0
    %v645 = vadd.f32 %v420, %v644
    %v646 = vpop.f32.mrb[0].mxu0
    %647 = vmatprep.mubr.bf16.mxu0 0
    %648 = vmatmul.mubr.bf16.gmra.mrb[0].mxu0 %v486
    %v649 = vpop.f32.mrb[0].mxu0
    %v650 = vadd.f32 %v420, %v649
    %v651 = vpop.f32.mrb[0].mxu0
    %v652 = vpop.f32.mrb[0].mxu0
    %v653 = vadd.f32 %v420, %v652
    %v654 = vpop.f32.mrb[0].mxu0
    %655 = vdwg.mxu0
    %v656 = vmax.f32 %v530, 0.0
    %v657 = vmax.f32 %v533, 0.0
    %v658 = vmax.f32 %v538, 0.0
    %v659 = vmax.f32 %v541, 0.0
    %v660 = vmax.f32 %v546, 0.0
    %v661 = vmax.f32 %v549, 0.0
    %v662 = vmax.f32 %v554, 0.0
    %v663 = vmax.f32 %v557, 0.0
    %v664 = vmax.f32 %v562, 0.0
    %v665 = vmax.f32 %v565, 0.0
    %v666 = vmax.f32 %v570, 0.0
    %v667 = vmax.f32 %v573, 0.0
    %v668 = vmax.f32 %v578, 0.0
    %v669 = vmax.f32 %v581, 0.0
    %v670 = vmax.f32 %v586, 0.0
    %v671 = vmax.f32 %v589, 0.0
    %v672 = vmax.f32 %v594, 0.0
    %v673 = vmax.f32 %v597, 0.0
    %v674 = vmax.f32 %v602, 0.0
    %v675 = vmax.f32 %v605, 0.0
    %v676 = vmax.f32 %v610, 0.0
    %v677 = vmax.f32 %v613, 0.0
    %v678 = vmax.f32 %v618, 0.0
    %v679 = vmax.f32 %v621, 0.0
    %v680 = vmax.f32 %v626, 0.0
    %v681 = vmax.f32 %v629, 0.0
    %v682 = vmax.f32 %v634, 0.0
    %v683 = vmax.f32 %v637, 0.0
    %v684 = vmax.f32 %v642, 0.0
    %v685 = vmax.f32 %v645, 0.0
    %v686 = vmax.f32 %v650, 0.0
    %v687 = vmax.f32 %v653, 0.0
    %v688 = vld [vmem:[%s5] sm:$0xf]
    %v689 = vld [vmem:[%s5 + $0x4] sm:$0xf]
    %v690 = vld [vmem:[%s5 + $0x8] sm:$0xf]
    %v691 = vld [vmem:[%s5 + $0xc] sm:$0xf]
    %v692 = vpack.c.bf16 %v657, %v656
    %v693 = vpack.c.bf16 %v659, %v658
    %v694 = vpack.c.bf16 %v661, %v660
    %v695 = vpack.c.bf16 %v663, %v662
    %v696 = vpack.c.bf16 %v665, %v664
    %v697 = vpack.c.bf16 %v667, %v666
    %v698 = vpack.c.bf16 %v669, %v668
    %v699 = vpack.c.bf16 %v671, %v670
    %v700 = vpack.c.bf16 %v673, %v672
    %v701 = vpack.c.bf16 %v675, %v674
    %v702 = vpack.c.bf16 %v677, %v676
    %v703 = vpack.c.bf16 %v679, %v678
    %v704 = vpack.c.bf16 %v681, %v680
    %v705 = vpack.c.bf16 %v683, %v682
    %v706 = vpack.c.bf16 %v685, %v684
    %v707 = vpack.c.bf16 %v687, %v686
    %v708 = vld [vmem:[%s6] sm:$0x1]
    %v710 = vlaneseq
    %v711 = vshrl.u32 %v710, 7
    %v712 = vsub.s32 0, %v711
    %v713 = vrot.slane %v708, %v712
    %v719 = vunpack.c.l.b16 %v688
    %v720 = vunpack.c.l.b16 %v689
    %v721 = vunpack.c.l.b16 %v690
    %v722 = vunpack.c.l.b16 %v691
    %v723 = vpack.c.b16 %v720, %v719
    %v724 = vpack.c.b16 %v722, %v721
    %vm727 = vcmask 261120
    %v729 = vsel %vm727, %v692, 0
    %v732 = vsel %vm727, %v693, 0
    %v735 = vsel %vm727, %v694, 0
    %v738 = vsel %vm727, %v695, 0
    %v741 = vsel %vm727, %v696, 0
    %v744 = vsel %vm727, %v697, 0
    %v747 = vsel %vm727, %v698, 0
    %v750 = vsel %vm727, %v699, 0
    %v753 = vsel %vm727, %v700, 0
    %v756 = vsel %vm727, %v701, 0
    %v759 = vsel %vm727, %v702, 0
    %v762 = vsel %vm727, %v703, 0
    %v765 = vsel %vm727, %v704, 0
    %v768 = vsel %vm727, %v705, 0
    %v771 = vsel %vm727, %v706, 0
    %v774 = vsel %vm727, %v707, 0
    %776 = vmatprep.subr.bf16.mxu0 0
    %777 = vmatpush1.bf16.msra.mxu0 %v723
    %778 = vmatprep.subr.bf16.mxu0 0
    %779 = vmatpush1.bf16.msra.mxu0 %v724
    %780 = vmatprep.subr.bf16.mxu0 0
    %781 = vmatpush1.bf16.msra.mxu0 0
    %782 = vmatprep.subr.bf16.mxu0 0
    %783 = vmatpush1.bf16.msra.mxu0 0
    %784 = vmatprep.subr.bf16.mxu0 0
    %785 = vmatpush1.bf16.msra.mxu0 0
    %786 = vmatprep.subr.bf16.mxu0 0
    %787 = vmatpush1.bf16.msra.mxu0 0
    %788 = vmatprep.subr.bf16.mxu0 0
    %789 = vmatpush1.bf16.msra.mxu0 0
    %790 = vmatprep.subr.bf16.mxu0 0
    %791 = vmatpush1.bf16.msra.mxu0 0
    %792 = vmatprep.subr.bf16.mxu0 0
    %793 = vmatpush1.bf16.msra.mxu0 0
    %794 = vmatprep.subr.bf16.mxu0 0
    %795 = vmatpush1.bf16.msra.mxu0 0
    %796 = vmatprep.subr.bf16.mxu0 0
    %797 = vmatpush1.bf16.msra.mxu0 0
    %798 = vmatprep.subr.bf16.mxu0 0
    %799 = vmatpush1.bf16.msra.mxu0 0
    %800 = vmatprep.subr.bf16.mxu0 0
    %801 = vmatpush1.bf16.msra.mxu0 0
    %802 = vmatprep.subr.bf16.mxu0 0
    %803 = vmatpush1.bf16.msra.mxu0 0
    %804 = vmatprep.subr.bf16.mxu0 0
    %805 = vmatpush1.bf16.msra.mxu0 0
    %806 = vmatprep.subr.bf16.mxu0 0
    %807 = vmatpush1.bf16.msra.mxu0 0
    %808 = vmatprep.mubr.bf16.mxu0 0
    %809 = vmatmul.mubr.bf16.gmra.mrb[0].mxu0 %v729
    %v810 = vpop.f32.mrb[0].mxu0
    %v811 = vadd.f32 %v713, %v810
    %v812 = vpop.f32.mrb[0].mxu0
    %v813 = vpop.f32.mrb[0].mxu0
    %v814 = vadd.f32 %v713, %v813
    %v815 = vpop.f32.mrb[0].mxu0
    %816 = vmatprep.mubr.bf16.mxu0 0
    %817 = vmatmul.mubr.bf16.gmra.mrb[0].mxu0 %v732
    %v818 = vpop.f32.mrb[0].mxu0
    %v819 = vadd.f32 %v713, %v818
    %v820 = vpop.f32.mrb[0].mxu0
    %v821 = vpop.f32.mrb[0].mxu0
    %v822 = vadd.f32 %v713, %v821
    %v823 = vpop.f32.mrb[0].mxu0
    %824 = vmatprep.mubr.bf16.mxu0 0
    %825 = vmatmul.mubr.bf16.gmra.mrb[0].mxu0 %v735
    %v826 = vpop.f32.mrb[0].mxu0
    %v827 = vadd.f32 %v713, %v826
    %v828 = vpop.f32.mrb[0].mxu0
    %v829 = vpop.f32.mrb[0].mxu0
    %v830 = vadd.f32 %v713, %v829
    %v831 = vpop.f32.mrb[0].mxu0
    %832 = vmatprep.mubr.bf16.mxu0 0
    %833 = vmatmul.mubr.bf16.gmra.mrb[0].mxu0 %v738
    %v834 = vpop.f32.mrb[0].mxu0
    %v835 = vadd.f32 %v713, %v834
    %v836 = vpop.f32.mrb[0].mxu0
    %v837 = vpop.f32.mrb[0].mxu0
    %v838 = vadd.f32 %v713, %v837
    %v839 = vpop.f32.mrb[0].mxu0
    %840 = vmatprep.mubr.bf16.mxu0 0
    %841 = vmatmul.mubr.bf16.gmra.mrb[0].mxu0 %v741
    %v842 = vpop.f32.mrb[0].mxu0
    %v843 = vadd.f32 %v713, %v842
    %v844 = vpop.f32.mrb[0].mxu0
    %v845 = vpop.f32.mrb[0].mxu0
    %v846 = vadd.f32 %v713, %v845
    %v847 = vpop.f32.mrb[0].mxu0
    %848 = vmatprep.mubr.bf16.mxu0 0
    %849 = vmatmul.mubr.bf16.gmra.mrb[0].mxu0 %v744
    %v850 = vpop.f32.mrb[0].mxu0
    %v851 = vadd.f32 %v713, %v850
    %v852 = vpop.f32.mrb[0].mxu0
    %v853 = vpop.f32.mrb[0].mxu0
    %v854 = vadd.f32 %v713, %v853
    %v855 = vpop.f32.mrb[0].mxu0
    %856 = vmatprep.mubr.bf16.mxu0 0
    %857 = vmatmul.mubr.bf16.gmra.mrb[0].mxu0 %v747
    %v858 = vpop.f32.mrb[0].mxu0
    %v859 = vadd.f32 %v713, %v858
    %v860 = vpop.f32.mrb[0].mxu0
    %v861 = vpop.f32.mrb[0].mxu0
    %v862 = vadd.f32 %v713, %v861
    %v863 = vpop.f32.mrb[0].mxu0
    %864 = vmatprep.mubr.bf16.mxu0 0
    %865 = vmatmul.mubr.bf16.gmra.mrb[0].mxu0 %v750
    %v866 = vpop.f32.mrb[0].mxu0
    %v867 = vadd.f32 %v713, %v866
    %v868 = vpop.f32.mrb[0].mxu0
    %v869 = vpop.f32.mrb[0].mxu0
    %v870 = vadd.f32 %v713, %v869
    %v871 = vpop.f32.mrb[0].mxu0
    %872 = vmatprep.mubr.bf16.mxu0 0
    %873 = vmatmul.mubr.bf16.gmra.mrb[0].mxu0 %v753
    %v874 = vpop.f32.mrb[0].mxu0
    %v875 = vadd.f32 %v713, %v874
    %v876 = vpop.f32.mrb[0].mxu0
    %v877 = vpop.f32.mrb[0].mxu0
    %v878 = vadd.f32 %v713, %v877
    %v879 = vpop.f32.mrb[0].mxu0
    %880 = vmatprep.mubr.bf16.mxu0 0
    %881 = vmatmul.mubr.bf16.gmra.mrb[0].mxu0 %v756
    %v882 = vpop.f32.mrb[0].mxu0
    %v883 = vadd.f32 %v713, %v882
    %v884 = vpop.f32.mrb[0].mxu0
    %v885 = vpop.f32.mrb[0].mxu0
    %v886 = vadd.f32 %v713, %v885
    %v887 = vpop.f32.mrb[0].mxu0
    %888 = vmatprep.mubr.bf16.mxu0 0
    %889 = vmatmul.mubr.bf16.gmra.mrb[0].mxu0 %v759
    %v890 = vpop.f32.mrb[0].mxu0
    %v891 = vadd.f32 %v713, %v890
    %v892 = vpop.f32.mrb[0].mxu0
    %v893 = vpop.f32.mrb[0].mxu0
    %v894 = vadd.f32 %v713, %v893
    %v895 = vpop.f32.mrb[0].mxu0
    %896 = vmatprep.mubr.bf16.mxu0 0
    %897 = vmatmul.mubr.bf16.gmra.mrb[0].mxu0 %v762
    %v898 = vpop.f32.mrb[0].mxu0
    %v899 = vadd.f32 %v713, %v898
    %v900 = vpop.f32.mrb[0].mxu0
    %v901 = vpop.f32.mrb[0].mxu0
    %v902 = vadd.f32 %v713, %v901
    %v903 = vpop.f32.mrb[0].mxu0
    %904 = vmatprep.mubr.bf16.mxu0 0
    %905 = vmatmul.mubr.bf16.gmra.mrb[0].mxu0 %v765
    %v906 = vpop.f32.mrb[0].mxu0
    %v907 = vadd.f32 %v713, %v906
    %v908 = vpop.f32.mrb[0].mxu0
    %v909 = vpop.f32.mrb[0].mxu0
    %v910 = vadd.f32 %v713, %v909
    %v911 = vpop.f32.mrb[0].mxu0
    %912 = vmatprep.mubr.bf16.mxu0 0
    %913 = vmatmul.mubr.bf16.gmra.mrb[0].mxu0 %v768
    %v914 = vpop.f32.mrb[0].mxu0
    %v915 = vadd.f32 %v713, %v914
    %v916 = vpop.f32.mrb[0].mxu0
    %v917 = vpop.f32.mrb[0].mxu0
    %v918 = vadd.f32 %v713, %v917
    %v919 = vpop.f32.mrb[0].mxu0
    %920 = vmatprep.mubr.bf16.mxu0 0
    %921 = vmatmul.mubr.bf16.gmra.mrb[0].mxu0 %v771
    %v922 = vpop.f32.mrb[0].mxu0
    %v923 = vadd.f32 %v713, %v922
    %v924 = vpop.f32.mrb[0].mxu0
    %v925 = vpop.f32.mrb[0].mxu0
    %v926 = vadd.f32 %v713, %v925
    %v927 = vpop.f32.mrb[0].mxu0
    %928 = vmatprep.mubr.bf16.mxu0 0
    %929 = vmatmul.mubr.bf16.gmra.mrb[0].mxu0 %v774
    %v930 = vpop.f32.mrb[0].mxu0
    %v931 = vadd.f32 %v713, %v930
    %v932 = vpop.f32.mrb[0].mxu0
    %v933 = vpop.f32.mrb[0].mxu0
    %v934 = vadd.f32 %v713, %v933
    %v935 = vpop.f32.mrb[0].mxu0
    %936 = vdwg.mxu0
    %v937 = vmax.f32 %v811, 0.0
    %v938 = vmax.f32 %v814, 0.0
    %v939 = vmax.f32 %v819, 0.0
    %v940 = vmax.f32 %v822, 0.0
    %v941 = vmax.f32 %v827, 0.0
    %v942 = vmax.f32 %v830, 0.0
    %v943 = vmax.f32 %v835, 0.0
    %v944 = vmax.f32 %v838, 0.0
    %v945 = vmax.f32 %v843, 0.0
    %v946 = vmax.f32 %v846, 0.0
    %v947 = vmax.f32 %v851, 0.0
    %v948 = vmax.f32 %v854, 0.0
    %v949 = vmax.f32 %v859, 0.0
    %v950 = vmax.f32 %v862, 0.0
    %v951 = vmax.f32 %v867, 0.0
    %v952 = vmax.f32 %v870, 0.0
    %v953 = vmax.f32 %v875, 0.0
    %v954 = vmax.f32 %v878, 0.0
    %v955 = vmax.f32 %v883, 0.0
    %v956 = vmax.f32 %v886, 0.0
    %v957 = vmax.f32 %v891, 0.0
    %v958 = vmax.f32 %v894, 0.0
    %v959 = vmax.f32 %v899, 0.0
    %v960 = vmax.f32 %v902, 0.0
    %v961 = vmax.f32 %v907, 0.0
    %v962 = vmax.f32 %v910, 0.0
    %v963 = vmax.f32 %v915, 0.0
    %v964 = vmax.f32 %v918, 0.0
    %v965 = vmax.f32 %v923, 0.0
    %v966 = vmax.f32 %v926, 0.0
    %v967 = vmax.f32 %v931, 0.0
    %v968 = vmax.f32 %v934, 0.0
    %v969 = vld [vmem:[%s7] sm:$0xf]
    %v970 = vld [vmem:[%s7 + $0x4] sm:$0xf]
    %v971 = vld [vmem:[%s7 + $0x8] sm:$0x7]
    %v972 = vpack.c.bf16 %v938, %v937
    %v973 = vpack.c.bf16 %v940, %v939
    %v974 = vpack.c.bf16 %v942, %v941
    %v975 = vpack.c.bf16 %v944, %v943
    %v976 = vpack.c.bf16 %v946, %v945
    %v977 = vpack.c.bf16 %v948, %v947
    %v978 = vpack.c.bf16 %v950, %v949
    %v979 = vpack.c.bf16 %v952, %v951
    %v980 = vpack.c.bf16 %v954, %v953
    %v981 = vpack.c.bf16 %v956, %v955
    %v982 = vpack.c.bf16 %v958, %v957
    %v983 = vpack.c.bf16 %v960, %v959
    %v984 = vpack.c.bf16 %v962, %v961
    %v985 = vpack.c.bf16 %v964, %v963
    %v986 = vpack.c.bf16 %v966, %v965
    %v987 = vpack.c.bf16 %v968, %v967
    %v988 = vld [vmem:[%s8] sm:$0x1]
    %v990 = vlaneseq
    %v991 = vshrl.u32 %v990, 7
    %v992 = vsub.s32 0, %v991
    %v993 = vrot.slane %v988, %v992
    %v998 = vunpack.c.l.b16 %v969
    %v999 = vunpack.c.l.b16 %v970
    %v1000 = vunpack.c.l.b16 %v971
    %v1001 = vpack.c.b16 %v999, %v998
    %v1002 = vpack.c.b16 %v1000, %v1000
    %vm1004 = vcmask 179200
    %v1006 = vsel %vm1004, %v972, 0
    %v1009 = vsel %vm1004, %v973, 0
    %v1012 = vsel %vm1004, %v974, 0
    %v1015 = vsel %vm1004, %v975, 0
    %v1018 = vsel %vm1004, %v976, 0
    %v1021 = vsel %vm1004, %v977, 0
    %v1024 = vsel %vm1004, %v978, 0
    %v1027 = vsel %vm1004, %v979, 0
    %v1030 = vsel %vm1004, %v980, 0
    %v1033 = vsel %vm1004, %v981, 0
    %v1036 = vsel %vm1004, %v982, 0
    %v1039 = vsel %vm1004, %v983, 0
    %v1042 = vsel %vm1004, %v984, 0
    %v1045 = vsel %vm1004, %v985, 0
    %v1048 = vsel %vm1004, %v986, 0
    %v1051 = vsel %vm1004, %v987, 0
    %vm1053 = vcmask 1042432
    %v1055 = vsel %vm1053, %v1002, 0
    %1057 = vmatprep.subr.bf16.mxu0 0
    %1058 = vmatpush1.bf16.msra.mxu0 %v1001
    %1059 = vmatprep.subr.bf16.mxu0 0
    %1060 = vmatpush1.bf16.msra.mxu0 %v1055
    %1061 = vmatprep.subr.bf16.mxu0 0
    %1062 = vmatpush1.bf16.msra.mxu0 0
    %1063 = vmatprep.subr.bf16.mxu0 0
    %1064 = vmatpush1.bf16.msra.mxu0 0
    %1065 = vmatprep.subr.bf16.mxu0 0
    %1066 = vmatpush1.bf16.msra.mxu0 0
    %1067 = vmatprep.subr.bf16.mxu0 0
    %1068 = vmatpush1.bf16.msra.mxu0 0
    %1069 = vmatprep.subr.bf16.mxu0 0
    %1070 = vmatpush1.bf16.msra.mxu0 0
    %1071 = vmatprep.subr.bf16.mxu0 0
    %1072 = vmatpush1.bf16.msra.mxu0 0
    %1073 = vmatprep.subr.bf16.mxu0 0
    %1074 = vmatpush1.bf16.msra.mxu0 0
    %1075 = vmatprep.subr.bf16.mxu0 0
    %1076 = vmatpush1.bf16.msra.mxu0 0
    %1077 = vmatprep.subr.bf16.mxu0 0
    %1078 = vmatpush1.bf16.msra.mxu0 0
    %1079 = vmatprep.subr.bf16.mxu0 0
    %1080 = vmatpush1.bf16.msra.mxu0 0
    %1081 = vmatprep.subr.bf16.mxu0 0
    %1082 = vmatpush1.bf16.msra.mxu0 0
    %1083 = vmatprep.subr.bf16.mxu0 0
    %1084 = vmatpush1.bf16.msra.mxu0 0
    %1085 = vmatprep.subr.bf16.mxu0 0
    %1086 = vmatpush1.bf16.msra.mxu0 0
    %1087 = vmatprep.subr.bf16.mxu0 0
    %1088 = vmatpush1.bf16.msra.mxu0 0
    %1089 = vmatprep.mubr.bf16.mxu0 0
    %1090 = vmatmul.mubr.bf16.gmra.mrb[0].mxu0 %v1006
    %v1091 = vpop.f32.mrb[0].mxu0
    %v1092 = vadd.f32 %v993, %v1091
    %v1093 = vpop.f32.mrb[0].mxu0
    %v1094 = vpop.f32.mrb[0].mxu0
    %v1095 = vadd.f32 %v993, %v1094
    %v1096 = vpop.f32.mrb[0].mxu0
    %1097 = vmatprep.mubr.bf16.mxu0 0
    %1098 = vmatmul.mubr.bf16.gmra.mrb[0].mxu0 %v1009
    %v1099 = vpop.f32.mrb[0].mxu0
    %v1100 = vadd.f32 %v993, %v1099
    %v1101 = vpop.f32.mrb[0].mxu0
    %v1102 = vpop.f32.mrb[0].mxu0
    %v1103 = vadd.f32 %v993, %v1102
    %v1104 = vpop.f32.mrb[0].mxu0
    %1105 = vmatprep.mubr.bf16.mxu0 0
    %1106 = vmatmul.mubr.bf16.gmra.mrb[0].mxu0 %v1012
    %v1107 = vpop.f32.mrb[0].mxu0
    %v1108 = vadd.f32 %v993, %v1107
    %v1109 = vpop.f32.mrb[0].mxu0
    %v1110 = vpop.f32.mrb[0].mxu0
    %v1111 = vadd.f32 %v993, %v1110
    %v1112 = vpop.f32.mrb[0].mxu0
    %1113 = vmatprep.mubr.bf16.mxu0 0
    %1114 = vmatmul.mubr.bf16.gmra.mrb[0].mxu0 %v1015
    %v1115 = vpop.f32.mrb[0].mxu0
    %v1116 = vadd.f32 %v993, %v1115
    %v1117 = vpop.f32.mrb[0].mxu0
    %v1118 = vpop.f32.mrb[0].mxu0
    %v1119 = vadd.f32 %v993, %v1118
    %v1120 = vpop.f32.mrb[0].mxu0
    %1121 = vmatprep.mubr.bf16.mxu0 0
    %1122 = vmatmul.mubr.bf16.gmra.mrb[0].mxu0 %v1018
    %v1123 = vpop.f32.mrb[0].mxu0
    %v1124 = vadd.f32 %v993, %v1123
    %v1125 = vpop.f32.mrb[0].mxu0
    %v1126 = vpop.f32.mrb[0].mxu0
    %v1127 = vadd.f32 %v993, %v1126
    %v1128 = vpop.f32.mrb[0].mxu0
    %1129 = vmatprep.mubr.bf16.mxu0 0
    %1130 = vmatmul.mubr.bf16.gmra.mrb[0].mxu0 %v1021
    %v1131 = vpop.f32.mrb[0].mxu0
    %v1132 = vadd.f32 %v993, %v1131
    %v1133 = vpop.f32.mrb[0].mxu0
    %v1134 = vpop.f32.mrb[0].mxu0
    %v1135 = vadd.f32 %v993, %v1134
    %v1136 = vpop.f32.mrb[0].mxu0
    %1137 = vmatprep.mubr.bf16.mxu0 0
    %1138 = vmatmul.mubr.bf16.gmra.mrb[0].mxu0 %v1024
    %v1139 = vpop.f32.mrb[0].mxu0
    %v1140 = vadd.f32 %v993, %v1139
    %v1141 = vpop.f32.mrb[0].mxu0
    %v1142 = vpop.f32.mrb[0].mxu0
    %v1143 = vadd.f32 %v993, %v1142
    %v1144 = vpop.f32.mrb[0].mxu0
    %1145 = vmatprep.mubr.bf16.mxu0 0
    %1146 = vmatmul.mubr.bf16.gmra.mrb[0].mxu0 %v1027
    %v1147 = vpop.f32.mrb[0].mxu0
    %v1148 = vadd.f32 %v993, %v1147
    %v1149 = vpop.f32.mrb[0].mxu0
    %v1150 = vpop.f32.mrb[0].mxu0
    %v1151 = vadd.f32 %v993, %v1150
    %v1152 = vpop.f32.mrb[0].mxu0
    %1153 = vmatprep.mubr.bf16.mxu0 0
    %1154 = vmatmul.mubr.bf16.gmra.mrb[0].mxu0 %v1030
    %v1155 = vpop.f32.mrb[0].mxu0
    %v1156 = vadd.f32 %v993, %v1155
    %v1157 = vpop.f32.mrb[0].mxu0
    %v1158 = vpop.f32.mrb[0].mxu0
    %v1159 = vadd.f32 %v993, %v1158
    %v1160 = vpop.f32.mrb[0].mxu0
    %1161 = vmatprep.mubr.bf16.mxu0 0
    %1162 = vmatmul.mubr.bf16.gmra.mrb[0].mxu0 %v1033
    %v1163 = vpop.f32.mrb[0].mxu0
    %v1164 = vadd.f32 %v993, %v1163
    %v1165 = vpop.f32.mrb[0].mxu0
    %v1166 = vpop.f32.mrb[0].mxu0
    %v1167 = vadd.f32 %v993, %v1166
    %v1168 = vpop.f32.mrb[0].mxu0
    %1169 = vmatprep.mubr.bf16.mxu0 0
    %1170 = vmatmul.mubr.bf16.gmra.mrb[0].mxu0 %v1036
    %v1171 = vpop.f32.mrb[0].mxu0
    %v1172 = vadd.f32 %v993, %v1171
    %v1173 = vpop.f32.mrb[0].mxu0
    %v1174 = vpop.f32.mrb[0].mxu0
    %v1175 = vadd.f32 %v993, %v1174
    %v1176 = vpop.f32.mrb[0].mxu0
    %1177 = vmatprep.mubr.bf16.mxu0 0
    %1178 = vmatmul.mubr.bf16.gmra.mrb[0].mxu0 %v1039
    %v1179 = vpop.f32.mrb[0].mxu0
    %v1180 = vadd.f32 %v993, %v1179
    %v1181 = vpop.f32.mrb[0].mxu0
    %v1182 = vpop.f32.mrb[0].mxu0
    %v1183 = vadd.f32 %v993, %v1182
    %v1184 = vpop.f32.mrb[0].mxu0
    %1185 = vmatprep.mubr.bf16.mxu0 0
    %1186 = vmatmul.mubr.bf16.gmra.mrb[0].mxu0 %v1042
    %v1187 = vpop.f32.mrb[0].mxu0
    %v1188 = vadd.f32 %v993, %v1187
    %v1189 = vpop.f32.mrb[0].mxu0
    %v1190 = vpop.f32.mrb[0].mxu0
    %v1191 = vadd.f32 %v993, %v1190
    %v1192 = vpop.f32.mrb[0].mxu0
    %1193 = vmatprep.mubr.bf16.mxu0 0
    %1194 = vmatmul.mubr.bf16.gmra.mrb[0].mxu0 %v1045
    %v1195 = vpop.f32.mrb[0].mxu0
    %v1196 = vadd.f32 %v993, %v1195
    %v1197 = vpop.f32.mrb[0].mxu0
    %v1198 = vpop.f32.mrb[0].mxu0
    %v1199 = vadd.f32 %v993, %v1198
    %v1200 = vpop.f32.mrb[0].mxu0
    %1201 = vmatprep.mubr.bf16.mxu0 0
    %1202 = vmatmul.mubr.bf16.gmra.mrb[0].mxu0 %v1048
    %v1203 = vpop.f32.mrb[0].mxu0
    %v1204 = vadd.f32 %v993, %v1203
    %v1205 = vpop.f32.mrb[0].mxu0
    %v1206 = vpop.f32.mrb[0].mxu0
    %v1207 = vadd.f32 %v993, %v1206
    %v1208 = vpop.f32.mrb[0].mxu0
    %1209 = vmatprep.mubr.bf16.mxu0 0
    %1210 = vmatmul.mubr.bf16.gmra.mrb[0].mxu0 %v1051
    %v1211 = vpop.f32.mrb[0].mxu0
    %v1212 = vadd.f32 %v993, %v1211
    %v1213 = vpop.f32.mrb[0].mxu0
    %v1214 = vpop.f32.mrb[0].mxu0
    %v1215 = vadd.f32 %v993, %v1214
    %v1216 = vpop.f32.mrb[0].mxu0
    %1217 = vdwg.mxu0
    %v1218 = vmax.f32 %v1092, 0.0
    %v1219 = vmax.f32 %v1095, 0.0
    %v1220 = vmax.f32 %v1100, 0.0
    %v1221 = vmax.f32 %v1103, 0.0
    %v1222 = vmax.f32 %v1108, 0.0
    %v1223 = vmax.f32 %v1111, 0.0
    %v1224 = vmax.f32 %v1116, 0.0
    %v1225 = vmax.f32 %v1119, 0.0
    %v1226 = vmax.f32 %v1124, 0.0
    %v1227 = vmax.f32 %v1127, 0.0
    %v1228 = vmax.f32 %v1132, 0.0
    %v1229 = vmax.f32 %v1135, 0.0
    %v1230 = vmax.f32 %v1140, 0.0
    %v1231 = vmax.f32 %v1143, 0.0
    %v1232 = vmax.f32 %v1148, 0.0
    %v1233 = vmax.f32 %v1151, 0.0
    %v1234 = vmax.f32 %v1156, 0.0
    %v1235 = vmax.f32 %v1159, 0.0
    %v1236 = vmax.f32 %v1164, 0.0
    %v1237 = vmax.f32 %v1167, 0.0
    %v1238 = vmax.f32 %v1172, 0.0
    %v1239 = vmax.f32 %v1175, 0.0
    %v1240 = vmax.f32 %v1180, 0.0
    %v1241 = vmax.f32 %v1183, 0.0
    %v1242 = vmax.f32 %v1188, 0.0
    %v1243 = vmax.f32 %v1191, 0.0
    %v1244 = vmax.f32 %v1196, 0.0
    %v1245 = vmax.f32 %v1199, 0.0
    %v1246 = vmax.f32 %v1204, 0.0
    %v1247 = vmax.f32 %v1207, 0.0
    %v1248 = vmax.f32 %v1212, 0.0
    %v1249 = vmax.f32 %v1215, 0.0
    %v1250 = vld [vmem:[%s9] sm:$0xff]
    %v1251 = vld [vmem:[%s9 + $0x8] sm:$0xff]
    %v1252 = vpack.c.bf16 %v1219, %v1218
    %v1253 = vpack.c.bf16 %v1221, %v1220
    %v1254 = vpack.c.bf16 %v1223, %v1222
    %v1255 = vpack.c.bf16 %v1225, %v1224
    %v1256 = vpack.c.bf16 %v1227, %v1226
    %v1257 = vpack.c.bf16 %v1229, %v1228
    %v1258 = vpack.c.bf16 %v1231, %v1230
    %v1259 = vpack.c.bf16 %v1233, %v1232
    %v1260 = vpack.c.bf16 %v1235, %v1234
    %v1261 = vpack.c.bf16 %v1237, %v1236
    %v1262 = vpack.c.bf16 %v1239, %v1238
    %v1263 = vpack.c.bf16 %v1241, %v1240
    %v1264 = vpack.c.bf16 %v1243, %v1242
    %v1265 = vpack.c.bf16 %v1245, %v1244
    %v1266 = vpack.c.bf16 %v1247, %v1246
    %v1267 = vpack.c.bf16 %v1249, %v1248
    %v1268 = vld [vmem:[%s10] sm:$0x3]
    %v1270 = vlaneseq
    %v1271 = vshrl.u32 %v1270, 7
    %v1272 = vsub.s32 0, %v1271
    %v1273 = vrot.slane %v1268, %v1272
    %v1274 = vlaneseq
    %v1275 = vshrl.u32 %v1274, 7
    %v1276 = vsub.s32 1, %v1275
    %v1277 = vrot.slane %v1268, %v1276
    %v1282 = vunpack.c.l.b16 %v1250
    %v1283 = vunpack.c.h.b16 %v1250
    %v1284 = vunpack.c.l.b16 %v1251
    %v1285 = vunpack.c.h.b16 %v1251
    %v1286 = vpack.c.b16 %v1284, %v1282
    %v1287 = vpack.c.b16 %v1285, %v1283
    %vm1290 = vcmask 130048
    %v1292 = vsel %vm1290, %v1252, 0
    %v1295 = vsel %vm1290, %v1253, 0
    %v1298 = vsel %vm1290, %v1254, 0
    %v1301 = vsel %vm1290, %v1255, 0
    %v1304 = vsel %vm1290, %v1256, 0
    %v1307 = vsel %vm1290, %v1257, 0
    %v1310 = vsel %vm1290, %v1258, 0
    %v1313 = vsel %vm1290, %v1259, 0
    %v1316 = vsel %vm1290, %v1260, 0
    %v1319 = vsel %vm1290, %v1261, 0
    %v1322 = vsel %vm1290, %v1262, 0
    %v1325 = vsel %vm1290, %v1263, 0
    %v1328 = vsel %vm1290, %v1264, 0
    %v1331 = vsel %vm1290, %v1265, 0
    %v1334 = vsel %vm1290, %v1266, 0
    %v1337 = vsel %vm1290, %v1267, 0
    %1339 = vmatprep.subr.bf16.mxu0 %v1287
    %1340 = vmatpush1.bf16.msra.mxu0 %v1286
    %1341 = vmatprep.subr.bf16.mxu0 0
    %1342 = vmatpush1.bf16.msra.mxu0 0
    %1343 = vmatprep.subr.bf16.mxu0 0
    %1344 = vmatpush1.bf16.msra.mxu0 0
    %1345 = vmatprep.subr.bf16.mxu0 0
    %1346 = vmatpush1.bf16.msra.mxu0 0
    %1347 = vmatprep.subr.bf16.mxu0 0
    %1348 = vmatpush1.bf16.msra.mxu0 0
    %1349 = vmatprep.subr.bf16.mxu0 0
    %1350 = vmatpush1.bf16.msra.mxu0 0
    %1351 = vmatprep.subr.bf16.mxu0 0
    %1352 = vmatpush1.bf16.msra.mxu0 0
    %1353 = vmatprep.subr.bf16.mxu0 0
    %1354 = vmatpush1.bf16.msra.mxu0 0
    %1355 = vmatprep.subr.bf16.mxu0 0
    %1356 = vmatpush1.bf16.msra.mxu0 0
    %1357 = vmatprep.subr.bf16.mxu0 0
    %1358 = vmatpush1.bf16.msra.mxu0 0
    %1359 = vmatprep.subr.bf16.mxu0 0
    %1360 = vmatpush1.bf16.msra.mxu0 0
    %1361 = vmatprep.subr.bf16.mxu0 0
    %1362 = vmatpush1.bf16.msra.mxu0 0
    %1363 = vmatprep.subr.bf16.mxu0 0
    %1364 = vmatpush1.bf16.msra.mxu0 0
    %1365 = vmatprep.subr.bf16.mxu0 0
    %1366 = vmatpush1.bf16.msra.mxu0 0
    %1367 = vmatprep.subr.bf16.mxu0 0
    %1368 = vmatpush1.bf16.msra.mxu0 0
    %1369 = vmatprep.subr.bf16.mxu0 0
    %1370 = vmatpush1.bf16.msra.mxu0 0
    %1371 = vmatprep.mubr.bf16.mxu0 0
    %1372 = vmatmul.mubr.bf16.gmra.mrb[0].mxu0 %v1292
    %v1373 = vpop.f32.mrb[0].mxu0
    %v1374 = vadd.f32 %v1273, %v1373
    %v1375 = vpop.f32.mrb[0].mxu0
    %v1376 = vadd.f32 %v1277, %v1375
    %v1377 = vpop.f32.mrb[0].mxu0
    %v1378 = vadd.f32 %v1273, %v1377
    %v1379 = vpop.f32.mrb[0].mxu0
    %v1380 = vadd.f32 %v1277, %v1379
    %1381 = vmatprep.mubr.bf16.mxu0 0
    %1382 = vmatmul.mubr.bf16.gmra.mrb[0].mxu0 %v1295
    %v1383 = vpop.f32.mrb[0].mxu0
    %v1384 = vadd.f32 %v1273, %v1383
    %v1385 = vpop.f32.mrb[0].mxu0
    %v1386 = vadd.f32 %v1277, %v1385
    %v1387 = vpop.f32.mrb[0].mxu0
    %v1388 = vadd.f32 %v1273, %v1387
    %v1389 = vpop.f32.mrb[0].mxu0
    %v1390 = vadd.f32 %v1277, %v1389
    %1391 = vmatprep.mubr.bf16.mxu0 0
    %1392 = vmatmul.mubr.bf16.gmra.mrb[0].mxu0 %v1298
    %v1393 = vpop.f32.mrb[0].mxu0
    %v1394 = vadd.f32 %v1273, %v1393
    %v1395 = vpop.f32.mrb[0].mxu0
    %v1396 = vadd.f32 %v1277, %v1395
    %v1397 = vpop.f32.mrb[0].mxu0
    %v1398 = vadd.f32 %v1273, %v1397
    %v1399 = vpop.f32.mrb[0].mxu0
    %v1400 = vadd.f32 %v1277, %v1399
    %1401 = vmatprep.mubr.bf16.mxu0 0
    %1402 = vmatmul.mubr.bf16.gmra.mrb[0].mxu0 %v1301
    %v1403 = vpop.f32.mrb[0].mxu0
    %v1404 = vadd.f32 %v1273, %v1403
    %v1405 = vpop.f32.mrb[0].mxu0
    %v1406 = vadd.f32 %v1277, %v1405
    %v1407 = vpop.f32.mrb[0].mxu0
    %v1408 = vadd.f32 %v1273, %v1407
    %v1409 = vpop.f32.mrb[0].mxu0
    %v1410 = vadd.f32 %v1277, %v1409
    %1411 = vmatprep.mubr.bf16.mxu0 0
    %1412 = vmatmul.mubr.bf16.gmra.mrb[0].mxu0 %v1304
    %v1413 = vpop.f32.mrb[0].mxu0
    %v1414 = vadd.f32 %v1273, %v1413
    %v1415 = vpop.f32.mrb[0].mxu0
    %v1416 = vadd.f32 %v1277, %v1415
    %v1417 = vpop.f32.mrb[0].mxu0
    %v1418 = vadd.f32 %v1273, %v1417
    %v1419 = vpop.f32.mrb[0].mxu0
    %v1420 = vadd.f32 %v1277, %v1419
    %1421 = vmatprep.mubr.bf16.mxu0 0
    %1422 = vmatmul.mubr.bf16.gmra.mrb[0].mxu0 %v1307
    %v1423 = vpop.f32.mrb[0].mxu0
    %v1424 = vadd.f32 %v1273, %v1423
    %v1425 = vpop.f32.mrb[0].mxu0
    %v1426 = vadd.f32 %v1277, %v1425
    %v1427 = vpop.f32.mrb[0].mxu0
    %v1428 = vadd.f32 %v1273, %v1427
    %v1429 = vpop.f32.mrb[0].mxu0
    %v1430 = vadd.f32 %v1277, %v1429
    %1431 = vmatprep.mubr.bf16.mxu0 0
    %1432 = vmatmul.mubr.bf16.gmra.mrb[0].mxu0 %v1310
    %v1433 = vpop.f32.mrb[0].mxu0
    %v1434 = vadd.f32 %v1273, %v1433
    %v1435 = vpop.f32.mrb[0].mxu0
    %v1436 = vadd.f32 %v1277, %v1435
    %v1437 = vpop.f32.mrb[0].mxu0
    %v1438 = vadd.f32 %v1273, %v1437
    %v1439 = vpop.f32.mrb[0].mxu0
    %v1440 = vadd.f32 %v1277, %v1439
    %1441 = vmatprep.mubr.bf16.mxu0 0
    %1442 = vmatmul.mubr.bf16.gmra.mrb[0].mxu0 %v1313
    %v1443 = vpop.f32.mrb[0].mxu0
    %v1444 = vadd.f32 %v1273, %v1443
    %v1445 = vpop.f32.mrb[0].mxu0
    %v1446 = vadd.f32 %v1277, %v1445
    %v1447 = vpop.f32.mrb[0].mxu0
    %v1448 = vadd.f32 %v1273, %v1447
    %v1449 = vpop.f32.mrb[0].mxu0
    %v1450 = vadd.f32 %v1277, %v1449
    %1451 = vmatprep.mubr.bf16.mxu0 0
    %1452 = vmatmul.mubr.bf16.gmra.mrb[0].mxu0 %v1316
    %v1453 = vpop.f32.mrb[0].mxu0
    %v1454 = vadd.f32 %v1273, %v1453
    %v1455 = vpop.f32.mrb[0].mxu0
    %v1456 = vadd.f32 %v1277, %v1455
    %v1457 = vpop.f32.mrb[0].mxu0
    %v1458 = vadd.f32 %v1273, %v1457
    %v1459 = vpop.f32.mrb[0].mxu0
    %v1460 = vadd.f32 %v1277, %v1459
    %1461 = vmatprep.mubr.bf16.mxu0 0
    %1462 = vmatmul.mubr.bf16.gmra.mrb[0].mxu0 %v1319
    %v1463 = vpop.f32.mrb[0].mxu0
    %v1464 = vadd.f32 %v1273, %v1463
    %v1465 = vpop.f32.mrb[0].mxu0
    %v1466 = vadd.f32 %v1277, %v1465
    %v1467 = vpop.f32.mrb[0].mxu0
    %v1468 = vadd.f32 %v1273, %v1467
    %v1469 = vpop.f32.mrb[0].mxu0
    %v1470 = vadd.f32 %v1277, %v1469
    %1471 = vmatprep.mubr.bf16.mxu0 0
    %1472 = vmatmul.mubr.bf16.gmra.mrb[0].mxu0 %v1322
    %v1473 = vpop.f32.mrb[0].mxu0
    %v1474 = vadd.f32 %v1273, %v1473
    %v1475 = vpop.f32.mrb[0].mxu0
    %v1476 = vadd.f32 %v1277, %v1475
    %v1477 = vpop.f32.mrb[0].mxu0
    %v1478 = vadd.f32 %v1273, %v1477
    %v1479 = vpop.f32.mrb[0].mxu0
    %v1480 = vadd.f32 %v1277, %v1479
    %1481 = vmatprep.mubr.bf16.mxu0 0
    %1482 = vmatmul.mubr.bf16.gmra.mrb[0].mxu0 %v1325
    %v1483 = vpop.f32.mrb[0].mxu0
    %v1484 = vadd.f32 %v1273, %v1483
    %v1485 = vpop.f32.mrb[0].mxu0
    %v1486 = vadd.f32 %v1277, %v1485
    %v1487 = vpop.f32.mrb[0].mxu0
    %v1488 = vadd.f32 %v1273, %v1487
    %v1489 = vpop.f32.mrb[0].mxu0
    %v1490 = vadd.f32 %v1277, %v1489
    %1491 = vmatprep.mubr.bf16.mxu0 0
    %1492 = vmatmul.mubr.bf16.gmra.mrb[0].mxu0 %v1328
    %v1493 = vpop.f32.mrb[0].mxu0
    %v1494 = vadd.f32 %v1273, %v1493
    %v1495 = vpop.f32.mrb[0].mxu0
    %v1496 = vadd.f32 %v1277, %v1495
    %v1497 = vpop.f32.mrb[0].mxu0
    %v1498 = vadd.f32 %v1273, %v1497
    %v1499 = vpop.f32.mrb[0].mxu0
    %v1500 = vadd.f32 %v1277, %v1499
    %1501 = vmatprep.mubr.bf16.mxu0 0
    %1502 = vmatmul.mubr.bf16.gmra.mrb[0].mxu0 %v1331
    %v1503 = vpop.f32.mrb[0].mxu0
    %v1504 = vadd.f32 %v1273, %v1503
    %v1505 = vpop.f32.mrb[0].mxu0
    %v1506 = vadd.f32 %v1277, %v1505
    %v1507 = vpop.f32.mrb[0].mxu0
    %v1508 = vadd.f32 %v1273, %v1507
    %v1509 = vpop.f32.mrb[0].mxu0
    %v1510 = vadd.f32 %v1277, %v1509
    %1511 = vmatprep.mubr.bf16.mxu0 0
    %1512 = vmatmul.mubr.bf16.gmra.mrb[0].mxu0 %v1334
    %v1513 = vpop.f32.mrb[0].mxu0
    %v1514 = vadd.f32 %v1273, %v1513
    %v1515 = vpop.f32.mrb[0].mxu0
    %v1516 = vadd.f32 %v1277, %v1515
    %v1517 = vpop.f32.mrb[0].mxu0
    %v1518 = vadd.f32 %v1273, %v1517
    %v1519 = vpop.f32.mrb[0].mxu0
    %v1520 = vadd.f32 %v1277, %v1519
    %1521 = vmatprep.mubr.bf16.mxu0 0
    %1522 = vmatmul.mubr.bf16.gmra.mrb[0].mxu0 %v1337
    %v1523 = vpop.f32.mrb[0].mxu0
    %v1524 = vadd.f32 %v1273, %v1523
    %v1525 = vpop.f32.mrb[0].mxu0
    %v1526 = vadd.f32 %v1277, %v1525
    %v1527 = vpop.f32.mrb[0].mxu0
    %v1528 = vadd.f32 %v1273, %v1527
    %v1529 = vpop.f32.mrb[0].mxu0
    %v1530 = vadd.f32 %v1277, %v1529
    %1531 = vdwg.mxu0
    %v1532 = vmax.f32 %v1374, 0.0
    %v1533 = vmax.f32 %v1376, 0.0
    %v1534 = vmax.f32 %v1378, 0.0
    %v1535 = vmax.f32 %v1380, 0.0
    %v1536 = vmax.f32 %v1384, 0.0
    %v1537 = vmax.f32 %v1386, 0.0
    %v1538 = vmax.f32 %v1388, 0.0
    %v1539 = vmax.f32 %v1390, 0.0
    %v1540 = vmax.f32 %v1394, 0.0
    %v1541 = vmax.f32 %v1396, 0.0
    %v1542 = vmax.f32 %v1398, 0.0
    %v1543 = vmax.f32 %v1400, 0.0
    %v1544 = vmax.f32 %v1404, 0.0
    %v1545 = vmax.f32 %v1406, 0.0
    %v1546 = vmax.f32 %v1408, 0.0
    %v1547 = vmax.f32 %v1410, 0.0
    %v1548 = vmax.f32 %v1414, 0.0
    %v1549 = vmax.f32 %v1416, 0.0
    %v1550 = vmax.f32 %v1418, 0.0
    %v1551 = vmax.f32 %v1420, 0.0
    %v1552 = vmax.f32 %v1424, 0.0
    %v1553 = vmax.f32 %v1426, 0.0
    %v1554 = vmax.f32 %v1428, 0.0
    %v1555 = vmax.f32 %v1430, 0.0
    %v1556 = vmax.f32 %v1434, 0.0
    %v1557 = vmax.f32 %v1436, 0.0
    %v1558 = vmax.f32 %v1438, 0.0
    %v1559 = vmax.f32 %v1440, 0.0
    %v1560 = vmax.f32 %v1444, 0.0
    %v1561 = vmax.f32 %v1446, 0.0
    %v1562 = vmax.f32 %v1448, 0.0
    %v1563 = vmax.f32 %v1450, 0.0
    %v1564 = vmax.f32 %v1454, 0.0
    %v1565 = vmax.f32 %v1456, 0.0
    %v1566 = vmax.f32 %v1458, 0.0
    %v1567 = vmax.f32 %v1460, 0.0
    %v1568 = vmax.f32 %v1464, 0.0
    %v1569 = vmax.f32 %v1466, 0.0
    %v1570 = vmax.f32 %v1468, 0.0
    %v1571 = vmax.f32 %v1470, 0.0
    %v1572 = vmax.f32 %v1474, 0.0
    %v1573 = vmax.f32 %v1476, 0.0
    %v1574 = vmax.f32 %v1478, 0.0
    %v1575 = vmax.f32 %v1480, 0.0
    %v1576 = vmax.f32 %v1484, 0.0
    %v1577 = vmax.f32 %v1486, 0.0
    %v1578 = vmax.f32 %v1488, 0.0
    %v1579 = vmax.f32 %v1490, 0.0
    %v1580 = vmax.f32 %v1494, 0.0
    %v1581 = vmax.f32 %v1496, 0.0
    %v1582 = vmax.f32 %v1498, 0.0
    %v1583 = vmax.f32 %v1500, 0.0
    %v1584 = vmax.f32 %v1504, 0.0
    %v1585 = vmax.f32 %v1506, 0.0
    %v1586 = vmax.f32 %v1508, 0.0
    %v1587 = vmax.f32 %v1510, 0.0
    %v1588 = vmax.f32 %v1514, 0.0
    %v1589 = vmax.f32 %v1516, 0.0
    %v1590 = vmax.f32 %v1518, 0.0
    %v1591 = vmax.f32 %v1520, 0.0
    %v1592 = vmax.f32 %v1524, 0.0
    %v1593 = vmax.f32 %v1526, 0.0
    %v1594 = vmax.f32 %v1528, 0.0
    %v1595 = vmax.f32 %v1530, 0.0
    %v1596 = vld [vmem:[%s11] sm:$0xf]
    %v1597 = vld [vmem:[%s11 + $0x4] sm:$0xf]
    %v1598 = vld [vmem:[%s11 + $0x8] sm:$0xf]
    %v1599 = vld [vmem:[%s11 + $0xc] sm:$0xf]
    %v1600 = vpack.c.bf16 %v1535, %v1533
    %v1601 = vpack.c.bf16 %v1539, %v1537
    %v1602 = vpack.c.bf16 %v1543, %v1541
    %v1603 = vpack.c.bf16 %v1547, %v1545
    %v1604 = vpack.c.bf16 %v1551, %v1549
    %v1605 = vpack.c.bf16 %v1555, %v1553
    %v1606 = vpack.c.bf16 %v1559, %v1557
    %v1607 = vpack.c.bf16 %v1563, %v1561
    %v1608 = vpack.c.bf16 %v1567, %v1565
    %v1609 = vpack.c.bf16 %v1571, %v1569
    %v1610 = vpack.c.bf16 %v1575, %v1573
    %v1611 = vpack.c.bf16 %v1579, %v1577
    %v1612 = vpack.c.bf16 %v1583, %v1581
    %v1613 = vpack.c.bf16 %v1587, %v1585
    %v1614 = vpack.c.bf16 %v1591, %v1589
    %v1615 = vpack.c.bf16 %v1595, %v1593
    %v1616 = vld [vmem:[%s12] sm:$0x1]
    %v1618 = vlaneseq
    %v1619 = vshrl.u32 %v1618, 7
    %v1620 = vsub.s32 0, %v1619
    %v1621 = vrot.slane %v1616, %v1620
    %v1627 = vunpack.c.l.b16 %v1596
    %v1628 = vunpack.c.l.b16 %v1597
    %v1629 = vunpack.c.l.b16 %v1598
    %v1630 = vunpack.c.l.b16 %v1599
    %v1631 = vpack.c.b16 %v1628, %v1627
    %v1632 = vpack.c.b16 %v1630, %v1629
    %v1636 = vsel %vm727, %v1600, 0
    %v1639 = vsel %vm727, %v1601, 0
    %v1642 = vsel %vm727, %v1602, 0
    %v1645 = vsel %vm727, %v1603, 0
    %v1648 = vsel %vm727, %v1604, 0
    %v1651 = vsel %vm727, %v1605, 0
    %v1654 = vsel %vm727, %v1606, 0
    %v1657 = vsel %vm727, %v1607, 0
    %v1660 = vsel %vm727, %v1608, 0
    %v1663 = vsel %vm727, %v1609, 0
    %v1666 = vsel %vm727, %v1610, 0
    %v1669 = vsel %vm727, %v1611, 0
    %v1672 = vsel %vm727, %v1612, 0
    %v1675 = vsel %vm727, %v1613, 0
    %v1678 = vsel %vm727, %v1614, 0
    %v1681 = vsel %vm727, %v1615, 0
    %1683 = vmatprep.subr.bf16.mxu0 0
    %1684 = vmatpush1.bf16.msra.mxu0 %v1631
    %1685 = vmatprep.subr.bf16.mxu0 0
    %1686 = vmatpush1.bf16.msra.mxu0 %v1632
    %1687 = vmatprep.subr.bf16.mxu0 0
    %1688 = vmatpush1.bf16.msra.mxu0 0
    %1689 = vmatprep.subr.bf16.mxu0 0
    %1690 = vmatpush1.bf16.msra.mxu0 0
    %1691 = vmatprep.subr.bf16.mxu0 0
    %1692 = vmatpush1.bf16.msra.mxu0 0
    %1693 = vmatprep.subr.bf16.mxu0 0
    %1694 = vmatpush1.bf16.msra.mxu0 0
    %1695 = vmatprep.subr.bf16.mxu0 0
    %1696 = vmatpush1.bf16.msra.mxu0 0
    %1697 = vmatprep.subr.bf16.mxu0 0
    %1698 = vmatpush1.bf16.msra.mxu0 0
    %1699 = vmatprep.subr.bf16.mxu0 0
    %1700 = vmatpush1.bf16.msra.mxu0 0
    %1701 = vmatprep.subr.bf16.mxu0 0
    %1702 = vmatpush1.bf16.msra.mxu0 0
    %1703 = vmatprep.subr.bf16.mxu0 0
    %1704 = vmatpush1.bf16.msra.mxu0 0
    %1705 = vmatprep.subr.bf16.mxu0 0
    %1706 = vmatpush1.bf16.msra.mxu0 0
    %1707 = vmatprep.subr.bf16.mxu0 0
    %1708 = vmatpush1.bf16.msra.mxu0 0
    %1709 = vmatprep.subr.bf16.mxu0 0
    %1710 = vmatpush1.bf16.msra.mxu0 0
    %1711 = vmatprep.subr.bf16.mxu0 0
    %1712 = vmatpush1.bf16.msra.mxu0 0
    %1713 = vmatprep.subr.bf16.mxu0 0
    %1714 = vmatpush1.bf16.msra.mxu0 0
    %1715 = vmatprep.mubr.bf16.mxu0 0
    %1716 = vmatmul.mubr.bf16.gmra.mrb[0].mxu0 %v1636
    %v1717 = vpop.f32.mrb[0].mxu0
    %v1718 = vadd.f32 %v1621, %v1717
    %v1719 = vpop.f32.mrb[0].mxu0
    %v1720 = vpop.f32.mrb[0].mxu0
    %v1721 = vadd.f32 %v1621, %v1720
    %v1722 = vpop.f32.mrb[0].mxu0
    %1723 = vmatprep.mubr.bf16.mxu0 0
    %1724 = vmatmul.mubr.bf16.gmra.mrb[0].mxu0 %v1639
    %v1725 = vpop.f32.mrb[0].mxu0
    %v1726 = vadd.f32 %v1621, %v1725
    %v1727 = vpop.f32.mrb[0].mxu0
    %v1728 = vpop.f32.mrb[0].mxu0
    %v1729 = vadd.f32 %v1621, %v1728
    %v1730 = vpop.f32.mrb[0].mxu0
    %1731 = vmatprep.mubr.bf16.mxu0 0
    %1732 = vmatmul.mubr.bf16.gmra.mrb[0].mxu0 %v1642
    %v1733 = vpop.f32.mrb[0].mxu0
    %v1734 = vadd.f32 %v1621, %v1733
    %v1735 = vpop.f32.mrb[0].mxu0
    %v1736 = vpop.f32.mrb[0].mxu0
    %v1737 = vadd.f32 %v1621, %v1736
    %v1738 = vpop.f32.mrb[0].mxu0
    %1739 = vmatprep.mubr.bf16.mxu0 0
    %1740 = vmatmul.mubr.bf16.gmra.mrb[0].mxu0 %v1645
    %v1741 = vpop.f32.mrb[0].mxu0
    %v1742 = vadd.f32 %v1621, %v1741
    %v1743 = vpop.f32.mrb[0].mxu0
    %v1744 = vpop.f32.mrb[0].mxu0
    %v1745 = vadd.f32 %v1621, %v1744
    %v1746 = vpop.f32.mrb[0].mxu0
    %1747 = vmatprep.mubr.bf16.mxu0 0
    %1748 = vmatmul.mubr.bf16.gmra.mrb[0].mxu0 %v1648
    %v1749 = vpop.f32.mrb[0].mxu0
    %v1750 = vadd.f32 %v1621, %v1749
    %v1751 = vpop.f32.mrb[0].mxu0
    %v1752 = vpop.f32.mrb[0].mxu0
    %v1753 = vadd.f32 %v1621, %v1752
    %v1754 = vpop.f32.mrb[0].mxu0
    %1755 = vmatprep.mubr.bf16.mxu0 0
    %1756 = vmatmul.mubr.bf16.gmra.mrb[0].mxu0 %v1651
    %v1757 = vpop.f32.mrb[0].mxu0
    %v1758 = vadd.f32 %v1621, %v1757
    %v1759 = vpop.f32.mrb[0].mxu0
    %v1760 = vpop.f32.mrb[0].mxu0
    %v1761 = vadd.f32 %v1621, %v1760
    %v1762 = vpop.f32.mrb[0].mxu0
    %1763 = vmatprep.mubr.bf16.mxu0 0
    %1764 = vmatmul.mubr.bf16.gmra.mrb[0].mxu0 %v1654
    %v1765 = vpop.f32.mrb[0].mxu0
    %v1766 = vadd.f32 %v1621, %v1765
    %v1767 = vpop.f32.mrb[0].mxu0
    %v1768 = vpop.f32.mrb[0].mxu0
    %v1769 = vadd.f32 %v1621, %v1768
    %v1770 = vpop.f32.mrb[0].mxu0
    %1771 = vmatprep.mubr.bf16.mxu0 0
    %1772 = vmatmul.mubr.bf16.gmra.mrb[0].mxu0 %v1657
    %v1773 = vpop.f32.mrb[0].mxu0
    %v1774 = vadd.f32 %v1621, %v1773
    %v1775 = vpop.f32.mrb[0].mxu0
    %v1776 = vpop.f32.mrb[0].mxu0
    %v1777 = vadd.f32 %v1621, %v1776
    %v1778 = vpop.f32.mrb[0].mxu0
    %1779 = vmatprep.mubr.bf16.mxu0 0
    %1780 = vmatmul.mubr.bf16.gmra.mrb[0].mxu0 %v1660
    %v1781 = vpop.f32.mrb[0].mxu0
    %v1782 = vadd.f32 %v1621, %v1781
    %v1783 = vpop.f32.mrb[0].mxu0
    %v1784 = vpop.f32.mrb[0].mxu0
    %v1785 = vadd.f32 %v1621, %v1784
    %v1786 = vpop.f32.mrb[0].mxu0
    %1787 = vmatprep.mubr.bf16.mxu0 0
    %1788 = vmatmul.mubr.bf16.gmra.mrb[0].mxu0 %v1663
    %v1789 = vpop.f32.mrb[0].mxu0
    %v1790 = vadd.f32 %v1621, %v1789
    %v1791 = vpop.f32.mrb[0].mxu0
    %v1792 = vpop.f32.mrb[0].mxu0
    %v1793 = vadd.f32 %v1621, %v1792
    %v1794 = vpop.f32.mrb[0].mxu0
    %1795 = vmatprep.mubr.bf16.mxu0 0
    %1796 = vmatmul.mubr.bf16.gmra.mrb[0].mxu0 %v1666
    %v1797 = vpop.f32.mrb[0].mxu0
    %v1798 = vadd.f32 %v1621, %v1797
    %v1799 = vpop.f32.mrb[0].mxu0
    %v1800 = vpop.f32.mrb[0].mxu0
    %v1801 = vadd.f32 %v1621, %v1800
    %v1802 = vpop.f32.mrb[0].mxu0
    %1803 = vmatprep.mubr.bf16.mxu0 0
    %1804 = vmatmul.mubr.bf16.gmra.mrb[0].mxu0 %v1669
    %v1805 = vpop.f32.mrb[0].mxu0
    %v1806 = vadd.f32 %v1621, %v1805
    %v1807 = vpop.f32.mrb[0].mxu0
    %v1808 = vpop.f32.mrb[0].mxu0
    %v1809 = vadd.f32 %v1621, %v1808
    %v1810 = vpop.f32.mrb[0].mxu0
    %1811 = vmatprep.mubr.bf16.mxu0 0
    %1812 = vmatmul.mubr.bf16.gmra.mrb[0].mxu0 %v1672
    %v1813 = vpop.f32.mrb[0].mxu0
    %v1814 = vadd.f32 %v1621, %v1813
    %v1815 = vpop.f32.mrb[0].mxu0
    %v1816 = vpop.f32.mrb[0].mxu0
    %v1817 = vadd.f32 %v1621, %v1816
    %v1818 = vpop.f32.mrb[0].mxu0
    %1819 = vmatprep.mubr.bf16.mxu0 0
    %1820 = vmatmul.mubr.bf16.gmra.mrb[0].mxu0 %v1675
    %v1821 = vpop.f32.mrb[0].mxu0
    %v1822 = vadd.f32 %v1621, %v1821
    %v1823 = vpop.f32.mrb[0].mxu0
    %v1824 = vpop.f32.mrb[0].mxu0
    %v1825 = vadd.f32 %v1621, %v1824
    %v1826 = vpop.f32.mrb[0].mxu0
    %1827 = vmatprep.mubr.bf16.mxu0 0
    %1828 = vmatmul.mubr.bf16.gmra.mrb[0].mxu0 %v1678
    %v1829 = vpop.f32.mrb[0].mxu0
    %v1830 = vadd.f32 %v1621, %v1829
    %v1831 = vpop.f32.mrb[0].mxu0
    %v1832 = vpop.f32.mrb[0].mxu0
    %v1833 = vadd.f32 %v1621, %v1832
    %v1834 = vpop.f32.mrb[0].mxu0
    %1835 = vmatprep.mubr.bf16.mxu0 0
    %1836 = vmatmul.mubr.bf16.gmra.mrb[0].mxu0 %v1681
    %v1837 = vpop.f32.mrb[0].mxu0
    %v1838 = vadd.f32 %v1621, %v1837
    %v1839 = vpop.f32.mrb[0].mxu0
    %v1840 = vpop.f32.mrb[0].mxu0
    %v1841 = vadd.f32 %v1621, %v1840
    %v1842 = vpop.f32.mrb[0].mxu0
    %1843 = vdwg.mxu0
    %v1844 = vxor.u32 %v1718, 2147483648
    %v1845 = vxor.u32 %v1721, 2147483648
    %v1846 = vxor.u32 %v1726, 2147483648
    %v1847 = vxor.u32 %v1729, 2147483648
    %v1848 = vxor.u32 %v1734, 2147483648
    %v1849 = vxor.u32 %v1737, 2147483648
    %v1850 = vxor.u32 %v1742, 2147483648
    %v1851 = vxor.u32 %v1745, 2147483648
    %v1852 = vxor.u32 %v1750, 2147483648
    %v1853 = vxor.u32 %v1753, 2147483648
    %v1854 = vxor.u32 %v1758, 2147483648
    %v1855 = vxor.u32 %v1761, 2147483648
    %v1856 = vxor.u32 %v1766, 2147483648
    %v1857 = vxor.u32 %v1769, 2147483648
    %v1858 = vxor.u32 %v1774, 2147483648
    %v1859 = vxor.u32 %v1777, 2147483648
    %v1860 = vxor.u32 %v1782, 2147483648
    %v1861 = vxor.u32 %v1785, 2147483648
    %v1862 = vxor.u32 %v1790, 2147483648
    %v1863 = vxor.u32 %v1793, 2147483648
    %v1864 = vxor.u32 %v1798, 2147483648
    %v1865 = vxor.u32 %v1801, 2147483648
    %v1866 = vxor.u32 %v1806, 2147483648
    %v1867 = vxor.u32 %v1809, 2147483648
    %v1868 = vxor.u32 %v1814, 2147483648
    %v1869 = vxor.u32 %v1817, 2147483648
    %v1870 = vxor.u32 %v1822, 2147483648
    %v1871 = vxor.u32 %v1825, 2147483648
    %v1872 = vxor.u32 %v1830, 2147483648
    %v1873 = vxor.u32 %v1833, 2147483648
    %v1874 = vxor.u32 %v1838, 2147483648
    %v1875 = vxor.u32 %v1841, 2147483648
    %v1876 = vmul.f32 %v1844, 1.442695
    %v1877 = vpow.pop %v1876
    %v1878 = vmul.f32 %v1845, 1.442695
    %v1879 = vpow.pop %v1878
    %v1880 = vmul.f32 %v1846, 1.442695
    %v1881 = vpow.pop %v1880
    %v1882 = vmul.f32 %v1847, 1.442695
    %v1883 = vpow.pop %v1882
    %v1884 = vmul.f32 %v1848, 1.442695
    %v1885 = vpow.pop %v1884
    %v1886 = vmul.f32 %v1849, 1.442695
    %v1887 = vpow.pop %v1886
    %v1888 = vmul.f32 %v1850, 1.442695
    %v1889 = vpow.pop %v1888
    %v1890 = vmul.f32 %v1851, 1.442695
    %v1891 = vpow.pop %v1890
    %v1892 = vmul.f32 %v1852, 1.442695
    %v1893 = vpow.pop %v1892
    %v1894 = vmul.f32 %v1853, 1.442695
    %v1895 = vpow.pop %v1894
    %v1896 = vmul.f32 %v1854, 1.442695
    %v1897 = vpow.pop %v1896
    %v1898 = vmul.f32 %v1855, 1.442695
    %v1899 = vpow.pop %v1898
    %v1900 = vmul.f32 %v1856, 1.442695
    %v1901 = vpow.pop %v1900
    %v1902 = vmul.f32 %v1857, 1.442695
    %v1903 = vpow.pop %v1902
    %v1904 = vmul.f32 %v1858, 1.442695
    %v1905 = vpow.pop %v1904
    %v1906 = vmul.f32 %v1859, 1.442695
    %v1907 = vpow.pop %v1906
    %v1908 = vmul.f32 %v1860, 1.442695
    %v1909 = vpow.pop %v1908
    %v1910 = vmul.f32 %v1861, 1.442695
    %v1911 = vpow.pop %v1910
    %v1912 = vmul.f32 %v1862, 1.442695
    %v1913 = vpow.pop %v1912
    %v1914 = vmul.f32 %v1863, 1.442695
    %v1915 = vpow.pop %v1914
    %v1916 = vmul.f32 %v1864, 1.442695
    %v1917 = vpow.pop %v1916
    %v1918 = vmul.f32 %v1865, 1.442695
    %v1919 = vpow.pop %v1918
    %v1920 = vmul.f32 %v1866, 1.442695
    %v1921 = vpow.pop %v1920
    %v1922 = vmul.f32 %v1867, 1.442695
    %v1923 = vpow.pop %v1922
    %v1924 = vmul.f32 %v1868, 1.442695
    %v1925 = vpow.pop %v1924
    %v1926 = vmul.f32 %v1869, 1.442695
    %v1927 = vpow.pop %v1926
    %v1928 = vmul.f32 %v1870, 1.442695
    %v1929 = vpow.pop %v1928
    %v1930 = vmul.f32 %v1871, 1.442695
    %v1931 = vpow.pop %v1930
    %v1932 = vmul.f32 %v1872, 1.442695
    %v1933 = vpow.pop %v1932
    %v1934 = vmul.f32 %v1873, 1.442695
    %v1935 = vpow.pop %v1934
    %v1936 = vmul.f32 %v1874, 1.442695
    %v1937 = vpow.pop %v1936
    %v1938 = vmul.f32 %v1875, 1.442695
    %v1939 = vpow.pop %v1938
    %v1940 = vadd.f32 %v1877, 1.0
    %v1941 = vadd.f32 %v1879, 1.0
    %v1942 = vadd.f32 %v1881, 1.0
    %v1943 = vadd.f32 %v1883, 1.0
    %v1944 = vadd.f32 %v1885, 1.0
    %v1945 = vadd.f32 %v1887, 1.0
    %v1946 = vadd.f32 %v1889, 1.0
    %v1947 = vadd.f32 %v1891, 1.0
    %v1948 = vadd.f32 %v1893, 1.0
    %v1949 = vadd.f32 %v1895, 1.0
    %v1950 = vadd.f32 %v1897, 1.0
    %v1951 = vadd.f32 %v1899, 1.0
    %v1952 = vadd.f32 %v1901, 1.0
    %v1953 = vadd.f32 %v1903, 1.0
    %v1954 = vadd.f32 %v1905, 1.0
    %v1955 = vadd.f32 %v1907, 1.0
    %v1956 = vadd.f32 %v1909, 1.0
    %v1957 = vadd.f32 %v1911, 1.0
    %v1958 = vadd.f32 %v1913, 1.0
    %v1959 = vadd.f32 %v1915, 1.0
    %v1960 = vadd.f32 %v1917, 1.0
    %v1961 = vadd.f32 %v1919, 1.0
    %v1962 = vadd.f32 %v1921, 1.0
    %v1963 = vadd.f32 %v1923, 1.0
    %v1964 = vadd.f32 %v1925, 1.0
    %v1965 = vadd.f32 %v1927, 1.0
    %v1966 = vadd.f32 %v1929, 1.0
    %v1967 = vadd.f32 %v1931, 1.0
    %v1968 = vadd.f32 %v1933, 1.0
    %v1969 = vadd.f32 %v1935, 1.0
    %v1970 = vadd.f32 %v1937, 1.0
    %v1971 = vadd.f32 %v1939, 1.0
    %v1972 = vrcp.pop %v1940
    %v1973 = vmul.f32 1.0, %v1972
    %v1974 = vrcp.pop %v1941
    %v1975 = vmul.f32 1.0, %v1974
    %v1976 = vrcp.pop %v1942
    %v1977 = vmul.f32 1.0, %v1976
    %v1978 = vrcp.pop %v1943
    %v1979 = vmul.f32 1.0, %v1978
    %v1980 = vrcp.pop %v1944
    %v1981 = vmul.f32 1.0, %v1980
    %v1982 = vrcp.pop %v1945
    %v1983 = vmul.f32 1.0, %v1982
    %v1984 = vrcp.pop %v1946
    %v1985 = vmul.f32 1.0, %v1984
    %v1986 = vrcp.pop %v1947
    %v1987 = vmul.f32 1.0, %v1986
    %v1988 = vrcp.pop %v1948
    %v1989 = vmul.f32 1.0, %v1988
    %v1990 = vrcp.pop %v1949
    %v1991 = vmul.f32 1.0, %v1990
    %v1992 = vrcp.pop %v1950
    %v1993 = vmul.f32 1.0, %v1992
    %v1994 = vrcp.pop %v1951
    %v1995 = vmul.f32 1.0, %v1994
    %v1996 = vrcp.pop %v1952
    %v1997 = vmul.f32 1.0, %v1996
    %v1998 = vrcp.pop %v1953
    %v1999 = vmul.f32 1.0, %v1998
    %v2000 = vrcp.pop %v1954
    %v2001 = vmul.f32 1.0, %v2000
    %v2002 = vrcp.pop %v1955
    %v2003 = vmul.f32 1.0, %v2002
    %v2004 = vrcp.pop %v1956
    %v2005 = vmul.f32 1.0, %v2004
    %v2006 = vrcp.pop %v1957
    %v2007 = vmul.f32 1.0, %v2006
    %v2008 = vrcp.pop %v1958
    %v2009 = vmul.f32 1.0, %v2008
    %v2010 = vrcp.pop %v1959
    %v2011 = vmul.f32 1.0, %v2010
    %v2012 = vrcp.pop %v1960
    %v2013 = vmul.f32 1.0, %v2012
    %v2014 = vrcp.pop %v1961
    %v2015 = vmul.f32 1.0, %v2014
    %v2016 = vrcp.pop %v1962
    %v2017 = vmul.f32 1.0, %v2016
    %v2018 = vrcp.pop %v1963
    %v2019 = vmul.f32 1.0, %v2018
    %v2020 = vrcp.pop %v1964
    %v2021 = vmul.f32 1.0, %v2020
    %v2022 = vrcp.pop %v1965
    %v2023 = vmul.f32 1.0, %v2022
    %v2024 = vrcp.pop %v1966
    %v2025 = vmul.f32 1.0, %v2024
    %v2026 = vrcp.pop %v1967
    %v2027 = vmul.f32 1.0, %v2026
    %v2028 = vrcp.pop %v1968
    %v2029 = vmul.f32 1.0, %v2028
    %v2030 = vrcp.pop %v1969
    %v2031 = vmul.f32 1.0, %v2030
    %v2032 = vrcp.pop %v1970
    %v2033 = vmul.f32 1.0, %v2032
    %v2034 = vrcp.pop %v1971
    %v2035 = vmul.f32 1.0, %v2034
    %v2036 = vld [vmem:[%s13] sm:$0xf]
    %v2037 = vld [vmem:[%s13 + $0x4] sm:$0xf]
    %v2038 = vld [vmem:[%s13 + $0x8] sm:$0xf]
    %v2039 = vld [vmem:[%s13 + $0xc] sm:$0xf]
    %v2040 = vld [vmem:[%s13 + $0x10] sm:$0xf]
    %v2041 = vld [vmem:[%s13 + $0x14] sm:$0xf]
    %v2042 = vld [vmem:[%s13 + $0x18] sm:$0xf]
    %v2043 = vld [vmem:[%s13 + $0x1c] sm:$0xf]
    %v2044 = vld [vmem:[%s13 + $0x20] sm:$0xf]
    %v2045 = vld [vmem:[%s13 + $0x24] sm:$0xf]
    %v2046 = vld [vmem:[%s13 + $0x28] sm:$0xf]
    %v2047 = vld [vmem:[%s13 + $0x2c] sm:$0xf]
    %v2048 = vld [vmem:[%s13 + $0x30] sm:$0xf]
    %v2049 = vld [vmem:[%s13 + $0x34] sm:$0xf]
    %v2050 = vld [vmem:[%s13 + $0x38] sm:$0xf]
    %v2051 = vld [vmem:[%s13 + $0x3c] sm:$0xf]
    %v2052 = vpack.c.bf16 %v1534, %v1532
    %v2053 = vpack.c.bf16 %v1538, %v1536
    %v2054 = vpack.c.bf16 %v1542, %v1540
    %v2055 = vpack.c.bf16 %v1546, %v1544
    %v2056 = vpack.c.bf16 %v1550, %v1548
    %v2057 = vpack.c.bf16 %v1554, %v1552
    %v2058 = vpack.c.bf16 %v1558, %v1556
    %v2059 = vpack.c.bf16 %v1562, %v1560
    %v2060 = vpack.c.bf16 %v1566, %v1564
    %v2061 = vpack.c.bf16 %v1570, %v1568
    %v2062 = vpack.c.bf16 %v1574, %v1572
    %v2063 = vpack.c.bf16 %v1578, %v1576
    %v2064 = vpack.c.bf16 %v1582, %v1580
    %v2065 = vpack.c.bf16 %v1586, %v1584
    %v2066 = vpack.c.bf16 %v1590, %v1588
    %v2067 = vpack.c.bf16 %v1594, %v1592
    %v2068 = vld [vmem:[%s14] sm:$0x1]
    %v2070 = vlaneseq
    %v2071 = vshrl.u32 %v2070, 7
    %v2072 = vsub.s32 0, %v2071
    %v2073 = vrot.slane %v2068, %v2072
    %v2091 = vunpack.c.l.b16 %v2036
    %v2092 = vunpack.c.l.b16 %v2037
    %v2093 = vunpack.c.l.b16 %v2038
    %v2094 = vunpack.c.l.b16 %v2039
    %v2095 = vunpack.c.l.b16 %v2040
    %v2096 = vunpack.c.l.b16 %v2041
    %v2097 = vunpack.c.l.b16 %v2042
    %v2098 = vunpack.c.l.b16 %v2043
    %v2099 = vunpack.c.l.b16 %v2044
    %v2100 = vunpack.c.l.b16 %v2045
    %v2101 = vunpack.c.l.b16 %v2046
    %v2102 = vunpack.c.l.b16 %v2047
    %v2103 = vunpack.c.l.b16 %v2048
    %v2104 = vunpack.c.l.b16 %v2049
    %v2105 = vunpack.c.l.b16 %v2050
    %v2106 = vunpack.c.l.b16 %v2051
    %v2107 = vpack.c.b16 %v2092, %v2091
    %v2108 = vpack.c.b16 %v2094, %v2093
    %v2109 = vpack.c.b16 %v2096, %v2095
    %v2110 = vpack.c.b16 %v2098, %v2097
    %v2111 = vpack.c.b16 %v2100, %v2099
    %v2112 = vpack.c.b16 %v2102, %v2101
    %v2113 = vpack.c.b16 %v2104, %v2103
    %v2114 = vpack.c.b16 %v2106, %v2105
    %2123 = vmatprep.subr.bf16.mxu0 0
    %2124 = vmatpush1.bf16.msra.mxu0 %v2107
    %2125 = vmatprep.subr.bf16.mxu0 0
    %2126 = vmatpush1.bf16.msra.mxu0 %v2108
    %2127 = vmatprep.subr.bf16.mxu0 0
    %2128 = vmatpush1.bf16.msra.mxu0 %v2109
    %2129 = vmatprep.subr.bf16.mxu0 0
    %2130 = vmatpush1.bf16.msra.mxu0 %v2110
    %2131 = vmatprep.subr.bf16.mxu0 0
    %2132 = vmatpush1.bf16.msra.mxu0 %v2111
    %2133 = vmatprep.subr.bf16.mxu0 0
    %2134 = vmatpush1.bf16.msra.mxu0 %v2112
    %2135 = vmatprep.subr.bf16.mxu0 0
    %2136 = vmatpush1.bf16.msra.mxu0 %v2113
    %2137 = vmatprep.subr.bf16.mxu0 0
    %2138 = vmatpush1.bf16.msra.mxu0 %v2114
    %2139 = vmatprep.subr.bf16.mxu0 0
    %2140 = vmatpush1.bf16.msra.mxu0 0
    %2141 = vmatprep.subr.bf16.mxu0 0
    %2142 = vmatpush1.bf16.msra.mxu0 0
    %2143 = vmatprep.subr.bf16.mxu0 0
    %2144 = vmatpush1.bf16.msra.mxu0 0
    %2145 = vmatprep.subr.bf16.mxu0 0
    %2146 = vmatpush1.bf16.msra.mxu0 0
    %2147 = vmatprep.subr.bf16.mxu0 0
    %2148 = vmatpush1.bf16.msra.mxu0 0
    %2149 = vmatprep.subr.bf16.mxu0 0
    %2150 = vmatpush1.bf16.msra.mxu0 0
    %2151 = vmatprep.subr.bf16.mxu0 0
    %2152 = vmatpush1.bf16.msra.mxu0 0
    %2153 = vmatprep.subr.bf16.mxu0 0
    %2154 = vmatpush1.bf16.msra.mxu0 0
    %2155 = vmatprep.mubr.bf16.mxu0 0
    %2156 = vmatmul.mubr.bf16.gmra.mrb[0].mxu0 %v2052
    %v2157 = vpop.f32.mrb[0].mxu0
    %v2158 = vadd.f32 %v2073, %v2157
    %v2159 = vpop.f32.mrb[0].mxu0
    %v2160 = vpop.f32.mrb[0].mxu0
    %v2161 = vadd.f32 %v2073, %v2160
    %v2162 = vpop.f32.mrb[0].mxu0
    %2163 = vmatprep.mubr.bf16.mxu0 0
    %2164 = vmatmul.mubr.bf16.gmra.mrb[0].mxu0 %v2053
    %v2165 = vpop.f32.mrb[0].mxu0
    %v2166 = vadd.f32 %v2073, %v2165
    %v2167 = vpop.f32.mrb[0].mxu0
    %v2168 = vpop.f32.mrb[0].mxu0
    %v2169 = vadd.f32 %v2073, %v2168
    %v2170 = vpop.f32.mrb[0].mxu0
    %2171 = vmatprep.mubr.bf16.mxu0 0
    %2172 = vmatmul.mubr.bf16.gmra.mrb[0].mxu0 %v2054
    %v2173 = vpop.f32.mrb[0].mxu0
    %v2174 = vadd.f32 %v2073, %v2173
    %v2175 = vpop.f32.mrb[0].mxu0
    %v2176 = vpop.f32.mrb[0].mxu0
    %v2177 = vadd.f32 %v2073, %v2176
    %v2178 = vpop.f32.mrb[0].mxu0
    %2179 = vmatprep.mubr.bf16.mxu0 0
    %2180 = vmatmul.mubr.bf16.gmra.mrb[0].mxu0 %v2055
    %v2181 = vpop.f32.mrb[0].mxu0
    %v2182 = vadd.f32 %v2073, %v2181
    %v2183 = vpop.f32.mrb[0].mxu0
    %v2184 = vpop.f32.mrb[0].mxu0
    %v2185 = vadd.f32 %v2073, %v2184
    %v2186 = vpop.f32.mrb[0].mxu0
    %2187 = vmatprep.mubr.bf16.mxu0 0
    %2188 = vmatmul.mubr.bf16.gmra.mrb[0].mxu0 %v2056
    %v2189 = vpop.f32.mrb[0].mxu0
    %v2190 = vadd.f32 %v2073, %v2189
    %v2191 = vpop.f32.mrb[0].mxu0
    %v2192 = vpop.f32.mrb[0].mxu0
    %v2193 = vadd.f32 %v2073, %v2192
    %v2194 = vpop.f32.mrb[0].mxu0
    %2195 = vmatprep.mubr.bf16.mxu0 0
    %2196 = vmatmul.mubr.bf16.gmra.mrb[0].mxu0 %v2057
    %v2197 = vpop.f32.mrb[0].mxu0
    %v2198 = vadd.f32 %v2073, %v2197
    %v2199 = vpop.f32.mrb[0].mxu0
    %v2200 = vpop.f32.mrb[0].mxu0
    %v2201 = vadd.f32 %v2073, %v2200
    %v2202 = vpop.f32.mrb[0].mxu0
    %2203 = vmatprep.mubr.bf16.mxu0 0
    %2204 = vmatmul.mubr.bf16.gmra.mrb[0].mxu0 %v2058
    %v2205 = vpop.f32.mrb[0].mxu0
    %v2206 = vadd.f32 %v2073, %v2205
    %v2207 = vpop.f32.mrb[0].mxu0
    %v2208 = vpop.f32.mrb[0].mxu0
    %v2209 = vadd.f32 %v2073, %v2208
    %v2210 = vpop.f32.mrb[0].mxu0
    %2211 = vmatprep.mubr.bf16.mxu0 0
    %2212 = vmatmul.mubr.bf16.gmra.mrb[0].mxu0 %v2059
    %v2213 = vpop.f32.mrb[0].mxu0
    %v2214 = vadd.f32 %v2073, %v2213
    %v2215 = vpop.f32.mrb[0].mxu0
    %v2216 = vpop.f32.mrb[0].mxu0
    %v2217 = vadd.f32 %v2073, %v2216
    %v2218 = vpop.f32.mrb[0].mxu0
    %2219 = vmatprep.mubr.bf16.mxu0 0
    %2220 = vmatmul.mubr.bf16.gmra.mrb[0].mxu0 %v2060
    %v2221 = vpop.f32.mrb[0].mxu0
    %v2222 = vadd.f32 %v2073, %v2221
    %v2223 = vpop.f32.mrb[0].mxu0
    %v2224 = vpop.f32.mrb[0].mxu0
    %v2225 = vadd.f32 %v2073, %v2224
    %v2226 = vpop.f32.mrb[0].mxu0
    %2227 = vmatprep.mubr.bf16.mxu0 0
    %2228 = vmatmul.mubr.bf16.gmra.mrb[0].mxu0 %v2061
    %v2229 = vpop.f32.mrb[0].mxu0
    %v2230 = vadd.f32 %v2073, %v2229
    %v2231 = vpop.f32.mrb[0].mxu0
    %v2232 = vpop.f32.mrb[0].mxu0
    %v2233 = vadd.f32 %v2073, %v2232
    %v2234 = vpop.f32.mrb[0].mxu0
    %2235 = vmatprep.mubr.bf16.mxu0 0
    %2236 = vmatmul.mubr.bf16.gmra.mrb[0].mxu0 %v2062
    %v2237 = vpop.f32.mrb[0].mxu0
    %v2238 = vadd.f32 %v2073, %v2237
    %v2239 = vpop.f32.mrb[0].mxu0
    %v2240 = vpop.f32.mrb[0].mxu0
    %v2241 = vadd.f32 %v2073, %v2240
    %v2242 = vpop.f32.mrb[0].mxu0
    %2243 = vmatprep.mubr.bf16.mxu0 0
    %2244 = vmatmul.mubr.bf16.gmra.mrb[0].mxu0 %v2063
    %v2245 = vpop.f32.mrb[0].mxu0
    %v2246 = vadd.f32 %v2073, %v2245
    %v2247 = vpop.f32.mrb[0].mxu0
    %v2248 = vpop.f32.mrb[0].mxu0
    %v2249 = vadd.f32 %v2073, %v2248
    %v2250 = vpop.f32.mrb[0].mxu0
    %2251 = vmatprep.mubr.bf16.mxu0 0
    %2252 = vmatmul.mubr.bf16.gmra.mrb[0].mxu0 %v2064
    %v2253 = vpop.f32.mrb[0].mxu0
    %v2254 = vadd.f32 %v2073, %v2253
    %v2255 = vpop.f32.mrb[0].mxu0
    %v2256 = vpop.f32.mrb[0].mxu0
    %v2257 = vadd.f32 %v2073, %v2256
    %v2258 = vpop.f32.mrb[0].mxu0
    %2259 = vmatprep.mubr.bf16.mxu0 0
    %2260 = vmatmul.mubr.bf16.gmra.mrb[0].mxu0 %v2065
    %v2261 = vpop.f32.mrb[0].mxu0
    %v2262 = vadd.f32 %v2073, %v2261
    %v2263 = vpop.f32.mrb[0].mxu0
    %v2264 = vpop.f32.mrb[0].mxu0
    %v2265 = vadd.f32 %v2073, %v2264
    %v2266 = vpop.f32.mrb[0].mxu0
    %2267 = vmatprep.mubr.bf16.mxu0 0
    %2268 = vmatmul.mubr.bf16.gmra.mrb[0].mxu0 %v2066
    %v2269 = vpop.f32.mrb[0].mxu0
    %v2270 = vadd.f32 %v2073, %v2269
    %v2271 = vpop.f32.mrb[0].mxu0
    %v2272 = vpop.f32.mrb[0].mxu0
    %v2273 = vadd.f32 %v2073, %v2272
    %v2274 = vpop.f32.mrb[0].mxu0
    %2275 = vmatprep.mubr.bf16.mxu0 0
    %2276 = vmatmul.mubr.bf16.gmra.mrb[0].mxu0 %v2067
    %v2277 = vpop.f32.mrb[0].mxu0
    %v2278 = vadd.f32 %v2073, %v2277
    %v2279 = vpop.f32.mrb[0].mxu0
    %v2280 = vpop.f32.mrb[0].mxu0
    %v2281 = vadd.f32 %v2073, %v2280
    %v2282 = vpop.f32.mrb[0].mxu0
    %2283 = vdwg.mxu0
    %v2284 = vmax.f32 %v2158, 0.0
    %v2285 = vmax.f32 %v2161, 0.0
    %v2286 = vmax.f32 %v2166, 0.0
    %v2287 = vmax.f32 %v2169, 0.0
    %v2288 = vmax.f32 %v2174, 0.0
    %v2289 = vmax.f32 %v2177, 0.0
    %v2290 = vmax.f32 %v2182, 0.0
    %v2291 = vmax.f32 %v2185, 0.0
    %v2292 = vmax.f32 %v2190, 0.0
    %v2293 = vmax.f32 %v2193, 0.0
    %v2294 = vmax.f32 %v2198, 0.0
    %v2295 = vmax.f32 %v2201, 0.0
    %v2296 = vmax.f32 %v2206, 0.0
    %v2297 = vmax.f32 %v2209, 0.0
    %v2298 = vmax.f32 %v2214, 0.0
    %v2299 = vmax.f32 %v2217, 0.0
    %v2300 = vmax.f32 %v2222, 0.0
    %v2301 = vmax.f32 %v2225, 0.0
    %v2302 = vmax.f32 %v2230, 0.0
    %v2303 = vmax.f32 %v2233, 0.0
    %v2304 = vmax.f32 %v2238, 0.0
    %v2305 = vmax.f32 %v2241, 0.0
    %v2306 = vmax.f32 %v2246, 0.0
    %v2307 = vmax.f32 %v2249, 0.0
    %v2308 = vmax.f32 %v2254, 0.0
    %v2309 = vmax.f32 %v2257, 0.0
    %v2310 = vmax.f32 %v2262, 0.0
    %v2311 = vmax.f32 %v2265, 0.0
    %v2312 = vmax.f32 %v2270, 0.0
    %v2313 = vmax.f32 %v2273, 0.0
    %v2314 = vmax.f32 %v2278, 0.0
    %v2315 = vmax.f32 %v2281, 0.0
    %v2316 = vld [vmem:[%s15] sm:$0x7]
    %v2317 = vpack.c.bf16 %v2285, %v2284
    %v2318 = vpack.c.bf16 %v2287, %v2286
    %v2319 = vpack.c.bf16 %v2289, %v2288
    %v2320 = vpack.c.bf16 %v2291, %v2290
    %v2321 = vpack.c.bf16 %v2293, %v2292
    %v2322 = vpack.c.bf16 %v2295, %v2294
    %v2323 = vpack.c.bf16 %v2297, %v2296
    %v2324 = vpack.c.bf16 %v2299, %v2298
    %v2325 = vpack.c.bf16 %v2301, %v2300
    %v2326 = vpack.c.bf16 %v2303, %v2302
    %v2327 = vpack.c.bf16 %v2305, %v2304
    %v2328 = vpack.c.bf16 %v2307, %v2306
    %v2329 = vpack.c.bf16 %v2309, %v2308
    %v2330 = vpack.c.bf16 %v2311, %v2310
    %v2331 = vpack.c.bf16 %v2313, %v2312
    %v2332 = vpack.c.bf16 %v2315, %v2314
    %v2333 = vld [vmem:[%s16] sm:$0x1]
    %v2335 = vlaneseq
    %v2336 = vshrl.u32 %v2335, 7
    %v2337 = vsub.s32 0, %v2336
    %v2338 = vrot.slane %v2333, %v2337
    %vm2340 = vcmask 48128
    %v2342 = vsel %vm2340, %v2317, 0
    %v2345 = vsel %vm2340, %v2318, 0
    %v2348 = vsel %vm2340, %v2319, 0
    %v2351 = vsel %vm2340, %v2320, 0
    %v2354 = vsel %vm2340, %v2321, 0
    %v2357 = vsel %vm2340, %v2322, 0
    %v2360 = vsel %vm2340, %v2323, 0
    %v2363 = vsel %vm2340, %v2324, 0
    %v2366 = vsel %vm2340, %v2325, 0
    %v2369 = vsel %vm2340, %v2326, 0
    %v2372 = vsel %vm2340, %v2327, 0
    %v2375 = vsel %vm2340, %v2328, 0
    %v2378 = vsel %vm2340, %v2329, 0
    %v2381 = vsel %vm2340, %v2330, 0
    %v2384 = vsel %vm2340, %v2331, 0
    %v2387 = vsel %vm2340, %v2332, 0
    %v2390 = vsel %vm1053, %v2316, 0
    %2392 = vmatprep.subr.bf16.mxu0 0
    %2393 = vmatpush1.bf16.msra.mxu0 %v2390
    %2394 = vmatprep.subr.bf16.mxu0 0
    %2395 = vmatpush1.bf16.msra.mxu0 0
    %2396 = vmatprep.subr.bf16.mxu0 0
    %2397 = vmatpush1.bf16.msra.mxu0 0
    %2398 = vmatprep.subr.bf16.mxu0 0
    %2399 = vmatpush1.bf16.msra.mxu0 0
    %2400 = vmatprep.subr.bf16.mxu0 0
    %2401 = vmatpush1.bf16.msra.mxu0 0
    %2402 = vmatprep.subr.bf16.mxu0 0
    %2403 = vmatpush1.bf16.msra.mxu0 0
    %2404 = vmatprep.subr.bf16.mxu0 0
    %2405 = vmatpush1.bf16.msra.mxu0 0
    %2406 = vmatprep.subr.bf16.mxu0 0
    %2407 = vmatpush1.bf16.msra.mxu0 0
    %2408 = vmatprep.subr.bf16.mxu0 0
    %2409 = vmatpush1.bf16.msra.mxu0 0
    %2410 = vmatprep.subr.bf16.mxu0 0
    %2411 = vmatpush1.bf16.msra.mxu0 0
    %2412 = vmatprep.subr.bf16.mxu0 0
    %2413 = vmatpush1.bf16.msra.mxu0 0
    %2414 = vmatprep.subr.bf16.mxu0 0
    %2415 = vmatpush1.bf16.msra.mxu0 0
    %2416 = vmatprep.subr.bf16.mxu0 0
    %2417 = vmatpush1.bf16.msra.mxu0 0
    %2418 = vmatprep.subr.bf16.mxu0 0
    %2419 = vmatpush1.bf16.msra.mxu0 0
    %2420 = vmatprep.subr.bf16.mxu0 0
    %2421 = vmatpush1.bf16.msra.mxu0 0
    %2422 = vmatprep.subr.bf16.mxu0 0
    %2423 = vmatpush1.bf16.msra.mxu0 0
    %2424 = vmatprep.mubr.bf16.mxu0 0
    %2425 = vmatmul.mubr.bf16.gmra.mrb[0].mxu0 %v2342
    %v2426 = vpop.f32.mrb[0].mxu0
    %v2427 = vadd.f32 %v2338, %v2426
    %v2428 = vpop.f32.mrb[0].mxu0
    %v2429 = vpop.f32.mrb[0].mxu0
    %v2430 = vadd.f32 %v2338, %v2429
    %v2431 = vpop.f32.mrb[0].mxu0
    %2432 = vmatprep.mubr.bf16.mxu0 0
    %2433 = vmatmul.mubr.bf16.gmra.mrb[0].mxu0 %v2345
    %v2434 = vpop.f32.mrb[0].mxu0
    %v2435 = vadd.f32 %v2338, %v2434
    %v2436 = vpop.f32.mrb[0].mxu0
    %v2437 = vpop.f32.mrb[0].mxu0
    %v2438 = vadd.f32 %v2338, %v2437
    %v2439 = vpop.f32.mrb[0].mxu0
    %2440 = vmatprep.mubr.bf16.mxu0 0
    %2441 = vmatmul.mubr.bf16.gmra.mrb[0].mxu0 %v2348
    %v2442 = vpop.f32.mrb[0].mxu0
    %v2443 = vadd.f32 %v2338, %v2442
    %v2444 = vpop.f32.mrb[0].mxu0
    %v2445 = vpop.f32.mrb[0].mxu0
    %v2446 = vadd.f32 %v2338, %v2445
    %v2447 = vpop.f32.mrb[0].mxu0
    %2448 = vmatprep.mubr.bf16.mxu0 0
    %2449 = vmatmul.mubr.bf16.gmra.mrb[0].mxu0 %v2351
    %v2450 = vpop.f32.mrb[0].mxu0
    %v2451 = vadd.f32 %v2338, %v2450
    %v2452 = vpop.f32.mrb[0].mxu0
    %v2453 = vpop.f32.mrb[0].mxu0
    %v2454 = vadd.f32 %v2338, %v2453
    %v2455 = vpop.f32.mrb[0].mxu0
    %2456 = vmatprep.mubr.bf16.mxu0 0
    %2457 = vmatmul.mubr.bf16.gmra.mrb[0].mxu0 %v2354
    %v2458 = vpop.f32.mrb[0].mxu0
    %v2459 = vadd.f32 %v2338, %v2458
    %v2460 = vpop.f32.mrb[0].mxu0
    %v2461 = vpop.f32.mrb[0].mxu0
    %v2462 = vadd.f32 %v2338, %v2461
    %v2463 = vpop.f32.mrb[0].mxu0
    %2464 = vmatprep.mubr.bf16.mxu0 0
    %2465 = vmatmul.mubr.bf16.gmra.mrb[0].mxu0 %v2357
    %v2466 = vpop.f32.mrb[0].mxu0
    %v2467 = vadd.f32 %v2338, %v2466
    %v2468 = vpop.f32.mrb[0].mxu0
    %v2469 = vpop.f32.mrb[0].mxu0
    %v2470 = vadd.f32 %v2338, %v2469
    %v2471 = vpop.f32.mrb[0].mxu0
    %2472 = vmatprep.mubr.bf16.mxu0 0
    %2473 = vmatmul.mubr.bf16.gmra.mrb[0].mxu0 %v2360
    %v2474 = vpop.f32.mrb[0].mxu0
    %v2475 = vadd.f32 %v2338, %v2474
    %v2476 = vpop.f32.mrb[0].mxu0
    %v2477 = vpop.f32.mrb[0].mxu0
    %v2478 = vadd.f32 %v2338, %v2477
    %v2479 = vpop.f32.mrb[0].mxu0
    %2480 = vmatprep.mubr.bf16.mxu0 0
    %2481 = vmatmul.mubr.bf16.gmra.mrb[0].mxu0 %v2363
    %v2482 = vpop.f32.mrb[0].mxu0
    %v2483 = vadd.f32 %v2338, %v2482
    %v2484 = vpop.f32.mrb[0].mxu0
    %v2485 = vpop.f32.mrb[0].mxu0
    %v2486 = vadd.f32 %v2338, %v2485
    %v2487 = vpop.f32.mrb[0].mxu0
    %2488 = vmatprep.mubr.bf16.mxu0 0
    %2489 = vmatmul.mubr.bf16.gmra.mrb[0].mxu0 %v2366
    %v2490 = vpop.f32.mrb[0].mxu0
    %v2491 = vadd.f32 %v2338, %v2490
    %v2492 = vpop.f32.mrb[0].mxu0
    %v2493 = vpop.f32.mrb[0].mxu0
    %v2494 = vadd.f32 %v2338, %v2493
    %v2495 = vpop.f32.mrb[0].mxu0
    %2496 = vmatprep.mubr.bf16.mxu0 0
    %2497 = vmatmul.mubr.bf16.gmra.mrb[0].mxu0 %v2369
    %v2498 = vpop.f32.mrb[0].mxu0
    %v2499 = vadd.f32 %v2338, %v2498
    %v2500 = vpop.f32.mrb[0].mxu0
    %v2501 = vpop.f32.mrb[0].mxu0
    %v2502 = vadd.f32 %v2338, %v2501
    %v2503 = vpop.f32.mrb[0].mxu0
    %2504 = vmatprep.mubr.bf16.mxu0 0
    %2505 = vmatmul.mubr.bf16.gmra.mrb[0].mxu0 %v2372
    %v2506 = vpop.f32.mrb[0].mxu0
    %v2507 = vadd.f32 %v2338, %v2506
    %v2508 = vpop.f32.mrb[0].mxu0
    %v2509 = vpop.f32.mrb[0].mxu0
    %v2510 = vadd.f32 %v2338, %v2509
    %v2511 = vpop.f32.mrb[0].mxu0
    %2512 = vmatprep.mubr.bf16.mxu0 0
    %2513 = vmatmul.mubr.bf16.gmra.mrb[0].mxu0 %v2375
    %v2514 = vpop.f32.mrb[0].mxu0
    %v2515 = vadd.f32 %v2338, %v2514
    %v2516 = vpop.f32.mrb[0].mxu0
    %v2517 = vpop.f32.mrb[0].mxu0
    %v2518 = vadd.f32 %v2338, %v2517
    %v2519 = vpop.f32.mrb[0].mxu0
    %2520 = vmatprep.mubr.bf16.mxu0 0
    %2521 = vmatmul.mubr.bf16.gmra.mrb[0].mxu0 %v2378
    %v2522 = vpop.f32.mrb[0].mxu0
    %v2523 = vadd.f32 %v2338, %v2522
    %v2524 = vpop.f32.mrb[0].mxu0
    %v2525 = vpop.f32.mrb[0].mxu0
    %v2526 = vadd.f32 %v2338, %v2525
    %v2527 = vpop.f32.mrb[0].mxu0
    %2528 = vmatprep.mubr.bf16.mxu0 0
    %2529 = vmatmul.mubr.bf16.gmra.mrb[0].mxu0 %v2381
    %v2530 = vpop.f32.mrb[0].mxu0
    %v2531 = vadd.f32 %v2338, %v2530
    %v2532 = vpop.f32.mrb[0].mxu0
    %v2533 = vpop.f32.mrb[0].mxu0
    %v2534 = vadd.f32 %v2338, %v2533
    %v2535 = vpop.f32.mrb[0].mxu0
    %2536 = vmatprep.mubr.bf16.mxu0 0
    %2537 = vmatmul.mubr.bf16.gmra.mrb[0].mxu0 %v2384
    %v2538 = vpop.f32.mrb[0].mxu0
    %v2539 = vadd.f32 %v2338, %v2538
    %v2540 = vpop.f32.mrb[0].mxu0
    %v2541 = vpop.f32.mrb[0].mxu0
    %v2542 = vadd.f32 %v2338, %v2541
    %v2543 = vpop.f32.mrb[0].mxu0
    %2544 = vmatprep.mubr.bf16.mxu0 0
    %2545 = vmatmul.mubr.bf16.gmra.mrb[0].mxu0 %v2387
    %v2546 = vpop.f32.mrb[0].mxu0
    %v2547 = vadd.f32 %v2338, %v2546
    %v2548 = vpop.f32.mrb[0].mxu0
    %v2549 = vpop.f32.mrb[0].mxu0
    %v2550 = vadd.f32 %v2338, %v2549
    %v2551 = vpop.f32.mrb[0].mxu0
    %2552 = vdwg.mxu0
    %v2553 = vmax.f32 %v2427, 0.0
    %v2554 = vmax.f32 %v2430, 0.0
    %v2555 = vmax.f32 %v2435, 0.0
    %v2556 = vmax.f32 %v2438, 0.0
    %v2557 = vmax.f32 %v2443, 0.0
    %v2558 = vmax.f32 %v2446, 0.0
    %v2559 = vmax.f32 %v2451, 0.0
    %v2560 = vmax.f32 %v2454, 0.0
    %v2561 = vmax.f32 %v2459, 0.0
    %v2562 = vmax.f32 %v2462, 0.0
    %v2563 = vmax.f32 %v2467, 0.0
    %v2564 = vmax.f32 %v2470, 0.0
    %v2565 = vmax.f32 %v2475, 0.0
    %v2566 = vmax.f32 %v2478, 0.0
    %v2567 = vmax.f32 %v2483, 0.0
    %v2568 = vmax.f32 %v2486, 0.0
    %v2569 = vmax.f32 %v2491, 0.0
    %v2570 = vmax.f32 %v2494, 0.0
    %v2571 = vmax.f32 %v2499, 0.0
    %v2572 = vmax.f32 %v2502, 0.0
    %v2573 = vmax.f32 %v2507, 0.0
    %v2574 = vmax.f32 %v2510, 0.0
    %v2575 = vmax.f32 %v2515, 0.0
    %v2576 = vmax.f32 %v2518, 0.0
    %v2577 = vmax.f32 %v2523, 0.0
    %v2578 = vmax.f32 %v2526, 0.0
    %v2579 = vmax.f32 %v2531, 0.0
    %v2580 = vmax.f32 %v2534, 0.0
    %v2581 = vmax.f32 %v2539, 0.0
    %v2582 = vmax.f32 %v2542, 0.0
    %v2583 = vmax.f32 %v2547, 0.0
    %v2584 = vmax.f32 %v2550, 0.0
    %v2585 = vld [vmem:[%s17] sm:$0xf]
    %v2586 = vld [vmem:[%s17 + $0x4] sm:$0x1]
    %v2587 = vpack.c.bf16 %v2554, %v2553
    %v2588 = vpack.c.bf16 %v2556, %v2555
    %v2589 = vpack.c.bf16 %v2558, %v2557
    %v2590 = vpack.c.bf16 %v2560, %v2559
    %v2591 = vpack.c.bf16 %v2562, %v2561
    %v2592 = vpack.c.bf16 %v2564, %v2563
    %v2593 = vpack.c.bf16 %v2566, %v2565
    %v2594 = vpack.c.bf16 %v2568, %v2567
    %v2595 = vpack.c.bf16 %v2570, %v2569
    %v2596 = vpack.c.bf16 %v2572, %v2571
    %v2597 = vpack.c.bf16 %v2574, %v2573
    %v2598 = vpack.c.bf16 %v2576, %v2575
    %v2599 = vpack.c.bf16 %v2578, %v2577
    %v2600 = vpack.c.bf16 %v2580, %v2579
    %v2601 = vpack.c.bf16 %v2582, %v2581
    %v2602 = vpack.c.bf16 %v2584, %v2583
    %v2603 = vld [vmem:[%s18] sm:$0x1]
    %v2605 = vlaneseq
    %v2606 = vshrl.u32 %v2605, 7
    %v2607 = vsub.s32 0, %v2606
    %v2608 = vrot.slane %v2603, %v2607
    %v2612 = vunpack.c.l.b16 %v2585
    %v2613 = vunpack.c.l.b16 %v2586
    %v2614 = vpack.c.b16 %v2613, %v2612
    %vm2615 = vcmask 72704
    %v2617 = vsel %vm2615, %v2587, 0
    %v2620 = vsel %vm2615, %v2588, 0
    %v2623 = vsel %vm2615, %v2589, 0
    %v2626 = vsel %vm2615, %v2590, 0
    %v2629 = vsel %vm2615, %v2591, 0
    %v2632 = vsel %vm2615, %v2592, 0
    %v2635 = vsel %vm2615, %v2593, 0
    %v2638 = vsel %vm2615, %v2594, 0
    %v2641 = vsel %vm2615, %v2595, 0
    %v2644 = vsel %vm2615, %v2596, 0
    %v2647 = vsel %vm2615, %v2597, 0
    %v2650 = vsel %vm2615, %v2598, 0
    %v2653 = vsel %vm2615, %v2599, 0
    %v2656 = vsel %vm2615, %v2600, 0
    %v2659 = vsel %vm2615, %v2601, 0
    %v2662 = vsel %vm2615, %v2602, 0
    %vm2664 = vcmask 1043456
    %vm2665 = vcmask 1044480
    %v2666 = vsel %vm2664, 4294967295, 65535
    %v2667 = vsel %vm2665, %v2666, 0
    %v2669 = vand.u32 %v2614, %v2667
    %2671 = vmatprep.subr.bf16.mxu0 0
    %2672 = vmatpush1.bf16.msra.mxu0 %v2669
    %2673 = vmatprep.subr.bf16.mxu0 0
    %2674 = vmatpush1.bf16.msra.mxu0 0
    %2675 = vmatprep.subr.bf16.mxu0 0
    %2676 = vmatpush1.bf16.msra.mxu0 0
    %2677 = vmatprep.subr.bf16.mxu0 0
    %2678 = vmatpush1.bf16.msra.mxu0 0
    %2679 = vmatprep.subr.bf16.mxu0 0
    %2680 = vmatpush1.bf16.msra.mxu0 0
    %2681 = vmatprep.subr.bf16.mxu0 0
    %2682 = vmatpush1.bf16.msra.mxu0 0
    %2683 = vmatprep.subr.bf16.mxu0 0
    %2684 = vmatpush1.bf16.msra.mxu0 0
    %2685 = vmatprep.subr.bf16.mxu0 0
    %2686 = vmatpush1.bf16.msra.mxu0 0
    %2687 = vmatprep.subr.bf16.mxu0 0
    %2688 = vmatpush1.bf16.msra.mxu0 0
    %2689 = vmatprep.subr.bf16.mxu0 0
    %2690 = vmatpush1.bf16.msra.mxu0 0
    %2691 = vmatprep.subr.bf16.mxu0 0
    %2692 = vmatpush1.bf16.msra.mxu0 0
    %2693 = vmatprep.subr.bf16.mxu0 0
    %2694 = vmatpush1.bf16.msra.mxu0 0
    %2695 = vmatprep.subr.bf16.mxu0 0
    %2696 = vmatpush1.bf16.msra.mxu0 0
    %2697 = vmatprep.subr.bf16.mxu0 0
    %2698 = vmatpush1.bf16.msra.mxu0 0
    %2699 = vmatprep.subr.bf16.mxu0 0
    %2700 = vmatpush1.bf16.msra.mxu0 0
    %2701 = vmatprep.subr.bf16.mxu0 0
    %2702 = vmatpush1.bf16.msra.mxu0 0
    %2703 = vmatprep.mubr.bf16.mxu0 0
    %2704 = vmatmul.mubr.bf16.gmra.mrb[0].mxu0 %v2617
    %v2705 = vpop.f32.mrb[0].mxu0
    %v2706 = vadd.f32 %v2608, %v2705
    %v2707 = vpop.f32.mrb[0].mxu0
    %v2708 = vpop.f32.mrb[0].mxu0
    %v2709 = vadd.f32 %v2608, %v2708
    %v2710 = vpop.f32.mrb[0].mxu0
    %2711 = vmatprep.mubr.bf16.mxu0 0
    %2712 = vmatmul.mubr.bf16.gmra.mrb[0].mxu0 %v2620
    %v2713 = vpop.f32.mrb[0].mxu0
    %v2714 = vadd.f32 %v2608, %v2713
    %v2715 = vpop.f32.mrb[0].mxu0
    %v2716 = vpop.f32.mrb[0].mxu0
    %v2717 = vadd.f32 %v2608, %v2716
    %v2718 = vpop.f32.mrb[0].mxu0
    %2719 = vmatprep.mubr.bf16.mxu0 0
    %2720 = vmatmul.mubr.bf16.gmra.mrb[0].mxu0 %v2623
    %v2721 = vpop.f32.mrb[0].mxu0
    %v2722 = vadd.f32 %v2608, %v2721
    %v2723 = vpop.f32.mrb[0].mxu0
    %v2724 = vpop.f32.mrb[0].mxu0
    %v2725 = vadd.f32 %v2608, %v2724
    %v2726 = vpop.f32.mrb[0].mxu0
    %2727 = vmatprep.mubr.bf16.mxu0 0
    %2728 = vmatmul.mubr.bf16.gmra.mrb[0].mxu0 %v2626
    %v2729 = vpop.f32.mrb[0].mxu0
    %v2730 = vadd.f32 %v2608, %v2729
    %v2731 = vpop.f32.mrb[0].mxu0
    %v2732 = vpop.f32.mrb[0].mxu0
    %v2733 = vadd.f32 %v2608, %v2732
    %v2734 = vpop.f32.mrb[0].mxu0
    %2735 = vmatprep.mubr.bf16.mxu0 0
    %2736 = vmatmul.mubr.bf16.gmra.mrb[0].mxu0 %v2629
    %v2737 = vpop.f32.mrb[0].mxu0
    %v2738 = vadd.f32 %v2608, %v2737
    %v2739 = vpop.f32.mrb[0].mxu0
    %v2740 = vpop.f32.mrb[0].mxu0
    %v2741 = vadd.f32 %v2608, %v2740
    %v2742 = vpop.f32.mrb[0].mxu0
    %2743 = vmatprep.mubr.bf16.mxu0 0
    %2744 = vmatmul.mubr.bf16.gmra.mrb[0].mxu0 %v2632
    %v2745 = vpop.f32.mrb[0].mxu0
    %v2746 = vadd.f32 %v2608, %v2745
    %v2747 = vpop.f32.mrb[0].mxu0
    %v2748 = vpop.f32.mrb[0].mxu0
    %v2749 = vadd.f32 %v2608, %v2748
    %v2750 = vpop.f32.mrb[0].mxu0
    %2751 = vmatprep.mubr.bf16.mxu0 0
    %2752 = vmatmul.mubr.bf16.gmra.mrb[0].mxu0 %v2635
    %v2753 = vpop.f32.mrb[0].mxu0
    %v2754 = vadd.f32 %v2608, %v2753
    %v2755 = vpop.f32.mrb[0].mxu0
    %v2756 = vpop.f32.mrb[0].mxu0
    %v2757 = vadd.f32 %v2608, %v2756
    %v2758 = vpop.f32.mrb[0].mxu0
    %2759 = vmatprep.mubr.bf16.mxu0 0
    %2760 = vmatmul.mubr.bf16.gmra.mrb[0].mxu0 %v2638
    %v2761 = vpop.f32.mrb[0].mxu0
    %v2762 = vadd.f32 %v2608, %v2761
    %v2763 = vpop.f32.mrb[0].mxu0
    %v2764 = vpop.f32.mrb[0].mxu0
    %v2765 = vadd.f32 %v2608, %v2764
    %v2766 = vpop.f32.mrb[0].mxu0
    %2767 = vmatprep.mubr.bf16.mxu0 0
    %2768 = vmatmul.mubr.bf16.gmra.mrb[0].mxu0 %v2641
    %v2769 = vpop.f32.mrb[0].mxu0
    %v2770 = vadd.f32 %v2608, %v2769
    %v2771 = vpop.f32.mrb[0].mxu0
    %v2772 = vpop.f32.mrb[0].mxu0
    %v2773 = vadd.f32 %v2608, %v2772
    %v2774 = vpop.f32.mrb[0].mxu0
    %2775 = vmatprep.mubr.bf16.mxu0 0
    %2776 = vmatmul.mubr.bf16.gmra.mrb[0].mxu0 %v2644
    %v2777 = vpop.f32.mrb[0].mxu0
    %v2778 = vadd.f32 %v2608, %v2777
    %v2779 = vpop.f32.mrb[0].mxu0
    %v2780 = vpop.f32.mrb[0].mxu0
    %v2781 = vadd.f32 %v2608, %v2780
    %v2782 = vpop.f32.mrb[0].mxu0
    %2783 = vmatprep.mubr.bf16.mxu0 0
    %2784 = vmatmul.mubr.bf16.gmra.mrb[0].mxu0 %v2647
    %v2785 = vpop.f32.mrb[0].mxu0
    %v2786 = vadd.f32 %v2608, %v2785
    %v2787 = vpop.f32.mrb[0].mxu0
    %v2788 = vpop.f32.mrb[0].mxu0
    %v2789 = vadd.f32 %v2608, %v2788
    %v2790 = vpop.f32.mrb[0].mxu0
    %2791 = vmatprep.mubr.bf16.mxu0 0
    %2792 = vmatmul.mubr.bf16.gmra.mrb[0].mxu0 %v2650
    %v2793 = vpop.f32.mrb[0].mxu0
    %v2794 = vadd.f32 %v2608, %v2793
    %v2795 = vpop.f32.mrb[0].mxu0
    %v2796 = vpop.f32.mrb[0].mxu0
    %v2797 = vadd.f32 %v2608, %v2796
    %v2798 = vpop.f32.mrb[0].mxu0
    %2799 = vmatprep.mubr.bf16.mxu0 0
    %2800 = vmatmul.mubr.bf16.gmra.mrb[0].mxu0 %v2653
    %v2801 = vpop.f32.mrb[0].mxu0
    %v2802 = vadd.f32 %v2608, %v2801
    %v2803 = vpop.f32.mrb[0].mxu0
    %v2804 = vpop.f32.mrb[0].mxu0
    %v2805 = vadd.f32 %v2608, %v2804
    %v2806 = vpop.f32.mrb[0].mxu0
    %2807 = vmatprep.mubr.bf16.mxu0 0
    %2808 = vmatmul.mubr.bf16.gmra.mrb[0].mxu0 %v2656
    %v2809 = vpop.f32.mrb[0].mxu0
    %v2810 = vadd.f32 %v2608, %v2809
    %v2811 = vpop.f32.mrb[0].mxu0
    %v2812 = vpop.f32.mrb[0].mxu0
    %v2813 = vadd.f32 %v2608, %v2812
    %v2814 = vpop.f32.mrb[0].mxu0
    %2815 = vmatprep.mubr.bf16.mxu0 0
    %2816 = vmatmul.mubr.bf16.gmra.mrb[0].mxu0 %v2659
    %v2817 = vpop.f32.mrb[0].mxu0
    %v2818 = vadd.f32 %v2608, %v2817
    %v2819 = vpop.f32.mrb[0].mxu0
    %v2820 = vpop.f32.mrb[0].mxu0
    %v2821 = vadd.f32 %v2608, %v2820
    %v2822 = vpop.f32.mrb[0].mxu0
    %2823 = vmatprep.mubr.bf16.mxu0 0
    %2824 = vmatmul.mubr.bf16.gmra.mrb[0].mxu0 %v2662
    %v2825 = vpop.f32.mrb[0].mxu0
    %v2826 = vadd.f32 %v2608, %v2825
    %v2827 = vpop.f32.mrb[0].mxu0
    %v2828 = vpop.f32.mrb[0].mxu0
    %v2829 = vadd.f32 %v2608, %v2828
    %v2830 = vpop.f32.mrb[0].mxu0
    %2831 = vdwg.mxu0
    %v2832 = vxor.u32 %v2706, 2147483648
    %v2833 = vxor.u32 %v2709, 2147483648
    %v2834 = vxor.u32 %v2714, 2147483648
    %v2835 = vxor.u32 %v2717, 2147483648
    %v2836 = vxor.u32 %v2722, 2147483648
    %v2837 = vxor.u32 %v2725, 2147483648
    %v2838 = vxor.u32 %v2730, 2147483648
    %v2839 = vxor.u32 %v2733, 2147483648
    %v2840 = vxor.u32 %v2738, 2147483648
    %v2841 = vxor.u32 %v2741, 2147483648
    %v2842 = vxor.u32 %v2746, 2147483648
    %v2843 = vxor.u32 %v2749, 2147483648
    %v2844 = vxor.u32 %v2754, 2147483648
    %v2845 = vxor.u32 %v2757, 2147483648
    %v2846 = vxor.u32 %v2762, 2147483648
    %v2847 = vxor.u32 %v2765, 2147483648
    %v2848 = vxor.u32 %v2770, 2147483648
    %v2849 = vxor.u32 %v2773, 2147483648
    %v2850 = vxor.u32 %v2778, 2147483648
    %v2851 = vxor.u32 %v2781, 2147483648
    %v2852 = vxor.u32 %v2786, 2147483648
    %v2853 = vxor.u32 %v2789, 2147483648
    %v2854 = vxor.u32 %v2794, 2147483648
    %v2855 = vxor.u32 %v2797, 2147483648
    %v2856 = vxor.u32 %v2802, 2147483648
    %v2857 = vxor.u32 %v2805, 2147483648
    %v2858 = vxor.u32 %v2810, 2147483648
    %v2859 = vxor.u32 %v2813, 2147483648
    %v2860 = vxor.u32 %v2818, 2147483648
    %v2861 = vxor.u32 %v2821, 2147483648
    %v2862 = vxor.u32 %v2826, 2147483648
    %v2863 = vxor.u32 %v2829, 2147483648
    %v2864 = vmul.f32 %v2832, 1.442695
    %v2865 = vpow.pop %v2864
    %v2866 = vmul.f32 %v2833, 1.442695
    %v2867 = vpow.pop %v2866
    %v2868 = vmul.f32 %v2834, 1.442695
    %v2869 = vpow.pop %v2868
    %v2870 = vmul.f32 %v2835, 1.442695
    %v2871 = vpow.pop %v2870
    %v2872 = vmul.f32 %v2836, 1.442695
    %v2873 = vpow.pop %v2872
    %v2874 = vmul.f32 %v2837, 1.442695
    %v2875 = vpow.pop %v2874
    %v2876 = vmul.f32 %v2838, 1.442695
    %v2877 = vpow.pop %v2876
    %v2878 = vmul.f32 %v2839, 1.442695
    %v2879 = vpow.pop %v2878
    %v2880 = vmul.f32 %v2840, 1.442695
    %v2881 = vpow.pop %v2880
    %v2882 = vmul.f32 %v2841, 1.442695
    %v2883 = vpow.pop %v2882
    %v2884 = vmul.f32 %v2842, 1.442695
    %v2885 = vpow.pop %v2884
    %v2886 = vmul.f32 %v2843, 1.442695
    %v2887 = vpow.pop %v2886
    %v2888 = vmul.f32 %v2844, 1.442695
    %v2889 = vpow.pop %v2888
    %v2890 = vmul.f32 %v2845, 1.442695
    %v2891 = vpow.pop %v2890
    %v2892 = vmul.f32 %v2846, 1.442695
    %v2893 = vpow.pop %v2892
    %v2894 = vmul.f32 %v2847, 1.442695
    %v2895 = vpow.pop %v2894
    %v2896 = vmul.f32 %v2848, 1.442695
    %v2897 = vpow.pop %v2896
    %v2898 = vmul.f32 %v2849, 1.442695
    %v2899 = vpow.pop %v2898
    %v2900 = vmul.f32 %v2850, 1.442695
    %v2901 = vpow.pop %v2900
    %v2902 = vmul.f32 %v2851, 1.442695
    %v2903 = vpow.pop %v2902
    %v2904 = vmul.f32 %v2852, 1.442695
    %v2905 = vpow.pop %v2904
    %v2906 = vmul.f32 %v2853, 1.442695
    %v2907 = vpow.pop %v2906
    %v2908 = vmul.f32 %v2854, 1.442695
    %v2909 = vpow.pop %v2908
    %v2910 = vmul.f32 %v2855, 1.442695
    %v2911 = vpow.pop %v2910
    %v2912 = vmul.f32 %v2856, 1.442695
    %v2913 = vpow.pop %v2912
    %v2914 = vmul.f32 %v2857, 1.442695
    %v2915 = vpow.pop %v2914
    %v2916 = vmul.f32 %v2858, 1.442695
    %v2917 = vpow.pop %v2916
    %v2918 = vmul.f32 %v2859, 1.442695
    %v2919 = vpow.pop %v2918
    %v2920 = vmul.f32 %v2860, 1.442695
    %v2921 = vpow.pop %v2920
    %v2922 = vmul.f32 %v2861, 1.442695
    %v2923 = vpow.pop %v2922
    %v2924 = vmul.f32 %v2862, 1.442695
    %v2925 = vpow.pop %v2924
    %v2926 = vmul.f32 %v2863, 1.442695
    %v2927 = vpow.pop %v2926
    %v2928 = vadd.f32 %v2865, 1.0
    %v2929 = vadd.f32 %v2867, 1.0
    %v2930 = vadd.f32 %v2869, 1.0
    %v2931 = vadd.f32 %v2871, 1.0
    %v2932 = vadd.f32 %v2873, 1.0
    %v2933 = vadd.f32 %v2875, 1.0
    %v2934 = vadd.f32 %v2877, 1.0
    %v2935 = vadd.f32 %v2879, 1.0
    %v2936 = vadd.f32 %v2881, 1.0
    %v2937 = vadd.f32 %v2883, 1.0
    %v2938 = vadd.f32 %v2885, 1.0
    %v2939 = vadd.f32 %v2887, 1.0
    %v2940 = vadd.f32 %v2889, 1.0
    %v2941 = vadd.f32 %v2891, 1.0
    %v2942 = vadd.f32 %v2893, 1.0
    %v2943 = vadd.f32 %v2895, 1.0
    %v2944 = vadd.f32 %v2897, 1.0
    %v2945 = vadd.f32 %v2899, 1.0
    %v2946 = vadd.f32 %v2901, 1.0
    %v2947 = vadd.f32 %v2903, 1.0
    %v2948 = vadd.f32 %v2905, 1.0
    %v2949 = vadd.f32 %v2907, 1.0
    %v2950 = vadd.f32 %v2909, 1.0
    %v2951 = vadd.f32 %v2911, 1.0
    %v2952 = vadd.f32 %v2913, 1.0
    %v2953 = vadd.f32 %v2915, 1.0
    %v2954 = vadd.f32 %v2917, 1.0
    %v2955 = vadd.f32 %v2919, 1.0
    %v2956 = vadd.f32 %v2921, 1.0
    %v2957 = vadd.f32 %v2923, 1.0
    %v2958 = vadd.f32 %v2925, 1.0
    %v2959 = vadd.f32 %v2927, 1.0
    %v2960 = vrcp.pop %v2928
    %v2961 = vmul.f32 1.0, %v2960
    %v2962 = vrcp.pop %v2929
    %v2963 = vmul.f32 1.0, %v2962
    %v2964 = vrcp.pop %v2930
    %v2965 = vmul.f32 1.0, %v2964
    %v2966 = vrcp.pop %v2931
    %v2967 = vmul.f32 1.0, %v2966
    %v2968 = vrcp.pop %v2932
    %v2969 = vmul.f32 1.0, %v2968
    %v2970 = vrcp.pop %v2933
    %v2971 = vmul.f32 1.0, %v2970
    %v2972 = vrcp.pop %v2934
    %v2973 = vmul.f32 1.0, %v2972
    %v2974 = vrcp.pop %v2935
    %v2975 = vmul.f32 1.0, %v2974
    %v2976 = vrcp.pop %v2936
    %v2977 = vmul.f32 1.0, %v2976
    %v2978 = vrcp.pop %v2937
    %v2979 = vmul.f32 1.0, %v2978
    %v2980 = vrcp.pop %v2938
    %v2981 = vmul.f32 1.0, %v2980
    %v2982 = vrcp.pop %v2939
    %v2983 = vmul.f32 1.0, %v2982
    %v2984 = vrcp.pop %v2940
    %v2985 = vmul.f32 1.0, %v2984
    %v2986 = vrcp.pop %v2941
    %v2987 = vmul.f32 1.0, %v2986
    %v2988 = vrcp.pop %v2942
    %v2989 = vmul.f32 1.0, %v2988
    %v2990 = vrcp.pop %v2943
    %v2991 = vmul.f32 1.0, %v2990
    %v2992 = vrcp.pop %v2944
    %v2993 = vmul.f32 1.0, %v2992
    %v2994 = vrcp.pop %v2945
    %v2995 = vmul.f32 1.0, %v2994
    %v2996 = vrcp.pop %v2946
    %v2997 = vmul.f32 1.0, %v2996
    %v2998 = vrcp.pop %v2947
    %v2999 = vmul.f32 1.0, %v2998
    %v3000 = vrcp.pop %v2948
    %v3001 = vmul.f32 1.0, %v3000
    %v3002 = vrcp.pop %v2949
    %v3003 = vmul.f32 1.0, %v3002
    %v3004 = vrcp.pop %v2950
    %v3005 = vmul.f32 1.0, %v3004
    %v3006 = vrcp.pop %v2951
    %v3007 = vmul.f32 1.0, %v3006
    %v3008 = vrcp.pop %v2952
    %v3009 = vmul.f32 1.0, %v3008
    %v3010 = vrcp.pop %v2953
    %v3011 = vmul.f32 1.0, %v3010
    %v3012 = vrcp.pop %v2954
    %v3013 = vmul.f32 1.0, %v3012
    %v3014 = vrcp.pop %v2955
    %v3015 = vmul.f32 1.0, %v3014
    %v3016 = vrcp.pop %v2956
    %v3017 = vmul.f32 1.0, %v3016
    %v3018 = vrcp.pop %v2957
    %v3019 = vmul.f32 1.0, %v3018
    %v3020 = vrcp.pop %v2958
    %v3021 = vmul.f32 1.0, %v3020
    %v3022 = vrcp.pop %v2959
    %v3023 = vmul.f32 1.0, %v3022
    %3056 = vrot.lane.b32.xlu0 %v2961, 64
    %v3057 = vpop.permute.xlu0 %3056
    %3058 = vrot.lane.b32.xlu0 %v2963, 64
    %v3059 = vpop.permute.xlu0 %3058
    %3060 = vrot.lane.b32.xlu0 %v2965, 64
    %v3061 = vpop.permute.xlu0 %3060
    %3062 = vrot.lane.b32.xlu0 %v2967, 64
    %v3063 = vpop.permute.xlu0 %3062
    %3064 = vrot.lane.b32.xlu0 %v2969, 64
    %v3065 = vpop.permute.xlu0 %3064
    %3066 = vrot.lane.b32.xlu0 %v2971, 64
    %v3067 = vpop.permute.xlu0 %3066
    %3068 = vrot.lane.b32.xlu0 %v2973, 64
    %v3069 = vpop.permute.xlu0 %3068
    %3070 = vrot.lane.b32.xlu0 %v2975, 64
    %v3071 = vpop.permute.xlu0 %3070
    %3072 = vrot.lane.b32.xlu0 %v2977, 64
    %v3073 = vpop.permute.xlu0 %3072
    %3074 = vrot.lane.b32.xlu0 %v2979, 64
    %v3075 = vpop.permute.xlu0 %3074
    %3076 = vrot.lane.b32.xlu0 %v2981, 64
    %v3077 = vpop.permute.xlu0 %3076
    %3078 = vrot.lane.b32.xlu0 %v2983, 64
    %v3079 = vpop.permute.xlu0 %3078
    %3080 = vrot.lane.b32.xlu0 %v2985, 64
    %v3081 = vpop.permute.xlu0 %3080
    %3082 = vrot.lane.b32.xlu0 %v2987, 64
    %v3083 = vpop.permute.xlu0 %3082
    %3084 = vrot.lane.b32.xlu0 %v2989, 64
    %v3085 = vpop.permute.xlu0 %3084
    %3086 = vrot.lane.b32.xlu0 %v2991, 64
    %v3087 = vpop.permute.xlu0 %3086
    %3088 = vrot.lane.b32.xlu0 %v2993, 64
    %v3089 = vpop.permute.xlu0 %3088
    %3090 = vrot.lane.b32.xlu0 %v2995, 64
    %v3091 = vpop.permute.xlu0 %3090
    %3092 = vrot.lane.b32.xlu0 %v2997, 64
    %v3093 = vpop.permute.xlu0 %3092
    %3094 = vrot.lane.b32.xlu0 %v2999, 64
    %v3095 = vpop.permute.xlu0 %3094
    %3096 = vrot.lane.b32.xlu0 %v3001, 64
    %v3097 = vpop.permute.xlu0 %3096
    %3098 = vrot.lane.b32.xlu0 %v3003, 64
    %v3099 = vpop.permute.xlu0 %3098
    %3100 = vrot.lane.b32.xlu0 %v3005, 64
    %v3101 = vpop.permute.xlu0 %3100
    %3102 = vrot.lane.b32.xlu0 %v3007, 64
    %v3103 = vpop.permute.xlu0 %3102
    %3104 = vrot.lane.b32.xlu0 %v3009, 64
    %v3105 = vpop.permute.xlu0 %3104
    %3106 = vrot.lane.b32.xlu0 %v3011, 64
    %v3107 = vpop.permute.xlu0 %3106
    %3108 = vrot.lane.b32.xlu0 %v3013, 64
    %v3109 = vpop.permute.xlu0 %3108
    %3110 = vrot.lane.b32.xlu0 %v3015, 64
    %v3111 = vpop.permute.xlu0 %3110
    %3112 = vrot.lane.b32.xlu0 %v3017, 64
    %v3113 = vpop.permute.xlu0 %3112
    %3114 = vrot.lane.b32.xlu0 %v3019, 64
    %v3115 = vpop.permute.xlu0 %3114
    %3116 = vrot.lane.b32.xlu0 %v3021, 64
    %v3117 = vpop.permute.xlu0 %3116
    %3118 = vrot.lane.b32.xlu0 %v3023, 64
    %v3119 = vpop.permute.xlu0 %3118
    %3184 = vrot.lane.b32.xlu0 %v1218, 67
    %v3185 = vpop.permute.xlu0 %3184
    %3186 = vrot.lane.b32.xlu0 %v1219, 67
    %v3187 = vpop.permute.xlu0 %3186
    %3188 = vrot.lane.b32.xlu0 %v1220, 67
    %v3189 = vpop.permute.xlu0 %3188
    %3190 = vrot.lane.b32.xlu0 %v1221, 67
    %v3191 = vpop.permute.xlu0 %3190
    %3192 = vrot.lane.b32.xlu0 %v1222, 67
    %v3193 = vpop.permute.xlu0 %3192
    %3194 = vrot.lane.b32.xlu0 %v1223, 67
    %v3195 = vpop.permute.xlu0 %3194
    %3196 = vrot.lane.b32.xlu0 %v1224, 67
    %v3197 = vpop.permute.xlu0 %3196
    %3198 = vrot.lane.b32.xlu0 %v1225, 67
    %v3199 = vpop.permute.xlu0 %3198
    %3200 = vrot.lane.b32.xlu0 %v1226, 67
    %v3201 = vpop.permute.xlu0 %3200
    %3202 = vrot.lane.b32.xlu0 %v1227, 67
    %v3203 = vpop.permute.xlu0 %3202
    %3204 = vrot.lane.b32.xlu0 %v1228, 67
    %v3205 = vpop.permute.xlu0 %3204
    %3206 = vrot.lane.b32.xlu0 %v1229, 67
    %v3207 = vpop.permute.xlu0 %3206
    %3208 = vrot.lane.b32.xlu0 %v1230, 67
    %v3209 = vpop.permute.xlu0 %3208
    %3210 = vrot.lane.b32.xlu0 %v1231, 67
    %v3211 = vpop.permute.xlu0 %3210
    %3212 = vrot.lane.b32.xlu0 %v1232, 67
    %v3213 = vpop.permute.xlu0 %3212
    %3214 = vrot.lane.b32.xlu0 %v1233, 67
    %v3215 = vpop.permute.xlu0 %3214
    %3216 = vrot.lane.b32.xlu0 %v1234, 67
    %v3217 = vpop.permute.xlu0 %3216
    %3218 = vrot.lane.b32.xlu0 %v1235, 67
    %v3219 = vpop.permute.xlu0 %3218
    %3220 = vrot.lane.b32.xlu0 %v1236, 67
    %v3221 = vpop.permute.xlu0 %3220
    %3222 = vrot.lane.b32.xlu0 %v1237, 67
    %v3223 = vpop.permute.xlu0 %3222
    %3224 = vrot.lane.b32.xlu0 %v1238, 67
    %v3225 = vpop.permute.xlu0 %3224
    %3226 = vrot.lane.b32.xlu0 %v1239, 67
    %v3227 = vpop.permute.xlu0 %3226
    %3228 = vrot.lane.b32.xlu0 %v1240, 67
    %v3229 = vpop.permute.xlu0 %3228
    %3230 = vrot.lane.b32.xlu0 %v1241, 67
    %v3231 = vpop.permute.xlu0 %3230
    %3232 = vrot.lane.b32.xlu0 %v1242, 67
    %v3233 = vpop.permute.xlu0 %3232
    %3234 = vrot.lane.b32.xlu0 %v1243, 67
    %v3235 = vpop.permute.xlu0 %3234
    %3236 = vrot.lane.b32.xlu0 %v1244, 67
    %v3237 = vpop.permute.xlu0 %3236
    %3238 = vrot.lane.b32.xlu0 %v1245, 67
    %v3239 = vpop.permute.xlu0 %3238
    %3240 = vrot.lane.b32.xlu0 %v1246, 67
    %v3241 = vpop.permute.xlu0 %3240
    %3242 = vrot.lane.b32.xlu0 %v1247, 67
    %v3243 = vpop.permute.xlu0 %3242
    %3244 = vrot.lane.b32.xlu0 %v1248, 67
    %v3245 = vpop.permute.xlu0 %3244
    %3246 = vrot.lane.b32.xlu0 %v1249, 67
    %v3247 = vpop.permute.xlu0 %3246
    %v3280 = vsel %vm151, %v1973, %v3057
    %v3281 = vsel %vm151, %v1975, %v3059
    %v3282 = vsel %vm151, %v1977, %v3061
    %v3283 = vsel %vm151, %v1979, %v3063
    %v3284 = vsel %vm151, %v1981, %v3065
    %v3285 = vsel %vm151, %v1983, %v3067
    %v3286 = vsel %vm151, %v1985, %v3069
    %v3287 = vsel %vm151, %v1987, %v3071
    %v3288 = vsel %vm151, %v1989, %v3073
    %v3289 = vsel %vm151, %v1991, %v3075
    %v3290 = vsel %vm151, %v1993, %v3077
    %v3291 = vsel %vm151, %v1995, %v3079
    %v3292 = vsel %vm151, %v1997, %v3081
    %v3293 = vsel %vm151, %v1999, %v3083
    %v3294 = vsel %vm151, %v2001, %v3085
    %v3295 = vsel %vm151, %v2003, %v3087
    %v3296 = vsel %vm151, %v2005, %v3089
    %v3297 = vsel %vm151, %v2007, %v3091
    %v3298 = vsel %vm151, %v2009, %v3093
    %v3299 = vsel %vm151, %v2011, %v3095
    %v3300 = vsel %vm151, %v2013, %v3097
    %v3301 = vsel %vm151, %v2015, %v3099
    %v3302 = vsel %vm151, %v2017, %v3101
    %v3303 = vsel %vm151, %v2019, %v3103
    %v3304 = vsel %vm151, %v2021, %v3105
    %v3305 = vsel %vm151, %v2023, %v3107
    %v3306 = vsel %vm151, %v2025, %v3109
    %v3307 = vsel %vm151, %v2027, %v3111
    %v3308 = vsel %vm151, %v2029, %v3113
    %v3309 = vsel %vm151, %v2031, %v3115
    %v3310 = vsel %vm151, %v2033, %v3117
    %v3311 = vsel %vm151, %v2035, %v3119
    %vm3312 = vcmask 547840
    %v3313 = vsel %vm3312, %v3280, %v3185
    %v3314 = vsel %vm3312, %v3281, %v3187
    %v3315 = vsel %vm3312, %v3282, %v3189
    %v3316 = vsel %vm3312, %v3283, %v3191
    %v3317 = vsel %vm3312, %v3284, %v3193
    %v3318 = vsel %vm3312, %v3285, %v3195
    %v3319 = vsel %vm3312, %v3286, %v3197
    %v3320 = vsel %vm3312, %v3287, %v3199
    %v3321 = vsel %vm3312, %v3288, %v3201
    %v3322 = vsel %vm3312, %v3289, %v3203
    %v3323 = vsel %vm3312, %v3290, %v3205
    %v3324 = vsel %vm3312, %v3291, %v3207
    %v3325 = vsel %vm3312, %v3292, %v3209
    %v3326 = vsel %vm3312, %v3293, %v3211
    %v3327 = vsel %vm3312, %v3294, %v3213
    %v3328 = vsel %vm3312, %v3295, %v3215
    %v3329 = vsel %vm3312, %v3296, %v3217
    %v3330 = vsel %vm3312, %v3297, %v3219
    %v3331 = vsel %vm3312, %v3298, %v3221
    %v3332 = vsel %vm3312, %v3299, %v3223
    %v3333 = vsel %vm3312, %v3300, %v3225
    %v3334 = vsel %vm3312, %v3301, %v3227
    %v3335 = vsel %vm3312, %v3302, %v3229
    %v3336 = vsel %vm3312, %v3303, %v3231
    %v3337 = vsel %vm3312, %v3304, %v3233
    %v3338 = vsel %vm3312, %v3305, %v3235
    %v3339 = vsel %vm3312, %v3306, %v3237
    %v3340 = vsel %vm3312, %v3307, %v3239
    %v3341 = vsel %vm3312, %v3308, %v3241
    %v3342 = vsel %vm3312, %v3309, %v3243
    %v3343 = vsel %vm3312, %v3310, %v3245
    %v3344 = vsel %vm3312, %v3311, %v3247
    %vm3345 = vcmask 678912
    %v3346 = vsel %vm3345, %v3313, 0.0
    %v3347 = vsel %vm3345, %v3314, 0.0
    %v3348 = vsel %vm3345, %v3315, 0.0
    %v3349 = vsel %vm3345, %v3316, 0.0
    %v3350 = vsel %vm3345, %v3317, 0.0
    %v3351 = vsel %vm3345, %v3318, 0.0
    %v3352 = vsel %vm3345, %v3319, 0.0
    %v3353 = vsel %vm3345, %v3320, 0.0
    %v3354 = vsel %vm3345, %v3321, 0.0
    %v3355 = vsel %vm3345, %v3322, 0.0
    %v3356 = vsel %vm3345, %v3323, 0.0
    %v3357 = vsel %vm3345, %v3324, 0.0
    %v3358 = vsel %vm3345, %v3325, 0.0
    %v3359 = vsel %vm3345, %v3326, 0.0
    %v3360 = vsel %vm3345, %v3327, 0.0
    %v3361 = vsel %vm3345, %v3328, 0.0
    %v3362 = vsel %vm3345, %v3329, 0.0
    %v3363 = vsel %vm3345, %v3330, 0.0
    %v3364 = vsel %vm3345, %v3331, 0.0
    %v3365 = vsel %vm3345, %v3332, 0.0
    %v3366 = vsel %vm3345, %v3333, 0.0
    %v3367 = vsel %vm3345, %v3334, 0.0
    %v3368 = vsel %vm3345, %v3335, 0.0
    %v3369 = vsel %vm3345, %v3336, 0.0
    %v3370 = vsel %vm3345, %v3337, 0.0
    %v3371 = vsel %vm3345, %v3338, 0.0
    %v3372 = vsel %vm3345, %v3339, 0.0
    %v3373 = vsel %vm3345, %v3340, 0.0
    %v3374 = vsel %vm3345, %v3341, 0.0
    %v3375 = vsel %vm3345, %v3342, 0.0
    %v3376 = vsel %vm3345, %v3343, 0.0
    %v3377 = vsel %vm3345, %v3344, 0.0
    %3378 = vst [vmem:[#allocation2] sm:$0xff] %v3346
    %3379 = vst [vmem:[#allocation2 + $0x8] sm:$0xff] %v3347
    %3380 = vst [vmem:[#allocation2 + $0x10] sm:$0xff] %v3348
    %3381 = vst [vmem:[#allocation2 + $0x18] sm:$0xff] %v3349
    %3382 = vst [vmem:[#allocation2 + $0x20] sm:$0xff] %v3350
    %3383 = vst [vmem:[#allocation2 + $0x28] sm:$0xff] %v3351
    %3384 = vst [vmem:[#allocation2 + $0x30] sm:$0xff] %v3352
    %3385 = vst [vmem:[#allocation2 + $0x38] sm:$0xff] %v3353
    %3386 = vst [vmem:[#allocation2 + $0x40] sm:$0xff] %v3354
    %3387 = vst [vmem:[#allocation2 + $0x48] sm:$0xff] %v3355
    %3388 = vst [vmem:[#allocation2 + $0x50] sm:$0xff] %v3356
    %3389 = vst [vmem:[#allocation2 + $0x58] sm:$0xff] %v3357
    %3390 = vst [vmem:[#allocation2 + $0x60] sm:$0xff] %v3358
    %3391 = vst [vmem:[#allocation2 + $0x68] sm:$0xff] %v3359
    %3392 = vst [vmem:[#allocation2 + $0x70] sm:$0xff] %v3360
    %3393 = vst [vmem:[#allocation2 + $0x78] sm:$0xff] %v3361
    %3394 = vst [vmem:[#allocation2 + $0x80] sm:$0xff] %v3362
    %3395 = vst [vmem:[#allocation2 + $0x88] sm:$0xff] %v3363
    %3396 = vst [vmem:[#allocation2 + $0x90] sm:$0xff] %v3364
    %3397 = vst [vmem:[#allocation2 + $0x98] sm:$0xff] %v3365
    %3398 = vst [vmem:[#allocation2 + $0xa0] sm:$0xff] %v3366
    %3399 = vst [vmem:[#allocation2 + $0xa8] sm:$0xff] %v3367
    %3400 = vst [vmem:[#allocation2 + $0xb0] sm:$0xff] %v3368
    %3401 = vst [vmem:[#allocation2 + $0xb8] sm:$0xff] %v3369
    %3402 = vst [vmem:[#allocation2 + $0xc0] sm:$0xff] %v3370
    %3403 = vst [vmem:[#allocation2 + $0xc8] sm:$0xff] %v3371
    %3404 = vst [vmem:[#allocation2 + $0xd0] sm:$0xff] %v3372
    %3405 = vst [vmem:[#allocation2 + $0xd8] sm:$0xff] %v3373
    %3406 = vst [vmem:[#allocation2 + $0xe0] sm:$0xff] %v3374
    %3407 = vst [vmem:[#allocation2 + $0xe8] sm:$0xff] %v3375
    %3408 = vst [vmem:[#allocation2 + $0xf0] sm:$0xff] %v3376
    %3409 = vst [vmem:[#allocation2 + $0xf8] sm:$0xff] %v3377
    // Predicated region
    $region78: #{tpu_custom_call.1} parent=1 // pred_check
      _
    $region79: #{tpu_custom_call.1} parent=1 // pred_check_branch
      %3411 = sbr.rel (0) target = $region81
    $region80: #{tpu_custom_call.1} parent=1 // pred_region
      %s3413 = ssub.s32 4096, 4096
      %3414 = vsyncadd [#allocation3], %s3413
      %s3415 = sshll.u32 [#allocation2], 4
      %s3416 = int_to_ptr.vmem [resolvable:$true] %s3415
      %3421 = dma.vmem_to_hbm [thread:$0]  %s3416, 4096, %s19, [#allocation3], 128, 128, 8
    $region81: #{tpu_custom_call.1} parent=1 // pred_fallthru
      _
    // Predicated region
    $region82: #{tpu_custom_call.1} parent=1 // pred_check
      _
    $region83: #{tpu_custom_call.1} parent=1 // pred_check_branch
      %3423 = sbr.rel (0) target = $region85
    $region84: #{tpu_custom_call.1} parent=1 // pred_region
      %3424 = dma.done [#allocation3], 4096
    $region85: #{tpu_custom_call.1} parent=1 // pred_fallthru
      _
    %3425 = vsyncpa [#allocation3], 1

// kernel: tpu_custom_call.1
$region0: #{tpu_custom_call.1}
  #allocation0 [shape = 'u32[]', space=smem, size = 0x4, offset = 0x4, fixed_abs, tag = 'smem constant byte address 0x4 - core index']
  #allocation1 [shape = 'u32[144,128]{1,0:T(1,128)}', space=vmem, size = 0x12000, scoped, tag = 'internal scratch']
  %s0 = inlined_call_operand.vmem [shape: f32[256,64], index: 0, kind: input, shape index: {}]
  %s1 = inlined_call_operand.vmem [shape: bf16[64,45], index: 1, kind: input, shape index: {}]
  %s2 = inlined_call_operand.vmem [shape: f32[1,45], index: 2, kind: input, shape index: {}]
  %s3 = inlined_call_operand.vmem [shape: bf16[45,32], index: 3, kind: input, shape index: {}]
  %s4 = inlined_call_operand.vmem [shape: f32[1,32], index: 4, kind: input, shape index: {}]
  %s5 = inlined_call_operand.vmem [shape: bf16[32,22], index: 5, kind: input, shape index: {}]
  %s6 = inlined_call_operand.vmem [shape: f32[1,22], index: 6, kind: input, shape index: {}]
  %s7 = inlined_call_operand.vmem [shape: bf16[22,16], index: 7, kind: input, shape index: {}]
  %s8 = inlined_call_operand.vmem [shape: f32[1,16], index: 8, kind: input, shape index: {}]
  %s9 = inlined_call_operand.vmem [shape: bf16[16,160], index: 9, kind: input, shape index: {}]
  %s10 = inlined_call_operand.vmem [shape: f32[1,160], index: 10, kind: input, shape index: {}]
  %s11 = inlined_call_operand.vmem [shape: bf16[32,64], index: 11, kind: input, shape index: {}]
  %s12 = inlined_call_operand.vmem [shape: f32[1,64], index: 12, kind: input, shape index: {}]
  %s13 = inlined_call_operand.vmem [shape: bf16[128,6], index: 13, kind: input, shape index: {}]
  %s14 = inlined_call_operand.vmem [shape: f32[1,6], index: 14, kind: input, shape index: {}]
  %s15 = inlined_call_operand.vmem [shape: bf16[6,9], index: 15, kind: input, shape index: {}]
  %s16 = inlined_call_operand.vmem [shape: f32[1,9], index: 16, kind: input, shape index: {}]
  %s17 = inlined_call_operand.vmem [shape: bf16[9,3], index: 17, kind: input, shape index: {}]
  %s18 = inlined_call_operand.vmem [shape: f32[1,3], index: 18, kind: input, shape index: {}]
  %s19 = inlined_call_operand.hbm [shape: f32[256,128], index: 19, kind: output, shape index: {}]
  %s20 = sld [smem:[#allocation0]]
  $region86: #{tpu_custom_call.1} parent=0
    _
  %s22 = ssub.s32 1, %s20
  %s23 = scalar_select 0, %s22, %s20
  $region1: #{tpu_custom_call.1} parent=0
    #allocation2 [shape = 'u8[131072]{0}', space=vmem, size = 0x20000, scoped, tag = 'output window, operand 0, single buffered']
    #allocation3 [shape = 's32[1]{0}', space=sflag, size = 0x4, scoped, tag = 'scoped memory for tpu_custom_call.1']
    %24 = vsyncpa [#allocation3], 0
    // Predicated region
    $region2: #{tpu_custom_call.1} parent=1 // pred_check
      _
    $region3: #{tpu_custom_call.1} parent=1 // pred_check_branch
      %26 = sbr.rel (0) target = $region5
    $region4: #{tpu_custom_call.1} parent=1 // pred_region
      _
    $region5: #{tpu_custom_call.1} parent=1 // pred_fallthru
      _
    // Predicated region
    $region6: #{tpu_custom_call.1} parent=1 // pred_check
      _
    $region7: #{tpu_custom_call.1} parent=1 // pred_check_branch
      %28 = sbr.rel (0) target = $region9
    $region8: #{tpu_custom_call.1} parent=1 // pred_region
      _
    $region9: #{tpu_custom_call.1} parent=1 // pred_fallthru
      _
    // Predicated region
    $region10: #{tpu_custom_call.1} parent=1 // pred_check
      _
    $region11: #{tpu_custom_call.1} parent=1 // pred_check_branch
      %30 = sbr.rel (0) target = $region13
    $region12: #{tpu_custom_call.1} parent=1 // pred_region
      _
    $region13: #{tpu_custom_call.1} parent=1 // pred_fallthru
      _
    // Predicated region
    $region14: #{tpu_custom_call.1} parent=1 // pred_check
      _
    $region15: #{tpu_custom_call.1} parent=1 // pred_check_branch
      %32 = sbr.rel (0) target = $region17
    $region16: #{tpu_custom_call.1} parent=1 // pred_region
      _
    $region17: #{tpu_custom_call.1} parent=1 // pred_fallthru
      _
    // Predicated region
    $region18: #{tpu_custom_call.1} parent=1 // pred_check
      _
    $region19: #{tpu_custom_call.1} parent=1 // pred_check_branch
      %34 = sbr.rel (0) target = $region21
    $region20: #{tpu_custom_call.1} parent=1 // pred_region
      _
    $region21: #{tpu_custom_call.1} parent=1 // pred_fallthru
      _
    // Predicated region
    $region22: #{tpu_custom_call.1} parent=1 // pred_check
      _
    $region23: #{tpu_custom_call.1} parent=1 // pred_check_branch
      %36 = sbr.rel (0) target = $region25
    $region24: #{tpu_custom_call.1} parent=1 // pred_region
      _
    $region25: #{tpu_custom_call.1} parent=1 // pred_fallthru
      _
    // Predicated region
    $region26: #{tpu_custom_call.1} parent=1 // pred_check
      _
    $region27: #{tpu_custom_call.1} parent=1 // pred_check_branch
      %38 = sbr.rel (0) target = $region29
    $region28: #{tpu_custom_call.1} parent=1 // pred_region
      _
    $region29: #{tpu_custom_call.1} parent=1 // pred_fallthru
      _
    // Predicated region
    $region30: #{tpu_custom_call.1} parent=1 // pred_check
      _
    $region31: #{tpu_custom_call.1} parent=1 // pred_check_branch
      %40 = sbr.rel (0) target = $region33
    $region32: #{tpu_custom_call.1} parent=1 // pred_region
      _
    $region33: #{tpu_custom_call.1} parent=1 // pred_fallthru
      _
    // Predicated region
    $region34: #{tpu_custom_call.1} parent=1 // pred_check
      _
    $region35: #{tpu_custom_call.1} parent=1 // pred_check_branch
      %42 = sbr.rel (0) target = $region37
    $region36: #{tpu_custom_call.1} parent=1 // pred_region
      _
    $region37: #{tpu_custom_call.1} parent=1 // pred_fallthru
      _
    // Predicated region
    $region38: #{tpu_custom_call.1} parent=1 // pred_check
      _
    $region39: #{tpu_custom_call.1} parent=1 // pred_check_branch
      %44 = sbr.rel (0) target = $region41
    $region40: #{tpu_custom_call.1} parent=1 // pred_region
      _
    $region41: #{tpu_custom_call.1} parent=1 // pred_fallthru
      _
    // Predicated region
    $region42: #{tpu_custom_call.1} parent=1 // pred_check
      _
    $region43: #{tpu_custom_call.1} parent=1 // pred_check_branch
      %46 = sbr.rel (0) target = $region45
    $region44: #{tpu_custom_call.1} parent=1 // pred_region
      _
    $region45: #{tpu_custom_call.1} parent=1 // pred_fallthru
      _
    // Predicated region
    $region46: #{tpu_custom_call.1} parent=1 // pred_check
      _
    $region47: #{tpu_custom_call.1} parent=1 // pred_check_branch
      %48 = sbr.rel (0) target = $region49
    $region48: #{tpu_custom_call.1} parent=1 // pred_region
      _
    $region49: #{tpu_custom_call.1} parent=1 // pred_fallthru
      _
    // Predicated region
    $region50: #{tpu_custom_call.1} parent=1 // pred_check
      _
    $region51: #{tpu_custom_call.1} parent=1 // pred_check_branch
      %50 = sbr.rel (0) target = $region53
    $region52: #{tpu_custom_call.1} parent=1 // pred_region
      _
    $region53: #{tpu_custom_call.1} parent=1 // pred_fallthru
      _
    // Predicated region
    $region54: #{tpu_custom_call.1} parent=1 // pred_check
      _
    $region55: #{tpu_custom_call.1} parent=1 // pred_check_branch
      %52 = sbr.rel (0) target = $region57
    $region56: #{tpu_custom_call.1} parent=1 // pred_region
      _
    $region57: #{tpu_custom_call.1} parent=1 // pred_fallthru
      _
    // Predicated region
    $region58: #{tpu_custom_call.1} parent=1 // pred_check
      _
    $region59: #{tpu_custom_call.1} parent=1 // pred_check_branch
      %54 = sbr.rel (0) target = $region61
    $region60: #{tpu_custom_call.1} parent=1 // pred_region
      _
    $region61: #{tpu_custom_call.1} parent=1 // pred_fallthru
      _
    // Predicated region
    $region62: #{tpu_custom_call.1} parent=1 // pred_check
      _
    $region63: #{tpu_custom_call.1} parent=1 // pred_check_branch
      %56 = sbr.rel (0) target = $region65
    $region64: #{tpu_custom_call.1} parent=1 // pred_region
      _
    $region65: #{tpu_custom_call.1} parent=1 // pred_fallthru
      _
    // Predicated region
    $region66: #{tpu_custom_call.1} parent=1 // pred_check
      _
    $region67: #{tpu_custom_call.1} parent=1 // pred_check_branch
      %58 = sbr.rel (0) target = $region69
    $region68: #{tpu_custom_call.1} parent=1 // pred_region
      _
    $region69: #{tpu_custom_call.1} parent=1 // pred_fallthru
      _
    // Predicated region
    $region70: #{tpu_custom_call.1} parent=1 // pred_check
      _
    $region71: #{tpu_custom_call.1} parent=1 // pred_check_branch
      %60 = sbr.rel (0) target = $region73
    $region72: #{tpu_custom_call.1} parent=1 // pred_region
      _
    $region73: #{tpu_custom_call.1} parent=1 // pred_fallthru
      _
    // Predicated region
    $region74: #{tpu_custom_call.1} parent=1 // pred_check
      _
    $region75: #{tpu_custom_call.1} parent=1 // pred_check_branch
      %62 = sbr.rel (0) target = $region77
    $region76: #{tpu_custom_call.1} parent=1 // pred_region
      _
    $region77: #{tpu_custom_call.1} parent=1 // pred_fallthru
      _
    %v64 = vld [vmem:[%s0] sm:$0xff]
    %v65 = vld [vmem:[%s0 + $0x8] sm:$0xff]
    %v66 = vld [vmem:[%s0 + $0x10] sm:$0xff]
    %v67 = vld [vmem:[%s0 + $0x18] sm:$0xff]
    %v68 = vld [vmem:[%s0 + $0x20] sm:$0xff]
    %v69 = vld [vmem:[%s0 + $0x28] sm:$0xff]
    %v70 = vld [vmem:[%s0 + $0x30] sm:$0xff]
    %v71 = vld [vmem:[%s0 + $0x38] sm:$0xff]
    %v72 = vld [vmem:[%s0 + $0x40] sm:$0xff]
    %v73 = vld [vmem:[%s0 + $0x48] sm:$0xff]
    %v74 = vld [vmem:[%s0 + $0x50] sm:$0xff]
    %v75 = vld [vmem:[%s0 + $0x58] sm:$0xff]
    %v76 = vld [vmem:[%s0 + $0x60] sm:$0xff]
    %v77 = vld [vmem:[%s0 + $0x68] sm:$0xff]
    %v78 = vld [vmem:[%s0 + $0x70] sm:$0xff]
    %v79 = vld [vmem:[%s0 + $0x78] sm:$0xff]
    %v80 = vld [vmem:[%s0 + $0x80] sm:$0xff]
    %v81 = vld [vmem:[%s0 + $0x88] sm:$0xff]
    %v82 = vld [vmem:[%s0 + $0x90] sm:$0xff]
    %v83 = vld [vmem:[%s0 + $0x98] sm:$0xff]
    %v84 = vld [vmem:[%s0 + $0xa0] sm:$0xff]
    %v85 = vld [vmem:[%s0 + $0xa8] sm:$0xff]
    %v86 = vld [vmem:[%s0 + $0xb0] sm:$0xff]
    %v87 = vld [vmem:[%s0 + $0xb8] sm:$0xff]
    %v88 = vld [vmem:[%s0 + $0xc0] sm:$0xff]
    %v89 = vld [vmem:[%s0 + $0xc8] sm:$0xff]
    %v90 = vld [vmem:[%s0 + $0xd0] sm:$0xff]
    %v91 = vld [vmem:[%s0 + $0xd8] sm:$0xff]
    %v92 = vld [vmem:[%s0 + $0xe0] sm:$0xff]
    %v93 = vld [vmem:[%s0 + $0xe8] sm:$0xff]
    %v94 = vld [vmem:[%s0 + $0xf0] sm:$0xff]
    %v95 = vld [vmem:[%s0 + $0xf8] sm:$0xff]
    %v96 = vld [vmem:[%s1] sm:$0xf]
    %v97 = vld [vmem:[%s1 + $0x4] sm:$0xf]
    %v98 = vld [vmem:[%s1 + $0x8] sm:$0xf]
    %v99 = vld [vmem:[%s1 + $0xc] sm:$0xf]
    %v100 = vld [vmem:[%s1 + $0x10] sm:$0xf]
    %v101 = vld [vmem:[%s1 + $0x14] sm:$0xf]
    %v102 = vld [vmem:[%s1 + $0x18] sm:$0xf]
    %v103 = vld [vmem:[%s1 + $0x1c] sm:$0xf]
    %v104 = vpack.c.bf16 %v65, %v64
    %v105 = vpack.c.bf16 %v67, %v66
    %v106 = vpack.c.bf16 %v69, %v68
    %v107 = vpack.c.bf16 %v71, %v70
    %v108 = vpack.c.bf16 %v73, %v72
    %v109 = vpack.c.bf16 %v75, %v74
    %v110 = vpack.c.bf16 %v77, %v76
    %v111 = vpack.c.bf16 %v79, %v78
    %v112 = vpack.c.bf16 %v81, %v80
    %v113 = vpack.c.bf16 %v83, %v82
    %v114 = vpack.c.bf16 %v85, %v84
    %v115 = vpack.c.bf16 %v87, %v86
    %v116 = vpack.c.bf16 %v89, %v88
    %v117 = vpack.c.bf16 %v91, %v90
    %v118 = vpack.c.bf16 %v93, %v92
    %v119 = vpack.c.bf16 %v95, %v94
    %v120 = vld [vmem:[%s2] sm:$0x1]
    %v122 = vlaneseq
    %v123 = vshrl.u32 %v122, 7
    %v124 = vsub.s32 0, %v123
    %v125 = vrot.slane %v120, %v124
    %v135 = vunpack.c.l.b16 %v96
    %v136 = vunpack.c.l.b16 %v97
    %v137 = vunpack.c.l.b16 %v98
    %v138 = vunpack.c.l.b16 %v99
    %v139 = vunpack.c.l.b16 %v100
    %v140 = vunpack.c.l.b16 %v101
    %v141 = vunpack.c.l.b16 %v102
    %v142 = vunpack.c.l.b16 %v103
    %v143 = vpack.c.b16 %v136, %v135
    %v144 = vpack.c.b16 %v138, %v137
    %v145 = vpack.c.b16 %v140, %v139
    %v146 = vpack.c.b16 %v142, %v141
    %vm151 = vcmask 523264
    %v153 = vsel %vm151, %v104, 0
    %v156 = vsel %vm151, %v105, 0
    %v159 = vsel %vm151, %v106, 0
    %v162 = vsel %vm151, %v107, 0
    %v165 = vsel %vm151, %v108, 0
    %v168 = vsel %vm151, %v109, 0
    %v171 = vsel %vm151, %v110, 0
    %v174 = vsel %vm151, %v111, 0
    %v177 = vsel %vm151, %v112, 0
    %v180 = vsel %vm151, %v113, 0
    %v183 = vsel %vm151, %v114, 0
    %v186 = vsel %vm151, %v115, 0
    %v189 = vsel %vm151, %v116, 0
    %v192 = vsel %vm151, %v117, 0
    %v195 = vsel %vm151, %v118, 0
    %v198 = vsel %vm151, %v119, 0
    %200 = vmatprep.subr.bf16.mxu0 0
    %201 = vmatpush1.bf16.msra.mxu0 %v143
    %202 = vmatprep.subr.bf16.mxu0 0
    %203 = vmatpush1.bf16.msra.mxu0 %v144
    %204 = vmatprep.subr.bf16.mxu0 0
    %205 = vmatpush1.bf16.msra.mxu0 %v145
    %206 = vmatprep.subr.bf16.mxu0 0
    %207 = vmatpush1.bf16.msra.mxu0 %v146
    %208 = vmatprep.subr.bf16.mxu0 0
    %209 = vmatpush1.bf16.msra.mxu0 0
    %210 = vmatprep.subr.bf16.mxu0 0
    %211 = vmatpush1.bf16.msra.mxu0 0
    %212 = vmatprep.subr.bf16.mxu0 0
    %213 = vmatpush1.bf16.msra.mxu0 0
    %214 = vmatprep.subr.bf16.mxu0 0
    %215 = vmatpush1.bf16.msra.mxu0 0
    %216 = vmatprep.subr.bf16.mxu0 0
    %217 = vmatpush1.bf16.msra.mxu0 0
    %218 = vmatprep.subr.bf16.mxu0 0
    %219 = vmatpush1.bf16.msra.mxu0 0
    %220 = vmatprep.subr.bf16.mxu0 0
    %221 = vmatpush1.bf16.msra.mxu0 0
    %222 = vmatprep.subr.bf16.mxu0 0
    %223 = vmatpush1.bf16.msra.mxu0 0
    %224 = vmatprep.subr.bf16.mxu0 0
    %225 = vmatpush1.bf16.msra.mxu0 0
    %226 = vmatprep.subr.bf16.mxu0 0
    %227 = vmatpush1.bf16.msra.mxu0 0
    %228 = vmatprep.subr.bf16.mxu0 0
    %229 = vmatpush1.bf16.msra.mxu0 0
    %230 = vmatprep.subr.bf16.mxu0 0
    %231 = vmatpush1.bf16.msra.mxu0 0
    %232 = vmatprep.mubr.bf16.mxu0 0
    %233 = vmatmul.mubr.bf16.gmra.mrb[0].mxu0 %v153
    %v234 = vpop.f32.mrb[0].mxu0
    %v235 = vadd.f32 %v125, %v234
    %v236 = vpop.f32.mrb[0].mxu0
    %v237 = vpop.f32.mrb[0].mxu0
    %v238 = vadd.f32 %v125, %v237
    %v239 = vpop.f32.mrb[0].mxu0
    %240 = vmatprep.mubr.bf16.mxu0 0
    %241 = vmatmul.mubr.bf16.gmra.mrb[0].mxu0 %v156
    %v242 = vpop.f32.mrb[0].mxu0
    %v243 = vadd.f32 %v125, %v242
    %v244 = vpop.f32.mrb[0].mxu0
    %v245 = vpop.f32.mrb[0].mxu0
    %v246 = vadd.f32 %v125, %v245
    %v247 = vpop.f32.mrb[0].mxu0
    %248 = vmatprep.mubr.bf16.mxu0 0
    %249 = vmatmul.mubr.bf16.gmra.mrb[0].mxu0 %v159
    %v250 = vpop.f32.mrb[0].mxu0
    %v251 = vadd.f32 %v125, %v250
    %v252 = vpop.f32.mrb[0].mxu0
    %v253 = vpop.f32.mrb[0].mxu0
    %v254 = vadd.f32 %v125, %v253
    %v255 = vpop.f32.mrb[0].mxu0
    %256 = vmatprep.mubr.bf16.mxu0 0
    %257 = vmatmul.mubr.bf16.gmra.mrb[0].mxu0 %v162
    %v258 = vpop.f32.mrb[0].mxu0
    %v259 = vadd.f32 %v125, %v258
    %v260 = vpop.f32.mrb[0].mxu0
    %v261 = vpop.f32.mrb[0].mxu0
    %v262 = vadd.f32 %v125, %v261
    %v263 = vpop.f32.mrb[0].mxu0
    %264 = vmatprep.mubr.bf16.mxu0 0
    %265 = vmatmul.mubr.bf16.gmra.mrb[0].mxu0 %v165
    %v266 = vpop.f32.mrb[0].mxu0
    %v267 = vadd.f32 %v125, %v266
    %v268 = vpop.f32.mrb[0].mxu0
    %v269 = vpop.f32.mrb[0].mxu0
    %v270 = vadd.f32 %v125, %v269
    %v271 = vpop.f32.mrb[0].mxu0
    %272 = vmatprep.mubr.bf16.mxu0 0
    %273 = vmatmul.mubr.bf16.gmra.mrb[0].mxu0 %v168
    %v274 = vpop.f32.mrb[0].mxu0
    %v275 = vadd.f32 %v125, %v274
    %v276 = vpop.f32.mrb[0].mxu0
    %v277 = vpop.f32.mrb[0].mxu0
    %v278 = vadd.f32 %v125, %v277
    %v279 = vpop.f32.mrb[0].mxu0
    %280 = vmatprep.mubr.bf16.mxu0 0
    %281 = vmatmul.mubr.bf16.gmra.mrb[0].mxu0 %v171
    %v282 = vpop.f32.mrb[0].mxu0
    %v283 = vadd.f32 %v125, %v282
    %v284 = vpop.f32.mrb[0].mxu0
    %v285 = vpop.f32.mrb[0].mxu0
    %v286 = vadd.f32 %v125, %v285
    %v287 = vpop.f32.mrb[0].mxu0
    %288 = vmatprep.mubr.bf16.mxu0 0
    %289 = vmatmul.mubr.bf16.gmra.mrb[0].mxu0 %v174
    %v290 = vpop.f32.mrb[0].mxu0
    %v291 = vadd.f32 %v125, %v290
    %v292 = vpop.f32.mrb[0].mxu0
    %v293 = vpop.f32.mrb[0].mxu0
    %v294 = vadd.f32 %v125, %v293
    %v295 = vpop.f32.mrb[0].mxu0
    %296 = vmatprep.mubr.bf16.mxu0 0
    %297 = vmatmul.mubr.bf16.gmra.mrb[0].mxu0 %v177
    %v298 = vpop.f32.mrb[0].mxu0
    %v299 = vadd.f32 %v125, %v298
    %v300 = vpop.f32.mrb[0].mxu0
    %v301 = vpop.f32.mrb[0].mxu0
    %v302 = vadd.f32 %v125, %v301
    %v303 = vpop.f32.mrb[0].mxu0
    %304 = vmatprep.mubr.bf16.mxu0 0
    %305 = vmatmul.mubr.bf16.gmra.mrb[0].mxu0 %v180
    %v306 = vpop.f32.mrb[0].mxu0
    %v307 = vadd.f32 %v125, %v306
    %v308 = vpop.f32.mrb[0].mxu0
    %v309 = vpop.f32.mrb[0].mxu0
    %v310 = vadd.f32 %v125, %v309
    %v311 = vpop.f32.mrb[0].mxu0
    %312 = vmatprep.mubr.bf16.mxu0 0
    %313 = vmatmul.mubr.bf16.gmra.mrb[0].mxu0 %v183
    %v314 = vpop.f32.mrb[0].mxu0
    %v315 = vadd.f32 %v125, %v314
    %v316 = vpop.f32.mrb[0].mxu0
    %v317 = vpop.f32.mrb[0].mxu0
    %v318 = vadd.f32 %v125, %v317
    %v319 = vpop.f32.mrb[0].mxu0
    %320 = vmatprep.mubr.bf16.mxu0 0
    %321 = vmatmul.mubr.bf16.gmra.mrb[0].mxu0 %v186
    %v322 = vpop.f32.mrb[0].mxu0
    %v323 = vadd.f32 %v125, %v322
    %v324 = vpop.f32.mrb[0].mxu0
    %v325 = vpop.f32.mrb[0].mxu0
    %v326 = vadd.f32 %v125, %v325
    %v327 = vpop.f32.mrb[0].mxu0
    %328 = vmatprep.mubr.bf16.mxu0 0
    %329 = vmatmul.mubr.bf16.gmra.mrb[0].mxu0 %v189
    %v330 = vpop.f32.mrb[0].mxu0
    %v331 = vadd.f32 %v125, %v330
    %v332 = vpop.f32.mrb[0].mxu0
    %v333 = vpop.f32.mrb[0].mxu0
    %v334 = vadd.f32 %v125, %v333
    %v335 = vpop.f32.mrb[0].mxu0
    %336 = vmatprep.mubr.bf16.mxu0 0
    %337 = vmatmul.mubr.bf16.gmra.mrb[0].mxu0 %v192
    %v338 = vpop.f32.mrb[0].mxu0
    %v339 = vadd.f32 %v125, %v338
    %v340 = vpop.f32.mrb[0].mxu0
    %v341 = vpop.f32.mrb[0].mxu0
    %v342 = vadd.f32 %v125, %v341
    %v343 = vpop.f32.mrb[0].mxu0
    %344 = vmatprep.mubr.bf16.mxu0 0
    %345 = vmatmul.mubr.bf16.gmra.mrb[0].mxu0 %v195
    %v346 = vpop.f32.mrb[0].mxu0
    %v347 = vadd.f32 %v125, %v346
    %v348 = vpop.f32.mrb[0].mxu0
    %v349 = vpop.f32.mrb[0].mxu0
    %v350 = vadd.f32 %v125, %v349
    %v351 = vpop.f32.mrb[0].mxu0
    %352 = vmatprep.mubr.bf16.mxu0 0
    %353 = vmatmul.mubr.bf16.gmra.mrb[0].mxu0 %v198
    %v354 = vpop.f32.mrb[0].mxu0
    %v355 = vadd.f32 %v125, %v354
    %v356 = vpop.f32.mrb[0].mxu0
    %v357 = vpop.f32.mrb[0].mxu0
    %v358 = vadd.f32 %v125, %v357
    %v359 = vpop.f32.mrb[0].mxu0
    %360 = vdwg.mxu0
    %v361 = vmax.f32 %v235, 0.0
    %v362 = vmax.f32 %v238, 0.0
    %v363 = vmax.f32 %v243, 0.0
    %v364 = vmax.f32 %v246, 0.0
    %v365 = vmax.f32 %v251, 0.0
    %v366 = vmax.f32 %v254, 0.0
    %v367 = vmax.f32 %v259, 0.0
    %v368 = vmax.f32 %v262, 0.0
    %v369 = vmax.f32 %v267, 0.0
    %v370 = vmax.f32 %v270, 0.0
    %v371 = vmax.f32 %v275, 0.0
    %v372 = vmax.f32 %v278, 0.0
    %v373 = vmax.f32 %v283, 0.0
    %v374 = vmax.f32 %v286, 0.0
    %v375 = vmax.f32 %v291, 0.0
    %v376 = vmax.f32 %v294, 0.0
    %v377 = vmax.f32 %v299, 0.0
    %v378 = vmax.f32 %v302, 0.0
    %v379 = vmax.f32 %v307, 0.0
    %v380 = vmax.f32 %v310, 0.0
    %v381 = vmax.f32 %v315, 0.0
    %v382 = vmax.f32 %v318, 0.0
    %v383 = vmax.f32 %v323, 0.0
    %v384 = vmax.f32 %v326, 0.0
    %v385 = vmax.f32 %v331, 0.0
    %v386 = vmax.f32 %v334, 0.0
    %v387 = vmax.f32 %v339, 0.0
    %v388 = vmax.f32 %v342, 0.0
    %v389 = vmax.f32 %v347, 0.0
    %v390 = vmax.f32 %v350, 0.0
    %v391 = vmax.f32 %v355, 0.0
    %v392 = vmax.f32 %v358, 0.0
    %v393 = vld [vmem:[%s3] sm:$0xf]
    %v394 = vld [vmem:[%s3 + $0x4] sm:$0xf]
    %v395 = vld [vmem:[%s3 + $0x8] sm:$0xf]
    %v396 = vld [vmem:[%s3 + $0xc] sm:$0xf]
    %v397 = vld [vmem:[%s3 + $0x10] sm:$0xf]
    %v398 = vld [vmem:[%s3 + $0x14] sm:$0x7]
    %v399 = vpack.c.bf16 %v362, %v361
    %v400 = vpack.c.bf16 %v364, %v363
    %v401 = vpack.c.bf16 %v366, %v365
    %v402 = vpack.c.bf16 %v368, %v367
    %v403 = vpack.c.bf16 %v370, %v369
    %v404 = vpack.c.bf16 %v372, %v371
    %v405 = vpack.c.bf16 %v374, %v373
    %v406 = vpack.c.bf16 %v376, %v375
    %v407 = vpack.c.bf16 %v378, %v377
    %v408 = vpack.c.bf16 %v380, %v379
    %v409 = vpack.c.bf16 %v382, %v381
    %v410 = vpack.c.bf16 %v384, %v383
    %v411 = vpack.c.bf16 %v386, %v385
    %v412 = vpack.c.bf16 %v388, %v387
    %v413 = vpack.c.bf16 %v390, %v389
    %v414 = vpack.c.bf16 %v392, %v391
    %v415 = vld [vmem:[%s4] sm:$0x1]
    %v417 = vlaneseq
    %v418 = vshrl.u32 %v417, 7
    %v419 = vsub.s32 0, %v418
    %v420 = vrot.slane %v415, %v419
    %v428 = vunpack.c.l.b16 %v393
    %v429 = vunpack.c.l.b16 %v394
    %v430 = vunpack.c.l.b16 %v395
    %v431 = vunpack.c.l.b16 %v396
    %v432 = vunpack.c.l.b16 %v397
    %v433 = vunpack.c.l.b16 %v398
    %v434 = vpack.c.b16 %v429, %v428
    %v435 = vpack.c.b16 %v431, %v430
    %v436 = vpack.c.b16 %v433, %v432
    %vm439 = vcmask 367616
    %v441 = vsel %vm439, %v399, 0
    %v444 = vsel %vm439, %v400, 0
    %v447 = vsel %vm439, %v401, 0
    %v450 = vsel %vm439, %v402, 0
    %v453 = vsel %vm439, %v403, 0
    %v456 = vsel %vm439, %v404, 0
    %v459 = vsel %vm439, %v405, 0
    %v462 = vsel %vm439, %v406, 0
    %v465 = vsel %vm439, %v407, 0
    %v468 = vsel %vm439, %v408, 0
    %v471 = vsel %vm439, %v409, 0
    %v474 = vsel %vm439, %v410, 0
    %v477 = vsel %vm439, %v411, 0
    %v480 = vsel %vm439, %v412, 0
    %v483 = vsel %vm439, %v413, 0
    %v486 = vsel %vm439, %v414, 0
    %vm488 = vcmask 1045504
    %vm489 = vcmask 1046528
    %v490 = vsel %vm488, 4294967295, 65535
    %v491 = vsel %vm489, %v490, 0
    %v493 = vand.u32 %v436, %v491
    %495 = vmatprep.subr.bf16.mxu0 0
    %496 = vmatpush1.bf16.msra.mxu0 %v434
    %497 = vmatprep.subr.bf16.mxu0 0
    %498 = vmatpush1.bf16.msra.mxu0 %v435
    %499 = vmatprep.subr.bf16.mxu0 0
    %500 = vmatpush1.bf16.msra.mxu0 %v493
    %501 = vmatprep.subr.bf16.mxu0 0
    %502 = vmatpush1.bf16.msra.mxu0 0
    %503 = vmatprep.subr.bf16.mxu0 0
    %504 = vmatpush1.bf16.msra.mxu0 0
    %505 = vmatprep.subr.bf16.mxu0 0
    %506 = vmatpush1.bf16.msra.mxu0 0
    %507 = vmatprep.subr.bf16.mxu0 0
    %508 = vmatpush1.bf16.msra.mxu0 0
    %509 = vmatprep.subr.bf16.mxu0 0
    %510 = vmatpush1.bf16.msra.mxu0 0
    %511 = vmatprep.subr.bf16.mxu0 0
    %512 = vmatpush1.bf16.msra.mxu0 0
    %513 = vmatprep.subr.bf16.mxu0 0
    %514 = vmatpush1.bf16.msra.mxu0 0
    %515 = vmatprep.subr.bf16.mxu0 0
    %516 = vmatpush1.bf16.msra.mxu0 0
    %517 = vmatprep.subr.bf16.mxu0 0
    %518 = vmatpush1.bf16.msra.mxu0 0
    %519 = vmatprep.subr.bf16.mxu0 0
    %520 = vmatpush1.bf16.msra.mxu0 0
    %521 = vmatprep.subr.bf16.mxu0 0
    %522 = vmatpush1.bf16.msra.mxu0 0
    %523 = vmatprep.subr.bf16.mxu0 0
    %524 = vmatpush1.bf16.msra.mxu0 0
    %525 = vmatprep.subr.bf16.mxu0 0
    %526 = vmatpush1.bf16.msra.mxu0 0
    %527 = vmatprep.mubr.bf16.mxu0 0
    %528 = vmatmul.mubr.bf16.gmra.mrb[0].mxu0 %v441
    %v529 = vpop.f32.mrb[0].mxu0
    %v530 = vadd.f32 %v420, %v529
    %v531 = vpop.f32.mrb[0].mxu0
    %v532 = vpop.f32.mrb[0].mxu0
    %v533 = vadd.f32 %v420, %v532
    %v534 = vpop.f32.mrb[0].mxu0
    %535 = vmatprep.mubr.bf16.mxu0 0
    %536 = vmatmul.mubr.bf16.gmra.mrb[0].mxu0 %v444
    %v537 = vpop.f32.mrb[0].mxu0
    %v538 = vadd.f32 %v420, %v537
    %v539 = vpop.f32.mrb[0].mxu0
    %v540 = vpop.f32.mrb[0].mxu0
    %v541 = vadd.f32 %v420, %v540
    %v542 = vpop.f32.mrb[0].mxu0
    %543 = vmatprep.mubr.bf16.mxu0 0
    %544 = vmatmul.mubr.bf16.gmra.mrb[0].mxu0 %v447
    %v545 = vpop.f32.mrb[0].mxu0
    %v546 = vadd.f32 %v420, %v545
    %v547 = vpop.f32.mrb[0].mxu0
    %v548 = vpop.f32.mrb[0].mxu0
    %v549 = vadd.f32 %v420, %v548
    %v550 = vpop.f32.mrb[0].mxu0
    %551 = vmatprep.mubr.bf16.mxu0 0
    %552 = vmatmul.mubr.bf16.gmra.mrb[0].mxu0 %v450
    %v553 = vpop.f32.mrb[0].mxu0
    %v554 = vadd.f32 %v420, %v553
    %v555 = vpop.f32.mrb[0].mxu0
    %v556 = vpop.f32.mrb[0].mxu0
    %v557 = vadd.f32 %v420, %v556
    %v558 = vpop.f32.mrb[0].mxu0
    %559 = vmatprep.mubr.bf16.mxu0 0
    %560 = vmatmul.mubr.bf16.gmra.mrb[0].mxu0 %v453
    %v561 = vpop.f32.mrb[0].mxu0
    %v562 = vadd.f32 %v420, %v561
    %v563 = vpop.f32.mrb[0].mxu0
    %v564 = vpop.f32.mrb[0].mxu0
    %v565 = vadd.f32 %v420, %v564
    %v566 = vpop.f32.mrb[0].mxu0
    %567 = vmatprep.mubr.bf16.mxu0 0
    %568 = vmatmul.mubr.bf16.gmra.mrb[0].mxu0 %v456
    %v569 = vpop.f32.mrb[0].mxu0
    %v570 = vadd.f32 %v420, %v569
    %v571 = vpop.f32.mrb[0].mxu0
    %v572 = vpop.f32.mrb[0].mxu0
    %v573 = vadd.f32 %v420, %v572
    %v574 = vpop.f32.mrb[0].mxu0
    %575 = vmatprep.mubr.bf16.mxu0 0
    %576 = vmatmul.mubr.bf16.gmra.mrb[0].mxu0 %v459
    %v577 = vpop.f32.mrb[0].mxu0
    %v578 = vadd.f32 %v420, %v577
    %v579 = vpop.f32.mrb[0].mxu0
    %v580 = vpop.f32.mrb[0].mxu0
    %v581 = vadd.f32 %v420, %v580
    %v582 = vpop.f32.mrb[0].mxu0
    %583 = vmatprep.mubr.bf16.mxu0 0
    %584 = vmatmul.mubr.bf16.gmra.mrb[0].mxu0 %v462
    %v585 = vpop.f32.mrb[0].mxu0
    %v586 = vadd.f32 %v420, %v585
    %v587 = vpop.f32.mrb[0].mxu0
    %v588 = vpop.f32.mrb[0].mxu0
    %v589 = vadd.f32 %v420, %v588
    %v590 = vpop.f32.mrb[0].mxu0
    %591 = vmatprep.mubr.bf16.mxu0 0
    %592 = vmatmul.mubr.bf16.gmra.mrb[0].mxu0 %v465
    %v593 = vpop.f32.mrb[0].mxu0
    %v594 = vadd.f32 %v420, %v593
    %v595 = vpop.f32.mrb[0].mxu0
    %v596 = vpop.f32.mrb[0].mxu0
    %v597 = vadd.f32 %v420, %v596
    %v598 = vpop.f32.mrb[0].mxu0
    %599 = vmatprep.mubr.bf16.mxu0 0
    %600 = vmatmul.mubr.bf16.gmra.mrb[0].mxu0 %v468
    %v601 = vpop.f32.mrb[0].mxu0
    %v602 = vadd.f32 %v420, %v601
    %v603 = vpop.f32.mrb[0].mxu0
    %v604 = vpop.f32.mrb[0].mxu0
    %v605 = vadd.f32 %v420, %v604
    %v606 = vpop.f32.mrb[0].mxu0
    %607 = vmatprep.mubr.bf16.mxu0 0
    %608 = vmatmul.mubr.bf16.gmra.mrb[0].mxu0 %v471
    %v609 = vpop.f32.mrb[0].mxu0
    %v610 = vadd.f32 %v420, %v609
    %v611 = vpop.f32.mrb[0].mxu0
    %v612 = vpop.f32.mrb[0].mxu0
    %v613 = vadd.f32 %v420, %v612
    %v614 = vpop.f32.mrb[0].mxu0
    %615 = vmatprep.mubr.bf16.mxu0 0
    %616 = vmatmul.mubr.bf16.gmra.mrb[0].mxu0 %v474
    %v617 = vpop.f32.mrb[0].mxu0
    %v618 = vadd.f32 %v420, %v617
    %v619 = vpop.f32.mrb[0].mxu0
    %v620 = vpop.f32.mrb[0].mxu0
    %v621 = vadd.f32 %v420, %v620
    %v622 = vpop.f32.mrb[0].mxu0
    %623 = vmatprep.mubr.bf16.mxu0 0
    %624 = vmatmul.mubr.bf16.gmra.mrb[0].mxu0 %v477
    %v625 = vpop.f32.mrb[0].mxu0
    %v626 = vadd.f32 %v420, %v625
    %v627 = vpop.f32.mrb[0].mxu0
    %v628 = vpop.f32.mrb[0].mxu0
    %v629 = vadd.f32 %v420, %v628
    %v630 = vpop.f32.mrb[0].mxu0
    %631 = vmatprep.mubr.bf16.mxu0 0
    %632 = vmatmul.mubr.bf16.gmra.mrb[0].mxu0 %v480
    %v633 = vpop.f32.mrb[0].mxu0
    %v634 = vadd.f32 %v420, %v633
    %v635 = vpop.f32.mrb[0].mxu0
    %v636 = vpop.f32.mrb[0].mxu0
    %v637 = vadd.f32 %v420, %v636
    %v638 = vpop.f32.mrb[0].mxu0
    %639 = vmatprep.mubr.bf16.mxu0 0
    %640 = vmatmul.mubr.bf16.gmra.mrb[0].mxu0 %v483
    %v641 = vpop.f32.mrb[0].mxu0
    %v642 = vadd.f32 %v420, %v641
    %v643 = vpop.f32.mrb[0].mxu0
    %v644 = vpop.f32.mrb[0].mxu0
    %v645 = vadd.f32 %v420, %v644
    %v646 = vpop.f32.mrb[0].mxu0
    %647 = vmatprep.mubr.bf16.mxu0 0
    %648 = vmatmul.mubr.bf16.gmra.mrb[0].mxu0 %v486
    %v649 = vpop.f32.mrb[0].mxu0
    %v650 = vadd.f32 %v420, %v649
    %v651 = vpop.f32.mrb[0].mxu0
    %v652 = vpop.f32.mrb[0].mxu0
    %v653 = vadd.f32 %v420, %v652
    %v654 = vpop.f32.mrb[0].mxu0
    %655 = vdwg.mxu0
    %v656 = vmax.f32 %v530, 0.0
    %v657 = vmax.f32 %v533, 0.0
    %v658 = vmax.f32 %v538, 0.0
    %v659 = vmax.f32 %v541, 0.0
    %v660 = vmax.f32 %v546, 0.0
    %v661 = vmax.f32 %v549, 0.0
    %v662 = vmax.f32 %v554, 0.0
    %v663 = vmax.f32 %v557, 0.0
    %v664 = vmax.f32 %v562, 0.0
    %v665 = vmax.f32 %v565, 0.0
    %v666 = vmax.f32 %v570, 0.0
    %v667 = vmax.f32 %v573, 0.0
    %v668 = vmax.f32 %v578, 0.0
    %v669 = vmax.f32 %v581, 0.0
    %v670 = vmax.f32 %v586, 0.0
    %v671 = vmax.f32 %v589, 0.0
    %v672 = vmax.f32 %v594, 0.0
    %v673 = vmax.f32 %v597, 0.0
    %v674 = vmax.f32 %v602, 0.0
    %v675 = vmax.f32 %v605, 0.0
    %v676 = vmax.f32 %v610, 0.0
    %v677 = vmax.f32 %v613, 0.0
    %v678 = vmax.f32 %v618, 0.0
    %v679 = vmax.f32 %v621, 0.0
    %v680 = vmax.f32 %v626, 0.0
    %v681 = vmax.f32 %v629, 0.0
    %v682 = vmax.f32 %v634, 0.0
    %v683 = vmax.f32 %v637, 0.0
    %v684 = vmax.f32 %v642, 0.0
    %v685 = vmax.f32 %v645, 0.0
    %v686 = vmax.f32 %v650, 0.0
    %v687 = vmax.f32 %v653, 0.0
    %v688 = vld [vmem:[%s5] sm:$0xf]
    %v689 = vld [vmem:[%s5 + $0x4] sm:$0xf]
    %v690 = vld [vmem:[%s5 + $0x8] sm:$0xf]
    %v691 = vld [vmem:[%s5 + $0xc] sm:$0xf]
    %v692 = vpack.c.bf16 %v657, %v656
    %v693 = vpack.c.bf16 %v659, %v658
    %v694 = vpack.c.bf16 %v661, %v660
    %v695 = vpack.c.bf16 %v663, %v662
    %v696 = vpack.c.bf16 %v665, %v664
    %v697 = vpack.c.bf16 %v667, %v666
    %v698 = vpack.c.bf16 %v669, %v668
    %v699 = vpack.c.bf16 %v671, %v670
    %v700 = vpack.c.bf16 %v673, %v672
    %v701 = vpack.c.bf16 %v675, %v674
    %v702 = vpack.c.bf16 %v677, %v676
    %v703 = vpack.c.bf16 %v679, %v678
    %v704 = vpack.c.bf16 %v681, %v680
    %v705 = vpack.c.bf16 %v683, %v682
    %v706 = vpack.c.bf16 %v685, %v684
    %v707 = vpack.c.bf16 %v687, %v686
    %v708 = vld [vmem:[%s6] sm:$0x1]
    %v710 = vlaneseq
    %v711 = vshrl.u32 %v710, 7
    %v712 = vsub.s32 0, %v711
    %v713 = vrot.slane %v708, %v712
    %v719 = vunpack.c.l.b16 %v688
    %v720 = vunpack.c.l.b16 %v689
    %v721 = vunpack.c.l.b16 %v690
    %v722 = vunpack.c.l.b16 %v691
    %v723 = vpack.c.b16 %v720, %v719
    %v724 = vpack.c.b16 %v722, %v721
    %vm727 = vcmask 261120
    %v729 = vsel %vm727, %v692, 0
    %v732 = vsel %vm727, %v693, 0
    %v735 = vsel %vm727, %v694, 0
    %v738 = vsel %vm727, %v695, 0
    %v741 = vsel %vm727, %v696, 0
    %v744 = vsel %vm727, %v697, 0
    %v747 = vsel %vm727, %v698, 0
    %v750 = vsel %vm727, %v699, 0
    %v753 = vsel %vm727, %v700, 0
    %v756 = vsel %vm727, %v701, 0
    %v759 = vsel %vm727, %v702, 0
    %v762 = vsel %vm727, %v703, 0
    %v765 = vsel %vm727, %v704, 0
    %v768 = vsel %vm727, %v705, 0
    %v771 = vsel %vm727, %v706, 0
    %v774 = vsel %vm727, %v707, 0
    %776 = vmatprep.subr.bf16.mxu0 0
    %777 = vmatpush1.bf16.msra.mxu0 %v723
    %778 = vmatprep.subr.bf16.mxu0 0
    %779 = vmatpush1.bf16.msra.mxu0 %v724
    %780 = vmatprep.subr.bf16.mxu0 0
    %781 = vmatpush1.bf16.msra.mxu0 0
    %782 = vmatprep.subr.bf16.mxu0 0
    %783 = vmatpush1.bf16.msra.mxu0 0
    %784 = vmatprep.subr.bf16.mxu0 0
    %785 = vmatpush1.bf16.msra.mxu0 0
    %786 = vmatprep.subr.bf16.mxu0 0
    %787 = vmatpush1.bf16.msra.mxu0 0
    %788 = vmatprep.subr.bf16.mxu0 0
    %789 = vmatpush1.bf16.msra.mxu0 0
    %790 = vmatprep.subr.bf16.mxu0 0
    %791 = vmatpush1.bf16.msra.mxu0 0
    %792 = vmatprep.subr.bf16.mxu0 0
    %793 = vmatpush1.bf16.msra.mxu0 0
    %794 = vmatprep.subr.bf16.mxu0 0
    %795 = vmatpush1.bf16.msra.mxu0 0
    %796 = vmatprep.subr.bf16.mxu0 0
    %797 = vmatpush1.bf16.msra.mxu0 0
    %798 = vmatprep.subr.bf16.mxu0 0
    %799 = vmatpush1.bf16.msra.mxu0 0
    %800 = vmatprep.subr.bf16.mxu0 0
    %801 = vmatpush1.bf16.msra.mxu0 0
    %802 = vmatprep.subr.bf16.mxu0 0
    %803 = vmatpush1.bf16.msra.mxu0 0
    %804 = vmatprep.subr.bf16.mxu0 0
    %805 = vmatpush1.bf16.msra.mxu0 0
    %806 = vmatprep.subr.bf16.mxu0 0
    %807 = vmatpush1.bf16.msra.mxu0 0
    %808 = vmatprep.mubr.bf16.mxu0 0
    %809 = vmatmul.mubr.bf16.gmra.mrb[0].mxu0 %v729
    %v810 = vpop.f32.mrb[0].mxu0
    %v811 = vadd.f32 %v713, %v810
    %v812 = vpop.f32.mrb[0].mxu0
    %v813 = vpop.f32.mrb[0].mxu0
    %v814 = vadd.f32 %v713, %v813
    %v815 = vpop.f32.mrb[0].mxu0
    %816 = vmatprep.mubr.bf16.mxu0 0
    %817 = vmatmul.mubr.bf16.gmra.mrb[0].mxu0 %v732
    %v818 = vpop.f32.mrb[0].mxu0
    %v819 = vadd.f32 %v713, %v818
    %v820 = vpop.f32.mrb[0].mxu0
    %v821 = vpop.f32.mrb[0].mxu0
    %v822 = vadd.f32 %v713, %v821
    %v823 = vpop.f32.mrb[0].mxu0
    %824 = vmatprep.mubr.bf16.mxu0 0
    %825 = vmatmul.mubr.bf16.gmra.mrb[0].mxu0 %v735
    %v826 = vpop.f32.mrb[0].mxu0
    %v827 = vadd.f32 %v713, %v826
    %v828 = vpop.f32.mrb[0].mxu0
    %v829 = vpop.f32.mrb[0].mxu0
    %v830 = vadd.f32 %v713, %v829
    %v831 = vpop.f32.mrb[0].mxu0
    %832 = vmatprep.mubr.bf16.mxu0 0
    %833 = vmatmul.mubr.bf16.gmra.mrb[0].mxu0 %v738
    %v834 = vpop.f32.mrb[0].mxu0
    %v835 = vadd.f32 %v713, %v834
    %v836 = vpop.f32.mrb[0].mxu0
    %v837 = vpop.f32.mrb[0].mxu0
    %v838 = vadd.f32 %v713, %v837
    %v839 = vpop.f32.mrb[0].mxu0
    %840 = vmatprep.mubr.bf16.mxu0 0
    %841 = vmatmul.mubr.bf16.gmra.mrb[0].mxu0 %v741
    %v842 = vpop.f32.mrb[0].mxu0
    %v843 = vadd.f32 %v713, %v842
    %v844 = vpop.f32.mrb[0].mxu0
    %v845 = vpop.f32.mrb[0].mxu0
    %v846 = vadd.f32 %v713, %v845
    %v847 = vpop.f32.mrb[0].mxu0
    %848 = vmatprep.mubr.bf16.mxu0 0
    %849 = vmatmul.mubr.bf16.gmra.mrb[0].mxu0 %v744
    %v850 = vpop.f32.mrb[0].mxu0
    %v851 = vadd.f32 %v713, %v850
    %v852 = vpop.f32.mrb[0].mxu0
    %v853 = vpop.f32.mrb[0].mxu0
    %v854 = vadd.f32 %v713, %v853
    %v855 = vpop.f32.mrb[0].mxu0
    %856 = vmatprep.mubr.bf16.mxu0 0
    %857 = vmatmul.mubr.bf16.gmra.mrb[0].mxu0 %v747
    %v858 = vpop.f32.mrb[0].mxu0
    %v859 = vadd.f32 %v713, %v858
    %v860 = vpop.f32.mrb[0].mxu0
    %v861 = vpop.f32.mrb[0].mxu0
    %v862 = vadd.f32 %v713, %v861
    %v863 = vpop.f32.mrb[0].mxu0
    %864 = vmatprep.mubr.bf16.mxu0 0
    %865 = vmatmul.mubr.bf16.gmra.mrb[0].mxu0 %v750
    %v866 = vpop.f32.mrb[0].mxu0
    %v867 = vadd.f32 %v713, %v866
    %v868 = vpop.f32.mrb[0].mxu0
    %v869 = vpop.f32.mrb[0].mxu0
    %v870 = vadd.f32 %v713, %v869
    %v871 = vpop.f32.mrb[0].mxu0
    %872 = vmatprep.mubr.bf16.mxu0 0
    %873 = vmatmul.mubr.bf16.gmra.mrb[0].mxu0 %v753
    %v874 = vpop.f32.mrb[0].mxu0
    %v875 = vadd.f32 %v713, %v874
    %v876 = vpop.f32.mrb[0].mxu0
    %v877 = vpop.f32.mrb[0].mxu0
    %v878 = vadd.f32 %v713, %v877
    %v879 = vpop.f32.mrb[0].mxu0
    %880 = vmatprep.mubr.bf16.mxu0 0
    %881 = vmatmul.mubr.bf16.gmra.mrb[0].mxu0 %v756
    %v882 = vpop.f32.mrb[0].mxu0
    %v883 = vadd.f32 %v713, %v882
    %v884 = vpop.f32.mrb[0].mxu0
    %v885 = vpop.f32.mrb[0].mxu0
    %v886 = vadd.f32 %v713, %v885
    %v887 = vpop.f32.mrb[0].mxu0
    %888 = vmatprep.mubr.bf16.mxu0 0
    %889 = vmatmul.mubr.bf16.gmra.mrb[0].mxu0 %v759
    %v890 = vpop.f32.mrb[0].mxu0
    %v891 = vadd.f32 %v713, %v890
    %v892 = vpop.f32.mrb[0].mxu0
    %v893 = vpop.f32.mrb[0].mxu0
    %v894 = vadd.f32 %v713, %v893
    %v895 = vpop.f32.mrb[0].mxu0
    %896 = vmatprep.mubr.bf16.mxu0 0
    %897 = vmatmul.mubr.bf16.gmra.mrb[0].mxu0 %v762
    %v898 = vpop.f32.mrb[0].mxu0
    %v899 = vadd.f32 %v713, %v898
    %v900 = vpop.f32.mrb[0].mxu0
    %v901 = vpop.f32.mrb[0].mxu0
    %v902 = vadd.f32 %v713, %v901
    %v903 = vpop.f32.mrb[0].mxu0
    %904 = vmatprep.mubr.bf16.mxu0 0
    %905 = vmatmul.mubr.bf16.gmra.mrb[0].mxu0 %v765
    %v906 = vpop.f32.mrb[0].mxu0
    %v907 = vadd.f32 %v713, %v906
    %v908 = vpop.f32.mrb[0].mxu0
    %v909 = vpop.f32.mrb[0].mxu0
    %v910 = vadd.f32 %v713, %v909
    %v911 = vpop.f32.mrb[0].mxu0
    %912 = vmatprep.mubr.bf16.mxu0 0
    %913 = vmatmul.mubr.bf16.gmra.mrb[0].mxu0 %v768
    %v914 = vpop.f32.mrb[0].mxu0
    %v915 = vadd.f32 %v713, %v914
    %v916 = vpop.f32.mrb[0].mxu0
    %v917 = vpop.f32.mrb[0].mxu0
    %v918 = vadd.f32 %v713, %v917
    %v919 = vpop.f32.mrb[0].mxu0
    %920 = vmatprep.mubr.bf16.mxu0 0
    %921 = vmatmul.mubr.bf16.gmra.mrb[0].mxu0 %v771
    %v922 = vpop.f32.mrb[0].mxu0
    %v923 = vadd.f32 %v713, %v922
    %v924 = vpop.f32.mrb[0].mxu0
    %v925 = vpop.f32.mrb[0].mxu0
    %v926 = vadd.f32 %v713, %v925
    %v927 = vpop.f32.mrb[0].mxu0
    %928 = vmatprep.mubr.bf16.mxu0 0
    %929 = vmatmul.mubr.bf16.gmra.mrb[0].mxu0 %v774
    %v930 = vpop.f32.mrb[0].mxu0
    %v931 = vadd.f32 %v713, %v930
    %v932 = vpop.f32.mrb[0].mxu0
    %v933 = vpop.f32.mrb[0].mxu0
    %v934 = vadd.f32 %v713, %v933
    %v935 = vpop.f32.mrb[0].mxu0
    %936 = vdwg.mxu0
    %v937 = vmax.f32 %v811, 0.0
    %v938 = vmax.f32 %v814, 0.0
    %v939 = vmax.f32 %v819, 0.0
    %v940 = vmax.f32 %v822, 0.0
    %v941 = vmax.f32 %v827, 0.0
    %v942 = vmax.f32 %v830, 0.0
    %v943 = vmax.f32 %v835, 0.0
    %v944 = vmax.f32 %v838, 0.0
    %v945 = vmax.f32 %v843, 0.0
    %v946 = vmax.f32 %v846, 0.0
    %v947 = vmax.f32 %v851, 0.0
    %v948 = vmax.f32 %v854, 0.0
    %v949 = vmax.f32 %v859, 0.0
    %v950 = vmax.f32 %v862, 0.0
    %v951 = vmax.f32 %v867, 0.0
    %v952 = vmax.f32 %v870, 0.0
    %v953 = vmax.f32 %v875, 0.0
    %v954 = vmax.f32 %v878, 0.0
    %v955 = vmax.f32 %v883, 0.0
    %v956 = vmax.f32 %v886, 0.0
    %v957 = vmax.f32 %v891, 0.0
    %v958 = vmax.f32 %v894, 0.0
    %v959 = vmax.f32 %v899, 0.0
    %v960 = vmax.f32 %v902, 0.0
    %v961 = vmax.f32 %v907, 0.0
    %v962 = vmax.f32 %v910, 0.0
    %v963 = vmax.f32 %v915, 0.0
    %v964 = vmax.f32 %v918, 0.0
    %v965 = vmax.f32 %v923, 0.0
    %v966 = vmax.f32 %v926, 0.0
    %v967 = vmax.f32 %v931, 0.0
    %v968 = vmax.f32 %v934, 0.0
    %v969 = vld [vmem:[%s7] sm:$0xf]
    %v970 = vld [vmem:[%s7 + $0x4] sm:$0xf]
    %v971 = vld [vmem:[%s7 + $0x8] sm:$0x7]
    %v972 = vpack.c.bf16 %v938, %v937
    %v973 = vpack.c.bf16 %v940, %v939
    %v974 = vpack.c.bf16 %v942, %v941
    %v975 = vpack.c.bf16 %v944, %v943
    %v976 = vpack.c.bf16 %v946, %v945
    %v977 = vpack.c.bf16 %v948, %v947
    %v978 = vpack.c.bf16 %v950, %v949
    %v979 = vpack.c.bf16 %v952, %v951
    %v980 = vpack.c.bf16 %v954, %v953
    %v981 = vpack.c.bf16 %v956, %v955
    %v982 = vpack.c.bf16 %v958, %v957
    %v983 = vpack.c.bf16 %v960, %v959
    %v984 = vpack.c.bf16 %v962, %v961
    %v985 = vpack.c.bf16 %v964, %v963
    %v986 = vpack.c.bf16 %v966, %v965
    %v987 = vpack.c.bf16 %v968, %v967
    %v988 = vld [vmem:[%s8] sm:$0x1]
    %v990 = vlaneseq
    %v991 = vshrl.u32 %v990, 7
    %v992 = vsub.s32 0, %v991
    %v993 = vrot.slane %v988, %v992
    %v998 = vunpack.c.l.b16 %v969
    %v999 = vunpack.c.l.b16 %v970
    %v1000 = vunpack.c.l.b16 %v971
    %v1001 = vpack.c.b16 %v999, %v998
    %v1002 = vpack.c.b16 %v1000, %v1000
    %vm1004 = vcmask 179200
    %v1006 = vsel %vm1004, %v972, 0
    %v1009 = vsel %vm1004, %v973, 0
    %v1012 = vsel %vm1004, %v974, 0
    %v1015 = vsel %vm1004, %v975, 0
    %v1018 = vsel %vm1004, %v976, 0
    %v1021 = vsel %vm1004, %v977, 0
    %v1024 = vsel %vm1004, %v978, 0
    %v1027 = vsel %vm1004, %v979, 0
    %v1030 = vsel %vm1004, %v980, 0
    %v1033 = vsel %vm1004, %v981, 0
    %v1036 = vsel %vm1004, %v982, 0
    %v1039 = vsel %vm1004, %v983, 0
    %v1042 = vsel %vm1004, %v984, 0
    %v1045 = vsel %vm1004, %v985, 0
    %v1048 = vsel %vm1004, %v986, 0
    %v1051 = vsel %vm1004, %v987, 0
    %vm1053 = vcmask 1042432
    %v1055 = vsel %vm1053, %v1002, 0
    %1057 = vmatprep.subr.bf16.mxu0 0
    %1058 = vmatpush1.bf16.msra.mxu0 %v1001
    %1059 = vmatprep.subr.bf16.mxu0 0
    %1060 = vmatpush1.bf16.msra.mxu0 %v1055
    %1061 = vmatprep.subr.bf16.mxu0 0
    %1062 = vmatpush1.bf16.msra.mxu0 0
    %1063 = vmatprep.subr.bf16.mxu0 0
    %1064 = vmatpush1.bf16.msra.mxu0 0
    %1065 = vmatprep.subr.bf16.mxu0 0
    %1066 = vmatpush1.bf16.msra.mxu0 0
    %1067 = vmatprep.subr.bf16.mxu0 0
    %1068 = vmatpush1.bf16.msra.mxu0 0
    %1069 = vmatprep.subr.bf16.mxu0 0
    %1070 = vmatpush1.bf16.msra.mxu0 0
    %1071 = vmatprep.subr.bf16.mxu0 0
    %1072 = vmatpush1.bf16.msra.mxu0 0
    %1073 = vmatprep.subr.bf16.mxu0 0
    %1074 = vmatpush1.bf16.msra.mxu0 0
    %1075 = vmatprep.subr.bf16.mxu0 0
    %1076 = vmatpush1.bf16.msra.mxu0 0
    %1077 = vmatprep.subr.bf16.mxu0 0
    %1078 = vmatpush1.bf16.msra.mxu0 0
    %1079 = vmatprep.subr.bf16.mxu0 0
    %1080 = vmatpush1.bf16.msra.mxu0 0
    %1081 = vmatprep.subr.bf16.mxu0 0
    %1082 = vmatpush1.bf16.msra.mxu0 0
    %1083 = vmatprep.subr.bf16.mxu0 0
    %1084 = vmatpush1.bf16.msra.mxu0 0
    %1085 = vmatprep.subr.bf16.mxu0 0
    %1086 = vmatpush1.bf16.msra.mxu0 0
    %1087 = vmatprep.subr.bf16.mxu0 0
    %1088 = vmatpush1.bf16.msra.mxu0 0
    %1089 = vmatprep.mubr.bf16.mxu0 0
    %1090 = vmatmul.mubr.bf16.gmra.mrb[0].mxu0 %v1006
    %v1091 = vpop.f32.mrb[0].mxu0
    %v1092 = vadd.f32 %v993, %v1091
    %v1093 = vpop.f32.mrb[0].mxu0
    %v1094 = vpop.f32.mrb[0].mxu0
    %v1095 = vadd.f32 %v993, %v1094
    %v1096 = vpop.f32.mrb[0].mxu0
    %1097 = vmatprep.mubr.bf16.mxu0 0
    %1098 = vmatmul.mubr.bf16.gmra.mrb[0].mxu0 %v1009
    %v1099 = vpop.f32.mrb[0].mxu0
    %v1100 = vadd.f32 %v993, %v1099
    %v1101 = vpop.f32.mrb[0].mxu0
    %v1102 = vpop.f32.mrb[0].mxu0
    %v1103 = vadd.f32 %v993, %v1102
    %v1104 = vpop.f32.mrb[0].mxu0
    %1105 = vmatprep.mubr.bf16.mxu0 0
    %1106 = vmatmul.mubr.bf16.gmra.mrb[0].mxu0 %v1012
    %v1107 = vpop.f32.mrb[0].mxu0
    %v1108 = vadd.f32 %v993, %v1107
    %v1109 = vpop.f32.mrb[0].mxu0
    %v1110 = vpop.f32.mrb[0].mxu0
    %v1111 = vadd.f32 %v993, %v1110
    %v1112 = vpop.f32.mrb[0].mxu0
    %1113 = vmatprep.mubr.bf16.mxu0 0
    %1114 = vmatmul.mubr.bf16.gmra.mrb[0].mxu0 %v1015
    %v1115 = vpop.f32.mrb[0].mxu0
    %v1116 = vadd.f32 %v993, %v1115
    %v1117 = vpop.f32.mrb[0].mxu0
    %v1118 = vpop.f32.mrb[0].mxu0
    %v1119 = vadd.f32 %v993, %v1118
    %v1120 = vpop.f32.mrb[0].mxu0
    %1121 = vmatprep.mubr.bf16.mxu0 0
    %1122 = vmatmul.mubr.bf16.gmra.mrb[0].mxu0 %v1018
    %v1123 = vpop.f32.mrb[0].mxu0
    %v1124 = vadd.f32 %v993, %v1123
    %v1125 = vpop.f32.mrb[0].mxu0
    %v1126 = vpop.f32.mrb[0].mxu0
    %v1127 = vadd.f32 %v993, %v1126
    %v1128 = vpop.f32.mrb[0].mxu0
    %1129 = vmatprep.mubr.bf16.mxu0 0
    %1130 = vmatmul.mubr.bf16.gmra.mrb[0].mxu0 %v1021
    %v1131 = vpop.f32.mrb[0].mxu0
    %v1132 = vadd.f32 %v993, %v1131
    %v1133 = vpop.f32.mrb[0].mxu0
    %v1134 = vpop.f32.mrb[0].mxu0
    %v1135 = vadd.f32 %v993, %v1134
    %v1136 = vpop.f32.mrb[0].mxu0
    %1137 = vmatprep.mubr.bf16.mxu0 0
    %1138 = vmatmul.mubr.bf16.gmra.mrb[0].mxu0 %v1024
    %v1139 = vpop.f32.mrb[0].mxu0
    %v1140 = vadd.f32 %v993, %v1139
    %v1141 = vpop.f32.mrb[0].mxu0
    %v1142 = vpop.f32.mrb[0].mxu0
    %v1143 = vadd.f32 %v993, %v1142
    %v1144 = vpop.f32.mrb[0].mxu0
    %1145 = vmatprep.mubr.bf16.mxu0 0
    %1146 = vmatmul.mubr.bf16.gmra.mrb[0].mxu0 %v1027
    %v1147 = vpop.f32.mrb[0].mxu0
    %v1148 = vadd.f32 %v993, %v1147
    %v1149 = vpop.f32.mrb[0].mxu0
    %v1150 = vpop.f32.mrb[0].mxu0
    %v1151 = vadd.f32 %v993, %v1150
    %v1152 = vpop.f32.mrb[0].mxu0
    %1153 = vmatprep.mubr.bf16.mxu0 0
    %1154 = vmatmul.mubr.bf16.gmra.mrb[0].mxu0 %v1030
    %v1155 = vpop.f32.mrb[0].mxu0
    %v1156 = vadd.f32 %v993, %v1155
    %v1157 = vpop.f32.mrb[0].mxu0
    %v1158 = vpop.f32.mrb[0].mxu0
    %v1159 = vadd.f32 %v993, %v1158
    %v1160 = vpop.f32.mrb[0].mxu0
    %1161 = vmatprep.mubr.bf16.mxu0 0
    %1162 = vmatmul.mubr.bf16.gmra.mrb[0].mxu0 %v1033
    %v1163 = vpop.f32.mrb[0].mxu0
    %v1164 = vadd.f32 %v993, %v1163
    %v1165 = vpop.f32.mrb[0].mxu0
    %v1166 = vpop.f32.mrb[0].mxu0
    %v1167 = vadd.f32 %v993, %v1166
    %v1168 = vpop.f32.mrb[0].mxu0
    %1169 = vmatprep.mubr.bf16.mxu0 0
    %1170 = vmatmul.mubr.bf16.gmra.mrb[0].mxu0 %v1036
    %v1171 = vpop.f32.mrb[0].mxu0
    %v1172 = vadd.f32 %v993, %v1171
    %v1173 = vpop.f32.mrb[0].mxu0
    %v1174 = vpop.f32.mrb[0].mxu0
    %v1175 = vadd.f32 %v993, %v1174
    %v1176 = vpop.f32.mrb[0].mxu0
    %1177 = vmatprep.mubr.bf16.mxu0 0
    %1178 = vmatmul.mubr.bf16.gmra.mrb[0].mxu0 %v1039
    %v1179 = vpop.f32.mrb[0].mxu0
    %v1180 = vadd.f32 %v993, %v1179
    %v1181 = vpop.f32.mrb[0].mxu0
    %v1182 = vpop.f32.mrb[0].mxu0
    %v1183 = vadd.f32 %v993, %v1182
    %v1184 = vpop.f32.mrb[0].mxu0
    %1185 = vmatprep.mubr.bf16.mxu0 0
    %1186 = vmatmul.mubr.bf16.gmra.mrb[0].mxu0 %v1042
    %v1187 = vpop.f32.mrb[0].mxu0
    %v1188 = vadd.f32 %v993, %v1187
    %v1189 = vpop.f32.mrb[0].mxu0
    %v1190 = vpop.f32.mrb[0].mxu0
    %v1191 = vadd.f32 %v993, %v1190
    %v1192 = vpop.f32.mrb[0].mxu0
    %1193 = vmatprep.mubr.bf16.mxu0 0
    %1194 = vmatmul.mubr.bf16.gmra.mrb[0].mxu0 %v1045
    %v1195 = vpop.f32.mrb[0].mxu0
    %v1196 = vadd.f32 %v993, %v1195
    %v1197 = vpop.f32.mrb[0].mxu0
    %v1198 = vpop.f32.mrb[0].mxu0
    %v1199 = vadd.f32 %v993, %v1198
    %v1200 = vpop.f32.mrb[0].mxu0
    %1201 = vmatprep.mubr.bf16.mxu0 0
    %1202 = vmatmul.mubr.bf16.gmra.mrb[0].mxu0 %v1048
    %v1203 = vpop.f32.mrb[0].mxu0
    %v1204 = vadd.f32 %v993, %v1203
    %v1205 = vpop.f32.mrb[0].mxu0
    %v1206 = vpop.f32.mrb[0].mxu0
    %v1207 = vadd.f32 %v993, %v1206
    %v1208 = vpop.f32.mrb[0].mxu0
    %1209 = vmatprep.mubr.bf16.mxu0 0
    %1210 = vmatmul.mubr.bf16.gmra.mrb[0].mxu0 %v1051
    %v1211 = vpop.f32.mrb[0].mxu0
    %v1212 = vadd.f32 %v993, %v1211
    %v1213 = vpop.f32.mrb[0].mxu0
    %v1214 = vpop.f32.mrb[0].mxu0
    %v1215 = vadd.f32 %v993, %v1214
    %v1216 = vpop.f32.mrb[0].mxu0
    %1217 = vdwg.mxu0
    %v1218 = vmax.f32 %v1092, 0.0
    %v1219 = vmax.f32 %v1095, 0.0
    %v1220 = vmax.f32 %v1100, 0.0
    %v1221 = vmax.f32 %v1103, 0.0
    %v1222 = vmax.f32 %v1108, 0.0
    %v1223 = vmax.f32 %v1111, 0.0
    %v1224 = vmax.f32 %v1116, 0.0
    %v1225 = vmax.f32 %v1119, 0.0
    %v1226 = vmax.f32 %v1124, 0.0
    %v1227 = vmax.f32 %v1127, 0.0
    %v1228 = vmax.f32 %v1132, 0.0
    %v1229 = vmax.f32 %v1135, 0.0
    %v1230 = vmax.f32 %v1140, 0.0
    %v1231 = vmax.f32 %v1143, 0.0
    %v1232 = vmax.f32 %v1148, 0.0
    %v1233 = vmax.f32 %v1151, 0.0
    %v1234 = vmax.f32 %v1156, 0.0
    %v1235 = vmax.f32 %v1159, 0.0
    %v1236 = vmax.f32 %v1164, 0.0
    %v1237 = vmax.f32 %v1167, 0.0
    %v1238 = vmax.f32 %v1172, 0.0
    %v1239 = vmax.f32 %v1175, 0.0
    %v1240 = vmax.f32 %v1180, 0.0
    %v1241 = vmax.f32 %v1183, 0.0
    %v1242 = vmax.f32 %v1188, 0.0
    %v1243 = vmax.f32 %v1191, 0.0
    %v1244 = vmax.f32 %v1196, 0.0
    %v1245 = vmax.f32 %v1199, 0.0
    %v1246 = vmax.f32 %v1204, 0.0
    %v1247 = vmax.f32 %v1207, 0.0
    %v1248 = vmax.f32 %v1212, 0.0
    %v1249 = vmax.f32 %v1215, 0.0
    %v1250 = vld [vmem:[%s9] sm:$0xff]
    %v1251 = vld [vmem:[%s9 + $0x8] sm:$0xff]
    %v1252 = vpack.c.bf16 %v1219, %v1218
    %v1253 = vpack.c.bf16 %v1221, %v1220
    %v1254 = vpack.c.bf16 %v1223, %v1222
    %v1255 = vpack.c.bf16 %v1225, %v1224
    %v1256 = vpack.c.bf16 %v1227, %v1226
    %v1257 = vpack.c.bf16 %v1229, %v1228
    %v1258 = vpack.c.bf16 %v1231, %v1230
    %v1259 = vpack.c.bf16 %v1233, %v1232
    %v1260 = vpack.c.bf16 %v1235, %v1234
    %v1261 = vpack.c.bf16 %v1237, %v1236
    %v1262 = vpack.c.bf16 %v1239, %v1238
    %v1263 = vpack.c.bf16 %v1241, %v1240
    %v1264 = vpack.c.bf16 %v1243, %v1242
    %v1265 = vpack.c.bf16 %v1245, %v1244
    %v1266 = vpack.c.bf16 %v1247, %v1246
    %v1267 = vpack.c.bf16 %v1249, %v1248
    %v1268 = vld [vmem:[%s10] sm:$0x3]
    %v1270 = vlaneseq
    %v1271 = vshrl.u32 %v1270, 7
    %v1272 = vsub.s32 0, %v1271
    %v1273 = vrot.slane %v1268, %v1272
    %v1274 = vlaneseq
    %v1275 = vshrl.u32 %v1274, 7
    %v1276 = vsub.s32 1, %v1275
    %v1277 = vrot.slane %v1268, %v1276
    %v1282 = vunpack.c.l.b16 %v1250
    %v1283 = vunpack.c.h.b16 %v1250
    %v1284 = vunpack.c.l.b16 %v1251
    %v1285 = vunpack.c.h.b16 %v1251
    %v1286 = vpack.c.b16 %v1284, %v1282
    %v1287 = vpack.c.b16 %v1285, %v1283
    %vm1290 = vcmask 130048
    %v1292 = vsel %vm1290, %v1252, 0
    %v1295 = vsel %vm1290, %v1253, 0
    %v1298 = vsel %vm1290, %v1254, 0
    %v1301 = vsel %vm1290, %v1255, 0
    %v1304 = vsel %vm1290, %v1256, 0
    %v1307 = vsel %vm1290, %v1257, 0
    %v1310 = vsel %vm1290, %v1258, 0
    %v1313 = vsel %vm1290, %v1259, 0
    %v1316 = vsel %vm1290, %v1260, 0
    %v1319 = vsel %vm1290, %v1261, 0
    %v1322 = vsel %vm1290, %v1262, 0
    %v1325 = vsel %vm1290, %v1263, 0
    %v1328 = vsel %vm1290, %v1264, 0
    %v1331 = vsel %vm1290, %v1265, 0
    %v1334 = vsel %vm1290, %v1266, 0
    %v1337 = vsel %vm1290, %v1267, 0
    %1339 = vmatprep.subr.bf16.mxu0 %v1287
    %1340 = vmatpush1.bf16.msra.mxu0 %v1286
    %1341 = vmatprep.subr.bf16.mxu0 0
    %1342 = vmatpush1.bf16.msra.mxu0 0
    %1343 = vmatprep.subr.bf16.mxu0 0
    %1344 = vmatpush1.bf16.msra.mxu0 0
    %1345 = vmatprep.subr.bf16.mxu0 0
    %1346 = vmatpush1.bf16.msra.mxu0 0
    %1347 = vmatprep.subr.bf16.mxu0 0
    %1348 = vmatpush1.bf16.msra.mxu0 0
    %1349 = vmatprep.subr.bf16.mxu0 0
    %1350 = vmatpush1.bf16.msra.mxu0 0
    %1351 = vmatprep.subr.bf16.mxu0 0
    %1352 = vmatpush1.bf16.msra.mxu0 0
    %1353 = vmatprep.subr.bf16.mxu0 0
    %1354 = vmatpush1.bf16.msra.mxu0 0
    %1355 = vmatprep.subr.bf16.mxu0 0
    %1356 = vmatpush1.bf16.msra.mxu0 0
    %1357 = vmatprep.subr.bf16.mxu0 0
    %1358 = vmatpush1.bf16.msra.mxu0 0
    %1359 = vmatprep.subr.bf16.mxu0 0
    %1360 = vmatpush1.bf16.msra.mxu0 0
    %1361 = vmatprep.subr.bf16.mxu0 0
    %1362 = vmatpush1.bf16.msra.mxu0 0
    %1363 = vmatprep.subr.bf16.mxu0 0
    %1364 = vmatpush1.bf16.msra.mxu0 0
    %1365 = vmatprep.subr.bf16.mxu0 0
    %1366 = vmatpush1.bf16.msra.mxu0 0
    %1367 = vmatprep.subr.bf16.mxu0 0
    %1368 = vmatpush1.bf16.msra.mxu0 0
    %1369 = vmatprep.subr.bf16.mxu0 0
    %1370 = vmatpush1.bf16.msra.mxu0 0
    %1371 = vmatprep.mubr.bf16.mxu0 0
    %1372 = vmatmul.mubr.bf16.gmra.mrb[0].mxu0 %v1292
    %v1373 = vpop.f32.mrb[0].mxu0
    %v1374 = vadd.f32 %v1273, %v1373
    %v1375 = vpop.f32.mrb[0].mxu0
    %v1376 = vadd.f32 %v1277, %v1375
    %v1377 = vpop.f32.mrb[0].mxu0
    %v1378 = vadd.f32 %v1273, %v1377
    %v1379 = vpop.f32.mrb[0].mxu0
    %v1380 = vadd.f32 %v1277, %v1379
    %1381 = vmatprep.mubr.bf16.mxu0 0
    %1382 = vmatmul.mubr.bf16.gmra.mrb[0].mxu0 %v1295
    %v1383 = vpop.f32.mrb[0].mxu0
    %v1384 = vadd.f32 %v1273, %v1383
    %v1385 = vpop.f32.mrb[0].mxu0
    %v1386 = vadd.f32 %v1277, %v1385
    %v1387 = vpop.f32.mrb[0].mxu0
    %v1388 = vadd.f32 %v1273, %v1387
    %v1389 = vpop.f32.mrb[0].mxu0
    %v1390 = vadd.f32 %v1277, %v1389
    %1391 = vmatprep.mubr.bf16.mxu0 0
    %1392 = vmatmul.mubr.bf16.gmra.mrb[0].mxu0 %v1298
    %v1393 = vpop.f32.mrb[0].mxu0
    %v1394 = vadd.f32 %v1273, %v1393
    %v1395 = vpop.f32.mrb[0].mxu0
    %v1396 = vadd.f32 %v1277, %v1395
    %v1397 = vpop.f32.mrb[0].mxu0
    %v1398 = vadd.f32 %v1273, %v1397
    %v1399 = vpop.f32.mrb[0].mxu0
    %v1400 = vadd.f32 %v1277, %v1399
    %1401 = vmatprep.mubr.bf16.mxu0 0
    %1402 = vmatmul.mubr.bf16.gmra.mrb[0].mxu0 %v1301
    %v1403 = vpop.f32.mrb[0].mxu0
    %v1404 = vadd.f32 %v1273, %v1403
    %v1405 = vpop.f32.mrb[0].mxu0
    %v1406 = vadd.f32 %v1277, %v1405
    %v1407 = vpop.f32.mrb[0].mxu0
    %v1408 = vadd.f32 %v1273, %v1407
    %v1409 = vpop.f32.mrb[0].mxu0
    %v1410 = vadd.f32 %v1277, %v1409
    %1411 = vmatprep.mubr.bf16.mxu0 0
    %1412 = vmatmul.mubr.bf16.gmra.mrb[0].mxu0 %v1304
    %v1413 = vpop.f32.mrb[0].mxu0
    %v1414 = vadd.f32 %v1273, %v1413
    %v1415 = vpop.f32.mrb[0].mxu0
    %v1416 = vadd.f32 %v1277, %v1415
    %v1417 = vpop.f32.mrb[0].mxu0
    %v1418 = vadd.f32 %v1273, %v1417
    %v1419 = vpop.f32.mrb[0].mxu0
    %v1420 = vadd.f32 %v1277, %v1419
    %1421 = vmatprep.mubr.bf16.mxu0 0
    %1422 = vmatmul.mubr.bf16.gmra.mrb[0].mxu0 %v1307
    %v1423 = vpop.f32.mrb[0].mxu0
    %v1424 = vadd.f32 %v1273, %v1423
    %v1425 = vpop.f32.mrb[0].mxu0
    %v1426 = vadd.f32 %v1277, %v1425
    %v1427 = vpop.f32.mrb[0].mxu0
    %v1428 = vadd.f32 %v1273, %v1427
    %v1429 = vpop.f32.mrb[0].mxu0
    %v1430 = vadd.f32 %v1277, %v1429
    %1431 = vmatprep.mubr.bf16.mxu0 0
    %1432 = vmatmul.mubr.bf16.gmra.mrb[0].mxu0 %v1310
    %v1433 = vpop.f32.mrb[0].mxu0
    %v1434 = vadd.f32 %v1273, %v1433
    %v1435 = vpop.f32.mrb[0].mxu0
    %v1436 = vadd.f32 %v1277, %v1435
    %v1437 = vpop.f32.mrb[0].mxu0
    %v1438 = vadd.f32 %v1273, %v1437
    %v1439 = vpop.f32.mrb[0].mxu0
    %v1440 = vadd.f32 %v1277, %v1439
    %1441 = vmatprep.mubr.bf16.mxu0 0
    %1442 = vmatmul.mubr.bf16.gmra.mrb[0].mxu0 %v1313
    %v1443 = vpop.f32.mrb[0].mxu0
    %v1444 = vadd.f32 %v1273, %v1443
    %v1445 = vpop.f32.mrb[0].mxu0
    %v1446 = vadd.f32 %v1277, %v1445
    %v1447 = vpop.f32.mrb[0].mxu0
    %v1448 = vadd.f32 %v1273, %v1447
    %v1449 = vpop.f32.mrb[0].mxu0
    %v1450 = vadd.f32 %v1277, %v1449
    %1451 = vmatprep.mubr.bf16.mxu0 0
    %1452 = vmatmul.mubr.bf16.gmra.mrb[0].mxu0 %v1316
    %v1453 = vpop.f32.mrb[0].mxu0
    %v1454 = vadd.f32 %v1273, %v1453
    %v1455 = vpop.f32.mrb[0].mxu0
    %v1456 = vadd.f32 %v1277, %v1455
    %v1457 = vpop.f32.mrb[0].mxu0
    %v1458 = vadd.f32 %v1273, %v1457
    %v1459 = vpop.f32.mrb[0].mxu0
    %v1460 = vadd.f32 %v1277, %v1459
    %1461 = vmatprep.mubr.bf16.mxu0 0
    %1462 = vmatmul.mubr.bf16.gmra.mrb[0].mxu0 %v1319
    %v1463 = vpop.f32.mrb[0].mxu0
    %v1464 = vadd.f32 %v1273, %v1463
    %v1465 = vpop.f32.mrb[0].mxu0
    %v1466 = vadd.f32 %v1277, %v1465
    %v1467 = vpop.f32.mrb[0].mxu0
    %v1468 = vadd.f32 %v1273, %v1467
    %v1469 = vpop.f32.mrb[0].mxu0
    %v1470 = vadd.f32 %v1277, %v1469
    %1471 = vmatprep.mubr.bf16.mxu0 0
    %1472 = vmatmul.mubr.bf16.gmra.mrb[0].mxu0 %v1322
    %v1473 = vpop.f32.mrb[0].mxu0
    %v1474 = vadd.f32 %v1273, %v1473
    %v1475 = vpop.f32.mrb[0].mxu0
    %v1476 = vadd.f32 %v1277, %v1475
    %v1477 = vpop.f32.mrb[0].mxu0
    %v1478 = vadd.f32 %v1273, %v1477
    %v1479 = vpop.f32.mrb[0].mxu0
    %v1480 = vadd.f32 %v1277, %v1479
    %1481 = vmatprep.mubr.bf16.mxu0 0
    %1482 = vmatmul.mubr.bf16.gmra.mrb[0].mxu0 %v1325
    %v1483 = vpop.f32.mrb[0].mxu0
    %v1484 = vadd.f32 %v1273, %v1483
    %v1485 = vpop.f32.mrb[0].mxu0
    %v1486 = vadd.f32 %v1277, %v1485
    %v1487 = vpop.f32.mrb[0].mxu0
    %v1488 = vadd.f32 %v1273, %v1487
    %v1489 = vpop.f32.mrb[0].mxu0
    %v1490 = vadd.f32 %v1277, %v1489
    %1491 = vmatprep.mubr.bf16.mxu0 0
    %1492 = vmatmul.mubr.bf16.gmra.mrb[0].mxu0 %v1328
    %v1493 = vpop.f32.mrb[0].mxu0
    %v1494 = vadd.f32 %v1273, %v1493
    %v1495 = vpop.f32.mrb[0].mxu0
    %v1496 = vadd.f32 %v1277, %v1495
    %v1497 = vpop.f32.mrb[0].mxu0
    %v1498 = vadd.f32 %v1273, %v1497
    %v1499 = vpop.f32.mrb[0].mxu0
    %v1500 = vadd.f32 %v1277, %v1499
    %1501 = vmatprep.mubr.bf16.mxu0 0
    %1502 = vmatmul.mubr.bf16.gmra.mrb[0].mxu0 %v1331
    %v1503 = vpop.f32.mrb[0].mxu0
    %v1504 = vadd.f32 %v1273, %v1503
    %v1505 = vpop.f32.mrb[0].mxu0
    %v1506 = vadd.f32 %v1277, %v1505
    %v1507 = vpop.f32.mrb[0].mxu0
    %v1508 = vadd.f32 %v1273, %v1507
    %v1509 = vpop.f32.mrb[0].mxu0
    %v1510 = vadd.f32 %v1277, %v1509
    %1511 = vmatprep.mubr.bf16.mxu0 0
    %1512 = vmatmul.mubr.bf16.gmra.mrb[0].mxu0 %v1334
    %v1513 = vpop.f32.mrb[0].mxu0
    %v1514 = vadd.f32 %v1273, %v1513
    %v1515 = vpop.f32.mrb[0].mxu0
    %v1516 = vadd.f32 %v1277, %v1515
    %v1517 = vpop.f32.mrb[0].mxu0
    %v1518 = vadd.f32 %v1273, %v1517
    %v1519 = vpop.f32.mrb[0].mxu0
    %v1520 = vadd.f32 %v1277, %v1519
    %1521 = vmatprep.mubr.bf16.mxu0 0
    %1522 = vmatmul.mubr.bf16.gmra.mrb[0].mxu0 %v1337
    %v1523 = vpop.f32.mrb[0].mxu0
    %v1524 = vadd.f32 %v1273, %v1523
    %v1525 = vpop.f32.mrb[0].mxu0
    %v1526 = vadd.f32 %v1277, %v1525
    %v1527 = vpop.f32.mrb[0].mxu0
    %v1528 = vadd.f32 %v1273, %v1527
    %v1529 = vpop.f32.mrb[0].mxu0
    %v1530 = vadd.f32 %v1277, %v1529
    %1531 = vdwg.mxu0
    %v1532 = vmax.f32 %v1374, 0.0
    %v1533 = vmax.f32 %v1376, 0.0
    %v1534 = vmax.f32 %v1378, 0.0
    %v1535 = vmax.f32 %v1380, 0.0
    %v1536 = vmax.f32 %v1384, 0.0
    %v1537 = vmax.f32 %v1386, 0.0
    %v1538 = vmax.f32 %v1388, 0.0
    %v1539 = vmax.f32 %v1390, 0.0
    %v1540 = vmax.f32 %v1394, 0.0
    %v1541 = vmax.f32 %v1396, 0.0
    %v1542 = vmax.f32 %v1398, 0.0
    %v1543 = vmax.f32 %v1400, 0.0
    %v1544 = vmax.f32 %v1404, 0.0
    %v1545 = vmax.f32 %v1406, 0.0
    %v1546 = vmax.f32 %v1408, 0.0
    %v1547 = vmax.f32 %v1410, 0.0
    %v1548 = vmax.f32 %v1414, 0.0
    %v1549 = vmax.f32 %v1416, 0.0
    %v1550 = vmax.f32 %v1418, 0.0
    %v1551 = vmax.f32 %v1420, 0.0
    %v1552 = vmax.f32 %v1424, 0.0
    %v1553 = vmax.f32 %v1426, 0.0
    %v1554 = vmax.f32 %v1428, 0.0
    %v1555 = vmax.f32 %v1430, 0.0
    %v1556 = vmax.f32 %v1434, 0.0
    %v1557 = vmax.f32 %v1436, 0.0
    %v1558 = vmax.f32 %v1438, 0.0
    %v1559 = vmax.f32 %v1440, 0.0
    %v1560 = vmax.f32 %v1444, 0.0
    %v1561 = vmax.f32 %v1446, 0.0
    %v1562 = vmax.f32 %v1448, 0.0
    %v1563 = vmax.f32 %v1450, 0.0
    %v1564 = vmax.f32 %v1454, 0.0
    %v1565 = vmax.f32 %v1456, 0.0
    %v1566 = vmax.f32 %v1458, 0.0
    %v1567 = vmax.f32 %v1460, 0.0
    %v1568 = vmax.f32 %v1464, 0.0
    %v1569 = vmax.f32 %v1466, 0.0
    %v1570 = vmax.f32 %v1468, 0.0
    %v1571 = vmax.f32 %v1470, 0.0
    %v1572 = vmax.f32 %v1474, 0.0
    %v1573 = vmax.f32 %v1476, 0.0
    %v1574 = vmax.f32 %v1478, 0.0
    %v1575 = vmax.f32 %v1480, 0.0
    %v1576 = vmax.f32 %v1484, 0.0
    %v1577 = vmax.f32 %v1486, 0.0
    %v1578 = vmax.f32 %v1488, 0.0
    %v1579 = vmax.f32 %v1490, 0.0
    %v1580 = vmax.f32 %v1494, 0.0
    %v1581 = vmax.f32 %v1496, 0.0
    %v1582 = vmax.f32 %v1498, 0.0
    %v1583 = vmax.f32 %v1500, 0.0
    %v1584 = vmax.f32 %v1504, 0.0
    %v1585 = vmax.f32 %v1506, 0.0
    %v1586 = vmax.f32 %v1508, 0.0
    %v1587 = vmax.f32 %v1510, 0.0
    %v1588 = vmax.f32 %v1514, 0.0
    %v1589 = vmax.f32 %v1516, 0.0
    %v1590 = vmax.f32 %v1518, 0.0
    %v1591 = vmax.f32 %v1520, 0.0
    %v1592 = vmax.f32 %v1524, 0.0
    %v1593 = vmax.f32 %v1526, 0.0
    %v1594 = vmax.f32 %v1528, 0.0
    %v1595 = vmax.f32 %v1530, 0.0
    %v1596 = vld [vmem:[%s11] sm:$0xf]
    %v1597 = vld [vmem:[%s11 + $0x4] sm:$0xf]
    %v1598 = vld [vmem:[%s11 + $0x8] sm:$0xf]
    %v1599 = vld [vmem:[%s11 + $0xc] sm:$0xf]
    %v1600 = vpack.c.bf16 %v1535, %v1533
    %v1601 = vpack.c.bf16 %v1539, %v1537
    %v1602 = vpack.c.bf16 %v1543, %v1541
    %v1603 = vpack.c.bf16 %v1547, %v1545
    %v1604 = vpack.c.bf16 %v1551, %v1549
    %v1605 = vpack.c.bf16 %v1555, %v1553
    %v1606 = vpack.c.bf16 %v1559, %v1557
    %v1607 = vpack.c.bf16 %v1563, %v1561
    %v1608 = vpack.c.bf16 %v1567, %v1565
    %v1609 = vpack.c.bf16 %v1571, %v1569
    %v1610 = vpack.c.bf16 %v1575, %v1573
    %v1611 = vpack.c.bf16 %v1579, %v1577
    %v1612 = vpack.c.bf16 %v1583, %v1581
    %v1613 = vpack.c.bf16 %v1587, %v1585
    %v1614 = vpack.c.bf16 %v1591, %v1589
    %v1615 = vpack.c.bf16 %v1595, %v1593
    %v1616 = vld [vmem:[%s12] sm:$0x1]
    %v1618 = vlaneseq
    %v1619 = vshrl.u32 %v1618, 7
    %v1620 = vsub.s32 0, %v1619
    %v1621 = vrot.slane %v1616, %v1620
    %v1627 = vunpack.c.l.b16 %v1596
    %v1628 = vunpack.c.l.b16 %v1597
    %v1629 = vunpack.c.l.b16 %v1598
    %v1630 = vunpack.c.l.b16 %v1599
    %v1631 = vpack.c.b16 %v1628, %v1627
    %v1632 = vpack.c.b16 %v1630, %v1629
    %v1636 = vsel %vm727, %v1600, 0
    %v1639 = vsel %vm727, %v1601, 0
    %v1642 = vsel %vm727, %v1602, 0
    %v1645 = vsel %vm727, %v1603, 0
    %v1648 = vsel %vm727, %v1604, 0
    %v1651 = vsel %vm727, %v1605, 0
    %v1654 = vsel %vm727, %v1606, 0
    %v1657 = vsel %vm727, %v1607, 0
    %v1660 = vsel %vm727, %v1608, 0
    %v1663 = vsel %vm727, %v1609, 0
    %v1666 = vsel %vm727, %v1610, 0
    %v1669 = vsel %vm727, %v1611, 0
    %v1672 = vsel %vm727, %v1612, 0
    %v1675 = vsel %vm727, %v1613, 0
    %v1678 = vsel %vm727, %v1614, 0
    %v1681 = vsel %vm727, %v1615, 0
    %1683 = vmatprep.subr.bf16.mxu0 0
    %1684 = vmatpush1.bf16.msra.mxu0 %v1631
    %1685 = vmatprep.subr.bf16.mxu0 0
    %1686 = vmatpush1.bf16.msra.mxu0 %v1632
    %1687 = vmatprep.subr.bf16.mxu0 0
    %1688 = vmatpush1.bf16.msra.mxu0 0
    %1689 = vmatprep.subr.bf16.mxu0 0
    %1690 = vmatpush1.bf16.msra.mxu0 0
    %1691 = vmatprep.subr.bf16.mxu0 0
    %1692 = vmatpush1.bf16.msra.mxu0 0
    %1693 = vmatprep.subr.bf16.mxu0 0
    %1694 = vmatpush1.bf16.msra.mxu0 0
    %1695 = vmatprep.subr.bf16.mxu0 0
    %1696 = vmatpush1.bf16.msra.mxu0 0
    %1697 = vmatprep.subr.bf16.mxu0 0
    %1698 = vmatpush1.bf16.msra.mxu0 0
    %1699 = vmatprep.subr.bf16.mxu0 0
    %1700 = vmatpush1.bf16.msra.mxu0 0
    %1701 = vmatprep.subr.bf16.mxu0 0
    %1702 = vmatpush1.bf16.msra.mxu0 0
    %1703 = vmatprep.subr.bf16.mxu0 0
    %1704 = vmatpush1.bf16.msra.mxu0 0
    %1705 = vmatprep.subr.bf16.mxu0 0
    %1706 = vmatpush1.bf16.msra.mxu0 0
    %1707 = vmatprep.subr.bf16.mxu0 0
    %1708 = vmatpush1.bf16.msra.mxu0 0
    %1709 = vmatprep.subr.bf16.mxu0 0
    %1710 = vmatpush1.bf16.msra.mxu0 0
    %1711 = vmatprep.subr.bf16.mxu0 0
    %1712 = vmatpush1.bf16.msra.mxu0 0
    %1713 = vmatprep.subr.bf16.mxu0 0
    %1714 = vmatpush1.bf16.msra.mxu0 0
    %1715 = vmatprep.mubr.bf16.mxu0 0
    %1716 = vmatmul.mubr.bf16.gmra.mrb[0].mxu0 %v1636
    %v1717 = vpop.f32.mrb[0].mxu0
    %v1718 = vadd.f32 %v1621, %v1717
    %v1719 = vpop.f32.mrb[0].mxu0
    %v1720 = vpop.f32.mrb[0].mxu0
    %v1721 = vadd.f32 %v1621, %v1720
    %v1722 = vpop.f32.mrb[0].mxu0
    %1723 = vmatprep.mubr.bf16.mxu0 0
    %1724 = vmatmul.mubr.bf16.gmra.mrb[0].mxu0 %v1639
    %v1725 = vpop.f32.mrb[0].mxu0
    %v1726 = vadd.f32 %v1621, %v1725
    %v1727 = vpop.f32.mrb[0].mxu0
    %v1728 = vpop.f32.mrb[0].mxu0
    %v1729 = vadd.f32 %v1621, %v1728
    %v1730 = vpop.f32.mrb[0].mxu0
    %1731 = vmatprep.mubr.bf16.mxu0 0
    %1732 = vmatmul.mubr.bf16.gmra.mrb[0].mxu0 %v1642
    %v1733 = vpop.f32.mrb[0].mxu0
    %v1734 = vadd.f32 %v1621, %v1733
    %v1735 = vpop.f32.mrb[0].mxu0
    %v1736 = vpop.f32.mrb[0].mxu0
    %v1737 = vadd.f32 %v1621, %v1736
    %v1738 = vpop.f32.mrb[0].mxu0
    %1739 = vmatprep.mubr.bf16.mxu0 0
    %1740 = vmatmul.mubr.bf16.gmra.mrb[0].mxu0 %v1645
    %v1741 = vpop.f32.mrb[0].mxu0
    %v1742 = vadd.f32 %v1621, %v1741
    %v1743 = vpop.f32.mrb[0].mxu0
    %v1744 = vpop.f32.mrb[0].mxu0
    %v1745 = vadd.f32 %v1621, %v1744
    %v1746 = vpop.f32.mrb[0].mxu0
    %1747 = vmatprep.mubr.bf16.mxu0 0
    %1748 = vmatmul.mubr.bf16.gmra.mrb[0].mxu0 %v1648
    %v1749 = vpop.f32.mrb[0].mxu0
    %v1750 = vadd.f32 %v1621, %v1749
    %v1751 = vpop.f32.mrb[0].mxu0
    %v1752 = vpop.f32.mrb[0].mxu0
    %v1753 = vadd.f32 %v1621, %v1752
    %v1754 = vpop.f32.mrb[0].mxu0
    %1755 = vmatprep.mubr.bf16.mxu0 0
    %1756 = vmatmul.mubr.bf16.gmra.mrb[0].mxu0 %v1651
    %v1757 = vpop.f32.mrb[0].mxu0
    %v1758 = vadd.f32 %v1621, %v1757
    %v1759 = vpop.f32.mrb[0].mxu0
    %v1760 = vpop.f32.mrb[0].mxu0
    %v1761 = vadd.f32 %v1621, %v1760
    %v1762 = vpop.f32.mrb[0].mxu0
    %1763 = vmatprep.mubr.bf16.mxu0 0
    %1764 = vmatmul.mubr.bf16.gmra.mrb[0].mxu0 %v1654
    %v1765 = vpop.f32.mrb[0].mxu0
    %v1766 = vadd.f32 %v1621, %v1765
    %v1767 = vpop.f32.mrb[0].mxu0
    %v1768 = vpop.f32.mrb[0].mxu0
    %v1769 = vadd.f32 %v1621, %v1768
    %v1770 = vpop.f32.mrb[0].mxu0
    %1771 = vmatprep.mubr.bf16.mxu0 0
    %1772 = vmatmul.mubr.bf16.gmra.mrb[0].mxu0 %v1657
    %v1773 = vpop.f32.mrb[0].mxu0
    %v1774 = vadd.f32 %v1621, %v1773
    %v1775 = vpop.f32.mrb[0].mxu0
    %v1776 = vpop.f32.mrb[0].mxu0
    %v1777 = vadd.f32 %v1621, %v1776
    %v1778 = vpop.f32.mrb[0].mxu0
    %1779 = vmatprep.mubr.bf16.mxu0 0
    %1780 = vmatmul.mubr.bf16.gmra.mrb[0].mxu0 %v1660
    %v1781 = vpop.f32.mrb[0].mxu0
    %v1782 = vadd.f32 %v1621, %v1781
    %v1783 = vpop.f32.mrb[0].mxu0
    %v1784 = vpop.f32.mrb[0].mxu0
    %v1785 = vadd.f32 %v1621, %v1784
    %v1786 = vpop.f32.mrb[0].mxu0
    %1787 = vmatprep.mubr.bf16.mxu0 0
    %1788 = vmatmul.mubr.bf16.gmra.mrb[0].mxu0 %v1663
    %v1789 = vpop.f32.mrb[0].mxu0
    %v1790 = vadd.f32 %v1621, %v1789
    %v1791 = vpop.f32.mrb[0].mxu0
    %v1792 = vpop.f32.mrb[0].mxu0
    %v1793 = vadd.f32 %v1621, %v1792
    %v1794 = vpop.f32.mrb[0].mxu0
    %1795 = vmatprep.mubr.bf16.mxu0 0
    %1796 = vmatmul.mubr.bf16.gmra.mrb[0].mxu0 %v1666
    %v1797 = vpop.f32.mrb[0].mxu0
    %v1798 = vadd.f32 %v1621, %v1797
    %v1799 = vpop.f32.mrb[0].mxu0
    %v1800 = vpop.f32.mrb[0].mxu0
    %v1801 = vadd.f32 %v1621, %v1800
    %v1802 = vpop.f32.mrb[0].mxu0
    %1803 = vmatprep.mubr.bf16.mxu0 0
    %1804 = vmatmul.mubr.bf16.gmra.mrb[0].mxu0 %v1669
    %v1805 = vpop.f32.mrb[0].mxu0
    %v1806 = vadd.f32 %v1621, %v1805
    %v1807 = vpop.f32.mrb[0].mxu0
    %v1808 = vpop.f32.mrb[0].mxu0
    %v1809 = vadd.f32 %v1621, %v1808
    %v1810 = vpop.f32.mrb[0].mxu0
    %1811 = vmatprep.mubr.bf16.mxu0 0
    %1812 = vmatmul.mubr.bf16.gmra.mrb[0].mxu0 %v1672
    %v1813 = vpop.f32.mrb[0].mxu0
    %v1814 = vadd.f32 %v1621, %v1813
    %v1815 = vpop.f32.mrb[0].mxu0
    %v1816 = vpop.f32.mrb[0].mxu0
    %v1817 = vadd.f32 %v1621, %v1816
    %v1818 = vpop.f32.mrb[0].mxu0
    %1819 = vmatprep.mubr.bf16.mxu0 0
    %1820 = vmatmul.mubr.bf16.gmra.mrb[0].mxu0 %v1675
    %v1821 = vpop.f32.mrb[0].mxu0
    %v1822 = vadd.f32 %v1621, %v1821
    %v1823 = vpop.f32.mrb[0].mxu0
    %v1824 = vpop.f32.mrb[0].mxu0
    %v1825 = vadd.f32 %v1621, %v1824
    %v1826 = vpop.f32.mrb[0].mxu0
    %1827 = vmatprep.mubr.bf16.mxu0 0
    %1828 = vmatmul.mubr.bf16.gmra.mrb[0].mxu0 %v1678
    %v1829 = vpop.f32.mrb[0].mxu0
    %v1830 = vadd.f32 %v1621, %v1829
    %v1831 = vpop.f32.mrb[0].mxu0
    %v1832 = vpop.f32.mrb[0].mxu0
    %v1833 = vadd.f32 %v1621, %v1832
    %v1834 = vpop.f32.mrb[0].mxu0
    %1835 = vmatprep.mubr.bf16.mxu0 0
    %1836 = vmatmul.mubr.bf16.gmra.mrb[0].mxu0 %v1681
    %v1837 = vpop.f32.mrb[0].mxu0
    %v1838 = vadd.f32 %v1621, %v1837
    %v1839 = vpop.f32.mrb[0].mxu0
    %v1840 = vpop.f32.mrb[0].mxu0
    %v1841 = vadd.f32 %v1621, %v1840
    %v1842 = vpop.f32.mrb[0].mxu0
    %1843 = vdwg.mxu0
    %v1844 = vxor.u32 %v1718, 2147483648
    %v1845 = vxor.u32 %v1721, 2147483648
    %v1846 = vxor.u32 %v1726, 2147483648
    %v1847 = vxor.u32 %v1729, 2147483648
    %v1848 = vxor.u32 %v1734, 2147483648
    %v1849 = vxor.u32 %v1737, 2147483648
    %v1850 = vxor.u32 %v1742, 2147483648
    %v1851 = vxor.u32 %v1745, 2147483648
    %v1852 = vxor.u32 %v1750, 2147483648
    %v1853 = vxor.u32 %v1753, 2147483648
    %v1854 = vxor.u32 %v1758, 2147483648
    %v1855 = vxor.u32 %v1761, 2147483648
    %v1856 = vxor.u32 %v1766, 2147483648
    %v1857 = vxor.u32 %v1769, 2147483648
    %v1858 = vxor.u32 %v1774, 2147483648
    %v1859 = vxor.u32 %v1777, 2147483648
    %v1860 = vxor.u32 %v1782, 2147483648
    %v1861 = vxor.u32 %v1785, 2147483648
    %v1862 = vxor.u32 %v1790, 2147483648
    %v1863 = vxor.u32 %v1793, 2147483648
    %v1864 = vxor.u32 %v1798, 2147483648
    %v1865 = vxor.u32 %v1801, 2147483648
    %v1866 = vxor.u32 %v1806, 2147483648
    %v1867 = vxor.u32 %v1809, 2147483648
    %v1868 = vxor.u32 %v1814, 2147483648
    %v1869 = vxor.u32 %v1817, 2147483648
    %v1870 = vxor.u32 %v1822, 2147483648
    %v1871 = vxor.u32 %v1825, 2147483648
    %v1872 = vxor.u32 %v1830, 2147483648
    %v1873 = vxor.u32 %v1833, 2147483648
    %v1874 = vxor.u32 %v1838, 2147483648
    %v1875 = vxor.u32 %v1841, 2147483648
    %v1876 = vmul.f32 %v1844, 1.442695
    %v1877 = vpow.pop %v1876
    %v1878 = vmul.f32 %v1845, 1.442695
    %v1879 = vpow.pop %v1878
    %v1880 = vmul.f32 %v1846, 1.442695
    %v1881 = vpow.pop %v1880
    %v1882 = vmul.f32 %v1847, 1.442695
    %v1883 = vpow.pop %v1882
    %v1884 = vmul.f32 %v1848, 1.442695
    %v1885 = vpow.pop %v1884
    %v1886 = vmul.f32 %v1849, 1.442695
    %v1887 = vpow.pop %v1886
    %v1888 = vmul.f32 %v1850, 1.442695
    %v1889 = vpow.pop %v1888
    %v1890 = vmul.f32 %v1851, 1.442695
    %v1891 = vpow.pop %v1890
    %v1892 = vmul.f32 %v1852, 1.442695
    %v1893 = vpow.pop %v1892
    %v1894 = vmul.f32 %v1853, 1.442695
    %v1895 = vpow.pop %v1894
    %v1896 = vmul.f32 %v1854, 1.442695
    %v1897 = vpow.pop %v1896
    %v1898 = vmul.f32 %v1855, 1.442695
    %v1899 = vpow.pop %v1898
    %v1900 = vmul.f32 %v1856, 1.442695
    %v1901 = vpow.pop %v1900
    %v1902 = vmul.f32 %v1857, 1.442695
    %v1903 = vpow.pop %v1902
    %v1904 = vmul.f32 %v1858, 1.442695
    %v1905 = vpow.pop %v1904
    %v1906 = vmul.f32 %v1859, 1.442695
    %v1907 = vpow.pop %v1906
    %v1908 = vmul.f32 %v1860, 1.442695
    %v1909 = vpow.pop %v1908
    %v1910 = vmul.f32 %v1861, 1.442695
    %v1911 = vpow.pop %v1910
    %v1912 = vmul.f32 %v1862, 1.442695
    %v1913 = vpow.pop %v1912
    %v1914 = vmul.f32 %v1863, 1.442695
    %v1915 = vpow.pop %v1914
    %v1916 = vmul.f32 %v1864, 1.442695
    %v1917 = vpow.pop %v1916
    %v1918 = vmul.f32 %v1865, 1.442695
    %v1919 = vpow.pop %v1918
    %v1920 = vmul.f32 %v1866, 1.442695
    %v1921 = vpow.pop %v1920
    %v1922 = vmul.f32 %v1867, 1.442695
    %v1923 = vpow.pop %v1922
    %v1924 = vmul.f32 %v1868, 1.442695
    %v1925 = vpow.pop %v1924
    %v1926 = vmul.f32 %v1869, 1.442695
    %v1927 = vpow.pop %v1926
    %v1928 = vmul.f32 %v1870, 1.442695
    %v1929 = vpow.pop %v1928
    %v1930 = vmul.f32 %v1871, 1.442695
    %v1931 = vpow.pop %v1930
    %v1932 = vmul.f32 %v1872, 1.442695
    %v1933 = vpow.pop %v1932
    %v1934 = vmul.f32 %v1873, 1.442695
    %v1935 = vpow.pop %v1934
    %v1936 = vmul.f32 %v1874, 1.442695
    %v1937 = vpow.pop %v1936
    %v1938 = vmul.f32 %v1875, 1.442695
    %v1939 = vpow.pop %v1938
    %v1940 = vadd.f32 %v1877, 1.0
    %v1941 = vadd.f32 %v1879, 1.0
    %v1942 = vadd.f32 %v1881, 1.0
    %v1943 = vadd.f32 %v1883, 1.0
    %v1944 = vadd.f32 %v1885, 1.0
    %v1945 = vadd.f32 %v1887, 1.0
    %v1946 = vadd.f32 %v1889, 1.0
    %v1947 = vadd.f32 %v1891, 1.0
    %v1948 = vadd.f32 %v1893, 1.0
    %v1949 = vadd.f32 %v1895, 1.0
    %v1950 = vadd.f32 %v1897, 1.0
    %v1951 = vadd.f32 %v1899, 1.0
    %v1952 = vadd.f32 %v1901, 1.0
    %v1953 = vadd.f32 %v1903, 1.0
    %v1954 = vadd.f32 %v1905, 1.0
    %v1955 = vadd.f32 %v1907, 1.0
    %v1956 = vadd.f32 %v1909, 1.0
    %v1957 = vadd.f32 %v1911, 1.0
    %v1958 = vadd.f32 %v1913, 1.0
    %v1959 = vadd.f32 %v1915, 1.0
    %v1960 = vadd.f32 %v1917, 1.0
    %v1961 = vadd.f32 %v1919, 1.0
    %v1962 = vadd.f32 %v1921, 1.0
    %v1963 = vadd.f32 %v1923, 1.0
    %v1964 = vadd.f32 %v1925, 1.0
    %v1965 = vadd.f32 %v1927, 1.0
    %v1966 = vadd.f32 %v1929, 1.0
    %v1967 = vadd.f32 %v1931, 1.0
    %v1968 = vadd.f32 %v1933, 1.0
    %v1969 = vadd.f32 %v1935, 1.0
    %v1970 = vadd.f32 %v1937, 1.0
    %v1971 = vadd.f32 %v1939, 1.0
    %v1972 = vrcp.pop %v1940
    %v1973 = vmul.f32 1.0, %v1972
    %v1974 = vrcp.pop %v1941
    %v1975 = vmul.f32 1.0, %v1974
    %v1976 = vrcp.pop %v1942
    %v1977 = vmul.f32 1.0, %v1976
    %v1978 = vrcp.pop %v1943
    %v1979 = vmul.f32 1.0, %v1978
    %v1980 = vrcp.pop %v1944
    %v1981 = vmul.f32 1.0, %v1980
    %v1982 = vrcp.pop %v1945
    %v1983 = vmul.f32 1.0, %v1982
    %v1984 = vrcp.pop %v1946
    %v1985 = vmul.f32 1.0, %v1984
    %v1986 = vrcp.pop %v1947
    %v1987 = vmul.f32 1.0, %v1986
    %v1988 = vrcp.pop %v1948
    %v1989 = vmul.f32 1.0, %v1988
    %v1990 = vrcp.pop %v1949
    %v1991 = vmul.f32 1.0, %v1990
    %v1992 = vrcp.pop %v1950
    %v1993 = vmul.f32 1.0, %v1992
    %v1994 = vrcp.pop %v1951
    %v1995 = vmul.f32 1.0, %v1994
    %v1996 = vrcp.pop %v1952
    %v1997 = vmul.f32 1.0, %v1996
    %v1998 = vrcp.pop %v1953
    %v1999 = vmul.f32 1.0, %v1998
    %v2000 = vrcp.pop %v1954
    %v2001 = vmul.f32 1.0, %v2000
    %v2002 = vrcp.pop %v1955
    %v2003 = vmul.f32 1.0, %v2002
    %v2004 = vrcp.pop %v1956
    %v2005 = vmul.f32 1.0, %v2004
    %v2006 = vrcp.pop %v1957
    %v2007 = vmul.f32 1.0, %v2006
    %v2008 = vrcp.pop %v1958
    %v2009 = vmul.f32 1.0, %v2008
    %v2010 = vrcp.pop %v1959
    %v2011 = vmul.f32 1.0, %v2010
    %v2012 = vrcp.pop %v1960
    %v2013 = vmul.f32 1.0, %v2012
    %v2014 = vrcp.pop %v1961
    %v2015 = vmul.f32 1.0, %v2014
    %v2016 = vrcp.pop %v1962
    %v2017 = vmul.f32 1.0, %v2016
    %v2018 = vrcp.pop %v1963
    %v2019 = vmul.f32 1.0, %v2018
    %v2020 = vrcp.pop %v1964
    %v2021 = vmul.f32 1.0, %v2020
    %v2022 = vrcp.pop %v1965
    %v2023 = vmul.f32 1.0, %v2022
    %v2024 = vrcp.pop %v1966
    %v2025 = vmul.f32 1.0, %v2024
    %v2026 = vrcp.pop %v1967
    %v2027 = vmul.f32 1.0, %v2026
    %v2028 = vrcp.pop %v1968
    %v2029 = vmul.f32 1.0, %v2028
    %v2030 = vrcp.pop %v1969
    %v2031 = vmul.f32 1.0, %v2030
    %v2032 = vrcp.pop %v1970
    %v2033 = vmul.f32 1.0, %v2032
    %v2034 = vrcp.pop %v1971
    %v2035 = vmul.f32 1.0, %v2034
    %v2036 = vld [vmem:[%s13] sm:$0xf]
    %v2037 = vld [vmem:[%s13 + $0x4] sm:$0xf]
    %v2038 = vld [vmem:[%s13 + $0x8] sm:$0xf]
    %v2039 = vld [vmem:[%s13 + $0xc] sm:$0xf]
    %v2040 = vld [vmem:[%s13 + $0x10] sm:$0xf]
    %v2041 = vld [vmem:[%s13 + $0x14] sm:$0xf]
    %v2042 = vld [vmem:[%s13 + $0x18] sm:$0xf]
    %v2043 = vld [vmem:[%s13 + $0x1c] sm:$0xf]
    %v2044 = vld [vmem:[%s13 + $0x20] sm:$0xf]
    %v2045 = vld [vmem:[%s13 + $0x24] sm:$0xf]
    %v2046 = vld [vmem:[%s13 + $0x28] sm:$0xf]
    %v2047 = vld [vmem:[%s13 + $0x2c] sm:$0xf]
    %v2048 = vld [vmem:[%s13 + $0x30] sm:$0xf]
    %v2049 = vld [vmem:[%s13 + $0x34] sm:$0xf]
    %v2050 = vld [vmem:[%s13 + $0x38] sm:$0xf]
    %v2051 = vld [vmem:[%s13 + $0x3c] sm:$0xf]
    %v2052 = vpack.c.bf16 %v1534, %v1532
    %v2053 = vpack.c.bf16 %v1538, %v1536
    %v2054 = vpack.c.bf16 %v1542, %v1540
    %v2055 = vpack.c.bf16 %v1546, %v1544
    %v2056 = vpack.c.bf16 %v1550, %v1548
    %v2057 = vpack.c.bf16 %v1554, %v1552
    %v2058 = vpack.c.bf16 %v1558, %v1556
    %v2059 = vpack.c.bf16 %v1562, %v1560
    %v2060 = vpack.c.bf16 %v1566, %v1564
    %v2061 = vpack.c.bf16 %v1570, %v1568
    %v2062 = vpack.c.bf16 %v1574, %v1572
    %v2063 = vpack.c.bf16 %v1578, %v1576
    %v2064 = vpack.c.bf16 %v1582, %v1580
    %v2065 = vpack.c.bf16 %v1586, %v1584
    %v2066 = vpack.c.bf16 %v1590, %v1588
    %v2067 = vpack.c.bf16 %v1594, %v1592
    %v2068 = vld [vmem:[%s14] sm:$0x1]
    %v2070 = vlaneseq
    %v2071 = vshrl.u32 %v2070, 7
    %v2072 = vsub.s32 0, %v2071
    %v2073 = vrot.slane %v2068, %v2072
    %v2091 = vunpack.c.l.b16 %v2036
    %v2092 = vunpack.c.l.b16 %v2037
    %v2093 = vunpack.c.l.b16 %v2038
    %v2094 = vunpack.c.l.b16 %v2039
    %v2095 = vunpack.c.l.b16 %v2040
    %v2096 = vunpack.c.l.b16 %v2041
    %v2097 = vunpack.c.l.b16 %v2042
    %v2098 = vunpack.c.l.b16 %v2043
    %v2099 = vunpack.c.l.b16 %v2044
    %v2100 = vunpack.c.l.b16 %v2045
    %v2101 = vunpack.c.l.b16 %v2046
    %v2102 = vunpack.c.l.b16 %v2047
    %v2103 = vunpack.c.l.b16 %v2048
    %v2104 = vunpack.c.l.b16 %v2049
    %v2105 = vunpack.c.l.b16 %v2050
    %v2106 = vunpack.c.l.b16 %v2051
    %v2107 = vpack.c.b16 %v2092, %v2091
    %v2108 = vpack.c.b16 %v2094, %v2093
    %v2109 = vpack.c.b16 %v2096, %v2095
    %v2110 = vpack.c.b16 %v2098, %v2097
    %v2111 = vpack.c.b16 %v2100, %v2099
    %v2112 = vpack.c.b16 %v2102, %v2101
    %v2113 = vpack.c.b16 %v2104, %v2103
    %v2114 = vpack.c.b16 %v2106, %v2105
    %2123 = vmatprep.subr.bf16.mxu0 0
    %2124 = vmatpush1.bf16.msra.mxu0 %v2107
    %2125 = vmatprep.subr.bf16.mxu0 0
    %2126 = vmatpush1.bf16.msra.mxu0 %v2108
    %2127 = vmatprep.subr.bf16.mxu0 0
    %2128 = vmatpush1.bf16.msra.mxu0 %v2109
    %2129 = vmatprep.subr.bf16.mxu0 0
    %2130 = vmatpush1.bf16.msra.mxu0 %v2110
    %2131 = vmatprep.subr.bf16.mxu0 0
    %2132 = vmatpush1.bf16.msra.mxu0 %v2111
    %2133 = vmatprep.subr.bf16.mxu0 0
    %2134 = vmatpush1.bf16.msra.mxu0 %v2112
    %2135 = vmatprep.subr.bf16.mxu0 0
    %2136 = vmatpush1.bf16.msra.mxu0 %v2113
    %2137 = vmatprep.subr.bf16.mxu0 0
    %2138 = vmatpush1.bf16.msra.mxu0 %v2114
    %2139 = vmatprep.subr.bf16.mxu0 0
    %2140 = vmatpush1.bf16.msra.mxu0 0
    %2141 = vmatprep.subr.bf16.mxu0 0
    %2142 = vmatpush1.bf16.msra.mxu0 0
    %2143 = vmatprep.subr.bf16.mxu0 0
    %2144 = vmatpush1.bf16.msra.mxu0 0
    %2145 = vmatprep.subr.bf16.mxu0 0
    %2146 = vmatpush1.bf16.msra.mxu0 0
    %2147 = vmatprep.subr.bf16.mxu0 0
    %2148 = vmatpush1.bf16.msra.mxu0 0
    %2149 = vmatprep.subr.bf16.mxu0 0
    %2150 = vmatpush1.bf16.msra.mxu0 0
    %2151 = vmatprep.subr.bf16.mxu0 0
    %2152 = vmatpush1.bf16.msra.mxu0 0
    %2153 = vmatprep.subr.bf16.mxu0 0
    %2154 = vmatpush1.bf16.msra.mxu0 0
    %2155 = vmatprep.mubr.bf16.mxu0 0
    %2156 = vmatmul.mubr.bf16.gmra.mrb[0].mxu0 %v2052
    %v2157 = vpop.f32.mrb[0].mxu0
    %v2158 = vadd.f32 %v2073, %v2157
    %v2159 = vpop.f32.mrb[0].mxu0
    %v2160 = vpop.f32.mrb[0].mxu0
    %v2161 = vadd.f32 %v2073, %v2160
    %v2162 = vpop.f32.mrb[0].mxu0
    %2163 = vmatprep.mubr.bf16.mxu0 0
    %2164 = vmatmul.mubr.bf16.gmra.mrb[0].mxu0 %v2053
    %v2165 = vpop.f32.mrb[0].mxu0
    %v2166 = vadd.f32 %v2073, %v2165
    %v2167 = vpop.f32.mrb[0].mxu0
    %v2168 = vpop.f32.mrb[0].mxu0
    %v2169 = vadd.f32 %v2073, %v2168
    %v2170 = vpop.f32.mrb[0].mxu0
    %2171 = vmatprep.mubr.bf16.mxu0 0
    %2172 = vmatmul.mubr.bf16.gmra.mrb[0].mxu0 %v2054
    %v2173 = vpop.f32.mrb[0].mxu0
    %v2174 = vadd.f32 %v2073, %v2173
    %v2175 = vpop.f32.mrb[0].mxu0
    %v2176 = vpop.f32.mrb[0].mxu0
    %v2177 = vadd.f32 %v2073, %v2176
    %v2178 = vpop.f32.mrb[0].mxu0
    %2179 = vmatprep.mubr.bf16.mxu0 0
    %2180 = vmatmul.mubr.bf16.gmra.mrb[0].mxu0 %v2055
    %v2181 = vpop.f32.mrb[0].mxu0
    %v2182 = vadd.f32 %v2073, %v2181
    %v2183 = vpop.f32.mrb[0].mxu0
    %v2184 = vpop.f32.mrb[0].mxu0
    %v2185 = vadd.f32 %v2073, %v2184
    %v2186 = vpop.f32.mrb[0].mxu0
    %2187 = vmatprep.mubr.bf16.mxu0 0
    %2188 = vmatmul.mubr.bf16.gmra.mrb[0].mxu0 %v2056
    %v2189 = vpop.f32.mrb[0].mxu0
    %v2190 = vadd.f32 %v2073, %v2189
    %v2191 = vpop.f32.mrb[0].mxu0
    %v2192 = vpop.f32.mrb[0].mxu0
    %v2193 = vadd.f32 %v2073, %v2192
    %v2194 = vpop.f32.mrb[0].mxu0
    %2195 = vmatprep.mubr.bf16.mxu0 0
    %2196 = vmatmul.mubr.bf16.gmra.mrb[0].mxu0 %v2057
    %v2197 = vpop.f32.mrb[0].mxu0
    %v2198 = vadd.f32 %v2073, %v2197
    %v2199 = vpop.f32.mrb[0].mxu0
    %v2200 = vpop.f32.mrb[0].mxu0
    %v2201 = vadd.f32 %v2073, %v2200
    %v2202 = vpop.f32.mrb[0].mxu0
    %2203 = vmatprep.mubr.bf16.mxu0 0
    %2204 = vmatmul.mubr.bf16.gmra.mrb[0].mxu0 %v2058
    %v2205 = vpop.f32.mrb[0].mxu0
    %v2206 = vadd.f32 %v2073, %v2205
    %v2207 = vpop.f32.mrb[0].mxu0
    %v2208 = vpop.f32.mrb[0].mxu0
    %v2209 = vadd.f32 %v2073, %v2208
    %v2210 = vpop.f32.mrb[0].mxu0
    %2211 = vmatprep.mubr.bf16.mxu0 0
    %2212 = vmatmul.mubr.bf16.gmra.mrb[0].mxu0 %v2059
    %v2213 = vpop.f32.mrb[0].mxu0
    %v2214 = vadd.f32 %v2073, %v2213
    %v2215 = vpop.f32.mrb[0].mxu0
    %v2216 = vpop.f32.mrb[0].mxu0
    %v2217 = vadd.f32 %v2073, %v2216
    %v2218 = vpop.f32.mrb[0].mxu0
    %2219 = vmatprep.mubr.bf16.mxu0 0
    %2220 = vmatmul.mubr.bf16.gmra.mrb[0].mxu0 %v2060
    %v2221 = vpop.f32.mrb[0].mxu0
    %v2222 = vadd.f32 %v2073, %v2221
    %v2223 = vpop.f32.mrb[0].mxu0
    %v2224 = vpop.f32.mrb[0].mxu0
    %v2225 = vadd.f32 %v2073, %v2224
    %v2226 = vpop.f32.mrb[0].mxu0
    %2227 = vmatprep.mubr.bf16.mxu0 0
    %2228 = vmatmul.mubr.bf16.gmra.mrb[0].mxu0 %v2061
    %v2229 = vpop.f32.mrb[0].mxu0
    %v2230 = vadd.f32 %v2073, %v2229
    %v2231 = vpop.f32.mrb[0].mxu0
    %v2232 = vpop.f32.mrb[0].mxu0
    %v2233 = vadd.f32 %v2073, %v2232
    %v2234 = vpop.f32.mrb[0].mxu0
    %2235 = vmatprep.mubr.bf16.mxu0 0
    %2236 = vmatmul.mubr.bf16.gmra.mrb[0].mxu0 %v2062
    %v2237 = vpop.f32.mrb[0].mxu0
    %v2238 = vadd.f32 %v2073, %v2237
    %v2239 = vpop.f32.mrb[0].mxu0
    %v2240 = vpop.f32.mrb[0].mxu0
    %v2241 = vadd.f32 %v2073, %v2240
    %v2242 = vpop.f32.mrb[0].mxu0
    %2243 = vmatprep.mubr.bf16.mxu0 0
    %2244 = vmatmul.mubr.bf16.gmra.mrb[0].mxu0 %v2063
    %v2245 = vpop.f32.mrb[0].mxu0
    %v2246 = vadd.f32 %v2073, %v2245
    %v2247 = vpop.f32.mrb[0].mxu0
    %v2248 = vpop.f32.mrb[0].mxu0
    %v2249 = vadd.f32 %v2073, %v2248
    %v2250 = vpop.f32.mrb[0].mxu0
    %2251 = vmatprep.mubr.bf16.mxu0 0
    %2252 = vmatmul.mubr.bf16.gmra.mrb[0].mxu0 %v2064
    %v2253 = vpop.f32.mrb[0].mxu0
    %v2254 = vadd.f32 %v2073, %v2253
    %v2255 = vpop.f32.mrb[0].mxu0
    %v2256 = vpop.f32.mrb[0].mxu0
    %v2257 = vadd.f32 %v2073, %v2256
    %v2258 = vpop.f32.mrb[0].mxu0
    %2259 = vmatprep.mubr.bf16.mxu0 0
    %2260 = vmatmul.mubr.bf16.gmra.mrb[0].mxu0 %v2065
    %v2261 = vpop.f32.mrb[0].mxu0
    %v2262 = vadd.f32 %v2073, %v2261
    %v2263 = vpop.f32.mrb[0].mxu0
    %v2264 = vpop.f32.mrb[0].mxu0
    %v2265 = vadd.f32 %v2073, %v2264
    %v2266 = vpop.f32.mrb[0].mxu0
    %2267 = vmatprep.mubr.bf16.mxu0 0
    %2268 = vmatmul.mubr.bf16.gmra.mrb[0].mxu0 %v2066
    %v2269 = vpop.f32.mrb[0].mxu0
    %v2270 = vadd.f32 %v2073, %v2269
    %v2271 = vpop.f32.mrb[0].mxu0
    %v2272 = vpop.f32.mrb[0].mxu0
    %v2273 = vadd.f32 %v2073, %v2272
    %v2274 = vpop.f32.mrb[0].mxu0
    %2275 = vmatprep.mubr.bf16.mxu0 0
    %2276 = vmatmul.mubr.bf16.gmra.mrb[0].mxu0 %v2067
    %v2277 = vpop.f32.mrb[0].mxu0
    %v2278 = vadd.f32 %v2073, %v2277
    %v2279 = vpop.f32.mrb[0].mxu0
    %v2280 = vpop.f32.mrb[0].mxu0
    %v2281 = vadd.f32 %v2073, %v2280
    %v2282 = vpop.f32.mrb[0].mxu0
    %2283 = vdwg.mxu0
    %v2284 = vmax.f32 %v2158, 0.0
    %v2285 = vmax.f32 %v2161, 0.0
    %v2286 = vmax.f32 %v2166, 0.0
    %v2287 = vmax.f32 %v2169, 0.0
    %v2288 = vmax.f32 %v2174, 0.0
    %v2289 = vmax.f32 %v2177, 0.0
    %v2290 = vmax.f32 %v2182, 0.0
    %v2291 = vmax.f32 %v2185, 0.0
    %v2292 = vmax.f32 %v2190, 0.0
    %v2293 = vmax.f32 %v2193, 0.0
    %v2294 = vmax.f32 %v2198, 0.0
    %v2295 = vmax.f32 %v2201, 0.0
    %v2296 = vmax.f32 %v2206, 0.0
    %v2297 = vmax.f32 %v2209, 0.0
    %v2298 = vmax.f32 %v2214, 0.0
    %v2299 = vmax.f32 %v2217, 0.0
    %v2300 = vmax.f32 %v2222, 0.0
    %v2301 = vmax.f32 %v2225, 0.0
    %v2302 = vmax.f32 %v2230, 0.0
    %v2303 = vmax.f32 %v2233, 0.0
    %v2304 = vmax.f32 %v2238, 0.0
    %v2305 = vmax.f32 %v2241, 0.0
    %v2306 = vmax.f32 %v2246, 0.0
    %v2307 = vmax.f32 %v2249, 0.0
    %v2308 = vmax.f32 %v2254, 0.0
    %v2309 = vmax.f32 %v2257, 0.0
    %v2310 = vmax.f32 %v2262, 0.0
    %v2311 = vmax.f32 %v2265, 0.0
    %v2312 = vmax.f32 %v2270, 0.0
    %v2313 = vmax.f32 %v2273, 0.0
    %v2314 = vmax.f32 %v2278, 0.0
    %v2315 = vmax.f32 %v2281, 0.0
    %v2316 = vld [vmem:[%s15] sm:$0x7]
    %v2317 = vpack.c.bf16 %v2285, %v2284
    %v2318 = vpack.c.bf16 %v2287, %v2286
    %v2319 = vpack.c.bf16 %v2289, %v2288
    %v2320 = vpack.c.bf16 %v2291, %v2290
    %v2321 = vpack.c.bf16 %v2293, %v2292
    %v2322 = vpack.c.bf16 %v2295, %v2294
    %v2323 = vpack.c.bf16 %v2297, %v2296
    %v2324 = vpack.c.bf16 %v2299, %v2298
    %v2325 = vpack.c.bf16 %v2301, %v2300
    %v2326 = vpack.c.bf16 %v2303, %v2302
    %v2327 = vpack.c.bf16 %v2305, %v2304
    %v2328 = vpack.c.bf16 %v2307, %v2306
    %v2329 = vpack.c.bf16 %v2309, %v2308
    %v2330 = vpack.c.bf16 %v2311, %v2310
    %v2331 = vpack.c.bf16 %v2313, %v2312
    %v2332 = vpack.c.bf16 %v2315, %v2314
    %v2333 = vld [vmem:[%s16] sm:$0x1]
    %v2335 = vlaneseq
    %v2336 = vshrl.u32 %v2335, 7
    %v2337 = vsub.s32 0, %v2336
    %v2338 = vrot.slane %v2333, %v2337
    %vm2340 = vcmask 48128
    %v2342 = vsel %vm2340, %v2317, 0
    %v2345 = vsel %vm2340, %v2318, 0
    %v2348 = vsel %vm2340, %v2319, 0
    %v2351 = vsel %vm2340, %v2320, 0
    %v2354 = vsel %vm2340, %v2321, 0
    %v2357 = vsel %vm2340, %v2322, 0
    %v2360 = vsel %vm2340, %v2323, 0
    %v2363 = vsel %vm2340, %v2324, 0
    %v2366 = vsel %vm2340, %v2325, 0
    %v2369 = vsel %vm2340, %v2326, 0
    %v2372 = vsel %vm2340, %v2327, 0
    %v2375 = vsel %vm2340, %v2328, 0
    %v2378 = vsel %vm2340, %v2329, 0
    %v2381 = vsel %vm2340, %v2330, 0
    %v2384 = vsel %vm2340, %v2331, 0
    %v2387 = vsel %vm2340, %v2332, 0
    %v2390 = vsel %vm1053, %v2316, 0
    %2392 = vmatprep.subr.bf16.mxu0 0
    %2393 = vmatpush1.bf16.msra.mxu0 %v2390
    %2394 = vmatprep.subr.bf16.mxu0 0
    %2395 = vmatpush1.bf16.msra.mxu0 0
    %2396 = vmatprep.subr.bf16.mxu0 0
    %2397 = vmatpush1.bf16.msra.mxu0 0
    %2398 = vmatprep.subr.bf16.mxu0 0
    %2399 = vmatpush1.bf16.msra.mxu0 0
    %2400 = vmatprep.subr.bf16.mxu0 0
    %2401 = vmatpush1.bf16.msra.mxu0 0
    %2402 = vmatprep.subr.bf16.mxu0 0
    %2403 = vmatpush1.bf16.msra.mxu0 0
    %2404 = vmatprep.subr.bf16.mxu0 0
    %2405 = vmatpush1.bf16.msra.mxu0 0
    %2406 = vmatprep.subr.bf16.mxu0 0
    %2407 = vmatpush1.bf16.msra.mxu0 0
    %2408 = vmatprep.subr.bf16.mxu0 0
    %2409 = vmatpush1.bf16.msra.mxu0 0
    %2410 = vmatprep.subr.bf16.mxu0 0
    %2411 = vmatpush1.bf16.msra.mxu0 0
    %2412 = vmatprep.subr.bf16.mxu0 0
    %2413 = vmatpush1.bf16.msra.mxu0 0
    %2414 = vmatprep.subr.bf16.mxu0 0
    %2415 = vmatpush1.bf16.msra.mxu0 0
    %2416 = vmatprep.subr.bf16.mxu0 0
    %2417 = vmatpush1.bf16.msra.mxu0 0
    %2418 = vmatprep.subr.bf16.mxu0 0
    %2419 = vmatpush1.bf16.msra.mxu0 0
    %2420 = vmatprep.subr.bf16.mxu0 0
    %2421 = vmatpush1.bf16.msra.mxu0 0
    %2422 = vmatprep.subr.bf16.mxu0 0
    %2423 = vmatpush1.bf16.msra.mxu0 0
    %2424 = vmatprep.mubr.bf16.mxu0 0
    %2425 = vmatmul.mubr.bf16.gmra.mrb[0].mxu0 %v2342
    %v2426 = vpop.f32.mrb[0].mxu0
    %v2427 = vadd.f32 %v2338, %v2426
    %v2428 = vpop.f32.mrb[0].mxu0
    %v2429 = vpop.f32.mrb[0].mxu0
    %v2430 = vadd.f32 %v2338, %v2429
    %v2431 = vpop.f32.mrb[0].mxu0
    %2432 = vmatprep.mubr.bf16.mxu0 0
    %2433 = vmatmul.mubr.bf16.gmra.mrb[0].mxu0 %v2345
    %v2434 = vpop.f32.mrb[0].mxu0
    %v2435 = vadd.f32 %v2338, %v2434
    %v2436 = vpop.f32.mrb[0].mxu0
    %v2437 = vpop.f32.mrb[0].mxu0
    %v2438 = vadd.f32 %v2338, %v2437
    %v2439 = vpop.f32.mrb[0].mxu0
    %2440 = vmatprep.mubr.bf16.mxu0 0
    %2441 = vmatmul.mubr.bf16.gmra.mrb[0].mxu0 %v2348
    %v2442 = vpop.f32.mrb[0].mxu0
    %v2443 = vadd.f32 %v2338, %v2442
    %v2444 = vpop.f32.mrb[0].mxu0
    %v2445 = vpop.f32.mrb[0].mxu0
    %v2446 = vadd.f32 %v2338, %v2445
    %v2447 = vpop.f32.mrb[0].mxu0
    %2448 = vmatprep.mubr.bf16.mxu0 0
    %2449 = vmatmul.mubr.bf16.gmra.mrb[0].mxu0 %v2351
    %v2450 = vpop.f32.mrb[0].mxu0
    %v2451 = vadd.f32 %v2338, %v2450
    %v2452 = vpop.f32.mrb[0].mxu0
    %v2453 = vpop.f32.mrb[0].mxu0
    %v2454 = vadd.f32 %v2338, %v2453
    %v2455 = vpop.f32.mrb[0].mxu0
    %2456 = vmatprep.mubr.bf16.mxu0 0
    %2457 = vmatmul.mubr.bf16.gmra.mrb[0].mxu0 %v2354
    %v2458 = vpop.f32.mrb[0].mxu0
    %v2459 = vadd.f32 %v2338, %v2458
    %v2460 = vpop.f32.mrb[0].mxu0
    %v2461 = vpop.f32.mrb[0].mxu0
    %v2462 = vadd.f32 %v2338, %v2461
    %v2463 = vpop.f32.mrb[0].mxu0
    %2464 = vmatprep.mubr.bf16.mxu0 0
    %2465 = vmatmul.mubr.bf16.gmra.mrb[0].mxu0 %v2357
    %v2466 = vpop.f32.mrb[0].mxu0
    %v2467 = vadd.f32 %v2338, %v2466
    %v2468 = vpop.f32.mrb[0].mxu0
    %v2469 = vpop.f32.mrb[0].mxu0
    %v2470 = vadd.f32 %v2338, %v2469
    %v2471 = vpop.f32.mrb[0].mxu0
    %2472 = vmatprep.mubr.bf16.mxu0 0
    %2473 = vmatmul.mubr.bf16.gmra.mrb[0].mxu0 %v2360
    %v2474 = vpop.f32.mrb[0].mxu0
    %v2475 = vadd.f32 %v2338, %v2474
    %v2476 = vpop.f32.mrb[0].mxu0
    %v2477 = vpop.f32.mrb[0].mxu0
    %v2478 = vadd.f32 %v2338, %v2477
    %v2479 = vpop.f32.mrb[0].mxu0
    %2480 = vmatprep.mubr.bf16.mxu0 0
    %2481 = vmatmul.mubr.bf16.gmra.mrb[0].mxu0 %v2363
    %v2482 = vpop.f32.mrb[0].mxu0
    %v2483 = vadd.f32 %v2338, %v2482
    %v2484 = vpop.f32.mrb[0].mxu0
    %v2485 = vpop.f32.mrb[0].mxu0
    %v2486 = vadd.f32 %v2338, %v2485
    %v2487 = vpop.f32.mrb[0].mxu0
    %2488 = vmatprep.mubr.bf16.mxu0 0
    %2489 = vmatmul.mubr.bf16.gmra.mrb[0].mxu0 %v2366
    %v2490 = vpop.f32.mrb[0].mxu0
    %v2491 = vadd.f32 %v2338, %v2490
    %v2492 = vpop.f32.mrb[0].mxu0
    %v2493 = vpop.f32.mrb[0].mxu0
    %v2494 = vadd.f32 %v2338, %v2493
    %v2495 = vpop.f32.mrb[0].mxu0
    %2496 = vmatprep.mubr.bf16.mxu0 0
    %2497 = vmatmul.mubr.bf16.gmra.mrb[0].mxu0 %v2369
    %v2498 = vpop.f32.mrb[0].mxu0
    %v2499 = vadd.f32 %v2338, %v2498
    %v2500 = vpop.f32.mrb[0].mxu0
    %v2501 = vpop.f32.mrb[0].mxu0
    %v2502 = vadd.f32 %v2338, %v2501
    %v2503 = vpop.f32.mrb[0].mxu0
    %2504 = vmatprep.mubr.bf16.mxu0 0
    %2505 = vmatmul.mubr.bf16.gmra.mrb[0].mxu0 %v2372
    %v2506 = vpop.f32.mrb[0].mxu0
    %v2507 = vadd.f32 %v2338, %v2506
    %v2508 = vpop.f32.mrb[0].mxu0
    %v2509 = vpop.f32.mrb[0].mxu0
    %v2510 = vadd.f32 %v2338, %v2509
    %v2511 = vpop.f32.mrb[0].mxu0
    %2512 = vmatprep.mubr.bf16.mxu0 0
    %2513 = vmatmul.mubr.bf16.gmra.mrb[0].mxu0 %v2375
    %v2514 = vpop.f32.mrb[0].mxu0
    %v2515 = vadd.f32 %v2338, %v2514
    %v2516 = vpop.f32.mrb[0].mxu0
    %v2517 = vpop.f32.mrb[0].mxu0
    %v2518 = vadd.f32 %v2338, %v2517
    %v2519 = vpop.f32.mrb[0].mxu0
    %2520 = vmatprep.mubr.bf16.mxu0 0
    %2521 = vmatmul.mubr.bf16.gmra.mrb[0].mxu0 %v2378
    %v2522 = vpop.f32.mrb[0].mxu0
    %v2523 = vadd.f32 %v2338, %v2522
    %v2524 = vpop.f32.mrb[0].mxu0
    %v2525 = vpop.f32.mrb[0].mxu0
    %v2526 = vadd.f32 %v2338, %v2525
    %v2527 = vpop.f32.mrb[0].mxu0
    %2528 = vmatprep.mubr.bf16.mxu0 0
    %2529 = vmatmul.mubr.bf16.gmra.mrb[0].mxu0 %v2381
    %v2530 = vpop.f32.mrb[0].mxu0
    %v2531 = vadd.f32 %v2338, %v2530
    %v2532 = vpop.f32.mrb[0].mxu0
    %v2533 = vpop.f32.mrb[0].mxu0
    %v2534 = vadd.f32 %v2338, %v2533
    %v2535 = vpop.f32.mrb[0].mxu0
    %2536 = vmatprep.mubr.bf16.mxu0 0
    %2537 = vmatmul.mubr.bf16.gmra.mrb[0].mxu0 %v2384
    %v2538 = vpop.f32.mrb[0].mxu0
    %v2539 = vadd.f32 %v2338, %v2538
    %v2540 = vpop.f32.mrb[0].mxu0
    %v2541 = vpop.f32.mrb[0].mxu0
    %v2542 = vadd.f32 %v2338, %v2541
    %v2543 = vpop.f32.mrb[0].mxu0
    %2544 = vmatprep.mubr.bf16.mxu0 0
    %2545 = vmatmul.mubr.bf16.gmra.mrb[0].mxu0 %v2387
    %v2546 = vpop.f32.mrb[0].mxu0
    %v2547 = vadd.f32 %v2338, %v2546
    %v2548 = vpop.f32.mrb[0].mxu0
    %v2549 = vpop.f32.mrb[0].mxu0
    %v2550 = vadd.f32 %v2338, %v2549
    %v2551 = vpop.f32.mrb[0].mxu0
    %2552 = vdwg.mxu0
    %v2553 = vmax.f32 %v2427, 0.0
    %v2554 = vmax.f32 %v2430, 0.0
    %v2555 = vmax.f32 %v2435, 0.0
    %v2556 = vmax.f32 %v2438, 0.0
    %v2557 = vmax.f32 %v2443, 0.0
    %v2558 = vmax.f32 %v2446, 0.0
    %v2559 = vmax.f32 %v2451, 0.0
    %v2560 = vmax.f32 %v2454, 0.0
    %v2561 = vmax.f32 %v2459, 0.0
    %v2562 = vmax.f32 %v2462, 0.0
    %v2563 = vmax.f32 %v2467, 0.0
    %v2564 = vmax.f32 %v2470, 0.0
    %v2565 = vmax.f32 %v2475, 0.0
    %v2566 = vmax.f32 %v2478, 0.0
    %v2567 = vmax.f32 %v2483, 0.0
    %v2568 = vmax.f32 %v2486, 0.0
    %v2569 = vmax.f32 %v2491, 0.0
    %v2570 = vmax.f32 %v2494, 0.0
    %v2571 = vmax.f32 %v2499, 0.0
    %v2572 = vmax.f32 %v2502, 0.0
    %v2573 = vmax.f32 %v2507, 0.0
    %v2574 = vmax.f32 %v2510, 0.0
    %v2575 = vmax.f32 %v2515, 0.0
    %v2576 = vmax.f32 %v2518, 0.0
    %v2577 = vmax.f32 %v2523, 0.0
    %v2578 = vmax.f32 %v2526, 0.0
    %v2579 = vmax.f32 %v2531, 0.0
    %v2580 = vmax.f32 %v2534, 0.0
    %v2581 = vmax.f32 %v2539, 0.0
    %v2582 = vmax.f32 %v2542, 0.0
    %v2583 = vmax.f32 %v2547, 0.0
    %v2584 = vmax.f32 %v2550, 0.0
    %v2585 = vld [vmem:[%s17] sm:$0xf]
    %v2586 = vld [vmem:[%s17 + $0x4] sm:$0x1]
    %v2587 = vpack.c.bf16 %v2554, %v2553
    %v2588 = vpack.c.bf16 %v2556, %v2555
    %v2589 = vpack.c.bf16 %v2558, %v2557
    %v2590 = vpack.c.bf16 %v2560, %v2559
    %v2591 = vpack.c.bf16 %v2562, %v2561
    %v2592 = vpack.c.bf16 %v2564, %v2563
    %v2593 = vpack.c.bf16 %v2566, %v2565
    %v2594 = vpack.c.bf16 %v2568, %v2567
    %v2595 = vpack.c.bf16 %v2570, %v2569
    %v2596 = vpack.c.bf16 %v2572, %v2571
    %v2597 = vpack.c.bf16 %v2574, %v2573
    %v2598 = vpack.c.bf16 %v2576, %v2575
    %v2599 = vpack.c.bf16 %v2578, %v2577
    %v2600 = vpack.c.bf16 %v2580, %v2579
    %v2601 = vpack.c.bf16 %v2582, %v2581
    %v2602 = vpack.c.bf16 %v2584, %v2583
    %v2603 = vld [vmem:[%s18] sm:$0x1]
    %v2605 = vlaneseq
    %v2606 = vshrl.u32 %v2605, 7
    %v2607 = vsub.s32 0, %v2606
    %v2608 = vrot.slane %v2603, %v2607
    %v2612 = vunpack.c.l.b16 %v2585
    %v2613 = vunpack.c.l.b16 %v2586
    %v2614 = vpack.c.b16 %v2613, %v2612
    %vm2615 = vcmask 72704
    %v2617 = vsel %vm2615, %v2587, 0
    %v2620 = vsel %vm2615, %v2588, 0
    %v2623 = vsel %vm2615, %v2589, 0
    %v2626 = vsel %vm2615, %v2590, 0
    %v2629 = vsel %vm2615, %v2591, 0
    %v2632 = vsel %vm2615, %v2592, 0
    %v2635 = vsel %vm2615, %v2593, 0
    %v2638 = vsel %vm2615, %v2594, 0
    %v2641 = vsel %vm2615, %v2595, 0
    %v2644 = vsel %vm2615, %v2596, 0
    %v2647 = vsel %vm2615, %v2597, 0
    %v2650 = vsel %vm2615, %v2598, 0
    %v2653 = vsel %vm2615, %v2599, 0
    %v2656 = vsel %vm2615, %v2600, 0
    %v2659 = vsel %vm2615, %v2601, 0
    %v2662 = vsel %vm2615, %v2602, 0
    %vm2664 = vcmask 1043456
    %vm2665 = vcmask 1044480
    %v2666 = vsel %vm2664, 4294967295, 65535
    %v2667 = vsel %vm2665, %v2666, 0
    %v2669 = vand.u32 %v2614, %v2667
    %2671 = vmatprep.subr.bf16.mxu0 0
    %2672 = vmatpush1.bf16.msra.mxu0 %v2669
    %2673 = vmatprep.subr.bf16.mxu0 0
    %2674 = vmatpush1.bf16.msra.mxu0 0
    %2675 = vmatprep.subr.bf16.mxu0 0
    %2676 = vmatpush1.bf16.msra.mxu0 0
    %2677 = vmatprep.subr.bf16.mxu0 0
    %2678 = vmatpush1.bf16.msra.mxu0 0
    %2679 = vmatprep.subr.bf16.mxu0 0
    %2680 = vmatpush1.bf16.msra.mxu0 0
    %2681 = vmatprep.subr.bf16.mxu0 0
    %2682 = vmatpush1.bf16.msra.mxu0 0
    %2683 = vmatprep.subr.bf16.mxu0 0
    %2684 = vmatpush1.bf16.msra.mxu0 0
    %2685 = vmatprep.subr.bf16.mxu0 0
    %2686 = vmatpush1.bf16.msra.mxu0 0
    %2687 = vmatprep.subr.bf16.mxu0 0
    %2688 = vmatpush1.bf16.msra.mxu0 0
    %2689 = vmatprep.subr.bf16.mxu0 0
    %2690 = vmatpush1.bf16.msra.mxu0 0
    %2691 = vmatprep.subr.bf16.mxu0 0
    %2692 = vmatpush1.bf16.msra.mxu0 0
    %2693 = vmatprep.subr.bf16.mxu0 0
    %2694 = vmatpush1.bf16.msra.mxu0 0
    %2695 = vmatprep.subr.bf16.mxu0 0
    %2696 = vmatpush1.bf16.msra.mxu0 0
    %2697 = vmatprep.subr.bf16.mxu0 0
    %2698 = vmatpush1.bf16.msra.mxu0 0
    %2699 = vmatprep.subr.bf16.mxu0 0
    %2700 = vmatpush1.bf16.msra.mxu0 0
    %2701 = vmatprep.subr.bf16.mxu0 0
    %2702 = vmatpush1.bf16.msra.mxu0 0
    %2703 = vmatprep.mubr.bf16.mxu0 0
    %2704 = vmatmul.mubr.bf16.gmra.mrb[0].mxu0 %v2617
    %v2705 = vpop.f32.mrb[0].mxu0
    %v2706 = vadd.f32 %v2608, %v2705
    %v2707 = vpop.f32.mrb[0].mxu0
    %v2708 = vpop.f32.mrb[0].mxu0
    %v2709 = vadd.f32 %v2608, %v2708
    %v2710 = vpop.f32.mrb[0].mxu0
    %2711 = vmatprep.mubr.bf16.mxu0 0
    %2712 = vmatmul.mubr.bf16.gmra.mrb[0].mxu0 %v2620
    %v2713 = vpop.f32.mrb[0].mxu0
    %v2714 = vadd.f32 %v2608, %v2713
    %v2715 = vpop.f32.mrb[0].mxu0
    %v2716 = vpop.f32.mrb[0].mxu0
    %v2717 = vadd.f32 %v2608, %v2716
    %v2718 = vpop.f32.mrb[0].mxu0
    %2719 = vmatprep.mubr.bf16.mxu0 0
    %2720 = vmatmul.mubr.bf16.gmra.mrb[0].mxu0 %v2623
    %v2721 = vpop.f32.mrb[0].mxu0
    %v2722 = vadd.f32 %v2608, %v2721
    %v2723 = vpop.f32.mrb[0].mxu0
    %v2724 = vpop.f32.mrb[0].mxu0
    %v2725 = vadd.f32 %v2608, %v2724
    %v2726 = vpop.f32.mrb[0].mxu0
    %2727 = vmatprep.mubr.bf16.mxu0 0
    %2728 = vmatmul.mubr.bf16.gmra.mrb[0].mxu0 %v2626
    %v2729 = vpop.f32.mrb[0].mxu0
    %v2730 = vadd.f32 %v2608, %v2729
    %v2731 = vpop.f32.mrb[0].mxu0
    %v2732 = vpop.f32.mrb[0].mxu0
    %v2733 = vadd.f32 %v2608, %v2732
    %v2734 = vpop.f32.mrb[0].mxu0
    %2735 = vmatprep.mubr.bf16.mxu0 0
    %2736 = vmatmul.mubr.bf16.gmra.mrb[0].mxu0 %v2629
    %v2737 = vpop.f32.mrb[0].mxu0
    %v2738 = vadd.f32 %v2608, %v2737
    %v2739 = vpop.f32.mrb[0].mxu0
    %v2740 = vpop.f32.mrb[0].mxu0
    %v2741 = vadd.f32 %v2608, %v2740
    %v2742 = vpop.f32.mrb[0].mxu0
    %2743 = vmatprep.mubr.bf16.mxu0 0
    %2744 = vmatmul.mubr.bf16.gmra.mrb[0].mxu0 %v2632
    %v2745 = vpop.f32.mrb[0].mxu0
    %v2746 = vadd.f32 %v2608, %v2745
    %v2747 = vpop.f32.mrb[0].mxu0
    %v2748 = vpop.f32.mrb[0].mxu0
    %v2749 = vadd.f32 %v2608, %v2748
    %v2750 = vpop.f32.mrb[0].mxu0
    %2751 = vmatprep.mubr.bf16.mxu0 0
    %2752 = vmatmul.mubr.bf16.gmra.mrb[0].mxu0 %v2635
    %v2753 = vpop.f32.mrb[0].mxu0
    %v2754 = vadd.f32 %v2608, %v2753
    %v2755 = vpop.f32.mrb[0].mxu0
    %v2756 = vpop.f32.mrb[0].mxu0
    %v2757 = vadd.f32 %v2608, %v2756
    %v2758 = vpop.f32.mrb[0].mxu0
    %2759 = vmatprep.mubr.bf16.mxu0 0
    %2760 = vmatmul.mubr.bf16.gmra.mrb[0].mxu0 %v2638
    %v2761 = vpop.f32.mrb[0].mxu0
    %v2762 = vadd.f32 %v2608, %v2761
    %v2763 = vpop.f32.mrb[0].mxu0
    %v2764 = vpop.f32.mrb[0].mxu0
    %v2765 = vadd.f32 %v2608, %v2764
    %v2766 = vpop.f32.mrb[0].mxu0
    %2767 = vmatprep.mubr.bf16.mxu0 0
    %2768 = vmatmul.mubr.bf16.gmra.mrb[0].mxu0 %v2641
    %v2769 = vpop.f32.mrb[0].mxu0
    %v2770 = vadd.f32 %v2608, %v2769
    %v2771 = vpop.f32.mrb[0].mxu0
    %v2772 = vpop.f32.mrb[0].mxu0
    %v2773 = vadd.f32 %v2608, %v2772
    %v2774 = vpop.f32.mrb[0].mxu0
    %2775 = vmatprep.mubr.bf16.mxu0 0
    %2776 = vmatmul.mubr.bf16.gmra.mrb[0].mxu0 %v2644
    %v2777 = vpop.f32.mrb[0].mxu0
    %v2778 = vadd.f32 %v2608, %v2777
    %v2779 = vpop.f32.mrb[0].mxu0
    %v2780 = vpop.f32.mrb[0].mxu0
    %v2781 = vadd.f32 %v2608, %v2780
    %v2782 = vpop.f32.mrb[0].mxu0
    %2783 = vmatprep.mubr.bf16.mxu0 0
    %2784 = vmatmul.mubr.bf16.gmra.mrb[0].mxu0 %v2647
    %v2785 = vpop.f32.mrb[0].mxu0
    %v2786 = vadd.f32 %v2608, %v2785
    %v2787 = vpop.f32.mrb[0].mxu0
    %v2788 = vpop.f32.mrb[0].mxu0
    %v2789 = vadd.f32 %v2608, %v2788
    %v2790 = vpop.f32.mrb[0].mxu0
    %2791 = vmatprep.mubr.bf16.mxu0 0
    %2792 = vmatmul.mubr.bf16.gmra.mrb[0].mxu0 %v2650
    %v2793 = vpop.f32.mrb[0].mxu0
    %v2794 = vadd.f32 %v2608, %v2793
    %v2795 = vpop.f32.mrb[0].mxu0
    %v2796 = vpop.f32.mrb[0].mxu0
    %v2797 = vadd.f32 %v2608, %v2796
    %v2798 = vpop.f32.mrb[0].mxu0
    %2799 = vmatprep.mubr.bf16.mxu0 0
    %2800 = vmatmul.mubr.bf16.gmra.mrb[0].mxu0 %v2653
    %v2801 = vpop.f32.mrb[0].mxu0
    %v2802 = vadd.f32 %v2608, %v2801
    %v2803 = vpop.f32.mrb[0].mxu0
    %v2804 = vpop.f32.mrb[0].mxu0
    %v2805 = vadd.f32 %v2608, %v2804
    %v2806 = vpop.f32.mrb[0].mxu0
    %2807 = vmatprep.mubr.bf16.mxu0 0
    %2808 = vmatmul.mubr.bf16.gmra.mrb[0].mxu0 %v2656
    %v2809 = vpop.f32.mrb[0].mxu0
    %v2810 = vadd.f32 %v2608, %v2809
    %v2811 = vpop.f32.mrb[0].mxu0
    %v2812 = vpop.f32.mrb[0].mxu0
    %v2813 = vadd.f32 %v2608, %v2812
    %v2814 = vpop.f32.mrb[0].mxu0
    %2815 = vmatprep.mubr.bf16.mxu0 0
    %2816 = vmatmul.mubr.bf16.gmra.mrb[0].mxu0 %v2659
    %v2817 = vpop.f32.mrb[0].mxu0
    %v2818 = vadd.f32 %v2608, %v2817
    %v2819 = vpop.f32.mrb[0].mxu0
    %v2820 = vpop.f32.mrb[0].mxu0
    %v2821 = vadd.f32 %v2608, %v2820
    %v2822 = vpop.f32.mrb[0].mxu0
    %2823 = vmatprep.mubr.bf16.mxu0 0
    %2824 = vmatmul.mubr.bf16.gmra.mrb[0].mxu0 %v2662
    %v2825 = vpop.f32.mrb[0].mxu0
    %v2826 = vadd.f32 %v2608, %v2825
    %v2827 = vpop.f32.mrb[0].mxu0
    %v2828 = vpop.f32.mrb[0].mxu0
    %v2829 = vadd.f32 %v2608, %v2828
    %v2830 = vpop.f32.mrb[0].mxu0
    %2831 = vdwg.mxu0
    %v2832 = vxor.u32 %v2706, 2147483648
    %v2833 = vxor.u32 %v2709, 2147483648
    %v2834 = vxor.u32 %v2714, 2147483648
    %v2835 = vxor.u32 %v2717, 2147483648
    %v2836 = vxor.u32 %v2722, 2147483648
    %v2837 = vxor.u32 %v2725, 2147483648
    %v2838 = vxor.u32 %v2730, 2147483648
    %v2839 = vxor.u32 %v2733, 2147483648
    %v2840 = vxor.u32 %v2738, 2147483648
    %v2841 = vxor.u32 %v2741, 2147483648
    %v2842 = vxor.u32 %v2746, 2147483648
    %v2843 = vxor.u32 %v2749, 2147483648
    %v2844 = vxor.u32 %v2754, 2147483648
    %v2845 = vxor.u32 %v2757, 2147483648
    %v2846 = vxor.u32 %v2762, 2147483648
    %v2847 = vxor.u32 %v2765, 2147483648
    %v2848 = vxor.u32 %v2770, 2147483648
    %v2849 = vxor.u32 %v2773, 2147483648
    %v2850 = vxor.u32 %v2778, 2147483648
    %v2851 = vxor.u32 %v2781, 2147483648
    %v2852 = vxor.u32 %v2786, 2147483648
    %v2853 = vxor.u32 %v2789, 2147483648
    %v2854 = vxor.u32 %v2794, 2147483648
    %v2855 = vxor.u32 %v2797, 2147483648
    %v2856 = vxor.u32 %v2802, 2147483648
    %v2857 = vxor.u32 %v2805, 2147483648
    %v2858 = vxor.u32 %v2810, 2147483648
    %v2859 = vxor.u32 %v2813, 2147483648
    %v2860 = vxor.u32 %v2818, 2147483648
    %v2861 = vxor.u32 %v2821, 2147483648
    %v2862 = vxor.u32 %v2826, 2147483648
    %v2863 = vxor.u32 %v2829, 2147483648
    %v2864 = vmul.f32 %v2832, 1.442695
    %v2865 = vpow.pop %v2864
    %v2866 = vmul.f32 %v2833, 1.442695
    %v2867 = vpow.pop %v2866
    %v2868 = vmul.f32 %v2834, 1.442695
    %v2869 = vpow.pop %v2868
    %v2870 = vmul.f32 %v2835, 1.442695
    %v2871 = vpow.pop %v2870
    %v2872 = vmul.f32 %v2836, 1.442695
    %v2873 = vpow.pop %v2872
    %v2874 = vmul.f32 %v2837, 1.442695
    %v2875 = vpow.pop %v2874
    %v2876 = vmul.f32 %v2838, 1.442695
    %v2877 = vpow.pop %v2876
    %v2878 = vmul.f32 %v2839, 1.442695
    %v2879 = vpow.pop %v2878
    %v2880 = vmul.f32 %v2840, 1.442695
    %v2881 = vpow.pop %v2880
    %v2882 = vmul.f32 %v2841, 1.442695
    %v2883 = vpow.pop %v2882
    %v2884 = vmul.f32 %v2842, 1.442695
    %v2885 = vpow.pop %v2884
    %v2886 = vmul.f32 %v2843, 1.442695
    %v2887 = vpow.pop %v2886
    %v2888 = vmul.f32 %v2844, 1.442695
    %v2889 = vpow.pop %v2888
    %v2890 = vmul.f32 %v2845, 1.442695
    %v2891 = vpow.pop %v2890
    %v2892 = vmul.f32 %v2846, 1.442695
    %v2893 = vpow.pop %v2892
    %v2894 = vmul.f32 %v2847, 1.442695
    %v2895 = vpow.pop %v2894
    %v2896 = vmul.f32 %v2848, 1.442695
    %v2897 = vpow.pop %v2896
    %v2898 = vmul.f32 %v2849, 1.442695
    %v2899 = vpow.pop %v2898
    %v2900 = vmul.f32 %v2850, 1.442695
    %v2901 = vpow.pop %v2900
    %v2902 = vmul.f32 %v2851, 1.442695
    %v2903 = vpow.pop %v2902
    %v2904 = vmul.f32 %v2852, 1.442695
    %v2905 = vpow.pop %v2904
    %v2906 = vmul.f32 %v2853, 1.442695
    %v2907 = vpow.pop %v2906
    %v2908 = vmul.f32 %v2854, 1.442695
    %v2909 = vpow.pop %v2908
    %v2910 = vmul.f32 %v2855, 1.442695
    %v2911 = vpow.pop %v2910
    %v2912 = vmul.f32 %v2856, 1.442695
    %v2913 = vpow.pop %v2912
    %v2914 = vmul.f32 %v2857, 1.442695
    %v2915 = vpow.pop %v2914
    %v2916 = vmul.f32 %v2858, 1.442695
    %v2917 = vpow.pop %v2916
    %v2918 = vmul.f32 %v2859, 1.442695
    %v2919 = vpow.pop %v2918
    %v2920 = vmul.f32 %v2860, 1.442695
    %v2921 = vpow.pop %v2920
    %v2922 = vmul.f32 %v2861, 1.442695
    %v2923 = vpow.pop %v2922
    %v2924 = vmul.f32 %v2862, 1.442695
    %v2925 = vpow.pop %v2924
    %v2926 = vmul.f32 %v2863, 1.442695
    %v2927 = vpow.pop %v2926
    %v2928 = vadd.f32 %v2865, 1.0
    %v2929 = vadd.f32 %v2867, 1.0
    %v2930 = vadd.f32 %v2869, 1.0
    %v2931 = vadd.f32 %v2871, 1.0
    %v2932 = vadd.f32 %v2873, 1.0
    %v2933 = vadd.f32 %v2875, 1.0
    %v2934 = vadd.f32 %v2877, 1.0
    %v2935 = vadd.f32 %v2879, 1.0
    %v2936 = vadd.f32 %v2881, 1.0
    %v2937 = vadd.f32 %v2883, 1.0
    %v2938 = vadd.f32 %v2885, 1.0
    %v2939 = vadd.f32 %v2887, 1.0
    %v2940 = vadd.f32 %v2889, 1.0
    %v2941 = vadd.f32 %v2891, 1.0
    %v2942 = vadd.f32 %v2893, 1.0
    %v2943 = vadd.f32 %v2895, 1.0
    %v2944 = vadd.f32 %v2897, 1.0
    %v2945 = vadd.f32 %v2899, 1.0
    %v2946 = vadd.f32 %v2901, 1.0
    %v2947 = vadd.f32 %v2903, 1.0
    %v2948 = vadd.f32 %v2905, 1.0
    %v2949 = vadd.f32 %v2907, 1.0
    %v2950 = vadd.f32 %v2909, 1.0
    %v2951 = vadd.f32 %v2911, 1.0
    %v2952 = vadd.f32 %v2913, 1.0
    %v2953 = vadd.f32 %v2915, 1.0
    %v2954 = vadd.f32 %v2917, 1.0
    %v2955 = vadd.f32 %v2919, 1.0
    %v2956 = vadd.f32 %v2921, 1.0
    %v2957 = vadd.f32 %v2923, 1.0
    %v2958 = vadd.f32 %v2925, 1.0
    %v2959 = vadd.f32 %v2927, 1.0
    %v2960 = vrcp.pop %v2928
    %v2961 = vmul.f32 1.0, %v2960
    %v2962 = vrcp.pop %v2929
    %v2963 = vmul.f32 1.0, %v2962
    %v2964 = vrcp.pop %v2930
    %v2965 = vmul.f32 1.0, %v2964
    %v2966 = vrcp.pop %v2931
    %v2967 = vmul.f32 1.0, %v2966
    %v2968 = vrcp.pop %v2932
    %v2969 = vmul.f32 1.0, %v2968
    %v2970 = vrcp.pop %v2933
    %v2971 = vmul.f32 1.0, %v2970
    %v2972 = vrcp.pop %v2934
    %v2973 = vmul.f32 1.0, %v2972
    %v2974 = vrcp.pop %v2935
    %v2975 = vmul.f32 1.0, %v2974
    %v2976 = vrcp.pop %v2936
    %v2977 = vmul.f32 1.0, %v2976
    %v2978 = vrcp.pop %v2937
    %v2979 = vmul.f32 1.0, %v2978
    %v2980 = vrcp.pop %v2938
    %v2981 = vmul.f32 1.0, %v2980
    %v2982 = vrcp.pop %v2939
    %v2983 = vmul.f32 1.0, %v2982
    %v2984 = vrcp.pop %v2940
    %v2985 = vmul.f32 1.0, %v2984
    %v2986 = vrcp.pop %v2941
    %v2987 = vmul.f32 1.0, %v2986
    %v2988 = vrcp.pop %v2942
    %v2989 = vmul.f32 1.0, %v2988
    %v2990 = vrcp.pop %v2943
    %v2991 = vmul.f32 1.0, %v2990
    %v2992 = vrcp.pop %v2944
    %v2993 = vmul.f32 1.0, %v2992
    %v2994 = vrcp.pop %v2945
    %v2995 = vmul.f32 1.0, %v2994
    %v2996 = vrcp.pop %v2946
    %v2997 = vmul.f32 1.0, %v2996
    %v2998 = vrcp.pop %v2947
    %v2999 = vmul.f32 1.0, %v2998
    %v3000 = vrcp.pop %v2948
    %v3001 = vmul.f32 1.0, %v3000
    %v3002 = vrcp.pop %v2949
    %v3003 = vmul.f32 1.0, %v3002
    %v3004 = vrcp.pop %v2950
    %v3005 = vmul.f32 1.0, %v3004
    %v3006 = vrcp.pop %v2951
    %v3007 = vmul.f32 1.0, %v3006
    %v3008 = vrcp.pop %v2952
    %v3009 = vmul.f32 1.0, %v3008
    %v3010 = vrcp.pop %v2953
    %v3011 = vmul.f32 1.0, %v3010
    %v3012 = vrcp.pop %v2954
    %v3013 = vmul.f32 1.0, %v3012
    %v3014 = vrcp.pop %v2955
    %v3015 = vmul.f32 1.0, %v3014
    %v3016 = vrcp.pop %v2956
    %v3017 = vmul.f32 1.0, %v3016
    %v3018 = vrcp.pop %v2957
    %v3019 = vmul.f32 1.0, %v3018
    %v3020 = vrcp.pop %v2958
    %v3021 = vmul.f32 1.0, %v3020
    %v3022 = vrcp.pop %v2959
    %v3023 = vmul.f32 1.0, %v3022
    %3056 = vrot.lane.b32.xlu0 %v2961, 64
    %v3057 = vpop.permute.xlu0 %3056
    %3058 = vrot.lane.b32.xlu0 %v2963, 64
    %v3059 = vpop.permute.xlu0 %3058
    %3060 = vrot.lane.b32.xlu0 %v2965, 64
    %v3061 = vpop.permute.xlu0 %3060
    %3062 = vrot.lane.b32.xlu0 %v2967, 64
    %v3063 = vpop.permute.xlu0 %3062
    %3064 = vrot.lane.b32.xlu0 %v2969, 64
    %v3065 = vpop.permute.xlu0 %3064
    %3066 = vrot.lane.b32.xlu0 %v2971, 64
    %v3067 = vpop.permute.xlu0 %3066
    %3068 = vrot.lane.b32.xlu0 %v2973, 64
    %v3069 = vpop.permute.xlu0 %3068
    %3070 = vrot.lane.b32.xlu0 %v2975, 64
    %v3071 = vpop.permute.xlu0 %3070
    %3072 = vrot.lane.b32.xlu0 %v2977, 64
    %v3073 = vpop.permute.xlu0 %3072
    %3074 = vrot.lane.b32.xlu0 %v2979, 64
    %v3075 = vpop.permute.xlu0 %3074
    %3076 = vrot.lane.b32.xlu0 %v2981, 64
    %v3077 = vpop.permute.xlu0 %3076
    %3078 = vrot.lane.b32.xlu0 %v2983, 64
    %v3079 = vpop.permute.xlu0 %3078
    %3080 = vrot.lane.b32.xlu0 %v2985, 64
    %v3081 = vpop.permute.xlu0 %3080
    %3082 = vrot.lane.b32.xlu0 %v2987, 64
    %v3083 = vpop.permute.xlu0 %3082
    %3084 = vrot.lane.b32.xlu0 %v2989, 64
    %v3085 = vpop.permute.xlu0 %3084
    %3086 = vrot.lane.b32.xlu0 %v2991, 64
    %v3087 = vpop.permute.xlu0 %3086
    %3088 = vrot.lane.b32.xlu0 %v2993, 64
    %v3089 = vpop.permute.xlu0 %3088
    %3090 = vrot.lane.b32.xlu0 %v2995, 64
    %v3091 = vpop.permute.xlu0 %3090
    %3092 = vrot.lane.b32.xlu0 %v2997, 64
    %v3093 = vpop.permute.xlu0 %3092
    %3094 = vrot.lane.b32.xlu0 %v2999, 64
    %v3095 = vpop.permute.xlu0 %3094
    %3096 = vrot.lane.b32.xlu0 %v3001, 64
    %v3097 = vpop.permute.xlu0 %3096
    %3098 = vrot.lane.b32.xlu0 %v3003, 64
    %v3099 = vpop.permute.xlu0 %3098
    %3100 = vrot.lane.b32.xlu0 %v3005, 64
    %v3101 = vpop.permute.xlu0 %3100
    %3102 = vrot.lane.b32.xlu0 %v3007, 64
    %v3103 = vpop.permute.xlu0 %3102
    %3104 = vrot.lane.b32.xlu0 %v3009, 64
    %v3105 = vpop.permute.xlu0 %3104
    %3106 = vrot.lane.b32.xlu0 %v3011, 64
    %v3107 = vpop.permute.xlu0 %3106
    %3108 = vrot.lane.b32.xlu0 %v3013, 64
    %v3109 = vpop.permute.xlu0 %3108
    %3110 = vrot.lane.b32.xlu0 %v3015, 64
    %v3111 = vpop.permute.xlu0 %3110
    %3112 = vrot.lane.b32.xlu0 %v3017, 64
    %v3113 = vpop.permute.xlu0 %3112
    %3114 = vrot.lane.b32.xlu0 %v3019, 64
    %v3115 = vpop.permute.xlu0 %3114
    %3116 = vrot.lane.b32.xlu0 %v3021, 64
    %v3117 = vpop.permute.xlu0 %3116
    %3118 = vrot.lane.b32.xlu0 %v3023, 64
    %v3119 = vpop.permute.xlu0 %3118
    %3184 = vrot.lane.b32.xlu0 %v1218, 67
    %v3185 = vpop.permute.xlu0 %3184
    %3186 = vrot.lane.b32.xlu0 %v1219, 67
    %v3187 = vpop.permute.xlu0 %3186
    %3188 = vrot.lane.b32.xlu0 %v1220, 67
    %v3189 = vpop.permute.xlu0 %3188
    %3190 = vrot.lane.b32.xlu0 %v1221, 67
    %v3191 = vpop.permute.xlu0 %3190
    %3192 = vrot.lane.b32.xlu0 %v1222, 67
    %v3193 = vpop.permute.xlu0 %3192
    %3194 = vrot.lane.b32.xlu0 %v1223, 67
    %v3195 = vpop.permute.xlu0 %3194
    %3196 = vrot.lane.b32.xlu0 %v1224, 67
    %v3197 = vpop.permute.xlu0 %3196
    %3198 = vrot.lane.b32.xlu0 %v1225, 67
    %v3199 = vpop.permute.xlu0 %3198
    %3200 = vrot.lane.b32.xlu0 %v1226, 67
    %v3201 = vpop.permute.xlu0 %3200
    %3202 = vrot.lane.b32.xlu0 %v1227, 67
    %v3203 = vpop.permute.xlu0 %3202
    %3204 = vrot.lane.b32.xlu0 %v1228, 67
    %v3205 = vpop.permute.xlu0 %3204
    %3206 = vrot.lane.b32.xlu0 %v1229, 67
    %v3207 = vpop.permute.xlu0 %3206
    %3208 = vrot.lane.b32.xlu0 %v1230, 67
    %v3209 = vpop.permute.xlu0 %3208
    %3210 = vrot.lane.b32.xlu0 %v1231, 67
    %v3211 = vpop.permute.xlu0 %3210
    %3212 = vrot.lane.b32.xlu0 %v1232, 67
    %v3213 = vpop.permute.xlu0 %3212
    %3214 = vrot.lane.b32.xlu0 %v1233, 67
    %v3215 = vpop.permute.xlu0 %3214
    %3216 = vrot.lane.b32.xlu0 %v1234, 67
    %v3217 = vpop.permute.xlu0 %3216
    %3218 = vrot.lane.b32.xlu0 %v1235, 67
    %v3219 = vpop.permute.xlu0 %3218
    %3220 = vrot.lane.b32.xlu0 %v1236, 67
    %v3221 = vpop.permute.xlu0 %3220
    %3222 = vrot.lane.b32.xlu0 %v1237, 67
    %v3223 = vpop.permute.xlu0 %3222
    %3224 = vrot.lane.b32.xlu0 %v1238, 67
    %v3225 = vpop.permute.xlu0 %3224
    %3226 = vrot.lane.b32.xlu0 %v1239, 67
    %v3227 = vpop.permute.xlu0 %3226
    %3228 = vrot.lane.b32.xlu0 %v1240, 67
    %v3229 = vpop.permute.xlu0 %3228
    %3230 = vrot.lane.b32.xlu0 %v1241, 67
    %v3231 = vpop.permute.xlu0 %3230
    %3232 = vrot.lane.b32.xlu0 %v1242, 67
    %v3233 = vpop.permute.xlu0 %3232
    %3234 = vrot.lane.b32.xlu0 %v1243, 67
    %v3235 = vpop.permute.xlu0 %3234
    %3236 = vrot.lane.b32.xlu0 %v1244, 67
    %v3237 = vpop.permute.xlu0 %3236
    %3238 = vrot.lane.b32.xlu0 %v1245, 67
    %v3239 = vpop.permute.xlu0 %3238
    %3240 = vrot.lane.b32.xlu0 %v1246, 67
    %v3241 = vpop.permute.xlu0 %3240
    %3242 = vrot.lane.b32.xlu0 %v1247, 67
    %v3243 = vpop.permute.xlu0 %3242
    %3244 = vrot.lane.b32.xlu0 %v1248, 67
    %v3245 = vpop.permute.xlu0 %3244
    %3246 = vrot.lane.b32.xlu0 %v1249, 67
    %v3247 = vpop.permute.xlu0 %3246
    %v3280 = vsel %vm151, %v1973, %v3057
    %v3281 = vsel %vm151, %v1975, %v3059
    %v3282 = vsel %vm151, %v1977, %v3061
    %v3283 = vsel %vm151, %v1979, %v3063
    %v3284 = vsel %vm151, %v1981, %v3065
    %v3285 = vsel %vm151, %v1983, %v3067
    %v3286 = vsel %vm151, %v1985, %v3069
    %v3287 = vsel %vm151, %v1987, %v3071
    %v3288 = vsel %vm151, %v1989, %v3073
    %v3289 = vsel %vm151, %v1991, %v3075
    %v3290 = vsel %vm151, %v1993, %v3077
    %v3291 = vsel %vm151, %v1995, %v3079
    %v3292 = vsel %vm151, %v1997, %v3081
    %v3293 = vsel %vm151, %v1999, %v3083
    %v3294 = vsel %vm151, %v2001, %v3085
    %v3295 = vsel %vm151, %v2003, %v3087
    %v3296 = vsel %vm151, %v2005, %v3089
    %v3297 = vsel %vm151, %v2007, %v3091
    %v3298 = vsel %vm151, %v2009, %v3093
    %v3299 = vsel %vm151, %v2011, %v3095
    %v3300 = vsel %vm151, %v2013, %v3097
    %v3301 = vsel %vm151, %v2015, %v3099
    %v3302 = vsel %vm151, %v2017, %v3101
    %v3303 = vsel %vm151, %v2019, %v3103
    %v3304 = vsel %vm151, %v2021, %v3105
    %v3305 = vsel %vm151, %v2023, %v3107
    %v3306 = vsel %vm151, %v2025, %v3109
    %v3307 = vsel %vm151, %v2027, %v3111
    %v3308 = vsel %vm151, %v2029, %v3113
    %v3309 = vsel %vm151, %v2031, %v3115
    %v3310 = vsel %vm151, %v2033, %v3117
    %v3311 = vsel %vm151, %v2035, %v3119
    %vm3312 = vcmask 547840
    %v3313 = vsel %vm3312, %v3280, %v3185
    %v3314 = vsel %vm3312, %v3281, %v3187
    %v3315 = vsel %vm3312, %v3282, %v3189
    %v3316 = vsel %vm3312, %v3283, %v3191
    %v3317 = vsel %vm3312, %v3284, %v3193
    %v3318 = vsel %vm3312, %v3285, %v3195
    %v3319 = vsel %vm3312, %v3286, %v3197
    %v3320 = vsel %vm3312, %v3287, %v3199
    %v3321 = vsel %vm3312, %v3288, %v3201
    %v3322 = vsel %vm3312, %v3289, %v3203
    %v3323 = vsel %vm3312, %v3290, %v3205
    %v3324 = vsel %vm3312, %v3291, %v3207
    %v3325 = vsel %vm3312, %v3292, %v3209
    %v3326 = vsel %vm3312, %v3293, %v3211
    %v3327 = vsel %vm3312, %v3294, %v3213
    %v3328 = vsel %vm3312, %v3295, %v3215
    %v3329 = vsel %vm3312, %v3296, %v3217
    %v3330 = vsel %vm3312, %v3297, %v3219
    %v3331 = vsel %vm3312, %v3298, %v3221
    %v3332 = vsel %vm3312, %v3299, %v3223
    %v3333 = vsel %vm3312, %v3300, %v3225
    %v3334 = vsel %vm3312, %v3301, %v3227
    %v3335 = vsel %vm3312, %v3302, %v3229
    %v3336 = vsel %vm3312, %v3303, %v3231
    %v3337 = vsel %vm3312, %v3304, %v3233
    %v3338 = vsel %vm3312, %v3305, %v3235
    %v3339 = vsel %vm3312, %v3306, %v3237
    %v3340 = vsel %vm3312, %v3307, %v3239
    %v3341 = vsel %vm3312, %v3308, %v3241
    %v3342 = vsel %vm3312, %v3309, %v3243
    %v3343 = vsel %vm3312, %v3310, %v3245
    %v3344 = vsel %vm3312, %v3311, %v3247
    %vm3345 = vcmask 678912
    %v3346 = vsel %vm3345, %v3313, 0.0
    %v3347 = vsel %vm3345, %v3314, 0.0
    %v3348 = vsel %vm3345, %v3315, 0.0
    %v3349 = vsel %vm3345, %v3316, 0.0
    %v3350 = vsel %vm3345, %v3317, 0.0
    %v3351 = vsel %vm3345, %v3318, 0.0
    %v3352 = vsel %vm3345, %v3319, 0.0
    %v3353 = vsel %vm3345, %v3320, 0.0
    %v3354 = vsel %vm3345, %v3321, 0.0
    %v3355 = vsel %vm3345, %v3322, 0.0
    %v3356 = vsel %vm3345, %v3323, 0.0
    %v3357 = vsel %vm3345, %v3324, 0.0
    %v3358 = vsel %vm3345, %v3325, 0.0
    %v3359 = vsel %vm3345, %v3326, 0.0
    %v3360 = vsel %vm3345, %v3327, 0.0
    %v3361 = vsel %vm3345, %v3328, 0.0
    %v3362 = vsel %vm3345, %v3329, 0.0
    %v3363 = vsel %vm3345, %v3330, 0.0
    %v3364 = vsel %vm3345, %v3331, 0.0
    %v3365 = vsel %vm3345, %v3332, 0.0
    %v3366 = vsel %vm3345, %v3333, 0.0
    %v3367 = vsel %vm3345, %v3334, 0.0
    %v3368 = vsel %vm3345, %v3335, 0.0
    %v3369 = vsel %vm3345, %v3336, 0.0
    %v3370 = vsel %vm3345, %v3337, 0.0
    %v3371 = vsel %vm3345, %v3338, 0.0
    %v3372 = vsel %vm3345, %v3339, 0.0
    %v3373 = vsel %vm3345, %v3340, 0.0
    %v3374 = vsel %vm3345, %v3341, 0.0
    %v3375 = vsel %vm3345, %v3342, 0.0
    %v3376 = vsel %vm3345, %v3343, 0.0
    %v3377 = vsel %vm3345, %v3344, 0.0
    %3378 = vst [vmem:[#allocation2] sm:$0xff] %v3346
    %3379 = vst [vmem:[#allocation2 + $0x8] sm:$0xff] %v3347
    %3380 = vst [vmem:[#allocation2 + $0x10] sm:$0xff] %v3348
    %3381 = vst [vmem:[#allocation2 + $0x18] sm:$0xff] %v3349
    %3382 = vst [vmem:[#allocation2 + $0x20] sm:$0xff] %v3350
    %3383 = vst [vmem:[#allocation2 + $0x28] sm:$0xff] %v3351
    %3384 = vst [vmem:[#allocation2 + $0x30] sm:$0xff] %v3352
    %3385 = vst [vmem:[#allocation2 + $0x38] sm:$0xff] %v3353
    %3386 = vst [vmem:[#allocation2 + $0x40] sm:$0xff] %v3354
    %3387 = vst [vmem:[#allocation2 + $0x48] sm:$0xff] %v3355
    %3388 = vst [vmem:[#allocation2 + $0x50] sm:$0xff] %v3356
    %3389 = vst [vmem:[#allocation2 + $0x58] sm:$0xff] %v3357
    %3390 = vst [vmem:[#allocation2 + $0x60] sm:$0xff] %v3358
    %3391 = vst [vmem:[#allocation2 + $0x68] sm:$0xff] %v3359
    %3392 = vst [vmem:[#allocation2 + $0x70] sm:$0xff] %v3360
    %3393 = vst [vmem:[#allocation2 + $0x78] sm:$0xff] %v3361
    %3394 = vst [vmem:[#allocation2 + $0x80] sm:$0xff] %v3362
    %3395 = vst [vmem:[#allocation2 + $0x88] sm:$0xff] %v3363
    %3396 = vst [vmem:[#allocation2 + $0x90] sm:$0xff] %v3364
    %3397 = vst [vmem:[#allocation2 + $0x98] sm:$0xff] %v3365
    %3398 = vst [vmem:[#allocation2 + $0xa0] sm:$0xff] %v3366
    %3399 = vst [vmem:[#allocation2 + $0xa8] sm:$0xff] %v3367
    %3400 = vst [vmem:[#allocation2 + $0xb0] sm:$0xff] %v3368
    %3401 = vst [vmem:[#allocation2 + $0xb8] sm:$0xff] %v3369
    %3402 = vst [vmem:[#allocation2 + $0xc0] sm:$0xff] %v3370
    %3403 = vst [vmem:[#allocation2 + $0xc8] sm:$0xff] %v3371
    %3404 = vst [vmem:[#allocation2 + $0xd0] sm:$0xff] %v3372
    %3405 = vst [vmem:[#allocation2 + $0xd8] sm:$0xff] %v3373
    %3406 = vst [vmem:[#allocation2 + $0xe0] sm:$0xff] %v3374
    %3407 = vst [vmem:[#allocation2 + $0xe8] sm:$0xff] %v3375
    %3408 = vst [vmem:[#allocation2 + $0xf0] sm:$0xff] %v3376
    %3409 = vst [vmem:[#allocation2 + $0xf8] sm:$0xff] %v3377
    // Predicated region
    $region78: #{tpu_custom_call.1} parent=1 // pred_check
      _
    $region79: #{tpu_custom_call.1} parent=1 // pred_check_branch
      %3411 = sbr.rel (0) target = $region81
    $region80: #{tpu_custom_call.1} parent=1 // pred_region
      %s3413 = ssub.s32 4096, 4096
      %3414 = vsyncadd [#allocation3], %s3413
      %s3415 = sshll.u32 [#allocation2], 4
      %s3416 = int_to_ptr.vmem [resolvable:$true] %s3415
      %3421 = dma.vmem_to_hbm [thread:$0]  %s3416, 4096, %s19, [#allocation3], 128, 128, 8
    $region81: #{tpu_custom_call.1} parent=1 // pred_fallthru
      _
    // Predicated region
    $region82: #{tpu_custom_call.1} parent=1 // pred_check
      _
    $region83: #{tpu_custom_call.1} parent=1 // pred_check_branch
      %3423 = sbr.rel (0) target = $region85
    $region84: #{tpu_custom_call.1} parent=1 // pred_region
      %3424 = dma.done [#allocation3], 4096
    $region85: #{tpu_custom_call.1} parent=1 // pred_fallthru
      _
    %3425 = vsyncpa [#allocation3], 1

</llo_original>
